<compile_context>
chip_gen: v6e
topology: v6e:2x2x1
jax: 0.10.0
libtpu: 0.0.40
codegen_flags: <defaults>
</compile_context>

<pallas_src>
import jax
import jax.numpy as jnp
from jax import lax
from jax.experimental import pallas as pl
from jax.experimental.pallas import tpu as pltpu

_EPS = 1e-5      # PyTorch BatchNorm2d default eps
_LANE = 128


def _round_up(x, m):
    return ((x + m - 1) // m) * m


def _vmem_limit_bytes():
    # Gen-aware VMEM budget: ~96 MiB on v5e/v6e (128 MiB physical), ~48 MiB on
    # v7x (64 MiB physical). Falls back to a safe value if the query fails.
    try:
        cap = int(pltpu.get_tpu_info().vmem_capacity_bytes)
    except Exception:
        cap = 64 * 1024 * 1024
    return int(min(96 * 1024 * 1024, (cap * 3) // 4))


_VMEM_LIMIT = _vmem_limit_bytes()


def _compiler_params():
    return pltpu.CompilerParams(
        dimension_semantics=("parallel",),      # batch axis -> 2 TCs on v7x
        vmem_limit_bytes=_VMEM_LIMIT)


# ----------------------------- Pallas kernels ------------------------------ #

def _conv1_kernel(x_ref, w_ref, b_ref, y_ref, sum_ref, sq_ref):
    """Conv1 as a single compact-K matmul + partial BN statistics.

    x_ref  : (1, H, W, K1p) bf16  -- compact im2col patch (9*Cin padded to K1p)
    w_ref  : (K1p, Cout_p)  bf16
    b_ref  : (1, Cout_p)    f32
    y_ref  : (1, H, W, Cout_p) bf16 out (conv + bias, pre-BN)
    sum_ref/sq_ref : (1, 1, Cout_p) f32 out (per-image partial stats)
    """
    h, w, k1p = x_ref.shape[1], x_ref.shape[2], x_ref.shape[3]
    cout_p = y_ref.shape[-1]

    patch = x_ref[0].reshape(h * w, k1p)
    acc = jnp.dot(patch, w_ref[...], preferred_element_type=jnp.float32)
    acc = acc + b_ref[...]                                    # (H*W, Cout_p) f32

    y_ref[0] = acc.reshape(h, w, cout_p).astype(y_ref.dtype)  # bf16 intermediate
    sum_ref[0] = jnp.sum(acc, axis=0, keepdims=True)
    sq_ref[0] = jnp.sum(acc * acc, axis=0, keepdims=True)


def _conv2_kernel(x_ref, scale_ref, shift_ref, w_ref, b_ref,
                  y_ref, sum_ref, sq_ref, halo_ref):
    """BN1+ReLU (fused input path) -> 3x3 conv via 9 accumulating per-tap
    matmuls (no materialized im2col) -> bias -> partial BN2 statistics.

    x_ref    : (1, H, W, Cp) bf16  (conv1 pre-BN output)
    scale_ref/shift_ref : (1, Cp) f32  (BN1 scale/shift)
    w_ref    : (9, Cp, Cout_p) bf16  (per-tap weights, tap = ky*3+kx)
    b_ref    : (1, Cout_p) f32
    y_ref    : (1, H, W, Cout_p) bf16 out
    halo_ref : (H+2, W+32, Cp) bf16 scratch; interior at [1:H+1, 16:16+W]
    """
    h, w, cp = x_ref.shape[1], x_ref.shape[2], x_ref.shape[3]
    cout_p = y_ref.shape[-1]

    # BN1 + ReLU fused into conv2's input path (saves a full HBM pass).
    x = jnp.maximum(x_ref[0].astype(jnp.float32) * scale_ref[...]
                    + shift_ref[...], 0.0)

    # Interior store at a sublane-pair-aligned offset.
    halo_ref[1:h + 1, 16:16 + w, :] = x.astype(halo_ref.dtype)

    # Zero only the border strips that are actually read (pair-aligned bf16
    # stores), instead of memsetting the whole scratch every grid step.
    zrow = jnp.zeros((1, w + 4, cp), halo_ref.dtype)
    halo_ref[0:1, 14:18 + w, :] = zrow
    halo_ref[h + 1:h + 2, 14:18 + w, :] = zrow
    zcol = jnp.zeros((h, 2, cp), halo_ref.dtype)
    halo_ref[1:h + 1, 14:16, :] = zcol
    halo_ref[1:h + 1, 16 + w:18 + w, :] = zcol

    # Nine accumulating per-tap matmuls into one f32 accumulator.
    # Hoist the 3 column-shifted (dx) views so each unaligned sublane read
    # happens once; row (dy) slices on the loaded value are free.
    acc = None
    for dx in range(3):
        col = halo_ref[:, 15 + dx:15 + dx + w, :]        # (H+2, W, Cp)
        for dy in range(3):
            tap = col[dy:dy + h].reshape(h * w, cp)
            d = jnp.dot(tap, w_ref[dy * 3 + dx],
                        preferred_element_type=jnp.float32)
            acc = d if acc is None else acc + d
    acc = acc + b_ref[...]                               # (H*W, Cout_p) f32

    y_ref[0] = acc.reshape(h, w, cout_p).astype(y_ref.dtype)
    sum_ref[0] = jnp.sum(acc, axis=0, keepdims=True)
    sq_ref[0] = jnp.sum(acc * acc, axis=0, keepdims=True)


def _finalize_kernel(y_ref, scale_ref, shift_ref, trace_ref, pool_ref):
    """BN2 + ReLU + fused 2x2/stride-2 max pool; lane-dense (Cp) outputs."""
    h, w, cp = y_ref.shape[1], y_ref.shape[2], y_ref.shape[3]
    ho, wo = h // 2, w // 2

    y = jnp.maximum(y_ref[0].astype(jnp.float32) * scale_ref[...]
                    + shift_ref[...], 0.0)               # (H, W, Cp) f32
    trace_ref[0] = y

    r = y.reshape(ho, 2, w, cp)
    rm = jnp.maximum(r[:, 0], r[:, 1])                   # (ho, W, Cp)
    r2 = rm.reshape(ho, wo, 2, cp)
    pool_ref[0] = jnp.maximum(r2[:, :, 0], r2[:, :, 1])  # (ho, wo, Cp)


# ------------------------------ JAX wrappers -------------------------------- #

def _im2col_conv1_input(x_nchw, k1p):
    """Compact im2col for conv1 built in XLA (input is tiny): (N,H,W,9*Cin)->K1p."""
    n, cin, h, w = x_nchw.shape
    x = jnp.transpose(x_nchw, (0, 2, 3, 1))                      # NHWC f32
    xp = jnp.pad(x, ((0, 0), (1, 1), (1, 1), (0, 0)))
    pieces = [xp[:, dy:dy + h, dx:dx + w, :]
              for dy in range(3) for dx in range(3)]
    patch = jnp.concatenate(pieces, axis=-1)                     # (N,H,W,9*Cin)
    patch = jnp.pad(patch, ((0, 0), (0, 0), (0, 0), (0, k1p - 9 * cin)))
    return patch.astype(jnp.bfloat16)


def _prep_w1(w_oihw, k1p, cout_p):
    cout, cin = w_oihw.shape[0], w_oihw.shape[1]
    w = jnp.transpose(w_oihw, (2, 3, 1, 0)).reshape(9 * cin, cout)
    w = jnp.pad(w, ((0, k1p - 9 * cin), (0, cout_p - cout)))
    return w.astype(jnp.bfloat16)                                # (K1p, Cout_p)


def _prep_w2(w_oihw, cin_p, cout_p):
    cout, cin = w_oihw.shape[0], w_oihw.shape[1]
    w = jnp.transpose(w_oihw, (2, 3, 1, 0)).reshape(9, cin, cout)
    w = jnp.pad(w, ((0, 0), (0, cin_p - cin), (0, cout_p - cout)))
    return w.astype(jnp.bfloat16)                                # (9, Cin_p, Cout_p)


def _pad_vec(v, cp):
    return jnp.pad(v.astype(jnp.float32), (0, cp - v.shape[0]))


def _bn_scale_shift(psum, psq, gamma_p, beta_p, count):
    # psum/psq: (N, 1, Cp) partials; tiny (Cp,)-sized reduce stays in XLA.
    tot = jnp.sum(psum, axis=(0, 1))
    tot2 = jnp.sum(psq, axis=(0, 1))
    mean = tot / count
    var = jnp.maximum(tot2 / count - mean * mean, 0.0)   # biased var (training fwd)
    scale = gamma_p * lax.rsqrt(var + _EPS)
    shift = beta_p - mean * scale
    return scale.reshape(1, -1), shift.reshape(1, -1)


def _conv1_call(patch, w1, b1):
    n, h, w, k1p = patch.shape
    cout_p = w1.shape[1]
    vec_spec = pl.BlockSpec((1, cout_p), lambda i: (0, 0))
    return pl.pallas_call(
        _conv1_kernel,
        grid=(n,),
        in_specs=[pl.BlockSpec((1, h, w, k1p), lambda i: (i, 0, 0, 0)),
                  pl.BlockSpec((k1p, cout_p), lambda i: (0, 0)),
                  vec_spec],
        out_specs=[pl.BlockSpec((1, h, w, cout_p), lambda i: (i, 0, 0, 0)),
                   pl.BlockSpec((1, 1, cout_p), lambda i: (i, 0, 0)),
                   pl.BlockSpec((1, 1, cout_p), lambda i: (i, 0, 0))],
        out_shape=[jax.ShapeDtypeStruct((n, h, w, cout_p), jnp.bfloat16),
                   jax.ShapeDtypeStruct((n, 1, cout_p), jnp.float32),
                   jax.ShapeDtypeStruct((n, 1, cout_p), jnp.float32)],
        compiler_params=_compiler_params(),
    )(patch, w1, b1)


def _conv2_call(y1, scale1, shift1, w2, b2):
    n, h, w, cp = y1.shape
    cout_p = w2.shape[2]
    vec_spec = pl.BlockSpec((1, cout_p), lambda i: (0, 0))
    return pl.pallas_call(
        _conv2_kernel,
        grid=(n,),
        in_specs=[pl.BlockSpec((1, h, w, cp), lambda i: (i, 0, 0, 0)),
                  vec_spec, vec_spec,
                  pl.BlockSpec((9, cp, cout_p), lambda i: (0, 0, 0)),
                  vec_spec],
        out_specs=[pl.BlockSpec((1, h, w, cout_p), lambda i: (i, 0, 0, 0)),
                   pl.BlockSpec((1, 1, cout_p), lambda i: (i, 0, 0)),
                   pl.BlockSpec((1, 1, cout_p), lambda i: (i, 0, 0))],
        out_shape=[jax.ShapeDtypeStruct((n, h, w, cout_p), jnp.bfloat16),
                   jax.ShapeDtypeStruct((n, 1, cout_p), jnp.float32),
                   jax.ShapeDtypeStruct((n, 1, cout_p), jnp.float32)],
        scratch_shapes=[pltpu.VMEM((h + 2, w + 32, cp), jnp.bfloat16)],
        compiler_params=_compiler_params(),
    )(y1, scale1, shift1, w2, b2)


def _finalize_call(y2, scale2, shift2):
    n, h, w, cp = y2.shape
    ho, wo = h // 2, w // 2
    vec_spec = pl.BlockSpec((1, cp), lambda i: (0, 0))
    return pl.pallas_call(
        _finalize_kernel,
        grid=(n,),
        in_specs=[pl.BlockSpec((1, h, w, cp), lambda i: (i, 0, 0, 0)),
                  vec_spec, vec_spec],
        out_specs=[pl.BlockSpec((1, h, w, cp), lambda i: (i, 0, 0, 0)),
                   pl.BlockSpec((1, ho, wo, cp), lambda i: (i, 0, 0, 0))],
        out_shape=[jax.ShapeDtypeStruct((n, h, w, cp), jnp.float32),
                   jax.ShapeDtypeStruct((n, ho, wo, cp), jnp.float32)],
        compiler_params=_compiler_params(),
    )(y2, scale2, shift2)


@jax.jit
def stack_encoder_forward(x_nchw, params):
    """StackEncoder.forward: returns (pooled, trace), both NCHW like PyTorch."""
    n, cin, h, w = x_nchw.shape
    cout = params["w1"].shape[0]
    k1p = _round_up(9 * cin, _LANE)          # compact conv1 K (taps x Cin)
    cout_p = _round_up(cout, _LANE)

    # Conv1 operands: compact XLA-side im2col + packed weights (bf16).
    patch = _im2col_conv1_input(x_nchw, k1p)
    w1 = _prep_w1(params["w1"], k1p, cout_p)
    w2 = _prep_w2(params["w2"], cout_p, cout_p)
    b1 = _pad_vec(params["b1"], cout_p).reshape(1, cout_p)
    b2 = _pad_vec(params["b2"], cout_p).reshape(1, cout_p)
    g1, be1 = _pad_vec(params["g1"], cout_p), _pad_vec(params["be1"], cout_p)
    g2, be2 = _pad_vec(params["g2"], cout_p), _pad_vec(params["be2"], cout_p)

    count = jnp.float32(n * h * w)

    # conv1 + bias + partial batch stats (y1 stored bf16).
    y1, s1, q1 = _conv1_call(patch, w1, b1)
    sc1, sh1 = _bn_scale_shift(s1, q1, g1, be1, count)

    # BN1+ReLU fused into conv2's input path; conv2 + bias + partial stats.
    y2, s2, q2 = _conv2_call(y1, sc1, sh1, w2, b2)
    sc2, sh2 = _bn_scale_shift(s2, q2, g2, be2, count)

    # BN2 + ReLU + fused 2x2 max pool; lane-dense outputs, crop fused below.
    trace_nhwc, pool_nhwc = _finalize_call(y2, sc2, sh2)

    # Channel crop + NCHW boundary transpose fuse into one cheap XLA pass.
    to_nchw = lambda t: jnp.transpose(t[..., :cout], (0, 3, 1, 2))
    return to_nchw(pool_nhwc), to_nchw(trace_nhwc)


# --------------------------- Pure-JAX reference ----------------------------- #
# Mirrors the kernel's numerics: bf16 conv operands with f32 accumulation, BN
# statistics from the f32 conv result, bf16-rounded intermediate activations.

def _ref_conv(x_f32, w_oihw, b):
    y = lax.conv_general_dilated(
        x_f32.astype(jnp.bfloat16), w_oihw.astype(jnp.bfloat16),
        window_strides=(1, 1), padding=((1, 1), (1, 1)),
        dimension_numbers=("NCHW", "OIHW", "NCHW"),
        preferred_element_type=jnp.float32)
    return y + b[None, :, None, None]


def _ref_bn_params(y_f32, g, be):
    mean = jnp.mean(y_f32, axis=(0, 2, 3))
    var = jnp.maximum(jnp.mean(y_f32 * y_f32, axis=(0, 2, 3)) - mean * mean, 0.0)
    scale = g * lax.rsqrt(var + _EPS)
    shift = be - mean * scale
    return scale[None, :, None, None], shift[None, :, None, None]


def ref_forward(x_nchw, p):
    y1 = _ref_conv(x_nchw, p["w1"], p["b1"])
    sc1, sh1 = _ref_bn_params(y1, p["g1"], p["be1"])
    y1q = y1.astype(jnp.bfloat16).astype(jnp.float32)   # kernel stores y1 as bf16
    x2 = jnp.maximum(y1q * sc1 + sh1, 0.0)
    y2 = _ref_conv(x2, p["w2"], p["b2"])
    sc2, sh2 = _ref_bn_params(y2, p["g2"], p["be2"])
    y2q = y2.astype(jnp.bfloat16).astype(jnp.float32)   # kernel stores y2 as bf16
    trace = jnp.maximum(y2q * sc2 + sh2, 0.0)
    n, c, h, w = trace.shape
    pooled = jnp.max(trace.reshape(n, c, h // 2, 2, w // 2, 2), axis=(3, 5))
    return pooled, trace


# --------------------------------- main ------------------------------------- #

def init_params(key, cin, cout):
    ks = jax.random.split(key, 8)
    f1, f2 = (cin * 9) ** 0.5, (cout * 9) ** 0.5
    return {
        "w1": jax.random.normal(ks[0], (cout, cin, 3, 3), jnp.float32) / f1,
        "b1": 0.1 * jax.random.normal(ks[1], (cout,), jnp.float32),
        "g1": 1.0 + 0.1 * jax.random.normal(ks[2], (cout,), jnp.float32),
        "be1": 0.1 * jax.random.normal(ks[3], (cout,), jnp.float32),
        "w2": jax.random.normal(ks[4], (cout, cout, 3, 3), jnp.float32) / f2,
        "b2": 0.1 * jax.random.normal(ks[5], (cout,), jnp.float32),
        "g2": 1.0 + 0.1 * jax.random.normal(ks[6], (cout,), jnp.float32),
        "be2": 0.1 * jax.random.normal(ks[7], (cout,), jnp.float32),
    }


if __name__ == "__main__":
    key = jax.random.PRNGKey(0)
    k_x, k_p = jax.random.split(key)

    N, C_in, C_out, H, W = 2, 4, 8, 16, 16
    x = jax.random.normal(k_x, (N, C_in, H, W), jnp.float32)   # NCHW like PyTorch
    params = init_params(k_p, C_in, C_out)

    pooled, trace = stack_encoder_forward(x, params)
    jax.block_until_ready((pooled, trace))

    assert pooled.shape == (N, C_out, H // 2, W // 2), pooled.shape
    assert trace.shape == (N, C_out, H, W), trace.shape

    ref_pooled, ref_trace = ref_forward(x, params)
    assert jnp.allclose(trace, ref_trace, atol=5e-3, rtol=5e-3), \
        float(jnp.max(jnp.abs(trace - ref_trace)))
    assert jnp.allclose(pooled, ref_pooled, atol=5e-3, rtol=5e-3), \
        float(jnp.max(jnp.abs(pooled - ref_pooled)))

    print("KERNEL_OK")
</pallas_src>

<mosaic_0001>
module attributes {stable_mosaic.version = 11 : i64} {
  func.func @_conv1_kernel(%arg0: i32, %arg1: memref<1x16x16x128xbf16, #tpu.memory_space<vmem>>, %arg2: memref<128x128xbf16, #tpu.memory_space<vmem>>, %arg3: memref<1x128xf32, #tpu.memory_space<vmem>>, %arg4: memref<1x16x16x128xbf16, #tpu.memory_space<vmem>>, %arg5: memref<1x1x128xf32, #tpu.memory_space<vmem>>, %arg6: memref<1x1x128xf32, #tpu.memory_space<vmem>>) attributes {dimension_semantics = [#tpu.dimension_semantics<parallel>], iteration_bounds = array<i64: 2>, scalar_prefetch = 0 : i64, scratch_operands = 0 : i64, tpu.core_type = #tpu.core_type<tc>, window_params = [{transform_indices = @transform_0, window_bounds = array<i64: 1, 16, 16, 128>}, {pipeline_mode = #tpu.pipeline_mode<synchronous>, transform_indices = @transform_1, window_bounds = array<i64: 128, 128>}, {pipeline_mode = #tpu.pipeline_mode<synchronous>, transform_indices = @transform_2, window_bounds = array<i64: 1, 128>}, {transform_indices = @transform_3, window_bounds = array<i64: 1, 16, 16, 128>}, {transform_indices = @transform_4, window_bounds = array<i64: 1, 1, 128>}, {transform_indices = @transform_5, window_bounds = array<i64: 1, 1, 128>}]} {
    %c0 = arith.constant 0 : index
    %c0_0 = arith.constant 0 : index
    %c0_1 = arith.constant 0 : index
    %c0_2 = arith.constant 0 : index
    %0 = vector.load %arg1[%c0, %c0_0, %c0_1, %c0_2] : memref<1x16x16x128xbf16, #tpu.memory_space<vmem>>, vector<1x16x16x128xbf16>
    %1 = vector.shape_cast %0 : vector<1x16x16x128xbf16> to vector<16x16x128xbf16>
    %2 = vector.shape_cast %1 : vector<16x16x128xbf16> to vector<256x128xbf16>
    %c0_3 = arith.constant 0 : index
    %c0_4 = arith.constant 0 : index
    %3 = vector.load %arg2[%c0_3, %c0_4] : memref<128x128xbf16, #tpu.memory_space<vmem>>, vector<128x128xbf16>
    %cst = arith.constant dense<0.000000e+00> : vector<256x128xf32>
    %4 = tpu.matmul %2, %3, %cst {dimension_numbers = #tpu.dot_dimension_numbers<[1], [0], [0], [1], [0, 0, 1, 1], [], []>} : vector<256x128xbf16>, vector<128x128xbf16>, vector<256x128xf32> -> vector<256x128xf32>
    %c0_5 = arith.constant 0 : index
    %c0_6 = arith.constant 0 : index
    %5 = vector.load %arg3[%c0_5, %c0_6] : memref<1x128xf32, #tpu.memory_space<vmem>>, vector<1x128xf32>
    %6 = vector.broadcast %5 : vector<1x128xf32> to vector<256x128xf32>
    %7 = arith.addf %4, %6 : vector<256x128xf32>
    %8 = vector.shape_cast %7 : vector<256x128xf32> to vector<16x16x128xf32>
    %9 = arith.truncf %8 : vector<16x16x128xf32> to vector<16x16x128xbf16>
    %c0_7 = arith.constant 0 : index
    %c0_8 = arith.constant 0 : index
    %c0_9 = arith.constant 0 : index
    %c0_10 = arith.constant 0 : index
    %10 = vector.load %arg4[%c0_7, %c0_8, %c0_9, %c0_10] : memref<1x16x16x128xbf16, #tpu.memory_space<vmem>>, vector<1x16x16x128xbf16>
    %11 = vector.shape_cast %10 : vector<1x16x16x128xbf16> to vector<16x16x128xbf16>
    %12 = vector.shape_cast %9 : vector<16x16x128xbf16> to vector<1x16x16x128xbf16>
    tpu.vector_store %arg4[%c0_7, %c0_8, %c0_9, %c0_10], %12 {strides = array<i32>} : memref<1x16x16x128xbf16, #tpu.memory_space<vmem>>, vector<1x16x16x128xbf16>,
    %cst_11 = arith.constant dense<0.000000e+00> : vector<128xf32>
    %13 = vector.multi_reduction <add>, %7, %cst_11 [0] : vector<256x128xf32> to vector<128xf32>
    %14 = vector.shape_cast %13 : vector<128xf32> to vector<1x128xf32>
    %c0_12 = arith.constant 0 : index
    %c0_13 = arith.constant 0 : index
    %c0_14 = arith.constant 0 : index
    %15 = vector.load %arg5[%c0_12, %c0_13, %c0_14] : memref<1x1x128xf32, #tpu.memory_space<vmem>>, vector<1x1x128xf32>
    %16 = vector.shape_cast %15 : vector<1x1x128xf32> to vector<1x128xf32>
    %17 = vector.shape_cast %14 : vector<1x128xf32> to vector<1x1x128xf32>
    tpu.vector_store %arg5[%c0_12, %c0_13, %c0_14], %17 {strides = array<i32>} : memref<1x1x128xf32, #tpu.memory_space<vmem>>, vector<1x1x128xf32>,
    %18 = arith.mulf %7, %7 : vector<256x128xf32>
    %cst_15 = arith.constant dense<0.000000e+00> : vector<128xf32>
    %19 = vector.multi_reduction <add>, %18, %cst_15 [0] : vector<256x128xf32> to vector<128xf32>
    %20 = vector.shape_cast %19 : vector<128xf32> to vector<1x128xf32>
    %c0_16 = arith.constant 0 : index
    %c0_17 = arith.constant 0 : index
    %c0_18 = arith.constant 0 : index
    %21 = vector.load %arg6[%c0_16, %c0_17, %c0_18] : memref<1x1x128xf32, #tpu.memory_space<vmem>>, vector<1x1x128xf32>
    %22 = vector.shape_cast %21 : vector<1x1x128xf32> to vector<1x128xf32>
    %23 = vector.shape_cast %20 : vector<1x128xf32> to vector<1x1x128xf32>
    tpu.vector_store %arg6[%c0_16, %c0_17, %c0_18], %23 {strides = array<i32>} : memref<1x1x128xf32, #tpu.memory_space<vmem>>, vector<1x1x128xf32>,
    return
  }
  func.func @transform_0(%arg0: i32) -> (i32, i32, i32, i32) {
    %c0_i32 = arith.constant 0 : i32
    %c0_i32_0 = arith.constant 0 : i32
    %c0_i32_1 = arith.constant 0 : i32
    %c0_i32_2 = arith.constant 0 : i32
    return %arg0, %c0_i32, %c0_i32_0, %c0_i32_1 : i32, i32, i32, i32
  }
  func.func @transform_1(%arg0: i32) -> (i32, i32) {
    %c0_i32 = arith.constant 0 : i32
    %c0_i32_0 = arith.constant 0 : i32
    %c0_i32_1 = arith.constant 0 : i32
    return %c0_i32, %c0_i32_0 : i32, i32
  }
  func.func @transform_2(%arg0: i32) -> (i32, i32) {
    %c0_i32 = arith.constant 0 : i32
    %c0_i32_0 = arith.constant 0 : i32
    %c0_i32_1 = arith.constant 0 : i32
    return %c0_i32, %c0_i32_0 : i32, i32
  }
  func.func @transform_3(%arg0: i32) -> (i32, i32, i32, i32) {
    %c0_i32 = arith.constant 0 : i32
    %c0_i32_0 = arith.constant 0 : i32
    %c0_i32_1 = arith.constant 0 : i32
    %c0_i32_2 = arith.constant 0 : i32
    return %arg0, %c0_i32, %c0_i32_0, %c0_i32_1 : i32, i32, i32, i32
  }
  func.func @transform_4(%arg0: i32) -> (i32, i32, i32) {
    %c0_i32 = arith.constant 0 : i32
    %c0_i32_0 = arith.constant 0 : i32
    %c0_i32_1 = arith.constant 0 : i32
    return %arg0, %c0_i32, %c0_i32_0 : i32, i32, i32
  }
  func.func @transform_5(%arg0: i32) -> (i32, i32, i32) {
    %c0_i32 = arith.constant 0 : i32
    %c0_i32_0 = arith.constant 0 : i32
    %c0_i32_1 = arith.constant 0 : i32
    return %arg0, %c0_i32, %c0_i32_0 : i32, i32, i32
  }
}

module attributes {stable_mosaic.version = 11 : i64} {
  func.func @_conv2_kernel(%arg0: i32, %arg1: memref<1x16x16x128xbf16, #tpu.memory_space<vmem>>, %arg2: memref<1x128xf32, #tpu.memory_space<vmem>>, %arg3: memref<1x128xf32, #tpu.memory_space<vmem>>, %arg4: memref<9x128x128xbf16, #tpu.memory_space<vmem>>, %arg5: memref<1x128xf32, #tpu.memory_space<vmem>>, %arg6: memref<1x16x16x128xbf16, #tpu.memory_space<vmem>>, %arg7: memref<1x1x128xf32, #tpu.memory_space<vmem>>, %arg8: memref<1x1x128xf32, #tpu.memory_space<vmem>>, %arg9: memref<18x48x128xbf16, #tpu.memory_space<vmem>>) attributes {dimension_semantics = [#tpu.dimension_semantics<parallel>], iteration_bounds = array<i64: 2>, scalar_prefetch = 0 : i64, scratch_operands = 1 : i64, tpu.core_type = #tpu.core_type<tc>, window_params = [{transform_indices = @transform_0, window_bounds = array<i64: 1, 16, 16, 128>}, {pipeline_mode = #tpu.pipeline_mode<synchronous>, transform_indices = @transform_1, window_bounds = array<i64: 1, 128>}, {pipeline_mode = #tpu.pipeline_mode<synchronous>, transform_indices = @transform_2, window_bounds = array<i64: 1, 128>}, {pipeline_mode = #tpu.pipeline_mode<synchronous>, transform_indices = @transform_3, window_bounds = array<i64: 9, 128, 128>}, {pipeline_mode = #tpu.pipeline_mode<synchronous>, transform_indices = @transform_4, window_bounds = array<i64: 1, 128>}, {transform_indices = @transform_5, window_bounds = array<i64: 1, 16, 16, 128>}, {transform_indices = @transform_6, window_bounds = array<i64: 1, 1, 128>}, {transform_indices = @transform_7, window_bounds = array<i64: 1, 1, 128>}]} {
    %c0 = arith.constant 0 : index
    %c0_0 = arith.constant 0 : index
    %c0_1 = arith.constant 0 : index
    %c0_2 = arith.constant 0 : index
    %0 = vector.load %arg1[%c0, %c0_0, %c0_1, %c0_2] : memref<1x16x16x128xbf16, #tpu.memory_space<vmem>>, vector<1x16x16x128xbf16>
    %1 = vector.shape_cast %0 : vector<1x16x16x128xbf16> to vector<16x16x128xbf16>
    %2 = arith.extf %1 : vector<16x16x128xbf16> to vector<16x16x128xf32>
    %c0_3 = arith.constant 0 : index
    %c0_4 = arith.constant 0 : index
    %3 = vector.load %arg2[%c0_3, %c0_4] : memref<1x128xf32, #tpu.memory_space<vmem>>, vector<1x128xf32>
    %4 = vector.shape_cast %3 : vector<1x128xf32> to vector<1x1x128xf32>
    %5 = vector.broadcast %4 : vector<1x1x128xf32> to vector<16x16x128xf32>
    %6 = arith.mulf %2, %5 : vector<16x16x128xf32>
    %c0_5 = arith.constant 0 : index
    %c0_6 = arith.constant 0 : index
    %7 = vector.load %arg3[%c0_5, %c0_6] : memref<1x128xf32, #tpu.memory_space<vmem>>, vector<1x128xf32>
    %8 = vector.shape_cast %7 : vector<1x128xf32> to vector<1x1x128xf32>
    %9 = vector.broadcast %8 : vector<1x1x128xf32> to vector<16x16x128xf32>
    %10 = arith.addf %6, %9 : vector<16x16x128xf32>
    %cst = arith.constant 0.000000e+00 : f32
    %11 = vector.broadcast %cst : f32 to vector<16x16x128xf32>
    %12 = arith.maximumf %10, %11 : vector<16x16x128xf32>
    %13 = arith.truncf %12 : vector<16x16x128xf32> to vector<16x16x128xbf16>
    %c1 = arith.constant 1 : index
    %c16 = arith.constant 16 : index
    %c0_7 = arith.constant 0 : index
    %14 = vector.load %arg9[%c1, %c16, %c0_7] : memref<18x48x128xbf16, #tpu.memory_space<vmem>>, vector<16x16x128xbf16>
    tpu.vector_store %arg9[%c1, %c16, %c0_7], %13 {strides = array<i32>} : memref<18x48x128xbf16, #tpu.memory_space<vmem>>, vector<16x16x128xbf16>,
    %cst_8 = arith.constant 0.000000e+00 : bf16
    %15 = vector.broadcast %cst_8 : bf16 to vector<1x20x128xbf16>
    %c0_9 = arith.constant 0 : index
    %c14 = arith.constant 14 : index
    %c0_10 = arith.constant 0 : index
    %16 = vector.load %arg9[%c0_9, %c14, %c0_10] : memref<18x48x128xbf16, #tpu.memory_space<vmem>>, vector<1x20x128xbf16>
    tpu.vector_store %arg9[%c0_9, %c14, %c0_10], %15 {strides = array<i32>} : memref<18x48x128xbf16, #tpu.memory_space<vmem>>, vector<1x20x128xbf16>,
    %c17 = arith.constant 17 : index
    %c14_11 = arith.constant 14 : index
    %c0_12 = arith.constant 0 : index
    %17 = vector.load %arg9[%c17, %c14_11, %c0_12] : memref<18x48x128xbf16, #tpu.memory_space<vmem>>, vector<1x20x128xbf16>
    tpu.vector_store %arg9[%c17, %c14_11, %c0_12], %15 {strides = array<i32>} : memref<18x48x128xbf16, #tpu.memory_space<vmem>>, vector<1x20x128xbf16>,
    %cst_13 = arith.constant 0.000000e+00 : bf16
    %18 = vector.broadcast %cst_13 : bf16 to vector<16x2x128xbf16>
    %c1_14 = arith.constant 1 : index
    %c14_15 = arith.constant 14 : index
    %c0_16 = arith.constant 0 : index
    %19 = vector.load %arg9[%c1_14, %c14_15, %c0_16] : memref<18x48x128xbf16, #tpu.memory_space<vmem>>, vector<16x2x128xbf16>
    tpu.vector_store %arg9[%c1_14, %c14_15, %c0_16], %18 {strides = array<i32>} : memref<18x48x128xbf16, #tpu.memory_space<vmem>>, vector<16x2x128xbf16>,
    %c1_17 = arith.constant 1 : index
    %c32 = arith.constant 32 : index
    %c0_18 = arith.constant 0 : index
    %20 = vector.load %arg9[%c1_17, %c32, %c0_18] : memref<18x48x128xbf16, #tpu.memory_space<vmem>>, vector<16x2x128xbf16>
    tpu.vector_store %arg9[%c1_17, %c32, %c0_18], %18 {strides = array<i32>} : memref<18x48x128xbf16, #tpu.memory_space<vmem>>, vector<16x2x128xbf16>,
    %c0_19 = arith.constant 0 : index
    %c15 = arith.constant 15 : index
    %c0_20 = arith.constant 0 : index
    %21 = vector.load %arg9[%c0_19, %c15, %c0_20] : memref<18x48x128xbf16, #tpu.memory_space<vmem>>, vector<18x16x128xbf16>
    %22 = vector.extract_strided_slice %21 {offsets = [0, 0, 0], sizes = [16, 16, 128], strides = [1, 1, 1]} : vector<18x16x128xbf16> to vector<16x16x128xbf16>
    %23 = vector.shape_cast %22 : vector<16x16x128xbf16> to vector<256x128xbf16>
    %c0_21 = arith.constant 0 : index
    %c0_22 = arith.constant 0 : index
    %c0_23 = arith.constant 0 : index
    %24 = vector.load %arg4[%c0_21, %c0_22, %c0_23] : memref<9x128x128xbf16, #tpu.memory_space<vmem>>, vector<1x128x128xbf16>
    %25 = vector.shape_cast %24 : vector<1x128x128xbf16> to vector<128x128xbf16>
    %cst_24 = arith.constant dense<0.000000e+00> : vector<256x128xf32>
    %26 = tpu.matmul %23, %25, %cst_24 {dimension_numbers = #tpu.dot_dimension_numbers<[1], [0], [0], [1], [0, 0, 1, 1], [], []>} : vector<256x128xbf16>, vector<128x128xbf16>, vector<256x128xf32> -> vector<256x128xf32>
    %27 = vector.extract_strided_slice %21 {offsets = [1, 0, 0], sizes = [16, 16, 128], strides = [1, 1, 1]} : vector<18x16x128xbf16> to vector<16x16x128xbf16>
    %28 = vector.shape_cast %27 : vector<16x16x128xbf16> to vector<256x128xbf16>
    %c3 = arith.constant 3 : index
    %c0_25 = arith.constant 0 : index
    %c0_26 = arith.constant 0 : index
    %29 = vector.load %arg4[%c3, %c0_25, %c0_26] : memref<9x128x128xbf16, #tpu.memory_space<vmem>>, vector<1x128x128xbf16>
    %30 = vector.shape_cast %29 : vector<1x128x128xbf16> to vector<128x128xbf16>
    %cst_27 = arith.constant dense<0.000000e+00> : vector<256x128xf32>
    %31 = tpu.matmul %28, %30, %cst_27 {dimension_numbers = #tpu.dot_dimension_numbers<[1], [0], [0], [1], [0, 0, 1, 1], [], []>} : vector<256x128xbf16>, vector<128x128xbf16>, vector<256x128xf32> -> vector<256x128xf32>
    %32 = arith.addf %26, %31 : vector<256x128xf32>
    %33 = vector.extract_strided_slice %21 {offsets = [2, 0, 0], sizes = [16, 16, 128], strides = [1, 1, 1]} : vector<18x16x128xbf16> to vector<16x16x128xbf16>
    %34 = vector.shape_cast %33 : vector<16x16x128xbf16> to vector<256x128xbf16>
    %c6 = arith.constant 6 : index
    %c0_28 = arith.constant 0 : index
    %c0_29 = arith.constant 0 : index
    %35 = vector.load %arg4[%c6, %c0_28, %c0_29] : memref<9x128x128xbf16, #tpu.memory_space<vmem>>, vector<1x128x128xbf16>
    %36 = vector.shape_cast %35 : vector<1x128x128xbf16> to vector<128x128xbf16>
    %cst_30 = arith.constant dense<0.000000e+00> : vector<256x128xf32>
    %37 = tpu.matmul %34, %36, %cst_30 {dimension_numbers = #tpu.dot_dimension_numbers<[1], [0], [0], [1], [0, 0, 1, 1], [], []>} : vector<256x128xbf16>, vector<128x128xbf16>, vector<256x128xf32> -> vector<256x128xf32>
    %38 = arith.addf %32, %37 : vector<256x128xf32>
    %c0_31 = arith.constant 0 : index
    %c16_32 = arith.constant 16 : index
    %c0_33 = arith.constant 0 : index
    %39 = vector.load %arg9[%c0_31, %c16_32, %c0_33] : memref<18x48x128xbf16, #tpu.memory_space<vmem>>, vector<18x16x128xbf16>
    %40 = vector.extract_strided_slice %39 {offsets = [0, 0, 0], sizes = [16, 16, 128], strides = [1, 1, 1]} : vector<18x16x128xbf16> to vector<16x16x128xbf16>
    %41 = vector.shape_cast %40 : vector<16x16x128xbf16> to vector<256x128xbf16>
    %c1_34 = arith.constant 1 : index
    %c0_35 = arith.constant 0 : index
    %c0_36 = arith.constant 0 : index
    %42 = vector.load %arg4[%c1_34, %c0_35, %c0_36] : memref<9x128x128xbf16, #tpu.memory_space<vmem>>, vector<1x128x128xbf16>
    %43 = vector.shape_cast %42 : vector<1x128x128xbf16> to vector<128x128xbf16>
    %cst_37 = arith.constant dense<0.000000e+00> : vector<256x128xf32>
    %44 = tpu.matmul %41, %43, %cst_37 {dimension_numbers = #tpu.dot_dimension_numbers<[1], [0], [0], [1], [0, 0, 1, 1], [], []>} : vector<256x128xbf16>, vector<128x128xbf16>, vector<256x128xf32> -> vector<256x128xf32>
    %45 = arith.addf %38, %44 : vector<256x128xf32>
    %46 = vector.extract_strided_slice %39 {offsets = [1, 0, 0], sizes = [16, 16, 128], strides = [1, 1, 1]} : vector<18x16x128xbf16> to vector<16x16x128xbf16>
    %47 = vector.shape_cast %46 : vector<16x16x128xbf16> to vector<256x128xbf16>
    %c4 = arith.constant 4 : index
    %c0_38 = arith.constant 0 : index
    %c0_39 = arith.constant 0 : index
    %48 = vector.load %arg4[%c4, %c0_38, %c0_39] : memref<9x128x128xbf16, #tpu.memory_space<vmem>>, vector<1x128x128xbf16>
    %49 = vector.shape_cast %48 : vector<1x128x128xbf16> to vector<128x128xbf16>
    %cst_40 = arith.constant dense<0.000000e+00> : vector<256x128xf32>
    %50 = tpu.matmul %47, %49, %cst_40 {dimension_numbers = #tpu.dot_dimension_numbers<[1], [0], [0], [1], [0, 0, 1, 1], [], []>} : vector<256x128xbf16>, vector<128x128xbf16>, vector<256x128xf32> -> vector<256x128xf32>
    %51 = arith.addf %45, %50 : vector<256x128xf32>
    %52 = vector.extract_strided_slice %39 {offsets = [2, 0, 0], sizes = [16, 16, 128], strides = [1, 1, 1]} : vector<18x16x128xbf16> to vector<16x16x128xbf16>
    %53 = vector.shape_cast %52 : vector<16x16x128xbf16> to vector<256x128xbf16>
    %c7 = arith.constant 7 : index
    %c0_41 = arith.constant 0 : index
    %c0_42 = arith.constant 0 : index
    %54 = vector.load %arg4[%c7, %c0_41, %c0_42] : memref<9x128x128xbf16, #tpu.memory_space<vmem>>, vector<1x128x128xbf16>
    %55 = vector.shape_cast %54 : vector<1x128x128xbf16> to vector<128x128xbf16>
    %cst_43 = arith.constant dense<0.000000e+00> : vector<256x128xf32>
    %56 = tpu.matmul %53, %55, %cst_43 {dimension_numbers = #tpu.dot_dimension_numbers<[1], [0], [0], [1], [0, 0, 1, 1], [], []>} : vector<256x128xbf16>, vector<128x128xbf16>, vector<256x128xf32> -> vector<256x128xf32>
    %57 = arith.addf %51, %56 : vector<256x128xf32>
    %c0_44 = arith.constant 0 : index
    %c17_45 = arith.constant 17 : index
    %c0_46 = arith.constant 0 : index
    %58 = vector.load %arg9[%c0_44, %c17_45, %c0_46] : memref<18x48x128xbf16, #tpu.memory_space<vmem>>, vector<18x16x128xbf16>
    %59 = vector.extract_strided_slice %58 {offsets = [0, 0, 0], sizes = [16, 16, 128], strides = [1, 1, 1]} : vector<18x16x128xbf16> to vector<16x16x128xbf16>
    %60 = vector.shape_cast %59 : vector<16x16x128xbf16> to vector<256x128xbf16>
    %c2 = arith.constant 2 : index
    %c0_47 = arith.constant 0 : index
    %c0_48 = arith.constant 0 : index
    %61 = vector.load %arg4[%c2, %c0_47, %c0_48] : memref<9x128x128xbf16, #tpu.memory_space<vmem>>, vector<1x128x128xbf16>
    %62 = vector.shape_cast %61 : vector<1x128x128xbf16> to vector<128x128xbf16>
    %cst_49 = arith.constant dense<0.000000e+00> : vector<256x128xf32>
    %63 = tpu.matmul %60, %62, %cst_49 {dimension_numbers = #tpu.dot_dimension_numbers<[1], [0], [0], [1], [0, 0, 1, 1], [], []>} : vector<256x128xbf16>, vector<128x128xbf16>, vector<256x128xf32> -> vector<256x128xf32>
    %64 = arith.addf %57, %63 : vector<256x128xf32>
    %65 = vector.extract_strided_slice %58 {offsets = [1, 0, 0], sizes = [16, 16, 128], strides = [1, 1, 1]} : vector<18x16x128xbf16> to vector<16x16x128xbf16>
    %66 = vector.shape_cast %65 : vector<16x16x128xbf16> to vector<256x128xbf16>
    %c5 = arith.constant 5 : index
    %c0_50 = arith.constant 0 : index
    %c0_51 = arith.constant 0 : index
    %67 = vector.load %arg4[%c5, %c0_50, %c0_51] : memref<9x128x128xbf16, #tpu.memory_space<vmem>>, vector<1x128x128xbf16>
    %68 = vector.shape_cast %67 : vector<1x128x128xbf16> to vector<128x128xbf16>
    %cst_52 = arith.constant dense<0.000000e+00> : vector<256x128xf32>
    %69 = tpu.matmul %66, %68, %cst_52 {dimension_numbers = #tpu.dot_dimension_numbers<[1], [0], [0], [1], [0, 0, 1, 1], [], []>} : vector<256x128xbf16>, vector<128x128xbf16>, vector<256x128xf32> -> vector<256x128xf32>
    %70 = arith.addf %64, %69 : vector<256x128xf32>
    %71 = vector.extract_strided_slice %58 {offsets = [2, 0, 0], sizes = [16, 16, 128], strides = [1, 1, 1]} : vector<18x16x128xbf16> to vector<16x16x128xbf16>
    %72 = vector.shape_cast %71 : vector<16x16x128xbf16> to vector<256x128xbf16>
    %c8 = arith.constant 8 : index
    %c0_53 = arith.constant 0 : index
    %c0_54 = arith.constant 0 : index
    %73 = vector.load %arg4[%c8, %c0_53, %c0_54] : memref<9x128x128xbf16, #tpu.memory_space<vmem>>, vector<1x128x128xbf16>
    %74 = vector.shape_cast %73 : vector<1x128x128xbf16> to vector<128x128xbf16>
    %cst_55 = arith.constant dense<0.000000e+00> : vector<256x128xf32>
    %75 = tpu.matmul %72, %74, %cst_55 {dimension_numbers = #tpu.dot_dimension_numbers<[1], [0], [0], [1], [0, 0, 1, 1], [], []>} : vector<256x128xbf16>, vector<128x128xbf16>, vector<256x128xf32> -> vector<256x128xf32>
    %76 = arith.addf %70, %75 : vector<256x128xf32>
    %c0_56 = arith.constant 0 : index
    %c0_57 = arith.constant 0 : index
    %77 = vector.load %arg5[%c0_56, %c0_57] : memref<1x128xf32, #tpu.memory_space<vmem>>, vector<1x128xf32>
    %78 = vector.broadcast %77 : vector<1x128xf32> to vector<256x128xf32>
    %79 = arith.addf %76, %78 : vector<256x128xf32>
    %80 = vector.shape_cast %79 : vector<256x128xf32> to vector<16x16x128xf32>
    %81 = arith.truncf %80 : vector<16x16x128xf32> to vector<16x16x128xbf16>
    %c0_58 = arith.constant 0 : index
    %c0_59 = arith.constant 0 : index
    %c0_60 = arith.constant 0 : index
    %c0_61 = arith.constant 0 : index
    %82 = vector.load %arg6[%c0_58, %c0_59, %c0_60, %c0_61] : memref<1x16x16x128xbf16, #tpu.memory_space<vmem>>, vector<1x16x16x128xbf16>
    %83 = vector.shape_cast %82 : vector<1x16x16x128xbf16> to vector<16x16x128xbf16>
    %84 = vector.shape_cast %81 : vector<16x16x128xbf16> to vector<1x16x16x128xbf16>
    tpu.vector_store %arg6[%c0_58, %c0_59, %c0_60, %c0_61], %84 {strides = array<i32>} : memref<1x16x16x128xbf16, #tpu.memory_space<vmem>>, vector<1x16x16x128xbf16>,
    %cst_62 = arith.constant dense<0.000000e+00> : vector<128xf32>
    %85 = vector.multi_reduction <add>, %79, %cst_62 [0] : vector<256x128xf32> to vector<128xf32>
    %86 = vector.shape_cast %85 : vector<128xf32> to vector<1x128xf32>
    %c0_63 = arith.constant 0 : index
    %c0_64 = arith.constant 0 : index
    %c0_65 = arith.constant 0 : index
    %87 = vector.load %arg7[%c0_63, %c0_64, %c0_65] : memref<1x1x128xf32, #tpu.memory_space<vmem>>, vector<1x1x128xf32>
    %88 = vector.shape_cast %87 : vector<1x1x128xf32> to vector<1x128xf32>
    %89 = vector.shape_cast %86 : vector<1x128xf32> to vector<1x1x128xf32>
    tpu.vector_store %arg7[%c0_63, %c0_64, %c0_65], %89 {strides = array<i32>} : memref<1x1x128xf32, #tpu.memory_space<vmem>>, vector<1x1x128xf32>,
    %90 = arith.mulf %79, %79 : vector<256x128xf32>
    %cst_66 = arith.constant dense<0.000000e+00> : vector<128xf32>
    %91 = vector.multi_reduction <add>, %90, %cst_66 [0] : vector<256x128xf32> to vector<128xf32>
    %92 = vector.shape_cast %91 : vector<128xf32> to vector<1x128xf32>
    %c0_67 = arith.constant 0 : index
    %c0_68 = arith.constant 0 : index
    %c0_69 = arith.constant 0 : index
    %93 = vector.load %arg8[%c0_67, %c0_68, %c0_69] : memref<1x1x128xf32, #tpu.memory_space<vmem>>, vector<1x1x128xf32>
    %94 = vector.shape_cast %93 : vector<1x1x128xf32> to vector<1x128xf32>
    %95 = vector.shape_cast %92 : vector<1x128xf32> to vector<1x1x128xf32>
    tpu.vector_store %arg8[%c0_67, %c0_68, %c0_69], %95 {strides = array<i32>} : memref<1x1x128xf32, #tpu.memory_space<vmem>>, vector<1x1x128xf32>,
    return
  }
  func.func @transform_0(%arg0: i32) -> (i32, i32, i32, i32) {
    %c0_i32 = arith.constant 0 : i32
    %c0_i32_0 = arith.constant 0 : i32
    %c0_i32_1 = arith.constant 0 : i32
    %c0_i32_2 = arith.constant 0 : i32
    return %arg0, %c0_i32, %c0_i32_0, %c0_i32_1 : i32, i32, i32, i32
  }
  func.func @transform_1(%arg0: i32) -> (i32, i32) {
    %c0_i32 = arith.constant 0 : i32
    %c0_i32_0 = arith.constant 0 : i32
    %c0_i32_1 = arith.constant 0 : i32
    return %c0_i32, %c0_i32_0 : i32, i32
  }
  func.func @transform_2(%arg0: i32) -> (i32, i32) {
    %c0_i32 = arith.constant 0 : i32
    %c0_i32_0 = arith.constant 0 : i32
    %c0_i32_1 = arith.constant 0 : i32
    return %c0_i32, %c0_i32_0 : i32, i32
  }
  func.func @transform_3(%arg0: i32) -> (i32, i32, i32) {
    %c0_i32 = arith.constant 0 : i32
    %c0_i32_0 = arith.constant 0 : i32
    %c0_i32_1 = arith.constant 0 : i32
    %c0_i32_2 = arith.constant 0 : i32
    return %c0_i32, %c0_i32_0, %c0_i32_1 : i32, i32, i32
  }
  func.func @transform_4(%arg0: i32) -> (i32, i32) {
    %c0_i32 = arith.constant 0 : i32
    %c0_i32_0 = arith.constant 0 : i32
    %c0_i32_1 = arith.constant 0 : i32
    return %c0_i32, %c0_i32_0 : i32, i32
  }
  func.func @transform_5(%arg0: i32) -> (i32, i32, i32, i32) {
    %c0_i32 = arith.constant 0 : i32
    %c0_i32_0 = arith.constant 0 : i32
    %c0_i32_1 = arith.constant 0 : i32
    %c0_i32_2 = arith.constant 0 : i32
    return %arg0, %c0_i32, %c0_i32_0, %c0_i32_1 : i32, i32, i32, i32
  }
  func.func @transform_6(%arg0: i32) -> (i32, i32, i32) {
    %c0_i32 = arith.constant 0 : i32
    %c0_i32_0 = arith.constant 0 : i32
    %c0_i32_1 = arith.constant 0 : i32
    return %arg0, %c0_i32, %c0_i32_0 : i32, i32, i32
  }
  func.func @transform_7(%arg0: i32) -> (i32, i32, i32) {
    %c0_i32 = arith.constant 0 : i32
    %c0_i32_0 = arith.constant 0 : i32
    %c0_i32_1 = arith.constant 0 : i32
    return %arg0, %c0_i32, %c0_i32_0 : i32, i32, i32
  }
}

module attributes {stable_mosaic.version = 11 : i64} {
  func.func @_finalize_kernel(%arg0: i32, %arg1: memref<1x16x16x128xbf16, #tpu.memory_space<vmem>>, %arg2: memref<1x128xf32, #tpu.memory_space<vmem>>, %arg3: memref<1x128xf32, #tpu.memory_space<vmem>>, %arg4: memref<1x16x16x128xf32, #tpu.memory_space<vmem>>, %arg5: memref<1x8x8x128xf32, #tpu.memory_space<vmem>>) attributes {dimension_semantics = [#tpu.dimension_semantics<parallel>], iteration_bounds = array<i64: 2>, scalar_prefetch = 0 : i64, scratch_operands = 0 : i64, tpu.core_type = #tpu.core_type<tc>, window_params = [{transform_indices = @transform_0, window_bounds = array<i64: 1, 16, 16, 128>}, {pipeline_mode = #tpu.pipeline_mode<synchronous>, transform_indices = @transform_1, window_bounds = array<i64: 1, 128>}, {pipeline_mode = #tpu.pipeline_mode<synchronous>, transform_indices = @transform_2, window_bounds = array<i64: 1, 128>}, {transform_indices = @transform_3, window_bounds = array<i64: 1, 16, 16, 128>}, {transform_indices = @transform_4, window_bounds = array<i64: 1, 8, 8, 128>}]} {
    %c0 = arith.constant 0 : index
    %c0_0 = arith.constant 0 : index
    %c0_1 = arith.constant 0 : index
    %c0_2 = arith.constant 0 : index
    %0 = vector.load %arg1[%c0, %c0_0, %c0_1, %c0_2] : memref<1x16x16x128xbf16, #tpu.memory_space<vmem>>, vector<1x16x16x128xbf16>
    %1 = vector.shape_cast %0 : vector<1x16x16x128xbf16> to vector<16x16x128xbf16>
    %2 = arith.extf %1 : vector<16x16x128xbf16> to vector<16x16x128xf32>
    %c0_3 = arith.constant 0 : index
    %c0_4 = arith.constant 0 : index
    %3 = vector.load %arg2[%c0_3, %c0_4] : memref<1x128xf32, #tpu.memory_space<vmem>>, vector<1x128xf32>
    %4 = vector.shape_cast %3 : vector<1x128xf32> to vector<1x1x128xf32>
    %5 = vector.broadcast %4 : vector<1x1x128xf32> to vector<16x16x128xf32>
    %6 = arith.mulf %2, %5 : vector<16x16x128xf32>
    %c0_5 = arith.constant 0 : index
    %c0_6 = arith.constant 0 : index
    %7 = vector.load %arg3[%c0_5, %c0_6] : memref<1x128xf32, #tpu.memory_space<vmem>>, vector<1x128xf32>
    %8 = vector.shape_cast %7 : vector<1x128xf32> to vector<1x1x128xf32>
    %9 = vector.broadcast %8 : vector<1x1x128xf32> to vector<16x16x128xf32>
    %10 = arith.addf %6, %9 : vector<16x16x128xf32>
    %cst = arith.constant 0.000000e+00 : f32
    %11 = vector.broadcast %cst : f32 to vector<16x16x128xf32>
    %12 = arith.maximumf %10, %11 : vector<16x16x128xf32>
    %c0_7 = arith.constant 0 : index
    %c0_8 = arith.constant 0 : index
    %c0_9 = arith.constant 0 : index
    %c0_10 = arith.constant 0 : index
    %13 = vector.load %arg4[%c0_7, %c0_8, %c0_9, %c0_10] : memref<1x16x16x128xf32, #tpu.memory_space<vmem>>, vector<1x16x16x128xf32>
    %14 = vector.shape_cast %13 : vector<1x16x16x128xf32> to vector<16x16x128xf32>
    %15 = vector.shape_cast %12 : vector<16x16x128xf32> to vector<1x16x16x128xf32>
    tpu.vector_store %arg4[%c0_7, %c0_8, %c0_9, %c0_10], %15 {strides = array<i32>} : memref<1x16x16x128xf32, #tpu.memory_space<vmem>>, vector<1x16x16x128xf32>,
    %16 = vector.shape_cast %12 : vector<16x16x128xf32> to vector<8x2x16x128xf32>
    %17 = vector.extract_strided_slice %16 {offsets = [0, 0, 0, 0], sizes = [8, 1, 16, 128], strides = [1, 1, 1, 1]} : vector<8x2x16x128xf32> to vector<8x1x16x128xf32>
    %18 = vector.shape_cast %17 : vector<8x1x16x128xf32> to vector<8x16x128xf32>
    %19 = vector.extract_strided_slice %16 {offsets = [0, 1, 0, 0], sizes = [8, 1, 16, 128], strides = [1, 1, 1, 1]} : vector<8x2x16x128xf32> to vector<8x1x16x128xf32>
    %20 = vector.shape_cast %19 : vector<8x1x16x128xf32> to vector<8x16x128xf32>
    %21 = arith.maximumf %18, %20 : vector<8x16x128xf32>
    %22 = vector.shape_cast %21 : vector<8x16x128xf32> to vector<8x8x2x128xf32>
    %23 = vector.extract_strided_slice %22 {offsets = [0, 0, 0, 0], sizes = [8, 8, 1, 128], strides = [1, 1, 1, 1]} : vector<8x8x2x128xf32> to vector<8x8x1x128xf32>
    %24 = vector.shape_cast %23 : vector<8x8x1x128xf32> to vector<8x8x128xf32>
    %25 = vector.extract_strided_slice %22 {offsets = [0, 0, 1, 0], sizes = [8, 8, 1, 128], strides = [1, 1, 1, 1]} : vector<8x8x2x128xf32> to vector<8x8x1x128xf32>
    %26 = vector.shape_cast %25 : vector<8x8x1x128xf32> to vector<8x8x128xf32>
    %27 = arith.maximumf %24, %26 : vector<8x8x128xf32>
    %c0_11 = arith.constant 0 : index
    %c0_12 = arith.constant 0 : index
    %c0_13 = arith.constant 0 : index
    %c0_14 = arith.constant 0 : index
    %28 = vector.load %arg5[%c0_11, %c0_12, %c0_13, %c0_14] : memref<1x8x8x128xf32, #tpu.memory_space<vmem>>, vector<1x8x8x128xf32>
    %29 = vector.shape_cast %28 : vector<1x8x8x128xf32> to vector<8x8x128xf32>
    %30 = vector.shape_cast %27 : vector<8x8x128xf32> to vector<1x8x8x128xf32>
    tpu.vector_store %arg5[%c0_11, %c0_12, %c0_13, %c0_14], %30 {strides = array<i32>} : memref<1x8x8x128xf32, #tpu.memory_space<vmem>>, vector<1x8x8x128xf32>,
    return
  }
  func.func @transform_0(%arg0: i32) -> (i32, i32, i32, i32) {
    %c0_i32 = arith.constant 0 : i32
    %c0_i32_0 = arith.constant 0 : i32
    %c0_i32_1 = arith.constant 0 : i32
    %c0_i32_2 = arith.constant 0 : i32
    return %arg0, %c0_i32, %c0_i32_0, %c0_i32_1 : i32, i32, i32, i32
  }
  func.func @transform_1(%arg0: i32) -> (i32, i32) {
    %c0_i32 = arith.constant 0 : i32
    %c0_i32_0 = arith.constant 0 : i32
    %c0_i32_1 = arith.constant 0 : i32
    return %c0_i32, %c0_i32_0 : i32, i32
  }
  func.func @transform_2(%arg0: i32) -> (i32, i32) {
    %c0_i32 = arith.constant 0 : i32
    %c0_i32_0 = arith.constant 0 : i32
    %c0_i32_1 = arith.constant 0 : i32
    return %c0_i32, %c0_i32_0 : i32, i32
  }
  func.func @transform_3(%arg0: i32) -> (i32, i32, i32, i32) {
    %c0_i32 = arith.constant 0 : i32
    %c0_i32_0 = arith.constant 0 : i32
    %c0_i32_1 = arith.constant 0 : i32
    %c0_i32_2 = arith.constant 0 : i32
    return %arg0, %c0_i32, %c0_i32_0, %c0_i32_1 : i32, i32, i32, i32
  }
  func.func @transform_4(%arg0: i32) -> (i32, i32, i32, i32) {
    %c0_i32 = arith.constant 0 : i32
    %c0_i32_0 = arith.constant 0 : i32
    %c0_i32_1 = arith.constant 0 : i32
    %c0_i32_2 = arith.constant 0 : i32
    return %arg0, %c0_i32, %c0_i32_0, %c0_i32_1 : i32, i32, i32, i32
  }
}

</mosaic_0001>

<llo_original>
// kernel: stack_encoder_forward.3
$region0: #{stack_encoder_forward.3}
  #allocation0 [shape = 'u32[]', space=smem, size = 0x4, offset = 0x4, fixed_abs, tag = 'smem constant byte address 0x4 - core index']
  #allocation1 [shape = 'u32[144,128]{1,0:T(1,128)}', space=vmem, size = 0x12000, scoped, tag = 'internal scratch']
  %s0 = inlined_call_operand.vmem [shape: bf16[2,16,16,128], index: 0, kind: input, shape index: {}]
  %s1 = inlined_call_operand.vmem [shape: bf16[128,128], index: 1, kind: input, shape index: {}]
  %s2 = inlined_call_operand.vmem [shape: f32[1,128], index: 2, kind: input, shape index: {}]
  %s3 = inlined_call_operand.vmem [shape: bf16[2,16,16,128], index: 3, kind: output, shape index: {0}]
  %s4 = inlined_call_operand.vmem [shape: f32[2,1,128], index: 4, kind: output, shape index: {1}]
  %s5 = inlined_call_operand.vmem [shape: f32[2,1,128], index: 5, kind: output, shape index: {2}]
  %6 = xla_tuple %s3, %s4, %s5
  %s7 = sld [smem:[#allocation0]]
  $region61: #{stack_encoder_forward.3} parent=0
    _
  %s9 = ssub.s32 1, %s7
  %s10 = scalar_select 0, %s9, %s7
  loop: start=0, step=1, limit=4
  $region2: #{stack_encoder_forward.3} parent=0 // loop_pre_header
    _
  $region3: #{stack_encoder_forward.3} parent=0 // loop_header
    %s12 = sphi 0, %s16
    %p13 = scmp.ge.s32.totalorder %s12, 4
    %s22 = sphi 0, %s24
    %s25 = sphi 0, %s22
    %s26 = sphi 0, %s25
    %s42 = sphi 0, %s26
    %s46 = sphi 0, %s46
    %s48 = sphi 0, %s46
    %s49 = sphi 0, %s48
    %s63 = sphi 0, %s49
    %s67 = sphi 0, %s67
    %s69 = sphi 0, %s67
    %s70 = sphi 0, %s69
    %s84 = sphi 0, %s70
    %s90 = sphi 0, %s92
    %s93 = sphi 0, %s90
    %s94 = sphi 0, %s93
    %s110 = sphi 0, %s94
    %s116 = sphi 0, %s118
    %s119 = sphi 0, %s116
    %s120 = sphi 0, %s119
    %s136 = sphi 0, %s120
    %s142 = sphi 0, %s144
    %s145 = sphi 0, %s142
    %s146 = sphi 0, %s145
    %s162 = sphi 0, %s146
  $region4: #{stack_encoder_forward.3} parent=0 // loop_header_branch
    %15 = sbr.rel (%p13) target = $region8
  $region5: #{stack_encoder_forward.3} parent=0 // loop_body
    %s17 = ssub.s32 %s12, 1
    %s18 = ssub.s32 %s12, 2
    %s19 = sadd.s32 %s12, 1
    %s20 = ssub.s32 %s12, %s19
    %p21 = scmp.eq.s32.totalorder %s20, 0
    %s23 = sadd.s32 %s22, 1
    %s24 = scalar_select %p21, %s22, %s23
    %p27 = pneg %p21
    %p28 = scmp.eq.s32.totalorder %s12, 1
    %p29 = por %p27, %p28
    %p30 = scmp.ne.s32.totalorder %s22, %s25
    %p31 = scmp.eq.s32.totalorder %s12, 0
    %p32 = por %p30, %p31
    %p33 = scmp.ne.s32.totalorder %s22, %s25
    %p34 = scmp.eq.s32.totalorder %s17, 1
    %p35 = por %p33, %p34
    %p36 = scmp.ne.s32.totalorder %s25, %s26
    %p37 = scmp.eq.s32.totalorder %s17, 0
    %p38 = por %p36, %p37
    %p39 = scmp.ne.s32.totalorder %s25, %s26
    %p40 = scmp.eq.s32.totalorder %s18, 1
    %p41 = por %p39, %p40
    %p43 = scmp.ne.s32.totalorder %s26, %s42
    %p44 = scmp.eq.s32.totalorder %s18, 0
    %p45 = por %p43, %p44
    %s47 = sadd.s32 %s46, 1
    %p50 = scmp.eq.s32.totalorder %s12, 1
    %p51 = scmp.ne.s32.totalorder %s46, %s48
    %p52 = scmp.eq.s32.totalorder %s12, 0
    %p53 = por %p51, %p52
    %p54 = scmp.ne.s32.totalorder %s46, %s48
    %p55 = scmp.eq.s32.totalorder %s17, 1
    %p56 = por %p54, %p55
    %p57 = scmp.ne.s32.totalorder %s48, %s49
    %p58 = scmp.eq.s32.totalorder %s17, 0
    %p59 = por %p57, %p58
    %p60 = scmp.ne.s32.totalorder %s48, %s49
    %p61 = scmp.eq.s32.totalorder %s18, 1
    %p62 = por %p60, %p61
    %p64 = scmp.ne.s32.totalorder %s49, %s63
    %p65 = scmp.eq.s32.totalorder %s18, 0
    %p66 = por %p64, %p65
    %s68 = sadd.s32 %s67, 1
    %p71 = scmp.eq.s32.totalorder %s12, 1
    %p72 = scmp.ne.s32.totalorder %s67, %s69
    %p73 = scmp.eq.s32.totalorder %s12, 0
    %p74 = por %p72, %p73
    %p75 = scmp.ne.s32.totalorder %s67, %s69
    %p76 = scmp.eq.s32.totalorder %s17, 1
    %p77 = por %p75, %p76
    %p78 = scmp.ne.s32.totalorder %s69, %s70
    %p79 = scmp.eq.s32.totalorder %s17, 0
    %p80 = por %p78, %p79
    %p81 = scmp.ne.s32.totalorder %s69, %s70
    %p82 = scmp.eq.s32.totalorder %s18, 1
    %p83 = por %p81, %p82
    %p85 = scmp.ne.s32.totalorder %s70, %s84
    %p86 = scmp.eq.s32.totalorder %s18, 0
    %p87 = por %p85, %p86
    %s88 = ssub.s32 %s12, %s19
    %p89 = scmp.eq.s32.totalorder %s88, 0
    %s91 = sadd.s32 %s90, 1
    %s92 = scalar_select %p89, %s90, %s91
    %p95 = pneg %p89
    %p96 = scmp.eq.s32.totalorder %s12, 1
    %p97 = por %p95, %p96
    %p98 = scmp.ne.s32.totalorder %s90, %s93
    %p99 = scmp.eq.s32.totalorder %s12, 0
    %p100 = por %p98, %p99
    %p101 = scmp.ne.s32.totalorder %s90, %s93
    %p102 = scmp.eq.s32.totalorder %s17, 1
    %p103 = por %p101, %p102
    %p104 = scmp.ne.s32.totalorder %s93, %s94
    %p105 = scmp.eq.s32.totalorder %s17, 0
    %p106 = por %p104, %p105
    %p107 = scmp.ne.s32.totalorder %s93, %s94
    %p108 = scmp.eq.s32.totalorder %s18, 1
    %p109 = por %p107, %p108
    %p111 = scmp.ne.s32.totalorder %s94, %s110
    %p112 = scmp.eq.s32.totalorder %s18, 0
    %p113 = por %p111, %p112
    %s114 = ssub.s32 %s12, %s19
    %p115 = scmp.eq.s32.totalorder %s114, 0
    %s117 = sadd.s32 %s116, 1
    %s118 = scalar_select %p115, %s116, %s117
    %p121 = pneg %p115
    %p122 = scmp.eq.s32.totalorder %s12, 1
    %p123 = por %p121, %p122
    %p124 = scmp.ne.s32.totalorder %s116, %s119
    %p125 = scmp.eq.s32.totalorder %s12, 0
    %p126 = por %p124, %p125
    %p127 = scmp.ne.s32.totalorder %s116, %s119
    %p128 = scmp.eq.s32.totalorder %s17, 1
    %p129 = por %p127, %p128
    %p130 = scmp.ne.s32.totalorder %s119, %s120
    %p131 = scmp.eq.s32.totalorder %s17, 0
    %p132 = por %p130, %p131
    %p133 = scmp.ne.s32.totalorder %s119, %s120
    %p134 = scmp.eq.s32.totalorder %s18, 1
    %p135 = por %p133, %p134
    %p137 = scmp.ne.s32.totalorder %s120, %s136
    %p138 = scmp.eq.s32.totalorder %s18, 0
    %p139 = por %p137, %p138
    %s140 = ssub.s32 %s12, %s19
    %p141 = scmp.eq.s32.totalorder %s140, 0
    %s143 = sadd.s32 %s142, 1
    %s144 = scalar_select %p141, %s142, %s143
    %p147 = pneg %p141
    %p148 = scmp.eq.s32.totalorder %s12, 1
    %p149 = por %p147, %p148
    %p150 = scmp.ne.s32.totalorder %s142, %s145
    %p151 = scmp.eq.s32.totalorder %s12, 0
    %p152 = por %p150, %p151
    %p153 = scmp.ne.s32.totalorder %s142, %s145
    %p154 = scmp.eq.s32.totalorder %s17, 1
    %p155 = por %p153, %p154
    %p156 = scmp.ne.s32.totalorder %s145, %s146
    %p157 = scmp.eq.s32.totalorder %s17, 0
    %p158 = por %p156, %p157
    %p159 = scmp.ne.s32.totalorder %s145, %s146
    %p160 = scmp.eq.s32.totalorder %s18, 1
    %p161 = por %p159, %p160
    %p163 = scmp.ne.s32.totalorder %s146, %s162
    %p164 = scmp.eq.s32.totalorder %s18, 0
    %p165 = por %p163, %p164
    %p166 = scmp.le.s32.totalorder 1, %s12
    %p167 = scmp.lt.s32.totalorder %s12, 3
    %p168 = pnand %p166, %p167
    %p169 = pneg %p168
    // Predicated region
    $region9: #{stack_encoder_forward.3} parent=5 // pred_check
      _
    $region10: #{stack_encoder_forward.3} parent=5 // pred_check_branch
      %171 = sbr.rel (%p168) target = $region12
    $region11: #{stack_encoder_forward.3} parent=5 // pred_region
      %s172 = ssub.s32 %s12, 1
      // Predicated region
      $region13: #{stack_encoder_forward.3} parent=11 // pred_check
        %p173 = pneg %p59
      $region14: #{stack_encoder_forward.3} parent=11 // pred_check_branch
        %175 = sbr.rel (%p173) target = $region16
      $region15: #{stack_encoder_forward.3} parent=11 // pred_region
        _
      $region16: #{stack_encoder_forward.3} parent=11 // pred_fallthru
        _
      // Predicated region
      $region17: #{stack_encoder_forward.3} parent=11 // pred_check
        %p176 = pneg %p80
      $region18: #{stack_encoder_forward.3} parent=11 // pred_check_branch
        %178 = sbr.rel (%p176) target = $region20
      $region19: #{stack_encoder_forward.3} parent=11 // pred_region
        _
      $region20: #{stack_encoder_forward.3} parent=11 // pred_fallthru
        _
    $region12: #{stack_encoder_forward.3} parent=5 // pred_fallthru
      _
    %p179 = scmp.lt.s32.totalorder %s12, 2
    // Predicated region
    $region21: #{stack_encoder_forward.3} parent=5 // pred_check
      %p180 = pneg %p179
    $region22: #{stack_encoder_forward.3} parent=5 // pred_check_branch
      %182 = sbr.rel (%p180) target = $region24
    $region23: #{stack_encoder_forward.3} parent=5 // pred_region
      // Predicated region
      $region25: #{stack_encoder_forward.3} parent=23 // pred_check
        %p183 = pneg %p32
      $region26: #{stack_encoder_forward.3} parent=23 // pred_check_branch
        %185 = sbr.rel (%p183) target = $region28
      $region27: #{stack_encoder_forward.3} parent=23 // pred_region
        %p186 = scmp.lt.s32.totalorder %s12, 1
        %s187 = scalar_select %p186, %s12, 1
        %s188 = smul.addr %s187, 32
        %s189 = smul.addr %s188, 4
        %s190 = scalar_lea.vmem %s0, %s189
      $region28: #{stack_encoder_forward.3} parent=23 // pred_fallthru
        _
    $region24: #{stack_encoder_forward.3} parent=5 // pred_fallthru
      _
    %p191 = scmp.le.s32.totalorder 1, %s12
    %p192 = scmp.lt.s32.totalorder %s12, 3
    %p193 = pnand %p191, %p192
    %p194 = pneg %p193
    // Predicated region
    $region29: #{stack_encoder_forward.3} parent=5 // pred_check
      _
    $region30: #{stack_encoder_forward.3} parent=5 // pred_check_branch
      %196 = sbr.rel (%p193) target = $region32
    $region31: #{stack_encoder_forward.3} parent=5 // pred_region
      %s197 = ssub.s32 %s12, 1
      %p198 = scmp.lt.s32.totalorder %s17, 1
      %s199 = scalar_select %p198, %s17, 1
      %s200 = smul.addr %s199, 32
      %s201 = smul.addr %s200, 4
      %s202 = scalar_lea.vmem %s0, %s201
      %p203 = pneg %p38
      %p204 = pneg %p35
      %p205 = pneg %p59
      %p206 = pneg %p56
      %p207 = pneg %p80
      %p208 = pneg %p77
      %p209 = pneg %p106
      %p210 = pneg %p103
      %p211 = scmp.lt.s32.totalorder %s17, 1
      %s212 = scalar_select %p211, %s17, 1
      %s213 = smul.addr %s212, 32
      %s214 = smul.addr %s213, 4
      %s215 = scalar_lea.vmem %s3, %s214
      %p216 = pneg %p132
      %p217 = pneg %p129
      %p218 = scmp.lt.s32.totalorder %s17, 1
      %s219 = scalar_select %p218, %s17, 1
      %s220 = scalar_lea.vmem %s4, %s219
      %p221 = pneg %p158
      %p222 = pneg %p155
      %p223 = scmp.lt.s32.totalorder %s17, 1
      %s224 = scalar_select %p223, %s17, 1
      %s225 = scalar_lea.vmem %s5, %s224
      %p226 = scmp.lt.s32.totalorder %s17, 1
      %s227 = scalar_select %p226, %s17, 1
      %s228 = smul.addr %s227, 32
      %s229 = smul.addr %s228, 4
      %s230 = scalar_lea.vmem %s0, %s229
      %p231 = scmp.lt.s32.totalorder %s17, 1
      %s232 = scalar_select %p231, %s17, 1
      %s233 = smul.addr %s232, 32
      %s234 = smul.addr %s233, 4
      %s235 = scalar_lea.vmem %s3, %s234
      %p236 = scmp.lt.s32.totalorder %s17, 1
      %s237 = scalar_select %p236, %s17, 1
      %s238 = scalar_lea.vmem %s4, %s237
      %p239 = scmp.lt.s32.totalorder %s17, 1
      %s240 = scalar_select %p239, %s17, 1
      %s241 = scalar_lea.vmem %s5, %s240
      %v243 = vld [vmem:[%s230] sm:$0xf]
      %v244 = vld [vmem:[%s230 + $0x4] sm:$0xf]
      %v245 = vld [vmem:[%s230 + $0x8] sm:$0xf]
      %v246 = vld [vmem:[%s230 + $0xc] sm:$0xf]
      %v247 = vld [vmem:[%s230 + $0x10] sm:$0xf]
      %v248 = vld [vmem:[%s230 + $0x14] sm:$0xf]
      %v249 = vld [vmem:[%s230 + $0x18] sm:$0xf]
      %v250 = vld [vmem:[%s230 + $0x1c] sm:$0xf]
      %v251 = vld [vmem:[%s230 + $0x20] sm:$0xf]
      %v252 = vld [vmem:[%s230 + $0x24] sm:$0xf]
      %v253 = vld [vmem:[%s230 + $0x28] sm:$0xf]
      %v254 = vld [vmem:[%s230 + $0x2c] sm:$0xf]
      %v255 = vld [vmem:[%s230 + $0x30] sm:$0xf]
      %v256 = vld [vmem:[%s230 + $0x34] sm:$0xf]
      %v257 = vld [vmem:[%s230 + $0x38] sm:$0xf]
      %v258 = vld [vmem:[%s230 + $0x3c] sm:$0xf]
      %v259 = vld [vmem:[%s230 + $0x40] sm:$0xf]
      %v260 = vld [vmem:[%s230 + $0x44] sm:$0xf]
      %v261 = vld [vmem:[%s230 + $0x48] sm:$0xf]
      %v262 = vld [vmem:[%s230 + $0x4c] sm:$0xf]
      %v263 = vld [vmem:[%s230 + $0x50] sm:$0xf]
      %v264 = vld [vmem:[%s230 + $0x54] sm:$0xf]
      %v265 = vld [vmem:[%s230 + $0x58] sm:$0xf]
      %v266 = vld [vmem:[%s230 + $0x5c] sm:$0xf]
      %v267 = vld [vmem:[%s230 + $0x60] sm:$0xf]
      %v268 = vld [vmem:[%s230 + $0x64] sm:$0xf]
      %v269 = vld [vmem:[%s230 + $0x68] sm:$0xf]
      %v270 = vld [vmem:[%s230 + $0x6c] sm:$0xf]
      %v271 = vld [vmem:[%s230 + $0x70] sm:$0xf]
      %v272 = vld [vmem:[%s230 + $0x74] sm:$0xf]
      %v273 = vld [vmem:[%s230 + $0x78] sm:$0xf]
      %v274 = vld [vmem:[%s230 + $0x7c] sm:$0xf]
      %v275 = vld [vmem:[%s1] sm:$0xf]
      %v276 = vld [vmem:[%s1 + $0x4] sm:$0xf]
      %v277 = vld [vmem:[%s1 + $0x8] sm:$0xf]
      %v278 = vld [vmem:[%s1 + $0xc] sm:$0xf]
      %v279 = vld [vmem:[%s1 + $0x10] sm:$0xf]
      %v280 = vld [vmem:[%s1 + $0x14] sm:$0xf]
      %v281 = vld [vmem:[%s1 + $0x18] sm:$0xf]
      %v282 = vld [vmem:[%s1 + $0x1c] sm:$0xf]
      %v283 = vld [vmem:[%s1 + $0x20] sm:$0xf]
      %v284 = vld [vmem:[%s1 + $0x24] sm:$0xf]
      %v285 = vld [vmem:[%s1 + $0x28] sm:$0xf]
      %v286 = vld [vmem:[%s1 + $0x2c] sm:$0xf]
      %v287 = vld [vmem:[%s1 + $0x30] sm:$0xf]
      %v288 = vld [vmem:[%s1 + $0x34] sm:$0xf]
      %v289 = vld [vmem:[%s1 + $0x38] sm:$0xf]
      %v290 = vld [vmem:[%s1 + $0x3c] sm:$0xf]
      %v291 = vld [vmem:[%s2] sm:$0x1]
      %v293 = vlaneseq
      %v294 = vshrl.u32 %v293, 7
      %v295 = vsub.s32 0, %v294
      %v296 = vrot.slane %v291, %v295
      %v330 = vunpack.c.l.b16 %v243
      %v331 = vunpack.c.l.b16 %v244
      %v332 = vunpack.c.l.b16 %v245
      %v333 = vunpack.c.l.b16 %v246
      %v334 = vunpack.c.l.b16 %v247
      %v335 = vunpack.c.l.b16 %v248
      %v336 = vunpack.c.l.b16 %v249
      %v337 = vunpack.c.l.b16 %v250
      %v338 = vunpack.c.l.b16 %v251
      %v339 = vunpack.c.l.b16 %v252
      %v340 = vunpack.c.l.b16 %v253
      %v341 = vunpack.c.l.b16 %v254
      %v342 = vunpack.c.l.b16 %v255
      %v343 = vunpack.c.l.b16 %v256
      %v344 = vunpack.c.l.b16 %v257
      %v345 = vunpack.c.l.b16 %v258
      %v346 = vunpack.c.l.b16 %v259
      %v347 = vunpack.c.l.b16 %v260
      %v348 = vunpack.c.l.b16 %v261
      %v349 = vunpack.c.l.b16 %v262
      %v350 = vunpack.c.l.b16 %v263
      %v351 = vunpack.c.l.b16 %v264
      %v352 = vunpack.c.l.b16 %v265
      %v353 = vunpack.c.l.b16 %v266
      %v354 = vunpack.c.l.b16 %v267
      %v355 = vunpack.c.l.b16 %v268
      %v356 = vunpack.c.l.b16 %v269
      %v357 = vunpack.c.l.b16 %v270
      %v358 = vunpack.c.l.b16 %v271
      %v359 = vunpack.c.l.b16 %v272
      %v360 = vunpack.c.l.b16 %v273
      %v361 = vunpack.c.l.b16 %v274
      %v362 = vpack.c.b16 %v331, %v330
      %v363 = vpack.c.b16 %v333, %v332
      %v364 = vpack.c.b16 %v335, %v334
      %v365 = vpack.c.b16 %v337, %v336
      %v366 = vpack.c.b16 %v339, %v338
      %v367 = vpack.c.b16 %v341, %v340
      %v368 = vpack.c.b16 %v343, %v342
      %v369 = vpack.c.b16 %v345, %v344
      %v370 = vpack.c.b16 %v347, %v346
      %v371 = vpack.c.b16 %v349, %v348
      %v372 = vpack.c.b16 %v351, %v350
      %v373 = vpack.c.b16 %v353, %v352
      %v374 = vpack.c.b16 %v355, %v354
      %v375 = vpack.c.b16 %v357, %v356
      %v376 = vpack.c.b16 %v359, %v358
      %v377 = vpack.c.b16 %v361, %v360
      %v410 = vunpack.c.l.b16 %v275
      %v411 = vunpack.c.l.b16 %v276
      %v412 = vunpack.c.l.b16 %v277
      %v413 = vunpack.c.l.b16 %v278
      %v414 = vunpack.c.l.b16 %v279
      %v415 = vunpack.c.l.b16 %v280
      %v416 = vunpack.c.l.b16 %v281
      %v417 = vunpack.c.l.b16 %v282
      %v418 = vunpack.c.l.b16 %v283
      %v419 = vunpack.c.l.b16 %v284
      %v420 = vunpack.c.l.b16 %v285
      %v421 = vunpack.c.l.b16 %v286
      %v422 = vunpack.c.l.b16 %v287
      %v423 = vunpack.c.l.b16 %v288
      %v424 = vunpack.c.l.b16 %v289
      %v425 = vunpack.c.l.b16 %v290
      %v426 = vpack.c.b16 %v411, %v410
      %v427 = vpack.c.b16 %v413, %v412
      %v428 = vpack.c.b16 %v415, %v414
      %v429 = vpack.c.b16 %v417, %v416
      %v430 = vpack.c.b16 %v419, %v418
      %v431 = vpack.c.b16 %v421, %v420
      %v432 = vpack.c.b16 %v423, %v422
      %v433 = vpack.c.b16 %v425, %v424
      %442 = vmatprep.subr.bf16.mxu0 0
      %443 = vmatpush1.bf16.msra.mxu0 %v433
      %444 = vmatprep.subr.bf16.mxu0 0
      %445 = vmatpush1.bf16.msra.mxu0 %v432
      %446 = vmatprep.subr.bf16.mxu0 0
      %447 = vmatpush1.bf16.msra.mxu0 %v431
      %448 = vmatprep.subr.bf16.mxu0 0
      %449 = vmatpush1.bf16.msra.mxu0 %v430
      %450 = vmatprep.subr.bf16.mxu0 0
      %451 = vmatpush1.bf16.msra.mxu0 %v429
      %452 = vmatprep.subr.bf16.mxu0 0
      %453 = vmatpush1.bf16.msra.mxu0 %v428
      %454 = vmatprep.subr.bf16.mxu0 0
      %455 = vmatpush1.bf16.msra.mxu0 %v427
      %456 = vmatprep.subr.bf16.mxu0 0
      %457 = vmatpush1.bf16.msra.mxu0 %v426
      %458 = vmatprep.subr.bf16.mxu0 0
      %459 = vmatpush2.bf16.msra.mxu0 0
      %460 = vmatprep.subr.bf16.mxu0 0
      %461 = vmatpush2.bf16.msra.mxu0 0
      %462 = vmatprep.subr.bf16.mxu0 0
      %463 = vmatpush2.bf16.msra.mxu0 0
      %464 = vmatprep.subr.bf16.mxu0 0
      %465 = vmatpush2.bf16.msra.mxu0 0
      %466 = vmatprep.subr.bf16.mxu0 0
      %467 = vmatpush2.bf16.msra.mxu0 0
      %468 = vmatprep.subr.bf16.mxu0 0
      %469 = vmatpush2.bf16.msra.mxu0 0
      %470 = vmatprep.subr.bf16.mxu0 0
      %471 = vmatpush2.bf16.msra.mxu0 0
      %472 = vmatprep.subr.bf16.mxu0 0
      %473 = vmatpush2.bf16.msra.mxu0 0
      %474 = vmatprep.mubr.bf16.mxu0 0
      %475 = vmatmul.mubr.bf16.gmra.mxu0 %v362
      %v476 = vpop.f32.mrf.mxu0
      %v477 = vadd.f32 %v296, %v476
      %v478 = vpop.f32.mrf.mxu0
      %v479 = vpop.f32.mrf.mxu0
      %v480 = vadd.f32 %v296, %v479
      %v481 = vpop.f32.mrf.mxu0
      %482 = vmatprep.mubr.bf16.mxu0 0
      %483 = vmatmul.mubr.bf16.gmra.mxu0 %v363
      %v484 = vpop.f32.mrf.mxu0
      %v485 = vadd.f32 %v296, %v484
      %v486 = vpop.f32.mrf.mxu0
      %v487 = vpop.f32.mrf.mxu0
      %v488 = vadd.f32 %v296, %v487
      %v489 = vpop.f32.mrf.mxu0
      %490 = vmatprep.mubr.bf16.mxu0 0
      %491 = vmatmul.mubr.bf16.gmra.mxu0 %v364
      %v492 = vpop.f32.mrf.mxu0
      %v493 = vadd.f32 %v296, %v492
      %v494 = vpop.f32.mrf.mxu0
      %v495 = vpop.f32.mrf.mxu0
      %v496 = vadd.f32 %v296, %v495
      %v497 = vpop.f32.mrf.mxu0
      %498 = vmatprep.mubr.bf16.mxu0 0
      %499 = vmatmul.mubr.bf16.gmra.mxu0 %v365
      %v500 = vpop.f32.mrf.mxu0
      %v501 = vadd.f32 %v296, %v500
      %v502 = vpop.f32.mrf.mxu0
      %v503 = vpop.f32.mrf.mxu0
      %v504 = vadd.f32 %v296, %v503
      %v505 = vpop.f32.mrf.mxu0
      %506 = vmatprep.mubr.bf16.mxu0 0
      %507 = vmatmul.mubr.bf16.gmra.mxu0 %v366
      %v508 = vpop.f32.mrf.mxu0
      %v509 = vadd.f32 %v296, %v508
      %v510 = vpop.f32.mrf.mxu0
      %v511 = vpop.f32.mrf.mxu0
      %v512 = vadd.f32 %v296, %v511
      %v513 = vpop.f32.mrf.mxu0
      %514 = vmatprep.mubr.bf16.mxu0 0
      %515 = vmatmul.mubr.bf16.gmra.mxu0 %v367
      %v516 = vpop.f32.mrf.mxu0
      %v517 = vadd.f32 %v296, %v516
      %v518 = vpop.f32.mrf.mxu0
      %v519 = vpop.f32.mrf.mxu0
      %v520 = vadd.f32 %v296, %v519
      %v521 = vpop.f32.mrf.mxu0
      %522 = vmatprep.mubr.bf16.mxu0 0
      %523 = vmatmul.mubr.bf16.gmra.mxu0 %v368
      %v524 = vpop.f32.mrf.mxu0
      %v525 = vadd.f32 %v296, %v524
      %v526 = vpop.f32.mrf.mxu0
      %v527 = vpop.f32.mrf.mxu0
      %v528 = vadd.f32 %v296, %v527
      %v529 = vpop.f32.mrf.mxu0
      %530 = vmatprep.mubr.bf16.mxu0 0
      %531 = vmatmul.mubr.bf16.gmra.mxu0 %v369
      %v532 = vpop.f32.mrf.mxu0
      %v533 = vadd.f32 %v296, %v532
      %v534 = vpop.f32.mrf.mxu0
      %v535 = vpop.f32.mrf.mxu0
      %v536 = vadd.f32 %v296, %v535
      %v537 = vpop.f32.mrf.mxu0
      %538 = vmatprep.mubr.bf16.mxu0 0
      %539 = vmatmul.mubr.bf16.gmra.mxu0 %v370
      %v540 = vpop.f32.mrf.mxu0
      %v541 = vadd.f32 %v296, %v540
      %v542 = vpop.f32.mrf.mxu0
      %v543 = vpop.f32.mrf.mxu0
      %v544 = vadd.f32 %v296, %v543
      %v545 = vpop.f32.mrf.mxu0
      %546 = vmatprep.mubr.bf16.mxu0 0
      %547 = vmatmul.mubr.bf16.gmra.mxu0 %v371
      %v548 = vpop.f32.mrf.mxu0
      %v549 = vadd.f32 %v296, %v548
      %v550 = vpop.f32.mrf.mxu0
      %v551 = vpop.f32.mrf.mxu0
      %v552 = vadd.f32 %v296, %v551
      %v553 = vpop.f32.mrf.mxu0
      %554 = vmatprep.mubr.bf16.mxu0 0
      %555 = vmatmul.mubr.bf16.gmra.mxu0 %v372
      %v556 = vpop.f32.mrf.mxu0
      %v557 = vadd.f32 %v296, %v556
      %v558 = vpop.f32.mrf.mxu0
      %v559 = vpop.f32.mrf.mxu0
      %v560 = vadd.f32 %v296, %v559
      %v561 = vpop.f32.mrf.mxu0
      %562 = vmatprep.mubr.bf16.mxu0 0
      %563 = vmatmul.mubr.bf16.gmra.mxu0 %v373
      %v564 = vpop.f32.mrf.mxu0
      %v565 = vadd.f32 %v296, %v564
      %v566 = vpop.f32.mrf.mxu0
      %v567 = vpop.f32.mrf.mxu0
      %v568 = vadd.f32 %v296, %v567
      %v569 = vpop.f32.mrf.mxu0
      %570 = vmatprep.mubr.bf16.mxu0 0
      %571 = vmatmul.mubr.bf16.gmra.mxu0 %v374
      %v572 = vpop.f32.mrf.mxu0
      %v573 = vadd.f32 %v296, %v572
      %v574 = vpop.f32.mrf.mxu0
      %v575 = vpop.f32.mrf.mxu0
      %v576 = vadd.f32 %v296, %v575
      %v577 = vpop.f32.mrf.mxu0
      %578 = vmatprep.mubr.bf16.mxu0 0
      %579 = vmatmul.mubr.bf16.gmra.mxu0 %v375
      %v580 = vpop.f32.mrf.mxu0
      %v581 = vadd.f32 %v296, %v580
      %v582 = vpop.f32.mrf.mxu0
      %v583 = vpop.f32.mrf.mxu0
      %v584 = vadd.f32 %v296, %v583
      %v585 = vpop.f32.mrf.mxu0
      %586 = vmatprep.mubr.bf16.mxu0 0
      %587 = vmatmul.mubr.bf16.gmra.mxu0 %v376
      %v588 = vpop.f32.mrf.mxu0
      %v589 = vadd.f32 %v296, %v588
      %v590 = vpop.f32.mrf.mxu0
      %v591 = vpop.f32.mrf.mxu0
      %v592 = vadd.f32 %v296, %v591
      %v593 = vpop.f32.mrf.mxu0
      %594 = vmatprep.mubr.bf16.mxu0 0
      %595 = vmatmul.mubr.bf16.gmra.mxu0 %v377
      %v596 = vpop.f32.mrf.mxu0
      %v597 = vadd.f32 %v296, %v596
      %v598 = vpop.f32.mrf.mxu0
      %v599 = vpop.f32.mrf.mxu0
      %v600 = vadd.f32 %v296, %v599
      %v601 = vpop.f32.mrf.mxu0
      %602 = vdwg.mxu0
      %v603 = vpack.c.bf16 %v480, %v477
      %v604 = vpack.c.bf16 %v488, %v485
      %v605 = vpack.c.bf16 %v496, %v493
      %v606 = vpack.c.bf16 %v504, %v501
      %v607 = vpack.c.bf16 %v512, %v509
      %v608 = vpack.c.bf16 %v520, %v517
      %v609 = vpack.c.bf16 %v528, %v525
      %v610 = vpack.c.bf16 %v536, %v533
      %v611 = vpack.c.bf16 %v544, %v541
      %v612 = vpack.c.bf16 %v552, %v549
      %v613 = vpack.c.bf16 %v560, %v557
      %v614 = vpack.c.bf16 %v568, %v565
      %v615 = vpack.c.bf16 %v576, %v573
      %v616 = vpack.c.bf16 %v584, %v581
      %v617 = vpack.c.bf16 %v592, %v589
      %v618 = vpack.c.bf16 %v600, %v597
      %v635 = vunpack.c.l.b16 %v603
      %v636 = vunpack.c.h.b16 %v603
      %v637 = vunpack.c.l.b16 %v604
      %v638 = vunpack.c.h.b16 %v604
      %v639 = vunpack.c.l.b16 %v605
      %v640 = vunpack.c.h.b16 %v605
      %v641 = vunpack.c.l.b16 %v606
      %v642 = vunpack.c.h.b16 %v606
      %v643 = vunpack.c.l.b16 %v607
      %v644 = vunpack.c.h.b16 %v607
      %v645 = vunpack.c.l.b16 %v608
      %v646 = vunpack.c.h.b16 %v608
      %v647 = vunpack.c.l.b16 %v609
      %v648 = vunpack.c.h.b16 %v609
      %v649 = vunpack.c.l.b16 %v610
      %v650 = vunpack.c.h.b16 %v610
      %v651 = vunpack.c.l.b16 %v611
      %v652 = vunpack.c.h.b16 %v611
      %v653 = vunpack.c.l.b16 %v612
      %v654 = vunpack.c.h.b16 %v612
      %v655 = vunpack.c.l.b16 %v613
      %v656 = vunpack.c.h.b16 %v613
      %v657 = vunpack.c.l.b16 %v614
      %v658 = vunpack.c.h.b16 %v614
      %v659 = vunpack.c.l.b16 %v615
      %v660 = vunpack.c.h.b16 %v615
      %v661 = vunpack.c.l.b16 %v616
      %v662 = vunpack.c.h.b16 %v616
      %v663 = vunpack.c.l.b16 %v617
      %v664 = vunpack.c.h.b16 %v617
      %v665 = vunpack.c.l.b16 %v618
      %v666 = vunpack.c.h.b16 %v618
      %v667 = vpack.c.b16 %v635, %v635
      %v668 = vpack.c.b16 %v636, %v636
      %v669 = vpack.c.b16 %v637, %v637
      %v670 = vpack.c.b16 %v638, %v638
      %v671 = vpack.c.b16 %v639, %v639
      %v672 = vpack.c.b16 %v640, %v640
      %v673 = vpack.c.b16 %v641, %v641
      %v674 = vpack.c.b16 %v642, %v642
      %v675 = vpack.c.b16 %v643, %v643
      %v676 = vpack.c.b16 %v644, %v644
      %v677 = vpack.c.b16 %v645, %v645
      %v678 = vpack.c.b16 %v646, %v646
      %v679 = vpack.c.b16 %v647, %v647
      %v680 = vpack.c.b16 %v648, %v648
      %v681 = vpack.c.b16 %v649, %v649
      %v682 = vpack.c.b16 %v650, %v650
      %v683 = vpack.c.b16 %v651, %v651
      %v684 = vpack.c.b16 %v652, %v652
      %v685 = vpack.c.b16 %v653, %v653
      %v686 = vpack.c.b16 %v654, %v654
      %v687 = vpack.c.b16 %v655, %v655
      %v688 = vpack.c.b16 %v656, %v656
      %v689 = vpack.c.b16 %v657, %v657
      %v690 = vpack.c.b16 %v658, %v658
      %v691 = vpack.c.b16 %v659, %v659
      %v692 = vpack.c.b16 %v660, %v660
      %v693 = vpack.c.b16 %v661, %v661
      %v694 = vpack.c.b16 %v662, %v662
      %v695 = vpack.c.b16 %v663, %v663
      %v696 = vpack.c.b16 %v664, %v664
      %v697 = vpack.c.b16 %v665, %v665
      %v698 = vpack.c.b16 %v666, %v666
      %731 = vst [vmem:[%s235] sm:$0xf] %v667
      %732 = vst [vmem:[%s235 + $0x4] sm:$0xf] %v668
      %733 = vst [vmem:[%s235 + $0x8] sm:$0xf] %v669
      %734 = vst [vmem:[%s235 + $0xc] sm:$0xf] %v670
      %735 = vst [vmem:[%s235 + $0x10] sm:$0xf] %v671
      %736 = vst [vmem:[%s235 + $0x14] sm:$0xf] %v672
      %737 = vst [vmem:[%s235 + $0x18] sm:$0xf] %v673
      %738 = vst [vmem:[%s235 + $0x1c] sm:$0xf] %v674
      %739 = vst [vmem:[%s235 + $0x20] sm:$0xf] %v675
      %740 = vst [vmem:[%s235 + $0x24] sm:$0xf] %v676
      %741 = vst [vmem:[%s235 + $0x28] sm:$0xf] %v677
      %742 = vst [vmem:[%s235 + $0x2c] sm:$0xf] %v678
      %743 = vst [vmem:[%s235 + $0x30] sm:$0xf] %v679
      %744 = vst [vmem:[%s235 + $0x34] sm:$0xf] %v680
      %745 = vst [vmem:[%s235 + $0x38] sm:$0xf] %v681
      %746 = vst [vmem:[%s235 + $0x3c] sm:$0xf] %v682
      %747 = vst [vmem:[%s235 + $0x40] sm:$0xf] %v683
      %748 = vst [vmem:[%s235 + $0x44] sm:$0xf] %v684
      %749 = vst [vmem:[%s235 + $0x48] sm:$0xf] %v685
      %750 = vst [vmem:[%s235 + $0x4c] sm:$0xf] %v686
      %751 = vst [vmem:[%s235 + $0x50] sm:$0xf] %v687
      %752 = vst [vmem:[%s235 + $0x54] sm:$0xf] %v688
      %753 = vst [vmem:[%s235 + $0x58] sm:$0xf] %v689
      %754 = vst [vmem:[%s235 + $0x5c] sm:$0xf] %v690
      %755 = vst [vmem:[%s235 + $0x60] sm:$0xf] %v691
      %756 = vst [vmem:[%s235 + $0x64] sm:$0xf] %v692
      %757 = vst [vmem:[%s235 + $0x68] sm:$0xf] %v693
      %758 = vst [vmem:[%s235 + $0x6c] sm:$0xf] %v694
      %759 = vst [vmem:[%s235 + $0x70] sm:$0xf] %v695
      %760 = vst [vmem:[%s235 + $0x74] sm:$0xf] %v696
      %761 = vst [vmem:[%s235 + $0x78] sm:$0xf] %v697
      %762 = vst [vmem:[%s235 + $0x7c] sm:$0xf] %v698
      %v763 = vadd.f32 %v477, %v480
      %v764 = vadd.f32 %v763, %v485
      %v765 = vadd.f32 %v764, %v488
      %v766 = vadd.f32 %v765, %v493
      %v767 = vadd.f32 %v766, %v496
      %v768 = vadd.f32 %v767, %v501
      %v769 = vadd.f32 %v768, %v504
      %v770 = vadd.f32 %v769, %v509
      %v771 = vadd.f32 %v770, %v512
      %v772 = vadd.f32 %v771, %v517
      %v773 = vadd.f32 %v772, %v520
      %v774 = vadd.f32 %v773, %v525
      %v775 = vadd.f32 %v774, %v528
      %v776 = vadd.f32 %v775, %v533
      %v777 = vadd.f32 %v776, %v536
      %v778 = vadd.f32 %v777, %v541
      %v779 = vadd.f32 %v778, %v544
      %v780 = vadd.f32 %v779, %v549
      %v781 = vadd.f32 %v780, %v552
      %v782 = vadd.f32 %v781, %v557
      %v783 = vadd.f32 %v782, %v560
      %v784 = vadd.f32 %v783, %v565
      %v785 = vadd.f32 %v784, %v568
      %v786 = vadd.f32 %v785, %v573
      %v787 = vadd.f32 %v786, %v576
      %v788 = vadd.f32 %v787, %v581
      %v789 = vadd.f32 %v788, %v584
      %v790 = vadd.f32 %v789, %v589
      %v791 = vadd.f32 %v790, %v592
      %v792 = vadd.f32 %v791, %v597
      %v793 = vadd.f32 %v792, %v600
      %v794 = vrot.slane %v793, 4
      %v795 = vadd.f32 %v793, %v794
      %v796 = vrot.slane %v795, 2
      %v797 = vadd.f32 %v795, %v796
      %v798 = vrot.slane %v797, 1
      %v799 = vadd.f32 %v797, %v798
      %800 = vst [vmem:[%s238] sm:$0x1] %v799
      %v801 = vmul.f32 %v477, %v477
      %v802 = vmul.f32 %v480, %v480
      %v803 = vmul.f32 %v485, %v485
      %v804 = vmul.f32 %v488, %v488
      %v805 = vmul.f32 %v493, %v493
      %v806 = vmul.f32 %v496, %v496
      %v807 = vmul.f32 %v501, %v501
      %v808 = vmul.f32 %v504, %v504
      %v809 = vmul.f32 %v509, %v509
      %v810 = vmul.f32 %v512, %v512
      %v811 = vmul.f32 %v517, %v517
      %v812 = vmul.f32 %v520, %v520
      %v813 = vmul.f32 %v525, %v525
      %v814 = vmul.f32 %v528, %v528
      %v815 = vmul.f32 %v533, %v533
      %v816 = vmul.f32 %v536, %v536
      %v817 = vmul.f32 %v541, %v541
      %v818 = vmul.f32 %v544, %v544
      %v819 = vmul.f32 %v549, %v549
      %v820 = vmul.f32 %v552, %v552
      %v821 = vmul.f32 %v557, %v557
      %v822 = vmul.f32 %v560, %v560
      %v823 = vmul.f32 %v565, %v565
      %v824 = vmul.f32 %v568, %v568
      %v825 = vmul.f32 %v573, %v573
      %v826 = vmul.f32 %v576, %v576
      %v827 = vmul.f32 %v581, %v581
      %v828 = vmul.f32 %v584, %v584
      %v829 = vmul.f32 %v589, %v589
      %v830 = vmul.f32 %v592, %v592
      %v831 = vmul.f32 %v597, %v597
      %v832 = vmul.f32 %v600, %v600
      %v833 = vadd.f32 %v801, %v802
      %v834 = vadd.f32 %v833, %v803
      %v835 = vadd.f32 %v834, %v804
      %v836 = vadd.f32 %v835, %v805
      %v837 = vadd.f32 %v836, %v806
      %v838 = vadd.f32 %v837, %v807
      %v839 = vadd.f32 %v838, %v808
      %v840 = vadd.f32 %v839, %v809
      %v841 = vadd.f32 %v840, %v810
      %v842 = vadd.f32 %v841, %v811
      %v843 = vadd.f32 %v842, %v812
      %v844 = vadd.f32 %v843, %v813
      %v845 = vadd.f32 %v844, %v814
      %v846 = vadd.f32 %v845, %v815
      %v847 = vadd.f32 %v846, %v816
      %v848 = vadd.f32 %v847, %v817
      %v849 = vadd.f32 %v848, %v818
      %v850 = vadd.f32 %v849, %v819
      %v851 = vadd.f32 %v850, %v820
      %v852 = vadd.f32 %v851, %v821
      %v853 = vadd.f32 %v852, %v822
      %v854 = vadd.f32 %v853, %v823
      %v855 = vadd.f32 %v854, %v824
      %v856 = vadd.f32 %v855, %v825
      %v857 = vadd.f32 %v856, %v826
      %v858 = vadd.f32 %v857, %v827
      %v859 = vadd.f32 %v858, %v828
      %v860 = vadd.f32 %v859, %v829
      %v861 = vadd.f32 %v860, %v830
      %v862 = vadd.f32 %v861, %v831
      %v863 = vadd.f32 %v862, %v832
      %v864 = vrot.slane %v863, 4
      %v865 = vadd.f32 %v863, %v864
      %v866 = vrot.slane %v865, 2
      %v867 = vadd.f32 %v865, %v866
      %v868 = vrot.slane %v867, 1
      %v869 = vadd.f32 %v867, %v868
      %870 = vst [vmem:[%s241] sm:$0x1] %v869
      %p871 = scmp.lt.s32.totalorder %s17, 1
      %s872 = scalar_select %p871, %s17, 1
      %s873 = smul.addr %s872, 32
      %s874 = smul.addr %s873, 4
      %s875 = scalar_lea.vmem %s3, %s874
      %p876 = scmp.lt.s32.totalorder %s17, 1
      %s877 = scalar_select %p876, %s17, 1
      %s878 = scalar_lea.vmem %s4, %s877
      %p879 = scmp.lt.s32.totalorder %s17, 1
      %s880 = scalar_select %p879, %s17, 1
      %s881 = scalar_lea.vmem %s5, %s880
      // Predicated region
      $region33: #{stack_encoder_forward.3} parent=31 // pred_check
        %p882 = pneg %p103
      $region34: #{stack_encoder_forward.3} parent=31 // pred_check_branch
        %884 = sbr.rel (%p882) target = $region36
      $region35: #{stack_encoder_forward.3} parent=31 // pred_region
        _
      $region36: #{stack_encoder_forward.3} parent=31 // pred_fallthru
        _
      // Predicated region
      $region37: #{stack_encoder_forward.3} parent=31 // pred_check
        %p885 = pneg %p129
      $region38: #{stack_encoder_forward.3} parent=31 // pred_check_branch
        %887 = sbr.rel (%p885) target = $region40
      $region39: #{stack_encoder_forward.3} parent=31 // pred_region
        _
      $region40: #{stack_encoder_forward.3} parent=31 // pred_fallthru
        _
      // Predicated region
      $region41: #{stack_encoder_forward.3} parent=31 // pred_check
        %p888 = pneg %p155
      $region42: #{stack_encoder_forward.3} parent=31 // pred_check_branch
        %890 = sbr.rel (%p888) target = $region44
      $region43: #{stack_encoder_forward.3} parent=31 // pred_region
        _
      $region44: #{stack_encoder_forward.3} parent=31 // pred_fallthru
        _
    $region32: #{stack_encoder_forward.3} parent=5 // pred_fallthru
      _
    %p891 = scmp.le.s32.totalorder 2, %s12
    // Predicated region
    $region45: #{stack_encoder_forward.3} parent=5 // pred_check
      %p892 = pneg %p891
    $region46: #{stack_encoder_forward.3} parent=5 // pred_check_branch
      %894 = sbr.rel (%p892) target = $region48
    $region47: #{stack_encoder_forward.3} parent=5 // pred_region
      %s895 = ssub.s32 %s12, 2
      // Predicated region
      $region49: #{stack_encoder_forward.3} parent=47 // pred_check
        %p896 = pneg %p109
      $region50: #{stack_encoder_forward.3} parent=47 // pred_check_branch
        %898 = sbr.rel (%p896) target = $region52
      $region51: #{stack_encoder_forward.3} parent=47 // pred_region
        %p899 = scmp.lt.s32.totalorder %s18, 1
        %s900 = scalar_select %p899, %s18, 1
        %s901 = smul.addr %s900, 32
        %s902 = smul.addr %s901, 4
        %s903 = scalar_lea.vmem %s3, %s902
      $region52: #{stack_encoder_forward.3} parent=47 // pred_fallthru
        _
      // Predicated region
      $region53: #{stack_encoder_forward.3} parent=47 // pred_check
        %p904 = pneg %p135
      $region54: #{stack_encoder_forward.3} parent=47 // pred_check_branch
        %906 = sbr.rel (%p904) target = $region56
      $region55: #{stack_encoder_forward.3} parent=47 // pred_region
        %p907 = scmp.lt.s32.totalorder %s18, 1
        %s908 = scalar_select %p907, %s18, 1
        %s909 = scalar_lea.vmem %s4, %s908
      $region56: #{stack_encoder_forward.3} parent=47 // pred_fallthru
        _
      // Predicated region
      $region57: #{stack_encoder_forward.3} parent=47 // pred_check
        %p910 = pneg %p161
      $region58: #{stack_encoder_forward.3} parent=47 // pred_check_branch
        %912 = sbr.rel (%p910) target = $region60
      $region59: #{stack_encoder_forward.3} parent=47 // pred_region
        %p913 = scmp.lt.s32.totalorder %s18, 1
        %s914 = scalar_select %p913, %s18, 1
        %s915 = scalar_lea.vmem %s5, %s914
      $region60: #{stack_encoder_forward.3} parent=47 // pred_fallthru
        _
    $region48: #{stack_encoder_forward.3} parent=5 // pred_fallthru
      _
  $region6: #{stack_encoder_forward.3} parent=0 // loop_footer
    %s16 = sadd.s32 1, %s12
  $region7: #{stack_encoder_forward.3} parent=0 // loop_footer_branch
    %11 = sbr.rel target = $region3
  $region8: #{stack_encoder_forward.3} parent=0 // loop_exit
    _

// kernel: stack_encoder_forward.5
$region0: #{stack_encoder_forward.5}
  #allocation0 [shape = 'u32[]', space=smem, size = 0x4, offset = 0x4, fixed_abs, tag = 'smem constant byte address 0x4 - core index']
  #allocation1 [shape = 'u32[144,128]{1,0:T(1,128)}', space=vmem, size = 0x12000, scoped, tag = 'internal scratch']
  %s0 = inlined_call_operand.vmem [shape: bf16[2,16,16,128], index: 0, kind: input, shape index: {}]
  %s1 = inlined_call_operand.vmem [shape: f32[1,128], index: 1, kind: input, shape index: {}]
  %s2 = inlined_call_operand.vmem [shape: f32[1,128], index: 2, kind: input, shape index: {}]
  %s3 = inlined_call_operand.vmem [shape: f32[2,16,16,128], index: 3, kind: output, shape index: {0}]
  %s4 = inlined_call_operand.vmem [shape: f32[2,8,8,128], index: 4, kind: output, shape index: {1}]
  %5 = xla_tuple %s3, %s4
  %s6 = sld [smem:[#allocation0]]
  $region53: #{stack_encoder_forward.5} parent=0
    _
  %s8 = ssub.s32 1, %s6
  %s9 = scalar_select 0, %s8, %s6
  loop: start=0, step=1, limit=4
  $region2: #{stack_encoder_forward.5} parent=0 // loop_pre_header
    _
  $region3: #{stack_encoder_forward.5} parent=0 // loop_header
    %s11 = sphi 0, %s15
    %p12 = scmp.ge.s32.totalorder %s11, 4
    %s21 = sphi 0, %s23
    %s24 = sphi 0, %s21
    %s25 = sphi 0, %s24
    %s41 = sphi 0, %s25
    %s45 = sphi 0, %s45
    %s47 = sphi 0, %s45
    %s48 = sphi 0, %s47
    %s62 = sphi 0, %s48
    %s66 = sphi 0, %s66
    %s68 = sphi 0, %s66
    %s69 = sphi 0, %s68
    %s83 = sphi 0, %s69
    %s89 = sphi 0, %s91
    %s92 = sphi 0, %s89
    %s93 = sphi 0, %s92
    %s109 = sphi 0, %s93
    %s115 = sphi 0, %s117
    %s118 = sphi 0, %s115
    %s119 = sphi 0, %s118
    %s135 = sphi 0, %s119
  $region4: #{stack_encoder_forward.5} parent=0 // loop_header_branch
    %14 = sbr.rel (%p12) target = $region8
  $region5: #{stack_encoder_forward.5} parent=0 // loop_body
    %s16 = ssub.s32 %s11, 1
    %s17 = ssub.s32 %s11, 2
    %s18 = sadd.s32 %s11, 1
    %s19 = ssub.s32 %s11, %s18
    %p20 = scmp.eq.s32.totalorder %s19, 0
    %s22 = sadd.s32 %s21, 1
    %s23 = scalar_select %p20, %s21, %s22
    %p26 = pneg %p20
    %p27 = scmp.eq.s32.totalorder %s11, 1
    %p28 = por %p26, %p27
    %p29 = scmp.ne.s32.totalorder %s21, %s24
    %p30 = scmp.eq.s32.totalorder %s11, 0
    %p31 = por %p29, %p30
    %p32 = scmp.ne.s32.totalorder %s21, %s24
    %p33 = scmp.eq.s32.totalorder %s16, 1
    %p34 = por %p32, %p33
    %p35 = scmp.ne.s32.totalorder %s24, %s25
    %p36 = scmp.eq.s32.totalorder %s16, 0
    %p37 = por %p35, %p36
    %p38 = scmp.ne.s32.totalorder %s24, %s25
    %p39 = scmp.eq.s32.totalorder %s17, 1
    %p40 = por %p38, %p39
    %p42 = scmp.ne.s32.totalorder %s25, %s41
    %p43 = scmp.eq.s32.totalorder %s17, 0
    %p44 = por %p42, %p43
    %s46 = sadd.s32 %s45, 1
    %p49 = scmp.eq.s32.totalorder %s11, 1
    %p50 = scmp.ne.s32.totalorder %s45, %s47
    %p51 = scmp.eq.s32.totalorder %s11, 0
    %p52 = por %p50, %p51
    %p53 = scmp.ne.s32.totalorder %s45, %s47
    %p54 = scmp.eq.s32.totalorder %s16, 1
    %p55 = por %p53, %p54
    %p56 = scmp.ne.s32.totalorder %s47, %s48
    %p57 = scmp.eq.s32.totalorder %s16, 0
    %p58 = por %p56, %p57
    %p59 = scmp.ne.s32.totalorder %s47, %s48
    %p60 = scmp.eq.s32.totalorder %s17, 1
    %p61 = por %p59, %p60
    %p63 = scmp.ne.s32.totalorder %s48, %s62
    %p64 = scmp.eq.s32.totalorder %s17, 0
    %p65 = por %p63, %p64
    %s67 = sadd.s32 %s66, 1
    %p70 = scmp.eq.s32.totalorder %s11, 1
    %p71 = scmp.ne.s32.totalorder %s66, %s68
    %p72 = scmp.eq.s32.totalorder %s11, 0
    %p73 = por %p71, %p72
    %p74 = scmp.ne.s32.totalorder %s66, %s68
    %p75 = scmp.eq.s32.totalorder %s16, 1
    %p76 = por %p74, %p75
    %p77 = scmp.ne.s32.totalorder %s68, %s69
    %p78 = scmp.eq.s32.totalorder %s16, 0
    %p79 = por %p77, %p78
    %p80 = scmp.ne.s32.totalorder %s68, %s69
    %p81 = scmp.eq.s32.totalorder %s17, 1
    %p82 = por %p80, %p81
    %p84 = scmp.ne.s32.totalorder %s69, %s83
    %p85 = scmp.eq.s32.totalorder %s17, 0
    %p86 = por %p84, %p85
    %s87 = ssub.s32 %s11, %s18
    %p88 = scmp.eq.s32.totalorder %s87, 0
    %s90 = sadd.s32 %s89, 1
    %s91 = scalar_select %p88, %s89, %s90
    %p94 = pneg %p88
    %p95 = scmp.eq.s32.totalorder %s11, 1
    %p96 = por %p94, %p95
    %p97 = scmp.ne.s32.totalorder %s89, %s92
    %p98 = scmp.eq.s32.totalorder %s11, 0
    %p99 = por %p97, %p98
    %p100 = scmp.ne.s32.totalorder %s89, %s92
    %p101 = scmp.eq.s32.totalorder %s16, 1
    %p102 = por %p100, %p101
    %p103 = scmp.ne.s32.totalorder %s92, %s93
    %p104 = scmp.eq.s32.totalorder %s16, 0
    %p105 = por %p103, %p104
    %p106 = scmp.ne.s32.totalorder %s92, %s93
    %p107 = scmp.eq.s32.totalorder %s17, 1
    %p108 = por %p106, %p107
    %p110 = scmp.ne.s32.totalorder %s93, %s109
    %p111 = scmp.eq.s32.totalorder %s17, 0
    %p112 = por %p110, %p111
    %s113 = ssub.s32 %s11, %s18
    %p114 = scmp.eq.s32.totalorder %s113, 0
    %s116 = sadd.s32 %s115, 1
    %s117 = scalar_select %p114, %s115, %s116
    %p120 = pneg %p114
    %p121 = scmp.eq.s32.totalorder %s11, 1
    %p122 = por %p120, %p121
    %p123 = scmp.ne.s32.totalorder %s115, %s118
    %p124 = scmp.eq.s32.totalorder %s11, 0
    %p125 = por %p123, %p124
    %p126 = scmp.ne.s32.totalorder %s115, %s118
    %p127 = scmp.eq.s32.totalorder %s16, 1
    %p128 = por %p126, %p127
    %p129 = scmp.ne.s32.totalorder %s118, %s119
    %p130 = scmp.eq.s32.totalorder %s16, 0
    %p131 = por %p129, %p130
    %p132 = scmp.ne.s32.totalorder %s118, %s119
    %p133 = scmp.eq.s32.totalorder %s17, 1
    %p134 = por %p132, %p133
    %p136 = scmp.ne.s32.totalorder %s119, %s135
    %p137 = scmp.eq.s32.totalorder %s17, 0
    %p138 = por %p136, %p137
    %p139 = scmp.le.s32.totalorder 1, %s11
    %p140 = scmp.lt.s32.totalorder %s11, 3
    %p141 = pnand %p139, %p140
    %p142 = pneg %p141
    // Predicated region
    $region9: #{stack_encoder_forward.5} parent=5 // pred_check
      _
    $region10: #{stack_encoder_forward.5} parent=5 // pred_check_branch
      %144 = sbr.rel (%p141) target = $region12
    $region11: #{stack_encoder_forward.5} parent=5 // pred_region
      %s145 = ssub.s32 %s11, 1
      // Predicated region
      $region13: #{stack_encoder_forward.5} parent=11 // pred_check
        %p146 = pneg %p58
      $region14: #{stack_encoder_forward.5} parent=11 // pred_check_branch
        %148 = sbr.rel (%p146) target = $region16
      $region15: #{stack_encoder_forward.5} parent=11 // pred_region
        _
      $region16: #{stack_encoder_forward.5} parent=11 // pred_fallthru
        _
      // Predicated region
      $region17: #{stack_encoder_forward.5} parent=11 // pred_check
        %p149 = pneg %p79
      $region18: #{stack_encoder_forward.5} parent=11 // pred_check_branch
        %151 = sbr.rel (%p149) target = $region20
      $region19: #{stack_encoder_forward.5} parent=11 // pred_region
        _
      $region20: #{stack_encoder_forward.5} parent=11 // pred_fallthru
        _
    $region12: #{stack_encoder_forward.5} parent=5 // pred_fallthru
      _
    %p152 = scmp.lt.s32.totalorder %s11, 2
    // Predicated region
    $region21: #{stack_encoder_forward.5} parent=5 // pred_check
      %p153 = pneg %p152
    $region22: #{stack_encoder_forward.5} parent=5 // pred_check_branch
      %155 = sbr.rel (%p153) target = $region24
    $region23: #{stack_encoder_forward.5} parent=5 // pred_region
      // Predicated region
      $region25: #{stack_encoder_forward.5} parent=23 // pred_check
        %p156 = pneg %p31
      $region26: #{stack_encoder_forward.5} parent=23 // pred_check_branch
        %158 = sbr.rel (%p156) target = $region28
      $region27: #{stack_encoder_forward.5} parent=23 // pred_region
        %p159 = scmp.lt.s32.totalorder %s11, 1
        %s160 = scalar_select %p159, %s11, 1
        %s161 = smul.addr %s160, 32
        %s162 = smul.addr %s161, 4
        %s163 = scalar_lea.vmem %s0, %s162
      $region28: #{stack_encoder_forward.5} parent=23 // pred_fallthru
        _
    $region24: #{stack_encoder_forward.5} parent=5 // pred_fallthru
      _
    %p164 = scmp.le.s32.totalorder 1, %s11
    %p165 = scmp.lt.s32.totalorder %s11, 3
    %p166 = pnand %p164, %p165
    %p167 = pneg %p166
    // Predicated region
    $region29: #{stack_encoder_forward.5} parent=5 // pred_check
      _
    $region30: #{stack_encoder_forward.5} parent=5 // pred_check_branch
      %169 = sbr.rel (%p166) target = $region32
    $region31: #{stack_encoder_forward.5} parent=5 // pred_region
      %s170 = ssub.s32 %s11, 1
      %p171 = scmp.lt.s32.totalorder %s16, 1
      %s172 = scalar_select %p171, %s16, 1
      %s173 = smul.addr %s172, 32
      %s174 = smul.addr %s173, 4
      %s175 = scalar_lea.vmem %s0, %s174
      %p176 = pneg %p37
      %p177 = pneg %p34
      %p178 = pneg %p58
      %p179 = pneg %p55
      %p180 = pneg %p79
      %p181 = pneg %p76
      %p182 = pneg %p105
      %p183 = pneg %p102
      %p184 = scmp.lt.s32.totalorder %s16, 1
      %s185 = scalar_select %p184, %s16, 1
      %s186 = smul.addr %s185, 32
      %s187 = smul.addr %s186, 8
      %s188 = scalar_lea.vmem %s3, %s187
      %p189 = pneg %p131
      %p190 = pneg %p128
      %p191 = scmp.lt.s32.totalorder %s16, 1
      %s192 = scalar_select %p191, %s16, 1
      %s193 = smul.addr %s192, 8
      %s194 = smul.addr %s193, 8
      %s195 = scalar_lea.vmem %s4, %s194
      %p196 = scmp.lt.s32.totalorder %s16, 1
      %s197 = scalar_select %p196, %s16, 1
      %s198 = smul.addr %s197, 32
      %s199 = smul.addr %s198, 4
      %s200 = scalar_lea.vmem %s0, %s199
      %p201 = scmp.lt.s32.totalorder %s16, 1
      %s202 = scalar_select %p201, %s16, 1
      %s203 = smul.addr %s202, 32
      %s204 = smul.addr %s203, 8
      %s205 = scalar_lea.vmem %s3, %s204
      %p206 = scmp.lt.s32.totalorder %s16, 1
      %s207 = scalar_select %p206, %s16, 1
      %s208 = smul.addr %s207, 8
      %s209 = smul.addr %s208, 8
      %s210 = scalar_lea.vmem %s4, %s209
      %v211 = vld [vmem:[%s200] sm:$0xf]
      %v212 = vld [vmem:[%s200 + $0x4] sm:$0xf]
      %v213 = vld [vmem:[%s200 + $0x8] sm:$0xf]
      %v214 = vld [vmem:[%s200 + $0xc] sm:$0xf]
      %v215 = vld [vmem:[%s200 + $0x10] sm:$0xf]
      %v216 = vld [vmem:[%s200 + $0x14] sm:$0xf]
      %v217 = vld [vmem:[%s200 + $0x18] sm:$0xf]
      %v218 = vld [vmem:[%s200 + $0x1c] sm:$0xf]
      %v219 = vld [vmem:[%s200 + $0x20] sm:$0xf]
      %v220 = vld [vmem:[%s200 + $0x24] sm:$0xf]
      %v221 = vld [vmem:[%s200 + $0x28] sm:$0xf]
      %v222 = vld [vmem:[%s200 + $0x2c] sm:$0xf]
      %v223 = vld [vmem:[%s200 + $0x30] sm:$0xf]
      %v224 = vld [vmem:[%s200 + $0x34] sm:$0xf]
      %v225 = vld [vmem:[%s200 + $0x38] sm:$0xf]
      %v226 = vld [vmem:[%s200 + $0x3c] sm:$0xf]
      %v227 = vld [vmem:[%s200 + $0x40] sm:$0xf]
      %v228 = vld [vmem:[%s200 + $0x44] sm:$0xf]
      %v229 = vld [vmem:[%s200 + $0x48] sm:$0xf]
      %v230 = vld [vmem:[%s200 + $0x4c] sm:$0xf]
      %v231 = vld [vmem:[%s200 + $0x50] sm:$0xf]
      %v232 = vld [vmem:[%s200 + $0x54] sm:$0xf]
      %v233 = vld [vmem:[%s200 + $0x58] sm:$0xf]
      %v234 = vld [vmem:[%s200 + $0x5c] sm:$0xf]
      %v235 = vld [vmem:[%s200 + $0x60] sm:$0xf]
      %v236 = vld [vmem:[%s200 + $0x64] sm:$0xf]
      %v237 = vld [vmem:[%s200 + $0x68] sm:$0xf]
      %v238 = vld [vmem:[%s200 + $0x6c] sm:$0xf]
      %v239 = vld [vmem:[%s200 + $0x70] sm:$0xf]
      %v240 = vld [vmem:[%s200 + $0x74] sm:$0xf]
      %v241 = vld [vmem:[%s200 + $0x78] sm:$0xf]
      %v242 = vld [vmem:[%s200 + $0x7c] sm:$0xf]
      %v243 = vunpack.c.l.bf16 %v211
      %v244 = vunpack.c.l.bf16 %v212
      %v245 = vunpack.c.l.bf16 %v213
      %v246 = vunpack.c.l.bf16 %v214
      %v247 = vunpack.c.l.bf16 %v215
      %v248 = vunpack.c.l.bf16 %v216
      %v249 = vunpack.c.l.bf16 %v217
      %v250 = vunpack.c.l.bf16 %v218
      %v251 = vunpack.c.l.bf16 %v219
      %v252 = vunpack.c.l.bf16 %v220
      %v253 = vunpack.c.l.bf16 %v221
      %v254 = vunpack.c.l.bf16 %v222
      %v255 = vunpack.c.l.bf16 %v223
      %v256 = vunpack.c.l.bf16 %v224
      %v257 = vunpack.c.l.bf16 %v225
      %v258 = vunpack.c.l.bf16 %v226
      %v259 = vunpack.c.l.bf16 %v227
      %v260 = vunpack.c.l.bf16 %v228
      %v261 = vunpack.c.l.bf16 %v229
      %v262 = vunpack.c.l.bf16 %v230
      %v263 = vunpack.c.l.bf16 %v231
      %v264 = vunpack.c.l.bf16 %v232
      %v265 = vunpack.c.l.bf16 %v233
      %v266 = vunpack.c.l.bf16 %v234
      %v267 = vunpack.c.l.bf16 %v235
      %v268 = vunpack.c.l.bf16 %v236
      %v269 = vunpack.c.l.bf16 %v237
      %v270 = vunpack.c.l.bf16 %v238
      %v271 = vunpack.c.l.bf16 %v239
      %v272 = vunpack.c.l.bf16 %v240
      %v273 = vunpack.c.l.bf16 %v241
      %v274 = vunpack.c.l.bf16 %v242
      %v275 = vld [vmem:[%s1] sm:$0x1]
      %v277 = vlaneseq
      %v278 = vshrl.u32 %v277, 7
      %v279 = vsub.s32 0, %v278
      %v280 = vrot.slane %v275, %v279
      %v282 = vmul.f32 %v243, %v280
      %v283 = vmul.f32 %v244, %v280
      %v284 = vmul.f32 %v245, %v280
      %v285 = vmul.f32 %v246, %v280
      %v286 = vmul.f32 %v247, %v280
      %v287 = vmul.f32 %v248, %v280
      %v288 = vmul.f32 %v249, %v280
      %v289 = vmul.f32 %v250, %v280
      %v290 = vmul.f32 %v251, %v280
      %v291 = vmul.f32 %v252, %v280
      %v292 = vmul.f32 %v253, %v280
      %v293 = vmul.f32 %v254, %v280
      %v294 = vmul.f32 %v255, %v280
      %v295 = vmul.f32 %v256, %v280
      %v296 = vmul.f32 %v257, %v280
      %v297 = vmul.f32 %v258, %v280
      %v298 = vmul.f32 %v259, %v280
      %v299 = vmul.f32 %v260, %v280
      %v300 = vmul.f32 %v261, %v280
      %v301 = vmul.f32 %v262, %v280
      %v302 = vmul.f32 %v263, %v280
      %v303 = vmul.f32 %v264, %v280
      %v304 = vmul.f32 %v265, %v280
      %v305 = vmul.f32 %v266, %v280
      %v306 = vmul.f32 %v267, %v280
      %v307 = vmul.f32 %v268, %v280
      %v308 = vmul.f32 %v269, %v280
      %v309 = vmul.f32 %v270, %v280
      %v310 = vmul.f32 %v271, %v280
      %v311 = vmul.f32 %v272, %v280
      %v312 = vmul.f32 %v273, %v280
      %v313 = vmul.f32 %v274, %v280
      %v314 = vld [vmem:[%s2] sm:$0x1]
      %v316 = vlaneseq
      %v317 = vshrl.u32 %v316, 7
      %v318 = vsub.s32 0, %v317
      %v319 = vrot.slane %v314, %v318
      %v321 = vadd.f32 %v282, %v319
      %v322 = vadd.f32 %v283, %v319
      %v323 = vadd.f32 %v284, %v319
      %v324 = vadd.f32 %v285, %v319
      %v325 = vadd.f32 %v286, %v319
      %v326 = vadd.f32 %v287, %v319
      %v327 = vadd.f32 %v288, %v319
      %v328 = vadd.f32 %v289, %v319
      %v329 = vadd.f32 %v290, %v319
      %v330 = vadd.f32 %v291, %v319
      %v331 = vadd.f32 %v292, %v319
      %v332 = vadd.f32 %v293, %v319
      %v333 = vadd.f32 %v294, %v319
      %v334 = vadd.f32 %v295, %v319
      %v335 = vadd.f32 %v296, %v319
      %v336 = vadd.f32 %v297, %v319
      %v337 = vadd.f32 %v298, %v319
      %v338 = vadd.f32 %v299, %v319
      %v339 = vadd.f32 %v300, %v319
      %v340 = vadd.f32 %v301, %v319
      %v341 = vadd.f32 %v302, %v319
      %v342 = vadd.f32 %v303, %v319
      %v343 = vadd.f32 %v304, %v319
      %v344 = vadd.f32 %v305, %v319
      %v345 = vadd.f32 %v306, %v319
      %v346 = vadd.f32 %v307, %v319
      %v347 = vadd.f32 %v308, %v319
      %v348 = vadd.f32 %v309, %v319
      %v349 = vadd.f32 %v310, %v319
      %v350 = vadd.f32 %v311, %v319
      %v351 = vadd.f32 %v312, %v319
      %v352 = vadd.f32 %v313, %v319
      %v353 = vmax.f32 %v321, 0.0
      %v354 = vmax.f32 %v322, 0.0
      %v355 = vmax.f32 %v323, 0.0
      %v356 = vmax.f32 %v324, 0.0
      %v357 = vmax.f32 %v325, 0.0
      %v358 = vmax.f32 %v326, 0.0
      %v359 = vmax.f32 %v327, 0.0
      %v360 = vmax.f32 %v328, 0.0
      %v361 = vmax.f32 %v329, 0.0
      %v362 = vmax.f32 %v330, 0.0
      %v363 = vmax.f32 %v331, 0.0
      %v364 = vmax.f32 %v332, 0.0
      %v365 = vmax.f32 %v333, 0.0
      %v366 = vmax.f32 %v334, 0.0
      %v367 = vmax.f32 %v335, 0.0
      %v368 = vmax.f32 %v336, 0.0
      %v369 = vmax.f32 %v337, 0.0
      %v370 = vmax.f32 %v338, 0.0
      %v371 = vmax.f32 %v339, 0.0
      %v372 = vmax.f32 %v340, 0.0
      %v373 = vmax.f32 %v341, 0.0
      %v374 = vmax.f32 %v342, 0.0
      %v375 = vmax.f32 %v343, 0.0
      %v376 = vmax.f32 %v344, 0.0
      %v377 = vmax.f32 %v345, 0.0
      %v378 = vmax.f32 %v346, 0.0
      %v379 = vmax.f32 %v347, 0.0
      %v380 = vmax.f32 %v348, 0.0
      %v381 = vmax.f32 %v349, 0.0
      %v382 = vmax.f32 %v350, 0.0
      %v383 = vmax.f32 %v351, 0.0
      %v384 = vmax.f32 %v352, 0.0
      %385 = vst [vmem:[%s205] sm:$0xff] %v353
      %386 = vst [vmem:[%s205 + $0x8] sm:$0xff] %v354
      %387 = vst [vmem:[%s205 + $0x10] sm:$0xff] %v355
      %388 = vst [vmem:[%s205 + $0x18] sm:$0xff] %v356
      %389 = vst [vmem:[%s205 + $0x20] sm:$0xff] %v357
      %390 = vst [vmem:[%s205 + $0x28] sm:$0xff] %v358
      %391 = vst [vmem:[%s205 + $0x30] sm:$0xff] %v359
      %392 = vst [vmem:[%s205 + $0x38] sm:$0xff] %v360
      %393 = vst [vmem:[%s205 + $0x40] sm:$0xff] %v361
      %394 = vst [vmem:[%s205 + $0x48] sm:$0xff] %v362
      %395 = vst [vmem:[%s205 + $0x50] sm:$0xff] %v363
      %396 = vst [vmem:[%s205 + $0x58] sm:$0xff] %v364
      %397 = vst [vmem:[%s205 + $0x60] sm:$0xff] %v365
      %398 = vst [vmem:[%s205 + $0x68] sm:$0xff] %v366
      %399 = vst [vmem:[%s205 + $0x70] sm:$0xff] %v367
      %400 = vst [vmem:[%s205 + $0x78] sm:$0xff] %v368
      %401 = vst [vmem:[%s205 + $0x80] sm:$0xff] %v369
      %402 = vst [vmem:[%s205 + $0x88] sm:$0xff] %v370
      %403 = vst [vmem:[%s205 + $0x90] sm:$0xff] %v371
      %404 = vst [vmem:[%s205 + $0x98] sm:$0xff] %v372
      %405 = vst [vmem:[%s205 + $0xa0] sm:$0xff] %v373
      %406 = vst [vmem:[%s205 + $0xa8] sm:$0xff] %v374
      %407 = vst [vmem:[%s205 + $0xb0] sm:$0xff] %v375
      %408 = vst [vmem:[%s205 + $0xb8] sm:$0xff] %v376
      %409 = vst [vmem:[%s205 + $0xc0] sm:$0xff] %v377
      %410 = vst [vmem:[%s205 + $0xc8] sm:$0xff] %v378
      %411 = vst [vmem:[%s205 + $0xd0] sm:$0xff] %v379
      %412 = vst [vmem:[%s205 + $0xd8] sm:$0xff] %v380
      %413 = vst [vmem:[%s205 + $0xe0] sm:$0xff] %v381
      %414 = vst [vmem:[%s205 + $0xe8] sm:$0xff] %v382
      %415 = vst [vmem:[%s205 + $0xf0] sm:$0xff] %v383
      %416 = vst [vmem:[%s205 + $0xf8] sm:$0xff] %v384
      %v417 = vmax.f32 %v353, %v355
      %v418 = vmax.f32 %v354, %v356
      %v419 = vmax.f32 %v357, %v359
      %v420 = vmax.f32 %v358, %v360
      %v421 = vmax.f32 %v361, %v363
      %v422 = vmax.f32 %v362, %v364
      %v423 = vmax.f32 %v365, %v367
      %v424 = vmax.f32 %v366, %v368
      %v425 = vmax.f32 %v369, %v371
      %v426 = vmax.f32 %v370, %v372
      %v427 = vmax.f32 %v373, %v375
      %v428 = vmax.f32 %v374, %v376
      %v429 = vmax.f32 %v377, %v379
      %v430 = vmax.f32 %v378, %v380
      %v431 = vmax.f32 %v381, %v383
      %v432 = vmax.f32 %v382, %v384
      %v449 = vcombine.high %v417, %v417
      %v451 = vunpack.c.l.s4 1983009808
      %v452 = vunpack.c.0.s8 %v451
      %v453 = vlaneseq
      %v454 = vshrl.u32 %v453, 7
      %v455 = vsub.s32 %v452, %v454
      %v456 = vrot.slane %v417, %v455
      %v458 = vunpack.c.l.s4 1983009808
      %v459 = vunpack.c.0.s8 %v458
      %v460 = vlaneseq
      %v461 = vshrl.u32 %v460, 7
      %v462 = vsub.s32 %v459, %v461
      %v463 = vrot.slane %v449, %v462
      %v464 = vcombine.high %v456, %v456
      %v465 = vcombine.high %v463, %v463
      %v466 = vcombine.high %v418, %v418
      %v468 = vunpack.c.l.s4 1983009808
      %v469 = vunpack.c.0.s8 %v468
      %v470 = vlaneseq
      %v471 = vshrl.u32 %v470, 7
      %v472 = vsub.s32 %v469, %v471
      %v473 = vrot.slane %v418, %v472
      %v475 = vunpack.c.l.s4 1983009808
      %v476 = vunpack.c.0.s8 %v475
      %v477 = vlaneseq
      %v478 = vshrl.u32 %v477, 7
      %v479 = vsub.s32 %v476, %v478
      %v480 = vrot.slane %v466, %v479
      %v481 = vcombine.high %v473, %v473
      %v482 = vcombine.high %v480, %v480
      %v483 = vcombine.high %v419, %v419
      %v485 = vunpack.c.l.s4 1983009808
      %v486 = vunpack.c.0.s8 %v485
      %v487 = vlaneseq
      %v488 = vshrl.u32 %v487, 7
      %v489 = vsub.s32 %v486, %v488
      %v490 = vrot.slane %v419, %v489
      %v492 = vunpack.c.l.s4 1983009808
      %v493 = vunpack.c.0.s8 %v492
      %v494 = vlaneseq
      %v495 = vshrl.u32 %v494, 7
      %v496 = vsub.s32 %v493, %v495
      %v497 = vrot.slane %v483, %v496
      %v498 = vcombine.high %v490, %v490
      %v499 = vcombine.high %v497, %v497
      %v500 = vcombine.high %v420, %v420
      %v502 = vunpack.c.l.s4 1983009808
      %v503 = vunpack.c.0.s8 %v502
      %v504 = vlaneseq
      %v505 = vshrl.u32 %v504, 7
      %v506 = vsub.s32 %v503, %v505
      %v507 = vrot.slane %v420, %v506
      %v509 = vunpack.c.l.s4 1983009808
      %v510 = vunpack.c.0.s8 %v509
      %v511 = vlaneseq
      %v512 = vshrl.u32 %v511, 7
      %v513 = vsub.s32 %v510, %v512
      %v514 = vrot.slane %v500, %v513
      %v515 = vcombine.high %v507, %v507
      %v516 = vcombine.high %v514, %v514
      %v517 = vcombine.high %v421, %v421
      %v519 = vunpack.c.l.s4 1983009808
      %v520 = vunpack.c.0.s8 %v519
      %v521 = vlaneseq
      %v522 = vshrl.u32 %v521, 7
      %v523 = vsub.s32 %v520, %v522
      %v524 = vrot.slane %v421, %v523
      %v526 = vunpack.c.l.s4 1983009808
      %v527 = vunpack.c.0.s8 %v526
      %v528 = vlaneseq
      %v529 = vshrl.u32 %v528, 7
      %v530 = vsub.s32 %v527, %v529
      %v531 = vrot.slane %v517, %v530
      %v532 = vcombine.high %v524, %v524
      %v533 = vcombine.high %v531, %v531
      %v534 = vcombine.high %v422, %v422
      %v536 = vunpack.c.l.s4 1983009808
      %v537 = vunpack.c.0.s8 %v536
      %v538 = vlaneseq
      %v539 = vshrl.u32 %v538, 7
      %v540 = vsub.s32 %v537, %v539
      %v541 = vrot.slane %v422, %v540
      %v543 = vunpack.c.l.s4 1983009808
      %v544 = vunpack.c.0.s8 %v543
      %v545 = vlaneseq
      %v546 = vshrl.u32 %v545, 7
      %v547 = vsub.s32 %v544, %v546
      %v548 = vrot.slane %v534, %v547
      %v549 = vcombine.high %v541, %v541
      %v550 = vcombine.high %v548, %v548
      %v551 = vcombine.high %v423, %v423
      %v553 = vunpack.c.l.s4 1983009808
      %v554 = vunpack.c.0.s8 %v553
      %v555 = vlaneseq
      %v556 = vshrl.u32 %v555, 7
      %v557 = vsub.s32 %v554, %v556
      %v558 = vrot.slane %v423, %v557
      %v560 = vunpack.c.l.s4 1983009808
      %v561 = vunpack.c.0.s8 %v560
      %v562 = vlaneseq
      %v563 = vshrl.u32 %v562, 7
      %v564 = vsub.s32 %v561, %v563
      %v565 = vrot.slane %v551, %v564
      %v566 = vcombine.high %v558, %v558
      %v567 = vcombine.high %v565, %v565
      %v568 = vcombine.high %v424, %v424
      %v570 = vunpack.c.l.s4 1983009808
      %v571 = vunpack.c.0.s8 %v570
      %v572 = vlaneseq
      %v573 = vshrl.u32 %v572, 7
      %v574 = vsub.s32 %v571, %v573
      %v575 = vrot.slane %v424, %v574
      %v577 = vunpack.c.l.s4 1983009808
      %v578 = vunpack.c.0.s8 %v577
      %v579 = vlaneseq
      %v580 = vshrl.u32 %v579, 7
      %v581 = vsub.s32 %v578, %v580
      %v582 = vrot.slane %v568, %v581
      %v583 = vcombine.high %v575, %v575
      %v584 = vcombine.high %v582, %v582
      %v585 = vcombine.high %v425, %v425
      %v587 = vunpack.c.l.s4 1983009808
      %v588 = vunpack.c.0.s8 %v587
      %v589 = vlaneseq
      %v590 = vshrl.u32 %v589, 7
      %v591 = vsub.s32 %v588, %v590
      %v592 = vrot.slane %v425, %v591
      %v594 = vunpack.c.l.s4 1983009808
      %v595 = vunpack.c.0.s8 %v594
      %v596 = vlaneseq
      %v597 = vshrl.u32 %v596, 7
      %v598 = vsub.s32 %v595, %v597
      %v599 = vrot.slane %v585, %v598
      %v600 = vcombine.high %v592, %v592
      %v601 = vcombine.high %v599, %v599
      %v602 = vcombine.high %v426, %v426
      %v604 = vunpack.c.l.s4 1983009808
      %v605 = vunpack.c.0.s8 %v604
      %v606 = vlaneseq
      %v607 = vshrl.u32 %v606, 7
      %v608 = vsub.s32 %v605, %v607
      %v609 = vrot.slane %v426, %v608
      %v611 = vunpack.c.l.s4 1983009808
      %v612 = vunpack.c.0.s8 %v611
      %v613 = vlaneseq
      %v614 = vshrl.u32 %v613, 7
      %v615 = vsub.s32 %v612, %v614
      %v616 = vrot.slane %v602, %v615
      %v617 = vcombine.high %v609, %v609
      %v618 = vcombine.high %v616, %v616
      %v619 = vcombine.high %v427, %v427
      %v621 = vunpack.c.l.s4 1983009808
      %v622 = vunpack.c.0.s8 %v621
      %v623 = vlaneseq
      %v624 = vshrl.u32 %v623, 7
      %v625 = vsub.s32 %v622, %v624
      %v626 = vrot.slane %v427, %v625
      %v628 = vunpack.c.l.s4 1983009808
      %v629 = vunpack.c.0.s8 %v628
      %v630 = vlaneseq
      %v631 = vshrl.u32 %v630, 7
      %v632 = vsub.s32 %v629, %v631
      %v633 = vrot.slane %v619, %v632
      %v634 = vcombine.high %v626, %v626
      %v635 = vcombine.high %v633, %v633
      %v636 = vcombine.high %v428, %v428
      %v638 = vunpack.c.l.s4 1983009808
      %v639 = vunpack.c.0.s8 %v638
      %v640 = vlaneseq
      %v641 = vshrl.u32 %v640, 7
      %v642 = vsub.s32 %v639, %v641
      %v643 = vrot.slane %v428, %v642
      %v645 = vunpack.c.l.s4 1983009808
      %v646 = vunpack.c.0.s8 %v645
      %v647 = vlaneseq
      %v648 = vshrl.u32 %v647, 7
      %v649 = vsub.s32 %v646, %v648
      %v650 = vrot.slane %v636, %v649
      %v651 = vcombine.high %v643, %v643
      %v652 = vcombine.high %v650, %v650
      %v653 = vcombine.high %v429, %v429
      %v655 = vunpack.c.l.s4 1983009808
      %v656 = vunpack.c.0.s8 %v655
      %v657 = vlaneseq
      %v658 = vshrl.u32 %v657, 7
      %v659 = vsub.s32 %v656, %v658
      %v660 = vrot.slane %v429, %v659
      %v662 = vunpack.c.l.s4 1983009808
      %v663 = vunpack.c.0.s8 %v662
      %v664 = vlaneseq
      %v665 = vshrl.u32 %v664, 7
      %v666 = vsub.s32 %v663, %v665
      %v667 = vrot.slane %v653, %v666
      %v668 = vcombine.high %v660, %v660
      %v669 = vcombine.high %v667, %v667
      %v670 = vcombine.high %v430, %v430
      %v672 = vunpack.c.l.s4 1983009808
      %v673 = vunpack.c.0.s8 %v672
      %v674 = vlaneseq
      %v675 = vshrl.u32 %v674, 7
      %v676 = vsub.s32 %v673, %v675
      %v677 = vrot.slane %v430, %v676
      %v679 = vunpack.c.l.s4 1983009808
      %v680 = vunpack.c.0.s8 %v679
      %v681 = vlaneseq
      %v682 = vshrl.u32 %v681, 7
      %v683 = vsub.s32 %v680, %v682
      %v684 = vrot.slane %v670, %v683
      %v685 = vcombine.high %v677, %v677
      %v686 = vcombine.high %v684, %v684
      %v687 = vcombine.high %v431, %v431
      %v689 = vunpack.c.l.s4 1983009808
      %v690 = vunpack.c.0.s8 %v689
      %v691 = vlaneseq
      %v692 = vshrl.u32 %v691, 7
      %v693 = vsub.s32 %v690, %v692
      %v694 = vrot.slane %v431, %v693
      %v696 = vunpack.c.l.s4 1983009808
      %v697 = vunpack.c.0.s8 %v696
      %v698 = vlaneseq
      %v699 = vshrl.u32 %v698, 7
      %v700 = vsub.s32 %v697, %v699
      %v701 = vrot.slane %v687, %v700
      %v702 = vcombine.high %v694, %v694
      %v703 = vcombine.high %v701, %v701
      %v704 = vcombine.high %v432, %v432
      %v706 = vunpack.c.l.s4 1983009808
      %v707 = vunpack.c.0.s8 %v706
      %v708 = vlaneseq
      %v709 = vshrl.u32 %v708, 7
      %v710 = vsub.s32 %v707, %v709
      %v711 = vrot.slane %v432, %v710
      %v713 = vunpack.c.l.s4 1983009808
      %v714 = vunpack.c.0.s8 %v713
      %v715 = vlaneseq
      %v716 = vshrl.u32 %v715, 7
      %v717 = vsub.s32 %v714, %v716
      %v718 = vrot.slane %v704, %v717
      %v719 = vcombine.high %v711, %v711
      %v720 = vcombine.high %v718, %v718
      %v785 = vrot.slane %v456, 7
      %v786 = vrot.slane %v785, 2
      %v787 = vrot.slane %v464, 7
      %v788 = vrot.slane %v787, 2
      %v789 = vrot.slane %v463, 7
      %v790 = vrot.slane %v789, 2
      %v791 = vrot.slane %v465, 7
      %v792 = vrot.slane %v791, 2
      %v793 = vrot.slane %v473, 7
      %v794 = vrot.slane %v793, 2
      %v795 = vrot.slane %v481, 7
      %v796 = vrot.slane %v795, 2
      %v797 = vrot.slane %v480, 7
      %v798 = vrot.slane %v797, 2
      %v799 = vrot.slane %v482, 7
      %v800 = vrot.slane %v799, 2
      %v801 = vrot.slane %v490, 7
      %v802 = vrot.slane %v801, 2
      %v803 = vrot.slane %v498, 7
      %v804 = vrot.slane %v803, 2
      %v805 = vrot.slane %v497, 7
      %v806 = vrot.slane %v805, 2
      %v807 = vrot.slane %v499, 7
      %v808 = vrot.slane %v807, 2
      %v809 = vrot.slane %v507, 7
      %v810 = vrot.slane %v809, 2
      %v811 = vrot.slane %v515, 7
      %v812 = vrot.slane %v811, 2
      %v813 = vrot.slane %v514, 7
      %v814 = vrot.slane %v813, 2
      %v815 = vrot.slane %v516, 7
      %v816 = vrot.slane %v815, 2
      %v817 = vrot.slane %v524, 7
      %v818 = vrot.slane %v817, 2
      %v819 = vrot.slane %v532, 7
      %v820 = vrot.slane %v819, 2
      %v821 = vrot.slane %v531, 7
      %v822 = vrot.slane %v821, 2
      %v823 = vrot.slane %v533, 7
      %v824 = vrot.slane %v823, 2
      %v825 = vrot.slane %v541, 7
      %v826 = vrot.slane %v825, 2
      %v827 = vrot.slane %v549, 7
      %v828 = vrot.slane %v827, 2
      %v829 = vrot.slane %v548, 7
      %v830 = vrot.slane %v829, 2
      %v831 = vrot.slane %v550, 7
      %v832 = vrot.slane %v831, 2
      %v833 = vrot.slane %v558, 7
      %v834 = vrot.slane %v833, 2
      %v835 = vrot.slane %v566, 7
      %v836 = vrot.slane %v835, 2
      %v837 = vrot.slane %v565, 7
      %v838 = vrot.slane %v837, 2
      %v839 = vrot.slane %v567, 7
      %v840 = vrot.slane %v839, 2
      %v841 = vrot.slane %v575, 7
      %v842 = vrot.slane %v841, 2
      %v843 = vrot.slane %v583, 7
      %v844 = vrot.slane %v843, 2
      %v845 = vrot.slane %v582, 7
      %v846 = vrot.slane %v845, 2
      %v847 = vrot.slane %v584, 7
      %v848 = vrot.slane %v847, 2
      %v849 = vrot.slane %v592, 7
      %v850 = vrot.slane %v849, 2
      %v851 = vrot.slane %v600, 7
      %v852 = vrot.slane %v851, 2
      %v853 = vrot.slane %v599, 7
      %v854 = vrot.slane %v853, 2
      %v855 = vrot.slane %v601, 7
      %v856 = vrot.slane %v855, 2
      %v857 = vrot.slane %v609, 7
      %v858 = vrot.slane %v857, 2
      %v859 = vrot.slane %v617, 7
      %v860 = vrot.slane %v859, 2
      %v861 = vrot.slane %v616, 7
      %v862 = vrot.slane %v861, 2
      %v863 = vrot.slane %v618, 7
      %v864 = vrot.slane %v863, 2
      %v865 = vrot.slane %v626, 7
      %v866 = vrot.slane %v865, 2
      %v867 = vrot.slane %v634, 7
      %v868 = vrot.slane %v867, 2
      %v869 = vrot.slane %v633, 7
      %v870 = vrot.slane %v869, 2
      %v871 = vrot.slane %v635, 7
      %v872 = vrot.slane %v871, 2
      %v873 = vrot.slane %v643, 7
      %v874 = vrot.slane %v873, 2
      %v875 = vrot.slane %v651, 7
      %v876 = vrot.slane %v875, 2
      %v877 = vrot.slane %v650, 7
      %v878 = vrot.slane %v877, 2
      %v879 = vrot.slane %v652, 7
      %v880 = vrot.slane %v879, 2
      %v881 = vrot.slane %v660, 7
      %v882 = vrot.slane %v881, 2
      %v883 = vrot.slane %v668, 7
      %v884 = vrot.slane %v883, 2
      %v885 = vrot.slane %v667, 7
      %v886 = vrot.slane %v885, 2
      %v887 = vrot.slane %v669, 7
      %v888 = vrot.slane %v887, 2
      %v889 = vrot.slane %v677, 7
      %v890 = vrot.slane %v889, 2
      %v891 = vrot.slane %v685, 7
      %v892 = vrot.slane %v891, 2
      %v893 = vrot.slane %v684, 7
      %v894 = vrot.slane %v893, 2
      %v895 = vrot.slane %v686, 7
      %v896 = vrot.slane %v895, 2
      %v897 = vrot.slane %v694, 7
      %v898 = vrot.slane %v897, 2
      %v899 = vrot.slane %v702, 7
      %v900 = vrot.slane %v899, 2
      %v901 = vrot.slane %v701, 7
      %v902 = vrot.slane %v901, 2
      %v903 = vrot.slane %v703, 7
      %v904 = vrot.slane %v903, 2
      %v905 = vrot.slane %v711, 7
      %v906 = vrot.slane %v905, 2
      %v907 = vrot.slane %v719, 7
      %v908 = vrot.slane %v907, 2
      %v909 = vrot.slane %v718, 7
      %v910 = vrot.slane %v909, 2
      %v911 = vrot.slane %v720, 7
      %v912 = vrot.slane %v911, 2
      %v977 = vmax.f32 %v456, %v786
      %v978 = vmax.f32 %v464, %v788
      %v979 = vmax.f32 %v463, %v790
      %v980 = vmax.f32 %v465, %v792
      %v981 = vmax.f32 %v473, %v794
      %v982 = vmax.f32 %v481, %v796
      %v983 = vmax.f32 %v480, %v798
      %v984 = vmax.f32 %v482, %v800
      %v985 = vmax.f32 %v490, %v802
      %v986 = vmax.f32 %v498, %v804
      %v987 = vmax.f32 %v497, %v806
      %v988 = vmax.f32 %v499, %v808
      %v989 = vmax.f32 %v507, %v810
      %v990 = vmax.f32 %v515, %v812
      %v991 = vmax.f32 %v514, %v814
      %v992 = vmax.f32 %v516, %v816
      %v993 = vmax.f32 %v524, %v818
      %v994 = vmax.f32 %v532, %v820
      %v995 = vmax.f32 %v531, %v822
      %v996 = vmax.f32 %v533, %v824
      %v997 = vmax.f32 %v541, %v826
      %v998 = vmax.f32 %v549, %v828
      %v999 = vmax.f32 %v548, %v830
      %v1000 = vmax.f32 %v550, %v832
      %v1001 = vmax.f32 %v558, %v834
      %v1002 = vmax.f32 %v566, %v836
      %v1003 = vmax.f32 %v565, %v838
      %v1004 = vmax.f32 %v567, %v840
      %v1005 = vmax.f32 %v575, %v842
      %v1006 = vmax.f32 %v583, %v844
      %v1007 = vmax.f32 %v582, %v846
      %v1008 = vmax.f32 %v584, %v848
      %v1009 = vmax.f32 %v592, %v850
      %v1010 = vmax.f32 %v600, %v852
      %v1011 = vmax.f32 %v599, %v854
      %v1012 = vmax.f32 %v601, %v856
      %v1013 = vmax.f32 %v609, %v858
      %v1014 = vmax.f32 %v617, %v860
      %v1015 = vmax.f32 %v616, %v862
      %v1016 = vmax.f32 %v618, %v864
      %v1017 = vmax.f32 %v626, %v866
      %v1018 = vmax.f32 %v634, %v868
      %v1019 = vmax.f32 %v633, %v870
      %v1020 = vmax.f32 %v635, %v872
      %v1021 = vmax.f32 %v643, %v874
      %v1022 = vmax.f32 %v651, %v876
      %v1023 = vmax.f32 %v650, %v878
      %v1024 = vmax.f32 %v652, %v880
      %v1025 = vmax.f32 %v660, %v882
      %v1026 = vmax.f32 %v668, %v884
      %v1027 = vmax.f32 %v667, %v886
      %v1028 = vmax.f32 %v669, %v888
      %v1029 = vmax.f32 %v677, %v890
      %v1030 = vmax.f32 %v685, %v892
      %v1031 = vmax.f32 %v684, %v894
      %v1032 = vmax.f32 %v686, %v896
      %v1033 = vmax.f32 %v694, %v898
      %v1034 = vmax.f32 %v702, %v900
      %v1035 = vmax.f32 %v701, %v902
      %v1036 = vmax.f32 %v703, %v904
      %v1037 = vmax.f32 %v711, %v906
      %v1038 = vmax.f32 %v719, %v908
      %v1039 = vmax.f32 %v718, %v910
      %v1040 = vmax.f32 %v720, %v912
      %v1105 = vlaneseq
      %v1106 = vshrl.u32 %v1105, 7
      %v1107 = vsub.s32 0, %v1106
      %v1108 = vrot.slane %v977, %v1107
      %v1109 = vlaneseq
      %v1110 = vshrl.u32 %v1109, 7
      %v1111 = vsub.s32 0, %v1110
      %v1112 = vrot.slane %v978, %v1111
      %v1113 = vlaneseq
      %v1114 = vshrl.u32 %v1113, 7
      %v1115 = vsub.s32 0, %v1114
      %v1116 = vrot.slane %v979, %v1115
      %v1117 = vlaneseq
      %v1118 = vshrl.u32 %v1117, 7
      %v1119 = vsub.s32 0, %v1118
      %v1120 = vrot.slane %v980, %v1119
      %v1121 = vlaneseq
      %v1122 = vshrl.u32 %v1121, 7
      %v1123 = vsub.s32 0, %v1122
      %v1124 = vrot.slane %v981, %v1123
      %v1125 = vlaneseq
      %v1126 = vshrl.u32 %v1125, 7
      %v1127 = vsub.s32 0, %v1126
      %v1128 = vrot.slane %v982, %v1127
      %v1129 = vlaneseq
      %v1130 = vshrl.u32 %v1129, 7
      %v1131 = vsub.s32 0, %v1130
      %v1132 = vrot.slane %v983, %v1131
      %v1133 = vlaneseq
      %v1134 = vshrl.u32 %v1133, 7
      %v1135 = vsub.s32 0, %v1134
      %v1136 = vrot.slane %v984, %v1135
      %v1137 = vlaneseq
      %v1138 = vshrl.u32 %v1137, 7
      %v1139 = vsub.s32 0, %v1138
      %v1140 = vrot.slane %v985, %v1139
      %v1141 = vlaneseq
      %v1142 = vshrl.u32 %v1141, 7
      %v1143 = vsub.s32 0, %v1142
      %v1144 = vrot.slane %v986, %v1143
      %v1145 = vlaneseq
      %v1146 = vshrl.u32 %v1145, 7
      %v1147 = vsub.s32 0, %v1146
      %v1148 = vrot.slane %v987, %v1147
      %v1149 = vlaneseq
      %v1150 = vshrl.u32 %v1149, 7
      %v1151 = vsub.s32 0, %v1150
      %v1152 = vrot.slane %v988, %v1151
      %v1153 = vlaneseq
      %v1154 = vshrl.u32 %v1153, 7
      %v1155 = vsub.s32 0, %v1154
      %v1156 = vrot.slane %v989, %v1155
      %v1157 = vlaneseq
      %v1158 = vshrl.u32 %v1157, 7
      %v1159 = vsub.s32 0, %v1158
      %v1160 = vrot.slane %v990, %v1159
      %v1161 = vlaneseq
      %v1162 = vshrl.u32 %v1161, 7
      %v1163 = vsub.s32 0, %v1162
      %v1164 = vrot.slane %v991, %v1163
      %v1165 = vlaneseq
      %v1166 = vshrl.u32 %v1165, 7
      %v1167 = vsub.s32 0, %v1166
      %v1168 = vrot.slane %v992, %v1167
      %v1169 = vlaneseq
      %v1170 = vshrl.u32 %v1169, 7
      %v1171 = vsub.s32 0, %v1170
      %v1172 = vrot.slane %v993, %v1171
      %v1173 = vlaneseq
      %v1174 = vshrl.u32 %v1173, 7
      %v1175 = vsub.s32 0, %v1174
      %v1176 = vrot.slane %v994, %v1175
      %v1177 = vlaneseq
      %v1178 = vshrl.u32 %v1177, 7
      %v1179 = vsub.s32 0, %v1178
      %v1180 = vrot.slane %v995, %v1179
      %v1181 = vlaneseq
      %v1182 = vshrl.u32 %v1181, 7
      %v1183 = vsub.s32 0, %v1182
      %v1184 = vrot.slane %v996, %v1183
      %v1185 = vlaneseq
      %v1186 = vshrl.u32 %v1185, 7
      %v1187 = vsub.s32 0, %v1186
      %v1188 = vrot.slane %v997, %v1187
      %v1189 = vlaneseq
      %v1190 = vshrl.u32 %v1189, 7
      %v1191 = vsub.s32 0, %v1190
      %v1192 = vrot.slane %v998, %v1191
      %v1193 = vlaneseq
      %v1194 = vshrl.u32 %v1193, 7
      %v1195 = vsub.s32 0, %v1194
      %v1196 = vrot.slane %v999, %v1195
      %v1197 = vlaneseq
      %v1198 = vshrl.u32 %v1197, 7
      %v1199 = vsub.s32 0, %v1198
      %v1200 = vrot.slane %v1000, %v1199
      %v1201 = vlaneseq
      %v1202 = vshrl.u32 %v1201, 7
      %v1203 = vsub.s32 0, %v1202
      %v1204 = vrot.slane %v1001, %v1203
      %v1205 = vlaneseq
      %v1206 = vshrl.u32 %v1205, 7
      %v1207 = vsub.s32 0, %v1206
      %v1208 = vrot.slane %v1002, %v1207
      %v1209 = vlaneseq
      %v1210 = vshrl.u32 %v1209, 7
      %v1211 = vsub.s32 0, %v1210
      %v1212 = vrot.slane %v1003, %v1211
      %v1213 = vlaneseq
      %v1214 = vshrl.u32 %v1213, 7
      %v1215 = vsub.s32 0, %v1214
      %v1216 = vrot.slane %v1004, %v1215
      %v1217 = vlaneseq
      %v1218 = vshrl.u32 %v1217, 7
      %v1219 = vsub.s32 0, %v1218
      %v1220 = vrot.slane %v1005, %v1219
      %v1221 = vlaneseq
      %v1222 = vshrl.u32 %v1221, 7
      %v1223 = vsub.s32 0, %v1222
      %v1224 = vrot.slane %v1006, %v1223
      %v1225 = vlaneseq
      %v1226 = vshrl.u32 %v1225, 7
      %v1227 = vsub.s32 0, %v1226
      %v1228 = vrot.slane %v1007, %v1227
      %v1229 = vlaneseq
      %v1230 = vshrl.u32 %v1229, 7
      %v1231 = vsub.s32 0, %v1230
      %v1232 = vrot.slane %v1008, %v1231
      %v1233 = vlaneseq
      %v1234 = vshrl.u32 %v1233, 7
      %v1235 = vsub.s32 0, %v1234
      %v1236 = vrot.slane %v1009, %v1235
      %v1237 = vlaneseq
      %v1238 = vshrl.u32 %v1237, 7
      %v1239 = vsub.s32 0, %v1238
      %v1240 = vrot.slane %v1010, %v1239
      %v1241 = vlaneseq
      %v1242 = vshrl.u32 %v1241, 7
      %v1243 = vsub.s32 0, %v1242
      %v1244 = vrot.slane %v1011, %v1243
      %v1245 = vlaneseq
      %v1246 = vshrl.u32 %v1245, 7
      %v1247 = vsub.s32 0, %v1246
      %v1248 = vrot.slane %v1012, %v1247
      %v1249 = vlaneseq
      %v1250 = vshrl.u32 %v1249, 7
      %v1251 = vsub.s32 0, %v1250
      %v1252 = vrot.slane %v1013, %v1251
      %v1253 = vlaneseq
      %v1254 = vshrl.u32 %v1253, 7
      %v1255 = vsub.s32 0, %v1254
      %v1256 = vrot.slane %v1014, %v1255
      %v1257 = vlaneseq
      %v1258 = vshrl.u32 %v1257, 7
      %v1259 = vsub.s32 0, %v1258
      %v1260 = vrot.slane %v1015, %v1259
      %v1261 = vlaneseq
      %v1262 = vshrl.u32 %v1261, 7
      %v1263 = vsub.s32 0, %v1262
      %v1264 = vrot.slane %v1016, %v1263
      %v1265 = vlaneseq
      %v1266 = vshrl.u32 %v1265, 7
      %v1267 = vsub.s32 0, %v1266
      %v1268 = vrot.slane %v1017, %v1267
      %v1269 = vlaneseq
      %v1270 = vshrl.u32 %v1269, 7
      %v1271 = vsub.s32 0, %v1270
      %v1272 = vrot.slane %v1018, %v1271
      %v1273 = vlaneseq
      %v1274 = vshrl.u32 %v1273, 7
      %v1275 = vsub.s32 0, %v1274
      %v1276 = vrot.slane %v1019, %v1275
      %v1277 = vlaneseq
      %v1278 = vshrl.u32 %v1277, 7
      %v1279 = vsub.s32 0, %v1278
      %v1280 = vrot.slane %v1020, %v1279
      %v1281 = vlaneseq
      %v1282 = vshrl.u32 %v1281, 7
      %v1283 = vsub.s32 0, %v1282
      %v1284 = vrot.slane %v1021, %v1283
      %v1285 = vlaneseq
      %v1286 = vshrl.u32 %v1285, 7
      %v1287 = vsub.s32 0, %v1286
      %v1288 = vrot.slane %v1022, %v1287
      %v1289 = vlaneseq
      %v1290 = vshrl.u32 %v1289, 7
      %v1291 = vsub.s32 0, %v1290
      %v1292 = vrot.slane %v1023, %v1291
      %v1293 = vlaneseq
      %v1294 = vshrl.u32 %v1293, 7
      %v1295 = vsub.s32 0, %v1294
      %v1296 = vrot.slane %v1024, %v1295
      %v1297 = vlaneseq
      %v1298 = vshrl.u32 %v1297, 7
      %v1299 = vsub.s32 0, %v1298
      %v1300 = vrot.slane %v1025, %v1299
      %v1301 = vlaneseq
      %v1302 = vshrl.u32 %v1301, 7
      %v1303 = vsub.s32 0, %v1302
      %v1304 = vrot.slane %v1026, %v1303
      %v1305 = vlaneseq
      %v1306 = vshrl.u32 %v1305, 7
      %v1307 = vsub.s32 0, %v1306
      %v1308 = vrot.slane %v1027, %v1307
      %v1309 = vlaneseq
      %v1310 = vshrl.u32 %v1309, 7
      %v1311 = vsub.s32 0, %v1310
      %v1312 = vrot.slane %v1028, %v1311
      %v1313 = vlaneseq
      %v1314 = vshrl.u32 %v1313, 7
      %v1315 = vsub.s32 0, %v1314
      %v1316 = vrot.slane %v1029, %v1315
      %v1317 = vlaneseq
      %v1318 = vshrl.u32 %v1317, 7
      %v1319 = vsub.s32 0, %v1318
      %v1320 = vrot.slane %v1030, %v1319
      %v1321 = vlaneseq
      %v1322 = vshrl.u32 %v1321, 7
      %v1323 = vsub.s32 0, %v1322
      %v1324 = vrot.slane %v1031, %v1323
      %v1325 = vlaneseq
      %v1326 = vshrl.u32 %v1325, 7
      %v1327 = vsub.s32 0, %v1326
      %v1328 = vrot.slane %v1032, %v1327
      %v1329 = vlaneseq
      %v1330 = vshrl.u32 %v1329, 7
      %v1331 = vsub.s32 0, %v1330
      %v1332 = vrot.slane %v1033, %v1331
      %v1333 = vlaneseq
      %v1334 = vshrl.u32 %v1333, 7
      %v1335 = vsub.s32 0, %v1334
      %v1336 = vrot.slane %v1034, %v1335
      %v1337 = vlaneseq
      %v1338 = vshrl.u32 %v1337, 7
      %v1339 = vsub.s32 0, %v1338
      %v1340 = vrot.slane %v1035, %v1339
      %v1341 = vlaneseq
      %v1342 = vshrl.u32 %v1341, 7
      %v1343 = vsub.s32 0, %v1342
      %v1344 = vrot.slane %v1036, %v1343
      %v1345 = vlaneseq
      %v1346 = vshrl.u32 %v1345, 7
      %v1347 = vsub.s32 0, %v1346
      %v1348 = vrot.slane %v1037, %v1347
      %v1349 = vlaneseq
      %v1350 = vshrl.u32 %v1349, 7
      %v1351 = vsub.s32 0, %v1350
      %v1352 = vrot.slane %v1038, %v1351
      %v1353 = vlaneseq
      %v1354 = vshrl.u32 %v1353, 7
      %v1355 = vsub.s32 0, %v1354
      %v1356 = vrot.slane %v1039, %v1355
      %v1357 = vlaneseq
      %v1358 = vshrl.u32 %v1357, 7
      %v1359 = vsub.s32 0, %v1358
      %v1360 = vrot.slane %v1040, %v1359
      %vm1361 = vcmask 1041409
      %v1362 = vsel %vm1361, %v1112, %v1108
      %vm1363 = vcmask 1042434
      %v1364 = vsel %vm1363, %v1116, %v1362
      %vm1365 = vcmask 1043459
      %v1366 = vsel %vm1365, %v1120, %v1364
      %vm1367 = vcmask 1044484
      %v1368 = vsel %vm1367, %v1124, %v1366
      %vm1369 = vcmask 1045509
      %v1370 = vsel %vm1369, %v1128, %v1368
      %vm1371 = vcmask 1046534
      %v1372 = vsel %vm1371, %v1132, %v1370
      %vm1373 = vcmask 1047559
      %v1374 = vsel %vm1373, %v1136, %v1372
      %v1375 = vsel %vm1361, %v1144, %v1140
      %v1376 = vsel %vm1363, %v1148, %v1375
      %v1377 = vsel %vm1365, %v1152, %v1376
      %v1378 = vsel %vm1367, %v1156, %v1377
      %v1379 = vsel %vm1369, %v1160, %v1378
      %v1380 = vsel %vm1371, %v1164, %v1379
      %v1381 = vsel %vm1373, %v1168, %v1380
      %v1382 = vsel %vm1361, %v1176, %v1172
      %v1383 = vsel %vm1363, %v1180, %v1382
      %v1384 = vsel %vm1365, %v1184, %v1383
      %v1385 = vsel %vm1367, %v1188, %v1384
      %v1386 = vsel %vm1369, %v1192, %v1385
      %v1387 = vsel %vm1371, %v1196, %v1386
      %v1388 = vsel %vm1373, %v1200, %v1387
      %v1389 = vsel %vm1361, %v1208, %v1204
      %v1390 = vsel %vm1363, %v1212, %v1389
      %v1391 = vsel %vm1365, %v1216, %v1390
      %v1392 = vsel %vm1367, %v1220, %v1391
      %v1393 = vsel %vm1369, %v1224, %v1392
      %v1394 = vsel %vm1371, %v1228, %v1393
      %v1395 = vsel %vm1373, %v1232, %v1394
      %v1396 = vsel %vm1361, %v1240, %v1236
      %v1397 = vsel %vm1363, %v1244, %v1396
      %v1398 = vsel %vm1365, %v1248, %v1397
      %v1399 = vsel %vm1367, %v1252, %v1398
      %v1400 = vsel %vm1369, %v1256, %v1399
      %v1401 = vsel %vm1371, %v1260, %v1400
      %v1402 = vsel %vm1373, %v1264, %v1401
      %v1403 = vsel %vm1361, %v1272, %v1268
      %v1404 = vsel %vm1363, %v1276, %v1403
      %v1405 = vsel %vm1365, %v1280, %v1404
      %v1406 = vsel %vm1367, %v1284, %v1405
      %v1407 = vsel %vm1369, %v1288, %v1406
      %v1408 = vsel %vm1371, %v1292, %v1407
      %v1409 = vsel %vm1373, %v1296, %v1408
      %v1410 = vsel %vm1361, %v1304, %v1300
      %v1411 = vsel %vm1363, %v1308, %v1410
      %v1412 = vsel %vm1365, %v1312, %v1411
      %v1413 = vsel %vm1367, %v1316, %v1412
      %v1414 = vsel %vm1369, %v1320, %v1413
      %v1415 = vsel %vm1371, %v1324, %v1414
      %v1416 = vsel %vm1373, %v1328, %v1415
      %v1417 = vsel %vm1361, %v1336, %v1332
      %v1418 = vsel %vm1363, %v1340, %v1417
      %v1419 = vsel %vm1365, %v1344, %v1418
      %v1420 = vsel %vm1367, %v1348, %v1419
      %v1421 = vsel %vm1369, %v1352, %v1420
      %v1422 = vsel %vm1371, %v1356, %v1421
      %v1423 = vsel %vm1373, %v1360, %v1422
      %1432 = vst [vmem:[%s210] sm:$0xff] %v1374
      %1433 = vst [vmem:[%s210 + $0x8] sm:$0xff] %v1381
      %1434 = vst [vmem:[%s210 + $0x10] sm:$0xff] %v1388
      %1435 = vst [vmem:[%s210 + $0x18] sm:$0xff] %v1395
      %1436 = vst [vmem:[%s210 + $0x20] sm:$0xff] %v1402
      %1437 = vst [vmem:[%s210 + $0x28] sm:$0xff] %v1409
      %1438 = vst [vmem:[%s210 + $0x30] sm:$0xff] %v1416
      %1439 = vst [vmem:[%s210 + $0x38] sm:$0xff] %v1423
      %p1440 = scmp.lt.s32.totalorder %s16, 1
      %s1441 = scalar_select %p1440, %s16, 1
      %s1442 = smul.addr %s1441, 32
      %s1443 = smul.addr %s1442, 8
      %s1444 = scalar_lea.vmem %s3, %s1443
      %p1445 = scmp.lt.s32.totalorder %s16, 1
      %s1446 = scalar_select %p1445, %s16, 1
      %s1447 = smul.addr %s1446, 8
      %s1448 = smul.addr %s1447, 8
      %s1449 = scalar_lea.vmem %s4, %s1448
      // Predicated region
      $region33: #{stack_encoder_forward.5} parent=31 // pred_check
        %p1450 = pneg %p102
      $region34: #{stack_encoder_forward.5} parent=31 // pred_check_branch
        %1452 = sbr.rel (%p1450) target = $region36
      $region35: #{stack_encoder_forward.5} parent=31 // pred_region
        _
      $region36: #{stack_encoder_forward.5} parent=31 // pred_fallthru
        _
      // Predicated region
      $region37: #{stack_encoder_forward.5} parent=31 // pred_check
        %p1453 = pneg %p128
      $region38: #{stack_encoder_forward.5} parent=31 // pred_check_branch
        %1455 = sbr.rel (%p1453) target = $region40
      $region39: #{stack_encoder_forward.5} parent=31 // pred_region
        _
      $region40: #{stack_encoder_forward.5} parent=31 // pred_fallthru
        _
    $region32: #{stack_encoder_forward.5} parent=5 // pred_fallthru
      _
    %p1456 = scmp.le.s32.totalorder 2, %s11
    // Predicated region
    $region41: #{stack_encoder_forward.5} parent=5 // pred_check
      %p1457 = pneg %p1456
    $region42: #{stack_encoder_forward.5} parent=5 // pred_check_branch
      %1459 = sbr.rel (%p1457) target = $region44
    $region43: #{stack_encoder_forward.5} parent=5 // pred_region
      %s1460 = ssub.s32 %s11, 2
      // Predicated region
      $region45: #{stack_encoder_forward.5} parent=43 // pred_check
        %p1461 = pneg %p108
      $region46: #{stack_encoder_forward.5} parent=43 // pred_check_branch
        %1463 = sbr.rel (%p1461) target = $region48
      $region47: #{stack_encoder_forward.5} parent=43 // pred_region
        %p1464 = scmp.lt.s32.totalorder %s17, 1
        %s1465 = scalar_select %p1464, %s17, 1
        %s1466 = smul.addr %s1465, 32
        %s1467 = smul.addr %s1466, 8
        %s1468 = scalar_lea.vmem %s3, %s1467
      $region48: #{stack_encoder_forward.5} parent=43 // pred_fallthru
        _
      // Predicated region
      $region49: #{stack_encoder_forward.5} parent=43 // pred_check
        %p1469 = pneg %p134
      $region50: #{stack_encoder_forward.5} parent=43 // pred_check_branch
        %1471 = sbr.rel (%p1469) target = $region52
      $region51: #{stack_encoder_forward.5} parent=43 // pred_region
        %p1472 = scmp.lt.s32.totalorder %s17, 1
        %s1473 = scalar_select %p1472, %s17, 1
        %s1474 = smul.addr %s1473, 8
        %s1475 = smul.addr %s1474, 8
        %s1476 = scalar_lea.vmem %s4, %s1475
      $region52: #{stack_encoder_forward.5} parent=43 // pred_fallthru
        _
    $region44: #{stack_encoder_forward.5} parent=5 // pred_fallthru
      _
  $region6: #{stack_encoder_forward.5} parent=0 // loop_footer
    %s15 = sadd.s32 1, %s11
  $region7: #{stack_encoder_forward.5} parent=0 // loop_footer_branch
    %10 = sbr.rel target = $region3
  $region8: #{stack_encoder_forward.5} parent=0 // loop_exit
    _

// kernel: stack_encoder_forward.4
$region0: #{stack_encoder_forward.4}
  #allocation0 [shape = 'u32[]', space=smem, size = 0x4, offset = 0x4, fixed_abs, tag = 'smem constant byte address 0x4 - core index']
  #allocation1 [shape = 'u32[144,128]{1,0:T(1,128)}', space=vmem, size = 0x12000, scoped, tag = 'internal scratch']
  #allocation2 [shape = 'bf16[18,48,128]{2,1,0:T(8,128)(2,1)}', space=vmem, size = 0x36000, scoped, tag = 'scratch operand']
  %s0 = inlined_call_operand.vmem [shape: bf16[2,16,16,128], index: 0, kind: input, shape index: {}]
  %s1 = inlined_call_operand.vmem [shape: f32[1,128], index: 1, kind: input, shape index: {}]
  %s2 = inlined_call_operand.vmem [shape: f32[1,128], index: 2, kind: input, shape index: {}]
  %s3 = inlined_call_operand.vmem [shape: bf16[9,128,128], index: 3, kind: input, shape index: {}]
  %s4 = inlined_call_operand.vmem [shape: f32[1,128], index: 4, kind: input, shape index: {}]
  %s5 = inlined_call_operand.vmem [shape: bf16[2,16,16,128], index: 5, kind: output, shape index: {0}]
  %s6 = inlined_call_operand.vmem [shape: f32[2,1,128], index: 6, kind: output, shape index: {1}]
  %s7 = inlined_call_operand.vmem [shape: f32[2,1,128], index: 7, kind: output, shape index: {2}]
  %8 = xla_tuple %s5, %s6, %s7
  %s9 = sld [smem:[#allocation0]]
  $region69: #{stack_encoder_forward.4} parent=0
    _
  %s11 = ssub.s32 1, %s9
  %s12 = scalar_select 0, %s11, %s9
  loop: start=0, step=1, limit=4
  $region2: #{stack_encoder_forward.4} parent=0 // loop_pre_header
    _
  $region3: #{stack_encoder_forward.4} parent=0 // loop_header
    %s14 = sphi 0, %s18
    %p15 = scmp.ge.s32.totalorder %s14, 4
    %s24 = sphi 0, %s26
    %s27 = sphi 0, %s24
    %s28 = sphi 0, %s27
    %s44 = sphi 0, %s28
    %s48 = sphi 0, %s48
    %s50 = sphi 0, %s48
    %s51 = sphi 0, %s50
    %s65 = sphi 0, %s51
    %s69 = sphi 0, %s69
    %s71 = sphi 0, %s69
    %s72 = sphi 0, %s71
    %s86 = sphi 0, %s72
    %s90 = sphi 0, %s90
    %s92 = sphi 0, %s90
    %s93 = sphi 0, %s92
    %s107 = sphi 0, %s93
    %s111 = sphi 0, %s111
    %s113 = sphi 0, %s111
    %s114 = sphi 0, %s113
    %s128 = sphi 0, %s114
    %s134 = sphi 0, %s136
    %s137 = sphi 0, %s134
    %s138 = sphi 0, %s137
    %s154 = sphi 0, %s138
    %s160 = sphi 0, %s162
    %s163 = sphi 0, %s160
    %s164 = sphi 0, %s163
    %s180 = sphi 0, %s164
    %s186 = sphi 0, %s188
    %s189 = sphi 0, %s186
    %s190 = sphi 0, %s189
    %s206 = sphi 0, %s190
  $region4: #{stack_encoder_forward.4} parent=0 // loop_header_branch
    %17 = sbr.rel (%p15) target = $region8
  $region5: #{stack_encoder_forward.4} parent=0 // loop_body
    %s19 = ssub.s32 %s14, 1
    %s20 = ssub.s32 %s14, 2
    %s21 = sadd.s32 %s14, 1
    %s22 = ssub.s32 %s14, %s21
    %p23 = scmp.eq.s32.totalorder %s22, 0
    %s25 = sadd.s32 %s24, 1
    %s26 = scalar_select %p23, %s24, %s25
    %p29 = pneg %p23
    %p30 = scmp.eq.s32.totalorder %s14, 1
    %p31 = por %p29, %p30
    %p32 = scmp.ne.s32.totalorder %s24, %s27
    %p33 = scmp.eq.s32.totalorder %s14, 0
    %p34 = por %p32, %p33
    %p35 = scmp.ne.s32.totalorder %s24, %s27
    %p36 = scmp.eq.s32.totalorder %s19, 1
    %p37 = por %p35, %p36
    %p38 = scmp.ne.s32.totalorder %s27, %s28
    %p39 = scmp.eq.s32.totalorder %s19, 0
    %p40 = por %p38, %p39
    %p41 = scmp.ne.s32.totalorder %s27, %s28
    %p42 = scmp.eq.s32.totalorder %s20, 1
    %p43 = por %p41, %p42
    %p45 = scmp.ne.s32.totalorder %s28, %s44
    %p46 = scmp.eq.s32.totalorder %s20, 0
    %p47 = por %p45, %p46
    %s49 = sadd.s32 %s48, 1
    %p52 = scmp.eq.s32.totalorder %s14, 1
    %p53 = scmp.ne.s32.totalorder %s48, %s50
    %p54 = scmp.eq.s32.totalorder %s14, 0
    %p55 = por %p53, %p54
    %p56 = scmp.ne.s32.totalorder %s48, %s50
    %p57 = scmp.eq.s32.totalorder %s19, 1
    %p58 = por %p56, %p57
    %p59 = scmp.ne.s32.totalorder %s50, %s51
    %p60 = scmp.eq.s32.totalorder %s19, 0
    %p61 = por %p59, %p60
    %p62 = scmp.ne.s32.totalorder %s50, %s51
    %p63 = scmp.eq.s32.totalorder %s20, 1
    %p64 = por %p62, %p63
    %p66 = scmp.ne.s32.totalorder %s51, %s65
    %p67 = scmp.eq.s32.totalorder %s20, 0
    %p68 = por %p66, %p67
    %s70 = sadd.s32 %s69, 1
    %p73 = scmp.eq.s32.totalorder %s14, 1
    %p74 = scmp.ne.s32.totalorder %s69, %s71
    %p75 = scmp.eq.s32.totalorder %s14, 0
    %p76 = por %p74, %p75
    %p77 = scmp.ne.s32.totalorder %s69, %s71
    %p78 = scmp.eq.s32.totalorder %s19, 1
    %p79 = por %p77, %p78
    %p80 = scmp.ne.s32.totalorder %s71, %s72
    %p81 = scmp.eq.s32.totalorder %s19, 0
    %p82 = por %p80, %p81
    %p83 = scmp.ne.s32.totalorder %s71, %s72
    %p84 = scmp.eq.s32.totalorder %s20, 1
    %p85 = por %p83, %p84
    %p87 = scmp.ne.s32.totalorder %s72, %s86
    %p88 = scmp.eq.s32.totalorder %s20, 0
    %p89 = por %p87, %p88
    %s91 = sadd.s32 %s90, 1
    %p94 = scmp.eq.s32.totalorder %s14, 1
    %p95 = scmp.ne.s32.totalorder %s90, %s92
    %p96 = scmp.eq.s32.totalorder %s14, 0
    %p97 = por %p95, %p96
    %p98 = scmp.ne.s32.totalorder %s90, %s92
    %p99 = scmp.eq.s32.totalorder %s19, 1
    %p100 = por %p98, %p99
    %p101 = scmp.ne.s32.totalorder %s92, %s93
    %p102 = scmp.eq.s32.totalorder %s19, 0
    %p103 = por %p101, %p102
    %p104 = scmp.ne.s32.totalorder %s92, %s93
    %p105 = scmp.eq.s32.totalorder %s20, 1
    %p106 = por %p104, %p105
    %p108 = scmp.ne.s32.totalorder %s93, %s107
    %p109 = scmp.eq.s32.totalorder %s20, 0
    %p110 = por %p108, %p109
    %s112 = sadd.s32 %s111, 1
    %p115 = scmp.eq.s32.totalorder %s14, 1
    %p116 = scmp.ne.s32.totalorder %s111, %s113
    %p117 = scmp.eq.s32.totalorder %s14, 0
    %p118 = por %p116, %p117
    %p119 = scmp.ne.s32.totalorder %s111, %s113
    %p120 = scmp.eq.s32.totalorder %s19, 1
    %p121 = por %p119, %p120
    %p122 = scmp.ne.s32.totalorder %s113, %s114
    %p123 = scmp.eq.s32.totalorder %s19, 0
    %p124 = por %p122, %p123
    %p125 = scmp.ne.s32.totalorder %s113, %s114
    %p126 = scmp.eq.s32.totalorder %s20, 1
    %p127 = por %p125, %p126
    %p129 = scmp.ne.s32.totalorder %s114, %s128
    %p130 = scmp.eq.s32.totalorder %s20, 0
    %p131 = por %p129, %p130
    %s132 = ssub.s32 %s14, %s21
    %p133 = scmp.eq.s32.totalorder %s132, 0
    %s135 = sadd.s32 %s134, 1
    %s136 = scalar_select %p133, %s134, %s135
    %p139 = pneg %p133
    %p140 = scmp.eq.s32.totalorder %s14, 1
    %p141 = por %p139, %p140
    %p142 = scmp.ne.s32.totalorder %s134, %s137
    %p143 = scmp.eq.s32.totalorder %s14, 0
    %p144 = por %p142, %p143
    %p145 = scmp.ne.s32.totalorder %s134, %s137
    %p146 = scmp.eq.s32.totalorder %s19, 1
    %p147 = por %p145, %p146
    %p148 = scmp.ne.s32.totalorder %s137, %s138
    %p149 = scmp.eq.s32.totalorder %s19, 0
    %p150 = por %p148, %p149
    %p151 = scmp.ne.s32.totalorder %s137, %s138
    %p152 = scmp.eq.s32.totalorder %s20, 1
    %p153 = por %p151, %p152
    %p155 = scmp.ne.s32.totalorder %s138, %s154
    %p156 = scmp.eq.s32.totalorder %s20, 0
    %p157 = por %p155, %p156
    %s158 = ssub.s32 %s14, %s21
    %p159 = scmp.eq.s32.totalorder %s158, 0
    %s161 = sadd.s32 %s160, 1
    %s162 = scalar_select %p159, %s160, %s161
    %p165 = pneg %p159
    %p166 = scmp.eq.s32.totalorder %s14, 1
    %p167 = por %p165, %p166
    %p168 = scmp.ne.s32.totalorder %s160, %s163
    %p169 = scmp.eq.s32.totalorder %s14, 0
    %p170 = por %p168, %p169
    %p171 = scmp.ne.s32.totalorder %s160, %s163
    %p172 = scmp.eq.s32.totalorder %s19, 1
    %p173 = por %p171, %p172
    %p174 = scmp.ne.s32.totalorder %s163, %s164
    %p175 = scmp.eq.s32.totalorder %s19, 0
    %p176 = por %p174, %p175
    %p177 = scmp.ne.s32.totalorder %s163, %s164
    %p178 = scmp.eq.s32.totalorder %s20, 1
    %p179 = por %p177, %p178
    %p181 = scmp.ne.s32.totalorder %s164, %s180
    %p182 = scmp.eq.s32.totalorder %s20, 0
    %p183 = por %p181, %p182
    %s184 = ssub.s32 %s14, %s21
    %p185 = scmp.eq.s32.totalorder %s184, 0
    %s187 = sadd.s32 %s186, 1
    %s188 = scalar_select %p185, %s186, %s187
    %p191 = pneg %p185
    %p192 = scmp.eq.s32.totalorder %s14, 1
    %p193 = por %p191, %p192
    %p194 = scmp.ne.s32.totalorder %s186, %s189
    %p195 = scmp.eq.s32.totalorder %s14, 0
    %p196 = por %p194, %p195
    %p197 = scmp.ne.s32.totalorder %s186, %s189
    %p198 = scmp.eq.s32.totalorder %s19, 1
    %p199 = por %p197, %p198
    %p200 = scmp.ne.s32.totalorder %s189, %s190
    %p201 = scmp.eq.s32.totalorder %s19, 0
    %p202 = por %p200, %p201
    %p203 = scmp.ne.s32.totalorder %s189, %s190
    %p204 = scmp.eq.s32.totalorder %s20, 1
    %p205 = por %p203, %p204
    %p207 = scmp.ne.s32.totalorder %s190, %s206
    %p208 = scmp.eq.s32.totalorder %s20, 0
    %p209 = por %p207, %p208
    %p210 = scmp.le.s32.totalorder 1, %s14
    %p211 = scmp.lt.s32.totalorder %s14, 3
    %p212 = pnand %p210, %p211
    %p213 = pneg %p212
    // Predicated region
    $region9: #{stack_encoder_forward.4} parent=5 // pred_check
      _
    $region10: #{stack_encoder_forward.4} parent=5 // pred_check_branch
      %215 = sbr.rel (%p212) target = $region12
    $region11: #{stack_encoder_forward.4} parent=5 // pred_region
      %s216 = ssub.s32 %s14, 1
      // Predicated region
      $region13: #{stack_encoder_forward.4} parent=11 // pred_check
        %p217 = pneg %p61
      $region14: #{stack_encoder_forward.4} parent=11 // pred_check_branch
        %219 = sbr.rel (%p217) target = $region16
      $region15: #{stack_encoder_forward.4} parent=11 // pred_region
        _
      $region16: #{stack_encoder_forward.4} parent=11 // pred_fallthru
        _
      // Predicated region
      $region17: #{stack_encoder_forward.4} parent=11 // pred_check
        %p220 = pneg %p82
      $region18: #{stack_encoder_forward.4} parent=11 // pred_check_branch
        %222 = sbr.rel (%p220) target = $region20
      $region19: #{stack_encoder_forward.4} parent=11 // pred_region
        _
      $region20: #{stack_encoder_forward.4} parent=11 // pred_fallthru
        _
      // Predicated region
      $region21: #{stack_encoder_forward.4} parent=11 // pred_check
        %p223 = pneg %p103
      $region22: #{stack_encoder_forward.4} parent=11 // pred_check_branch
        %225 = sbr.rel (%p223) target = $region24
      $region23: #{stack_encoder_forward.4} parent=11 // pred_region
        _
      $region24: #{stack_encoder_forward.4} parent=11 // pred_fallthru
        _
      // Predicated region
      $region25: #{stack_encoder_forward.4} parent=11 // pred_check
        %p226 = pneg %p124
      $region26: #{stack_encoder_forward.4} parent=11 // pred_check_branch
        %228 = sbr.rel (%p226) target = $region28
      $region27: #{stack_encoder_forward.4} parent=11 // pred_region
        _
      $region28: #{stack_encoder_forward.4} parent=11 // pred_fallthru
        _
    $region12: #{stack_encoder_forward.4} parent=5 // pred_fallthru
      _
    %p229 = scmp.lt.s32.totalorder %s14, 2
    // Predicated region
    $region29: #{stack_encoder_forward.4} parent=5 // pred_check
      %p230 = pneg %p229
    $region30: #{stack_encoder_forward.4} parent=5 // pred_check_branch
      %232 = sbr.rel (%p230) target = $region32
    $region31: #{stack_encoder_forward.4} parent=5 // pred_region
      // Predicated region
      $region33: #{stack_encoder_forward.4} parent=31 // pred_check
        %p233 = pneg %p34
      $region34: #{stack_encoder_forward.4} parent=31 // pred_check_branch
        %235 = sbr.rel (%p233) target = $region36
      $region35: #{stack_encoder_forward.4} parent=31 // pred_region
        %p236 = scmp.lt.s32.totalorder %s14, 1
        %s237 = scalar_select %p236, %s14, 1
        %s238 = smul.addr %s237, 32
        %s239 = smul.addr %s238, 4
        %s240 = scalar_lea.vmem %s0, %s239
      $region36: #{stack_encoder_forward.4} parent=31 // pred_fallthru
        _
    $region32: #{stack_encoder_forward.4} parent=5 // pred_fallthru
      _
    %p241 = scmp.le.s32.totalorder 1, %s14
    %p242 = scmp.lt.s32.totalorder %s14, 3
    %p243 = pnand %p241, %p242
    %p244 = pneg %p243
    // Predicated region
    $region37: #{stack_encoder_forward.4} parent=5 // pred_check
      _
    $region38: #{stack_encoder_forward.4} parent=5 // pred_check_branch
      %246 = sbr.rel (%p243) target = $region40
    $region39: #{stack_encoder_forward.4} parent=5 // pred_region
      %s247 = ssub.s32 %s14, 1
      %p248 = scmp.lt.s32.totalorder %s19, 1
      %s249 = scalar_select %p248, %s19, 1
      %s250 = smul.addr %s249, 32
      %s251 = smul.addr %s250, 4
      %s252 = scalar_lea.vmem %s0, %s251
      %p253 = pneg %p40
      %p254 = pneg %p37
      %p255 = pneg %p61
      %p256 = pneg %p58
      %p257 = pneg %p82
      %p258 = pneg %p79
      %p259 = pneg %p103
      %p260 = pneg %p100
      %p261 = pneg %p124
      %p262 = pneg %p121
      %p263 = pneg %p150
      %p264 = pneg %p147
      %p265 = scmp.lt.s32.totalorder %s19, 1
      %s266 = scalar_select %p265, %s19, 1
      %s267 = smul.addr %s266, 32
      %s268 = smul.addr %s267, 4
      %s269 = scalar_lea.vmem %s5, %s268
      %p270 = pneg %p176
      %p271 = pneg %p173
      %p272 = scmp.lt.s32.totalorder %s19, 1
      %s273 = scalar_select %p272, %s19, 1
      %s274 = scalar_lea.vmem %s6, %s273
      %p275 = pneg %p202
      %p276 = pneg %p199
      %p277 = scmp.lt.s32.totalorder %s19, 1
      %s278 = scalar_select %p277, %s19, 1
      %s279 = scalar_lea.vmem %s7, %s278
      %p280 = scmp.lt.s32.totalorder %s19, 1
      %s281 = scalar_select %p280, %s19, 1
      %s282 = smul.addr %s281, 32
      %s283 = smul.addr %s282, 4
      %s284 = scalar_lea.vmem %s0, %s283
      %p285 = scmp.lt.s32.totalorder %s19, 1
      %s286 = scalar_select %p285, %s19, 1
      %s287 = smul.addr %s286, 32
      %s288 = smul.addr %s287, 4
      %s289 = scalar_lea.vmem %s5, %s288
      %p290 = scmp.lt.s32.totalorder %s19, 1
      %s291 = scalar_select %p290, %s19, 1
      %s292 = scalar_lea.vmem %s6, %s291
      %p293 = scmp.lt.s32.totalorder %s19, 1
      %s294 = scalar_select %p293, %s19, 1
      %s295 = scalar_lea.vmem %s7, %s294
      %v297 = vld [vmem:[%s284] sm:$0xf]
      %v298 = vld [vmem:[%s284 + $0x4] sm:$0xf]
      %v299 = vld [vmem:[%s284 + $0x8] sm:$0xf]
      %v300 = vld [vmem:[%s284 + $0xc] sm:$0xf]
      %v301 = vld [vmem:[%s284 + $0x10] sm:$0xf]
      %v302 = vld [vmem:[%s284 + $0x14] sm:$0xf]
      %v303 = vld [vmem:[%s284 + $0x18] sm:$0xf]
      %v304 = vld [vmem:[%s284 + $0x1c] sm:$0xf]
      %v305 = vld [vmem:[%s284 + $0x20] sm:$0xf]
      %v306 = vld [vmem:[%s284 + $0x24] sm:$0xf]
      %v307 = vld [vmem:[%s284 + $0x28] sm:$0xf]
      %v308 = vld [vmem:[%s284 + $0x2c] sm:$0xf]
      %v309 = vld [vmem:[%s284 + $0x30] sm:$0xf]
      %v310 = vld [vmem:[%s284 + $0x34] sm:$0xf]
      %v311 = vld [vmem:[%s284 + $0x38] sm:$0xf]
      %v312 = vld [vmem:[%s284 + $0x3c] sm:$0xf]
      %v313 = vld [vmem:[%s284 + $0x40] sm:$0xf]
      %v314 = vld [vmem:[%s284 + $0x44] sm:$0xf]
      %v315 = vld [vmem:[%s284 + $0x48] sm:$0xf]
      %v316 = vld [vmem:[%s284 + $0x4c] sm:$0xf]
      %v317 = vld [vmem:[%s284 + $0x50] sm:$0xf]
      %v318 = vld [vmem:[%s284 + $0x54] sm:$0xf]
      %v319 = vld [vmem:[%s284 + $0x58] sm:$0xf]
      %v320 = vld [vmem:[%s284 + $0x5c] sm:$0xf]
      %v321 = vld [vmem:[%s284 + $0x60] sm:$0xf]
      %v322 = vld [vmem:[%s284 + $0x64] sm:$0xf]
      %v323 = vld [vmem:[%s284 + $0x68] sm:$0xf]
      %v324 = vld [vmem:[%s284 + $0x6c] sm:$0xf]
      %v325 = vld [vmem:[%s284 + $0x70] sm:$0xf]
      %v326 = vld [vmem:[%s284 + $0x74] sm:$0xf]
      %v327 = vld [vmem:[%s284 + $0x78] sm:$0xf]
      %v328 = vld [vmem:[%s284 + $0x7c] sm:$0xf]
      %v329 = vunpack.c.l.bf16 %v297
      %v330 = vunpack.c.l.bf16 %v298
      %v331 = vunpack.c.l.bf16 %v299
      %v332 = vunpack.c.l.bf16 %v300
      %v333 = vunpack.c.l.bf16 %v301
      %v334 = vunpack.c.l.bf16 %v302
      %v335 = vunpack.c.l.bf16 %v303
      %v336 = vunpack.c.l.bf16 %v304
      %v337 = vunpack.c.l.bf16 %v305
      %v338 = vunpack.c.l.bf16 %v306
      %v339 = vunpack.c.l.bf16 %v307
      %v340 = vunpack.c.l.bf16 %v308
      %v341 = vunpack.c.l.bf16 %v309
      %v342 = vunpack.c.l.bf16 %v310
      %v343 = vunpack.c.l.bf16 %v311
      %v344 = vunpack.c.l.bf16 %v312
      %v345 = vunpack.c.l.bf16 %v313
      %v346 = vunpack.c.l.bf16 %v314
      %v347 = vunpack.c.l.bf16 %v315
      %v348 = vunpack.c.l.bf16 %v316
      %v349 = vunpack.c.l.bf16 %v317
      %v350 = vunpack.c.l.bf16 %v318
      %v351 = vunpack.c.l.bf16 %v319
      %v352 = vunpack.c.l.bf16 %v320
      %v353 = vunpack.c.l.bf16 %v321
      %v354 = vunpack.c.l.bf16 %v322
      %v355 = vunpack.c.l.bf16 %v323
      %v356 = vunpack.c.l.bf16 %v324
      %v357 = vunpack.c.l.bf16 %v325
      %v358 = vunpack.c.l.bf16 %v326
      %v359 = vunpack.c.l.bf16 %v327
      %v360 = vunpack.c.l.bf16 %v328
      %v361 = vld [vmem:[%s1] sm:$0x1]
      %v363 = vlaneseq
      %v364 = vshrl.u32 %v363, 7
      %v365 = vsub.s32 0, %v364
      %v366 = vrot.slane %v361, %v365
      %v368 = vmul.f32 %v329, %v366
      %v369 = vmul.f32 %v330, %v366
      %v370 = vmul.f32 %v331, %v366
      %v371 = vmul.f32 %v332, %v366
      %v372 = vmul.f32 %v333, %v366
      %v373 = vmul.f32 %v334, %v366
      %v374 = vmul.f32 %v335, %v366
      %v375 = vmul.f32 %v336, %v366
      %v376 = vmul.f32 %v337, %v366
      %v377 = vmul.f32 %v338, %v366
      %v378 = vmul.f32 %v339, %v366
      %v379 = vmul.f32 %v340, %v366
      %v380 = vmul.f32 %v341, %v366
      %v381 = vmul.f32 %v342, %v366
      %v382 = vmul.f32 %v343, %v366
      %v383 = vmul.f32 %v344, %v366
      %v384 = vmul.f32 %v345, %v366
      %v385 = vmul.f32 %v346, %v366
      %v386 = vmul.f32 %v347, %v366
      %v387 = vmul.f32 %v348, %v366
      %v388 = vmul.f32 %v349, %v366
      %v389 = vmul.f32 %v350, %v366
      %v390 = vmul.f32 %v351, %v366
      %v391 = vmul.f32 %v352, %v366
      %v392 = vmul.f32 %v353, %v366
      %v393 = vmul.f32 %v354, %v366
      %v394 = vmul.f32 %v355, %v366
      %v395 = vmul.f32 %v356, %v366
      %v396 = vmul.f32 %v357, %v366
      %v397 = vmul.f32 %v358, %v366
      %v398 = vmul.f32 %v359, %v366
      %v399 = vmul.f32 %v360, %v366
      %v400 = vld [vmem:[%s2] sm:$0x1]
      %v402 = vlaneseq
      %v403 = vshrl.u32 %v402, 7
      %v404 = vsub.s32 0, %v403
      %v405 = vrot.slane %v400, %v404
      %v407 = vadd.f32 %v368, %v405
      %v408 = vadd.f32 %v369, %v405
      %v409 = vadd.f32 %v370, %v405
      %v410 = vadd.f32 %v371, %v405
      %v411 = vadd.f32 %v372, %v405
      %v412 = vadd.f32 %v373, %v405
      %v413 = vadd.f32 %v374, %v405
      %v414 = vadd.f32 %v375, %v405
      %v415 = vadd.f32 %v376, %v405
      %v416 = vadd.f32 %v377, %v405
      %v417 = vadd.f32 %v378, %v405
      %v418 = vadd.f32 %v379, %v405
      %v419 = vadd.f32 %v380, %v405
      %v420 = vadd.f32 %v381, %v405
      %v421 = vadd.f32 %v382, %v405
      %v422 = vadd.f32 %v383, %v405
      %v423 = vadd.f32 %v384, %v405
      %v424 = vadd.f32 %v385, %v405
      %v425 = vadd.f32 %v386, %v405
      %v426 = vadd.f32 %v387, %v405
      %v427 = vadd.f32 %v388, %v405
      %v428 = vadd.f32 %v389, %v405
      %v429 = vadd.f32 %v390, %v405
      %v430 = vadd.f32 %v391, %v405
      %v431 = vadd.f32 %v392, %v405
      %v432 = vadd.f32 %v393, %v405
      %v433 = vadd.f32 %v394, %v405
      %v434 = vadd.f32 %v395, %v405
      %v435 = vadd.f32 %v396, %v405
      %v436 = vadd.f32 %v397, %v405
      %v437 = vadd.f32 %v398, %v405
      %v438 = vadd.f32 %v399, %v405
      %v439 = vmax.f32 %v407, 0.0
      %v440 = vmax.f32 %v408, 0.0
      %v441 = vmax.f32 %v409, 0.0
      %v442 = vmax.f32 %v410, 0.0
      %v443 = vmax.f32 %v411, 0.0
      %v444 = vmax.f32 %v412, 0.0
      %v445 = vmax.f32 %v413, 0.0
      %v446 = vmax.f32 %v414, 0.0
      %v447 = vmax.f32 %v415, 0.0
      %v448 = vmax.f32 %v416, 0.0
      %v449 = vmax.f32 %v417, 0.0
      %v450 = vmax.f32 %v418, 0.0
      %v451 = vmax.f32 %v419, 0.0
      %v452 = vmax.f32 %v420, 0.0
      %v453 = vmax.f32 %v421, 0.0
      %v454 = vmax.f32 %v422, 0.0
      %v455 = vmax.f32 %v423, 0.0
      %v456 = vmax.f32 %v424, 0.0
      %v457 = vmax.f32 %v425, 0.0
      %v458 = vmax.f32 %v426, 0.0
      %v459 = vmax.f32 %v427, 0.0
      %v460 = vmax.f32 %v428, 0.0
      %v461 = vmax.f32 %v429, 0.0
      %v462 = vmax.f32 %v430, 0.0
      %v463 = vmax.f32 %v431, 0.0
      %v464 = vmax.f32 %v432, 0.0
      %v465 = vmax.f32 %v433, 0.0
      %v466 = vmax.f32 %v434, 0.0
      %v467 = vmax.f32 %v435, 0.0
      %v468 = vmax.f32 %v436, 0.0
      %v469 = vmax.f32 %v437, 0.0
      %v470 = vmax.f32 %v438, 0.0
      %v471 = vpack.c.bf16 %v440, %v439
      %v472 = vpack.c.bf16 %v442, %v441
      %v473 = vpack.c.bf16 %v444, %v443
      %v474 = vpack.c.bf16 %v446, %v445
      %v475 = vpack.c.bf16 %v448, %v447
      %v476 = vpack.c.bf16 %v450, %v449
      %v477 = vpack.c.bf16 %v452, %v451
      %v478 = vpack.c.bf16 %v454, %v453
      %v479 = vpack.c.bf16 %v456, %v455
      %v480 = vpack.c.bf16 %v458, %v457
      %v481 = vpack.c.bf16 %v460, %v459
      %v482 = vpack.c.bf16 %v462, %v461
      %v483 = vpack.c.bf16 %v464, %v463
      %v484 = vpack.c.bf16 %v466, %v465
      %v485 = vpack.c.bf16 %v468, %v467
      %v486 = vpack.c.bf16 %v470, %v469
      %v503 = vunpack.c.l.b16 %v471
      %v504 = vunpack.c.h.b16 %v471
      %v505 = vunpack.c.l.b16 %v472
      %v506 = vunpack.c.h.b16 %v472
      %v507 = vunpack.c.l.b16 %v473
      %v508 = vunpack.c.h.b16 %v473
      %v509 = vunpack.c.l.b16 %v474
      %v510 = vunpack.c.h.b16 %v474
      %v511 = vunpack.c.l.b16 %v475
      %v512 = vunpack.c.h.b16 %v475
      %v513 = vunpack.c.l.b16 %v476
      %v514 = vunpack.c.h.b16 %v476
      %v515 = vunpack.c.l.b16 %v477
      %v516 = vunpack.c.h.b16 %v477
      %v517 = vunpack.c.l.b16 %v478
      %v518 = vunpack.c.h.b16 %v478
      %v519 = vunpack.c.l.b16 %v479
      %v520 = vunpack.c.h.b16 %v479
      %v521 = vunpack.c.l.b16 %v480
      %v522 = vunpack.c.h.b16 %v480
      %v523 = vunpack.c.l.b16 %v481
      %v524 = vunpack.c.h.b16 %v481
      %v525 = vunpack.c.l.b16 %v482
      %v526 = vunpack.c.h.b16 %v482
      %v527 = vunpack.c.l.b16 %v483
      %v528 = vunpack.c.h.b16 %v483
      %v529 = vunpack.c.l.b16 %v484
      %v530 = vunpack.c.h.b16 %v484
      %v531 = vunpack.c.l.b16 %v485
      %v532 = vunpack.c.h.b16 %v485
      %v533 = vunpack.c.l.b16 %v486
      %v534 = vunpack.c.h.b16 %v486
      %v535 = vpack.c.b16 %v503, %v503
      %v536 = vpack.c.b16 %v504, %v504
      %v537 = vpack.c.b16 %v505, %v505
      %v538 = vpack.c.b16 %v506, %v506
      %v539 = vpack.c.b16 %v507, %v507
      %v540 = vpack.c.b16 %v508, %v508
      %v541 = vpack.c.b16 %v509, %v509
      %v542 = vpack.c.b16 %v510, %v510
      %v543 = vpack.c.b16 %v511, %v511
      %v544 = vpack.c.b16 %v512, %v512
      %v545 = vpack.c.b16 %v513, %v513
      %v546 = vpack.c.b16 %v514, %v514
      %v547 = vpack.c.b16 %v515, %v515
      %v548 = vpack.c.b16 %v516, %v516
      %v549 = vpack.c.b16 %v517, %v517
      %v550 = vpack.c.b16 %v518, %v518
      %v551 = vpack.c.b16 %v519, %v519
      %v552 = vpack.c.b16 %v520, %v520
      %v553 = vpack.c.b16 %v521, %v521
      %v554 = vpack.c.b16 %v522, %v522
      %v555 = vpack.c.b16 %v523, %v523
      %v556 = vpack.c.b16 %v524, %v524
      %v557 = vpack.c.b16 %v525, %v525
      %v558 = vpack.c.b16 %v526, %v526
      %v559 = vpack.c.b16 %v527, %v527
      %v560 = vpack.c.b16 %v528, %v528
      %v561 = vpack.c.b16 %v529, %v529
      %v562 = vpack.c.b16 %v530, %v530
      %v563 = vpack.c.b16 %v531, %v531
      %v564 = vpack.c.b16 %v532, %v532
      %v565 = vpack.c.b16 %v533, %v533
      %v566 = vpack.c.b16 %v534, %v534
      %s599 = scalar_lea.vmem [#allocation2], 24
      %600 = vst [vmem:[%s599 + $0x8] sm:$0xf] %v535
      %601 = vst [vmem:[%s599 + $0xc] sm:$0xf] %v536
      %602 = vst [vmem:[%s599 + $0x20] sm:$0xf] %v537
      %603 = vst [vmem:[%s599 + $0x24] sm:$0xf] %v538
      %604 = vst [vmem:[%s599 + $0x38] sm:$0xf] %v539
      %605 = vst [vmem:[%s599 + $0x3c] sm:$0xf] %v540
      %606 = vst [vmem:[%s599 + $0x50] sm:$0xf] %v541
      %607 = vst [vmem:[%s599 + $0x54] sm:$0xf] %v542
      %608 = vst [vmem:[%s599 + $0x68] sm:$0xf] %v543
      %609 = vst [vmem:[%s599 + $0x6c] sm:$0xf] %v544
      %610 = vst [vmem:[%s599 + $0x80] sm:$0xf] %v545
      %611 = vst [vmem:[%s599 + $0x84] sm:$0xf] %v546
      %612 = vst [vmem:[%s599 + $0x98] sm:$0xf] %v547
      %613 = vst [vmem:[%s599 + $0x9c] sm:$0xf] %v548
      %614 = vst [vmem:[%s599 + $0xb0] sm:$0xf] %v549
      %615 = vst [vmem:[%s599 + $0xb4] sm:$0xf] %v550
      %616 = vst [vmem:[%s599 + $0xc8] sm:$0xf] %v551
      %617 = vst [vmem:[%s599 + $0xcc] sm:$0xf] %v552
      %618 = vst [vmem:[%s599 + $0xe0] sm:$0xf] %v553
      %619 = vst [vmem:[%s599 + $0xe4] sm:$0xf] %v554
      %620 = vst [vmem:[%s599 + $0xf8] sm:$0xf] %v555
      %621 = vst [vmem:[%s599 + $0xfc] sm:$0xf] %v556
      %622 = vst [vmem:[%s599 + $0x110] sm:$0xf] %v557
      %623 = vst [vmem:[%s599 + $0x114] sm:$0xf] %v558
      %624 = vst [vmem:[%s599 + $0x128] sm:$0xf] %v559
      %625 = vst [vmem:[%s599 + $0x12c] sm:$0xf] %v560
      %626 = vst [vmem:[%s599 + $0x140] sm:$0xf] %v561
      %627 = vst [vmem:[%s599 + $0x144] sm:$0xf] %v562
      %628 = vst [vmem:[%s599 + $0x158] sm:$0xf] %v563
      %629 = vst [vmem:[%s599 + $0x15c] sm:$0xf] %v564
      %630 = vst [vmem:[%s599 + $0x170] sm:$0xf] %v565
      %631 = vst [vmem:[%s599 + $0x174] sm:$0xf] %v566
      %632 = vst [vmem:[#allocation2 + $0x4] sm:$0x8] 0
      %633 = vst [vmem:[#allocation2 + $0x8] sm:$0xf] 0
      %634 = vst [vmem:[#allocation2 + $0xc] sm:$0xf] 0
      %635 = vst [vmem:[#allocation2 + $0x10] sm:$0x1] 0
      %s636 = scalar_lea.vmem [#allocation2], 408
      %637 = vst [vmem:[%s636 + $0x4] sm:$0x8] 0
      %638 = vst [vmem:[%s636 + $0x8] sm:$0xf] 0
      %639 = vst [vmem:[%s636 + $0xc] sm:$0xf] 0
      %640 = vst [vmem:[%s636 + $0x10] sm:$0x1] 0
      %641 = vst [vmem:[%s599 + $0x4] sm:$0x8] 0
      %642 = vst [vmem:[%s599 + $0x1c] sm:$0x8] 0
      %643 = vst [vmem:[%s599 + $0x34] sm:$0x8] 0
      %644 = vst [vmem:[%s599 + $0x4c] sm:$0x8] 0
      %645 = vst [vmem:[%s599 + $0x64] sm:$0x8] 0
      %646 = vst [vmem:[%s599 + $0x7c] sm:$0x8] 0
      %647 = vst [vmem:[%s599 + $0x94] sm:$0x8] 0
      %648 = vst [vmem:[%s599 + $0xac] sm:$0x8] 0
      %649 = vst [vmem:[%s599 + $0xc4] sm:$0x8] 0
      %650 = vst [vmem:[%s599 + $0xdc] sm:$0x8] 0
      %651 = vst [vmem:[%s599 + $0xf4] sm:$0x8] 0
      %652 = vst [vmem:[%s599 + $0x10c] sm:$0x8] 0
      %653 = vst [vmem:[%s599 + $0x124] sm:$0x8] 0
      %654 = vst [vmem:[%s599 + $0x13c] sm:$0x8] 0
      %655 = vst [vmem:[%s599 + $0x154] sm:$0x8] 0
      %656 = vst [vmem:[%s599 + $0x16c] sm:$0x8] 0
      %657 = vst [vmem:[%s599 + $0x10] sm:$0x1] 0
      %658 = vst [vmem:[%s599 + $0x28] sm:$0x1] 0
      %659 = vst [vmem:[%s599 + $0x40] sm:$0x1] 0
      %660 = vst [vmem:[%s599 + $0x58] sm:$0x1] 0
      %661 = vst [vmem:[%s599 + $0x70] sm:$0x1] 0
      %662 = vst [vmem:[%s599 + $0x88] sm:$0x1] 0
      %663 = vst [vmem:[%s599 + $0xa0] sm:$0x1] 0
      %664 = vst [vmem:[%s599 + $0xb8] sm:$0x1] 0
      %665 = vst [vmem:[%s599 + $0xd0] sm:$0x1] 0
      %666 = vst [vmem:[%s599 + $0xe8] sm:$0x1] 0
      %667 = vst [vmem:[%s599 + $0x100] sm:$0x1] 0
      %668 = vst [vmem:[%s599 + $0x118] sm:$0x1] 0
      %669 = vst [vmem:[%s599 + $0x130] sm:$0x1] 0
      %670 = vst [vmem:[%s599 + $0x148] sm:$0x1] 0
      %671 = vst [vmem:[%s599 + $0x160] sm:$0x1] 0
      %672 = vst [vmem:[%s599 + $0x178] sm:$0x1] 0
      %v673 = vld [vmem:[#allocation2 + $0x4] sm:$0x8]
      %v674 = vld [vmem:[#allocation2 + $0x8] sm:$0xf]
      %v675 = vld [vmem:[#allocation2 + $0xc] sm:$0xf]
      %v676 = vld [vmem:[#allocation2 + $0x1c] sm:$0x8]
      %v677 = vld [vmem:[#allocation2 + $0x20] sm:$0xf]
      %v678 = vld [vmem:[#allocation2 + $0x24] sm:$0xf]
      %v679 = vld [vmem:[#allocation2 + $0x34] sm:$0x8]
      %v680 = vld [vmem:[#allocation2 + $0x38] sm:$0xf]
      %v681 = vld [vmem:[#allocation2 + $0x3c] sm:$0xf]
      %v682 = vld [vmem:[#allocation2 + $0x4c] sm:$0x8]
      %v683 = vld [vmem:[#allocation2 + $0x50] sm:$0xf]
      %v684 = vld [vmem:[#allocation2 + $0x54] sm:$0xf]
      %v685 = vld [vmem:[#allocation2 + $0x64] sm:$0x8]
      %v686 = vld [vmem:[#allocation2 + $0x68] sm:$0xf]
      %v687 = vld [vmem:[#allocation2 + $0x6c] sm:$0xf]
      %v688 = vld [vmem:[#allocation2 + $0x7c] sm:$0x8]
      %v689 = vld [vmem:[#allocation2 + $0x80] sm:$0xf]
      %v690 = vld [vmem:[#allocation2 + $0x84] sm:$0xf]
      %v691 = vld [vmem:[#allocation2 + $0x94] sm:$0x8]
      %v692 = vld [vmem:[#allocation2 + $0x98] sm:$0xf]
      %v693 = vld [vmem:[#allocation2 + $0x9c] sm:$0xf]
      %v694 = vld [vmem:[#allocation2 + $0xac] sm:$0x8]
      %v695 = vld [vmem:[#allocation2 + $0xb0] sm:$0xf]
      %v696 = vld [vmem:[#allocation2 + $0xb4] sm:$0xf]
      %v697 = vld [vmem:[#allocation2 + $0xc4] sm:$0x8]
      %v698 = vld [vmem:[#allocation2 + $0xc8] sm:$0xf]
      %v699 = vld [vmem:[#allocation2 + $0xcc] sm:$0xf]
      %v700 = vld [vmem:[#allocation2 + $0xdc] sm:$0x8]
      %v701 = vld [vmem:[#allocation2 + $0xe0] sm:$0xf]
      %v702 = vld [vmem:[#allocation2 + $0xe4] sm:$0xf]
      %v703 = vld [vmem:[#allocation2 + $0xf4] sm:$0x8]
      %v704 = vld [vmem:[#allocation2 + $0xf8] sm:$0xf]
      %v705 = vld [vmem:[#allocation2 + $0xfc] sm:$0xf]
      %v706 = vld [vmem:[#allocation2 + $0x10c] sm:$0x8]
      %v707 = vld [vmem:[#allocation2 + $0x110] sm:$0xf]
      %v708 = vld [vmem:[#allocation2 + $0x114] sm:$0xf]
      %v709 = vld [vmem:[#allocation2 + $0x124] sm:$0x8]
      %v710 = vld [vmem:[#allocation2 + $0x128] sm:$0xf]
      %v711 = vld [vmem:[#allocation2 + $0x12c] sm:$0xf]
      %v712 = vld [vmem:[#allocation2 + $0x13c] sm:$0x8]
      %v713 = vld [vmem:[#allocation2 + $0x140] sm:$0xf]
      %v714 = vld [vmem:[#allocation2 + $0x144] sm:$0xf]
      %v715 = vld [vmem:[#allocation2 + $0x154] sm:$0x8]
      %v716 = vld [vmem:[#allocation2 + $0x158] sm:$0xf]
      %v717 = vld [vmem:[#allocation2 + $0x15c] sm:$0xf]
      %v718 = vld [vmem:[#allocation2 + $0x16c] sm:$0x8]
      %v719 = vld [vmem:[#allocation2 + $0x170] sm:$0xf]
      %v720 = vld [vmem:[#allocation2 + $0x174] sm:$0xf]
      %v721 = vld [vmem:[#allocation2 + $0x184] sm:$0x8]
      %v722 = vld [vmem:[#allocation2 + $0x188] sm:$0xf]
      %v723 = vld [vmem:[#allocation2 + $0x18c] sm:$0xf]
      %v724 = vld [vmem:[#allocation2 + $0x19c] sm:$0x8]
      %v725 = vld [vmem:[#allocation2 + $0x1a0] sm:$0xf]
      %v726 = vld [vmem:[#allocation2 + $0x1a4] sm:$0xf]
      %vm727 = vsmask.f32 256
      %vm728 = vsmask.f32 4368
      %vm729 = vmor %vm727, %vm728
      %v731 = vshrl.u32 %v673, 16
      %v733 = vrot.slane %v731, 7
      %v734 = vrot.slane %v733, 4
      %v736 = vshrl.u32 %v674, 16
      %v738 = vrot.slane %v736, 7
      %v739 = vshll.u32 %v674, 16
      %v741 = vor.u32 %v738, %v739
      %v742 = vsel %vm729, %v734, %v741
      %v743 = vrot.slane %v738, 4
      %v745 = vshrl.u32 %v675, 16
      %v747 = vrot.slane %v745, 7
      %v748 = vshll.u32 %v675, 16
      %v750 = vor.u32 %v747, %v748
      %v751 = vsel %vm729, %v743, %v750
      %v753 = vshrl.u32 %v676, 16
      %v755 = vrot.slane %v753, 7
      %v756 = vrot.slane %v755, 4
      %v758 = vshrl.u32 %v677, 16
      %v760 = vrot.slane %v758, 7
      %v761 = vshll.u32 %v677, 16
      %v763 = vor.u32 %v760, %v761
      %v764 = vsel %vm729, %v756, %v763
      %v765 = vrot.slane %v760, 4
      %v767 = vshrl.u32 %v678, 16
      %v769 = vrot.slane %v767, 7
      %v770 = vshll.u32 %v678, 16
      %v772 = vor.u32 %v769, %v770
      %v773 = vsel %vm729, %v765, %v772
      %v775 = vshrl.u32 %v679, 16
      %v777 = vrot.slane %v775, 7
      %v778 = vrot.slane %v777, 4
      %v780 = vshrl.u32 %v680, 16
      %v782 = vrot.slane %v780, 7
      %v783 = vshll.u32 %v680, 16
      %v785 = vor.u32 %v782, %v783
      %v786 = vsel %vm729, %v778, %v785
      %v787 = vrot.slane %v782, 4
      %v789 = vshrl.u32 %v681, 16
      %v791 = vrot.slane %v789, 7
      %v792 = vshll.u32 %v681, 16
      %v794 = vor.u32 %v791, %v792
      %v795 = vsel %vm729, %v787, %v794
      %v797 = vshrl.u32 %v682, 16
      %v799 = vrot.slane %v797, 7
      %v800 = vrot.slane %v799, 4
      %v802 = vshrl.u32 %v683, 16
      %v804 = vrot.slane %v802, 7
      %v805 = vshll.u32 %v683, 16
      %v807 = vor.u32 %v804, %v805
      %v808 = vsel %vm729, %v800, %v807
      %v809 = vrot.slane %v804, 4
      %v811 = vshrl.u32 %v684, 16
      %v813 = vrot.slane %v811, 7
      %v814 = vshll.u32 %v684, 16
      %v816 = vor.u32 %v813, %v814
      %v817 = vsel %vm729, %v809, %v816
      %v819 = vshrl.u32 %v685, 16
      %v821 = vrot.slane %v819, 7
      %v822 = vrot.slane %v821, 4
      %v824 = vshrl.u32 %v686, 16
      %v826 = vrot.slane %v824, 7
      %v827 = vshll.u32 %v686, 16
      %v829 = vor.u32 %v826, %v827
      %v830 = vsel %vm729, %v822, %v829
      %v831 = vrot.slane %v826, 4
      %v833 = vshrl.u32 %v687, 16
      %v835 = vrot.slane %v833, 7
      %v836 = vshll.u32 %v687, 16
      %v838 = vor.u32 %v835, %v836
      %v839 = vsel %vm729, %v831, %v838
      %v841 = vshrl.u32 %v688, 16
      %v843 = vrot.slane %v841, 7
      %v844 = vrot.slane %v843, 4
      %v846 = vshrl.u32 %v689, 16
      %v848 = vrot.slane %v846, 7
      %v849 = vshll.u32 %v689, 16
      %v851 = vor.u32 %v848, %v849
      %v852 = vsel %vm729, %v844, %v851
      %v853 = vrot.slane %v848, 4
      %v855 = vshrl.u32 %v690, 16
      %v857 = vrot.slane %v855, 7
      %v858 = vshll.u32 %v690, 16
      %v860 = vor.u32 %v857, %v858
      %v861 = vsel %vm729, %v853, %v860
      %v863 = vshrl.u32 %v691, 16
      %v865 = vrot.slane %v863, 7
      %v866 = vrot.slane %v865, 4
      %v868 = vshrl.u32 %v692, 16
      %v870 = vrot.slane %v868, 7
      %v871 = vshll.u32 %v692, 16
      %v873 = vor.u32 %v870, %v871
      %v874 = vsel %vm729, %v866, %v873
      %v875 = vrot.slane %v870, 4
      %v877 = vshrl.u32 %v693, 16
      %v879 = vrot.slane %v877, 7
      %v880 = vshll.u32 %v693, 16
      %v882 = vor.u32 %v879, %v880
      %v883 = vsel %vm729, %v875, %v882
      %v885 = vshrl.u32 %v694, 16
      %v887 = vrot.slane %v885, 7
      %v888 = vrot.slane %v887, 4
      %v890 = vshrl.u32 %v695, 16
      %v892 = vrot.slane %v890, 7
      %v893 = vshll.u32 %v695, 16
      %v895 = vor.u32 %v892, %v893
      %v896 = vsel %vm729, %v888, %v895
      %v897 = vrot.slane %v892, 4
      %v899 = vshrl.u32 %v696, 16
      %v901 = vrot.slane %v899, 7
      %v902 = vshll.u32 %v696, 16
      %v904 = vor.u32 %v901, %v902
      %v905 = vsel %vm729, %v897, %v904
      %v907 = vshrl.u32 %v697, 16
      %v909 = vrot.slane %v907, 7
      %v910 = vrot.slane %v909, 4
      %v912 = vshrl.u32 %v698, 16
      %v914 = vrot.slane %v912, 7
      %v915 = vshll.u32 %v698, 16
      %v917 = vor.u32 %v914, %v915
      %v918 = vsel %vm729, %v910, %v917
      %v919 = vrot.slane %v914, 4
      %v921 = vshrl.u32 %v699, 16
      %v923 = vrot.slane %v921, 7
      %v924 = vshll.u32 %v699, 16
      %v926 = vor.u32 %v923, %v924
      %v927 = vsel %vm729, %v919, %v926
      %v929 = vshrl.u32 %v700, 16
      %v931 = vrot.slane %v929, 7
      %v932 = vrot.slane %v931, 4
      %v934 = vshrl.u32 %v701, 16
      %v936 = vrot.slane %v934, 7
      %v937 = vshll.u32 %v701, 16
      %v939 = vor.u32 %v936, %v937
      %v940 = vsel %vm729, %v932, %v939
      %v941 = vrot.slane %v936, 4
      %v943 = vshrl.u32 %v702, 16
      %v945 = vrot.slane %v943, 7
      %v946 = vshll.u32 %v702, 16
      %v948 = vor.u32 %v945, %v946
      %v949 = vsel %vm729, %v941, %v948
      %v951 = vshrl.u32 %v703, 16
      %v953 = vrot.slane %v951, 7
      %v954 = vrot.slane %v953, 4
      %v956 = vshrl.u32 %v704, 16
      %v958 = vrot.slane %v956, 7
      %v959 = vshll.u32 %v704, 16
      %v961 = vor.u32 %v958, %v959
      %v962 = vsel %vm729, %v954, %v961
      %v963 = vrot.slane %v958, 4
      %v965 = vshrl.u32 %v705, 16
      %v967 = vrot.slane %v965, 7
      %v968 = vshll.u32 %v705, 16
      %v970 = vor.u32 %v967, %v968
      %v971 = vsel %vm729, %v963, %v970
      %v973 = vshrl.u32 %v706, 16
      %v975 = vrot.slane %v973, 7
      %v976 = vrot.slane %v975, 4
      %v978 = vshrl.u32 %v707, 16
      %v980 = vrot.slane %v978, 7
      %v981 = vshll.u32 %v707, 16
      %v983 = vor.u32 %v980, %v981
      %v984 = vsel %vm729, %v976, %v983
      %v985 = vrot.slane %v980, 4
      %v987 = vshrl.u32 %v708, 16
      %v989 = vrot.slane %v987, 7
      %v990 = vshll.u32 %v708, 16
      %v992 = vor.u32 %v989, %v990
      %v993 = vsel %vm729, %v985, %v992
      %v995 = vshrl.u32 %v709, 16
      %v997 = vrot.slane %v995, 7
      %v998 = vrot.slane %v997, 4
      %v1000 = vshrl.u32 %v710, 16
      %v1002 = vrot.slane %v1000, 7
      %v1003 = vshll.u32 %v710, 16
      %v1005 = vor.u32 %v1002, %v1003
      %v1006 = vsel %vm729, %v998, %v1005
      %v1007 = vrot.slane %v1002, 4
      %v1009 = vshrl.u32 %v711, 16
      %v1011 = vrot.slane %v1009, 7
      %v1012 = vshll.u32 %v711, 16
      %v1014 = vor.u32 %v1011, %v1012
      %v1015 = vsel %vm729, %v1007, %v1014
      %v1017 = vshrl.u32 %v712, 16
      %v1019 = vrot.slane %v1017, 7
      %v1020 = vrot.slane %v1019, 4
      %v1022 = vshrl.u32 %v713, 16
      %v1024 = vrot.slane %v1022, 7
      %v1025 = vshll.u32 %v713, 16
      %v1027 = vor.u32 %v1024, %v1025
      %v1028 = vsel %vm729, %v1020, %v1027
      %v1029 = vrot.slane %v1024, 4
      %v1031 = vshrl.u32 %v714, 16
      %v1033 = vrot.slane %v1031, 7
      %v1034 = vshll.u32 %v714, 16
      %v1036 = vor.u32 %v1033, %v1034
      %v1037 = vsel %vm729, %v1029, %v1036
      %v1039 = vshrl.u32 %v715, 16
      %v1041 = vrot.slane %v1039, 7
      %v1042 = vrot.slane %v1041, 4
      %v1044 = vshrl.u32 %v716, 16
      %v1046 = vrot.slane %v1044, 7
      %v1047 = vshll.u32 %v716, 16
      %v1049 = vor.u32 %v1046, %v1047
      %v1050 = vsel %vm729, %v1042, %v1049
      %v1051 = vrot.slane %v1046, 4
      %v1053 = vshrl.u32 %v717, 16
      %v1055 = vrot.slane %v1053, 7
      %v1056 = vshll.u32 %v717, 16
      %v1058 = vor.u32 %v1055, %v1056
      %v1059 = vsel %vm729, %v1051, %v1058
      %v1061 = vshrl.u32 %v718, 16
      %v1063 = vrot.slane %v1061, 7
      %v1064 = vrot.slane %v1063, 4
      %v1066 = vshrl.u32 %v719, 16
      %v1068 = vrot.slane %v1066, 7
      %v1069 = vshll.u32 %v719, 16
      %v1071 = vor.u32 %v1068, %v1069
      %v1072 = vsel %vm729, %v1064, %v1071
      %v1073 = vrot.slane %v1068, 4
      %v1075 = vshrl.u32 %v720, 16
      %v1077 = vrot.slane %v1075, 7
      %v1078 = vshll.u32 %v720, 16
      %v1080 = vor.u32 %v1077, %v1078
      %v1081 = vsel %vm729, %v1073, %v1080
      %v1082 = vld [vmem:[%s3] sm:$0xf]
      %v1083 = vld [vmem:[%s3 + $0x4] sm:$0xf]
      %v1084 = vld [vmem:[%s3 + $0x8] sm:$0xf]
      %v1085 = vld [vmem:[%s3 + $0xc] sm:$0xf]
      %v1086 = vld [vmem:[%s3 + $0x10] sm:$0xf]
      %v1087 = vld [vmem:[%s3 + $0x14] sm:$0xf]
      %v1088 = vld [vmem:[%s3 + $0x18] sm:$0xf]
      %v1089 = vld [vmem:[%s3 + $0x1c] sm:$0xf]
      %v1090 = vld [vmem:[%s3 + $0x20] sm:$0xf]
      %v1091 = vld [vmem:[%s3 + $0x24] sm:$0xf]
      %v1092 = vld [vmem:[%s3 + $0x28] sm:$0xf]
      %v1093 = vld [vmem:[%s3 + $0x2c] sm:$0xf]
      %v1094 = vld [vmem:[%s3 + $0x30] sm:$0xf]
      %v1095 = vld [vmem:[%s3 + $0x34] sm:$0xf]
      %v1096 = vld [vmem:[%s3 + $0x38] sm:$0xf]
      %v1097 = vld [vmem:[%s3 + $0x3c] sm:$0xf]
      %v1099 = vshrl.u32 %v721, 16
      %v1101 = vrot.slane %v1099, 7
      %v1102 = vrot.slane %v1101, 4
      %v1104 = vshrl.u32 %v722, 16
      %v1106 = vrot.slane %v1104, 7
      %v1107 = vshll.u32 %v722, 16
      %v1109 = vor.u32 %v1106, %v1107
      %v1110 = vsel %vm729, %v1102, %v1109
      %v1111 = vrot.slane %v1106, 4
      %v1113 = vshrl.u32 %v723, 16
      %v1115 = vrot.slane %v1113, 7
      %v1116 = vshll.u32 %v723, 16
      %v1118 = vor.u32 %v1115, %v1116
      %v1119 = vsel %vm729, %v1111, %v1118
      %s1120 = scalar_lea.vmem %s3, 192
      %v1121 = vld [vmem:[%s1120] sm:$0xf]
      %v1122 = vld [vmem:[%s1120 + $0x4] sm:$0xf]
      %v1123 = vld [vmem:[%s1120 + $0x8] sm:$0xf]
      %v1124 = vld [vmem:[%s1120 + $0xc] sm:$0xf]
      %v1125 = vld [vmem:[%s1120 + $0x10] sm:$0xf]
      %v1126 = vld [vmem:[%s1120 + $0x14] sm:$0xf]
      %v1127 = vld [vmem:[%s1120 + $0x18] sm:$0xf]
      %v1128 = vld [vmem:[%s1120 + $0x1c] sm:$0xf]
      %v1129 = vld [vmem:[%s1120 + $0x20] sm:$0xf]
      %v1130 = vld [vmem:[%s1120 + $0x24] sm:$0xf]
      %v1131 = vld [vmem:[%s1120 + $0x28] sm:$0xf]
      %v1132 = vld [vmem:[%s1120 + $0x2c] sm:$0xf]
      %v1133 = vld [vmem:[%s1120 + $0x30] sm:$0xf]
      %v1134 = vld [vmem:[%s1120 + $0x34] sm:$0xf]
      %v1135 = vld [vmem:[%s1120 + $0x38] sm:$0xf]
      %v1136 = vld [vmem:[%s1120 + $0x3c] sm:$0xf]
      %v1137 = vunpack.c.l.b16 %v764
      %v1138 = vunpack.c.l.b16 %v773
      %v1139 = vunpack.c.l.b16 %v786
      %v1140 = vunpack.c.l.b16 %v795
      %v1141 = vunpack.c.l.b16 %v808
      %v1142 = vunpack.c.l.b16 %v817
      %v1143 = vunpack.c.l.b16 %v830
      %v1144 = vunpack.c.l.b16 %v839
      %v1145 = vunpack.c.l.b16 %v852
      %v1146 = vunpack.c.l.b16 %v861
      %v1147 = vunpack.c.l.b16 %v874
      %v1148 = vunpack.c.l.b16 %v883
      %v1149 = vunpack.c.l.b16 %v896
      %v1150 = vunpack.c.l.b16 %v905
      %v1151 = vunpack.c.l.b16 %v918
      %v1152 = vunpack.c.l.b16 %v927
      %v1153 = vunpack.c.l.b16 %v940
      %v1154 = vunpack.c.l.b16 %v949
      %v1155 = vunpack.c.l.b16 %v962
      %v1156 = vunpack.c.l.b16 %v971
      %v1157 = vunpack.c.l.b16 %v984
      %v1158 = vunpack.c.l.b16 %v993
      %v1159 = vunpack.c.l.b16 %v1006
      %v1160 = vunpack.c.l.b16 %v1015
      %v1161 = vunpack.c.l.b16 %v1028
      %v1162 = vunpack.c.l.b16 %v1037
      %v1163 = vunpack.c.l.b16 %v1050
      %v1164 = vunpack.c.l.b16 %v1059
      %v1165 = vunpack.c.l.b16 %v1072
      %v1166 = vunpack.c.l.b16 %v1081
      %v1167 = vunpack.c.l.b16 %v1110
      %v1168 = vunpack.c.l.b16 %v1119
      %v1169 = vpack.c.b16 %v1138, %v1137
      %v1170 = vpack.c.b16 %v1140, %v1139
      %v1171 = vpack.c.b16 %v1142, %v1141
      %v1172 = vpack.c.b16 %v1144, %v1143
      %v1173 = vpack.c.b16 %v1146, %v1145
      %v1174 = vpack.c.b16 %v1148, %v1147
      %v1175 = vpack.c.b16 %v1150, %v1149
      %v1176 = vpack.c.b16 %v1152, %v1151
      %v1177 = vpack.c.b16 %v1154, %v1153
      %v1178 = vpack.c.b16 %v1156, %v1155
      %v1179 = vpack.c.b16 %v1158, %v1157
      %v1180 = vpack.c.b16 %v1160, %v1159
      %v1181 = vpack.c.b16 %v1162, %v1161
      %v1182 = vpack.c.b16 %v1164, %v1163
      %v1183 = vpack.c.b16 %v1166, %v1165
      %v1184 = vpack.c.b16 %v1168, %v1167
      %v1217 = vunpack.c.l.b16 %v1121
      %v1218 = vunpack.c.l.b16 %v1122
      %v1219 = vunpack.c.l.b16 %v1123
      %v1220 = vunpack.c.l.b16 %v1124
      %v1221 = vunpack.c.l.b16 %v1125
      %v1222 = vunpack.c.l.b16 %v1126
      %v1223 = vunpack.c.l.b16 %v1127
      %v1224 = vunpack.c.l.b16 %v1128
      %v1225 = vunpack.c.l.b16 %v1129
      %v1226 = vunpack.c.l.b16 %v1130
      %v1227 = vunpack.c.l.b16 %v1131
      %v1228 = vunpack.c.l.b16 %v1132
      %v1229 = vunpack.c.l.b16 %v1133
      %v1230 = vunpack.c.l.b16 %v1134
      %v1231 = vunpack.c.l.b16 %v1135
      %v1232 = vunpack.c.l.b16 %v1136
      %v1233 = vpack.c.b16 %v1218, %v1217
      %v1234 = vpack.c.b16 %v1220, %v1219
      %v1235 = vpack.c.b16 %v1222, %v1221
      %v1236 = vpack.c.b16 %v1224, %v1223
      %v1237 = vpack.c.b16 %v1226, %v1225
      %v1238 = vpack.c.b16 %v1228, %v1227
      %v1239 = vpack.c.b16 %v1230, %v1229
      %v1240 = vpack.c.b16 %v1232, %v1231
      %1249 = vmatprep.subr.bf16.mxu0 0
      %1250 = vmatpush1.bf16.msra.mxu0 %v1240
      %1251 = vmatprep.subr.bf16.mxu0 0
      %1252 = vmatpush1.bf16.msra.mxu0 %v1239
      %1253 = vmatprep.subr.bf16.mxu0 0
      %1254 = vmatpush1.bf16.msra.mxu0 %v1238
      %1255 = vmatprep.subr.bf16.mxu0 0
      %1256 = vmatpush1.bf16.msra.mxu0 %v1237
      %1257 = vmatprep.subr.bf16.mxu0 0
      %1258 = vmatpush1.bf16.msra.mxu0 %v1236
      %1259 = vmatprep.subr.bf16.mxu0 0
      %1260 = vmatpush1.bf16.msra.mxu0 %v1235
      %1261 = vmatprep.subr.bf16.mxu0 0
      %1262 = vmatpush1.bf16.msra.mxu0 %v1234
      %1263 = vmatprep.subr.bf16.mxu0 0
      %1264 = vmatpush1.bf16.msra.mxu0 %v1233
      %1265 = vmatprep.subr.bf16.mxu0 0
      %1266 = vmatpush2.bf16.msra.mxu0 0
      %1267 = vmatprep.subr.bf16.mxu0 0
      %1268 = vmatpush2.bf16.msra.mxu0 0
      %1269 = vmatprep.subr.bf16.mxu0 0
      %1270 = vmatpush2.bf16.msra.mxu0 0
      %1271 = vmatprep.subr.bf16.mxu0 0
      %1272 = vmatpush2.bf16.msra.mxu0 0
      %1273 = vmatprep.subr.bf16.mxu0 0
      %1274 = vmatpush2.bf16.msra.mxu0 0
      %1275 = vmatprep.subr.bf16.mxu0 0
      %1276 = vmatpush2.bf16.msra.mxu0 0
      %1277 = vmatprep.subr.bf16.mxu0 0
      %1278 = vmatpush2.bf16.msra.mxu0 0
      %1279 = vmatprep.subr.bf16.mxu0 0
      %1280 = vmatpush2.bf16.msra.mxu0 0
      %1281 = vmatprep.mubr.bf16.mxu0 0
      %1282 = vmatmul.mubr.bf16.gmra.mxu0 %v1169
      %v1283 = vpop.f32.mrf.mxu0
      %v1284 = vadd.f32 0.0, %v1283
      %v1285 = vpop.f32.mrf.mxu0
      %v1286 = vpop.f32.mrf.mxu0
      %v1287 = vadd.f32 0.0, %v1286
      %v1288 = vpop.f32.mrf.mxu0
      %1289 = vmatprep.mubr.bf16.mxu0 0
      %1290 = vmatmul.mubr.bf16.gmra.mxu0 %v1170
      %v1291 = vpop.f32.mrf.mxu0
      %v1292 = vadd.f32 0.0, %v1291
      %v1293 = vpop.f32.mrf.mxu0
      %v1294 = vpop.f32.mrf.mxu0
      %v1295 = vadd.f32 0.0, %v1294
      %v1296 = vpop.f32.mrf.mxu0
      %1297 = vmatprep.mubr.bf16.mxu0 0
      %1298 = vmatmul.mubr.bf16.gmra.mxu0 %v1171
      %v1299 = vpop.f32.mrf.mxu0
      %v1300 = vadd.f32 0.0, %v1299
      %v1301 = vpop.f32.mrf.mxu0
      %v1302 = vpop.f32.mrf.mxu0
      %v1303 = vadd.f32 0.0, %v1302
      %v1304 = vpop.f32.mrf.mxu0
      %1305 = vmatprep.mubr.bf16.mxu0 0
      %1306 = vmatmul.mubr.bf16.gmra.mxu0 %v1172
      %v1307 = vpop.f32.mrf.mxu0
      %v1308 = vadd.f32 0.0, %v1307
      %v1309 = vpop.f32.mrf.mxu0
      %v1310 = vpop.f32.mrf.mxu0
      %v1311 = vadd.f32 0.0, %v1310
      %v1312 = vpop.f32.mrf.mxu0
      %1313 = vmatprep.mubr.bf16.mxu0 0
      %1314 = vmatmul.mubr.bf16.gmra.mxu0 %v1173
      %v1315 = vpop.f32.mrf.mxu0
      %v1316 = vadd.f32 0.0, %v1315
      %v1317 = vpop.f32.mrf.mxu0
      %v1318 = vpop.f32.mrf.mxu0
      %v1319 = vadd.f32 0.0, %v1318
      %v1320 = vpop.f32.mrf.mxu0
      %1321 = vmatprep.mubr.bf16.mxu0 0
      %1322 = vmatmul.mubr.bf16.gmra.mxu0 %v1174
      %v1323 = vpop.f32.mrf.mxu0
      %v1324 = vadd.f32 0.0, %v1323
      %v1325 = vpop.f32.mrf.mxu0
      %v1326 = vpop.f32.mrf.mxu0
      %v1327 = vadd.f32 0.0, %v1326
      %v1328 = vpop.f32.mrf.mxu0
      %1329 = vmatprep.mubr.bf16.mxu0 0
      %1330 = vmatmul.mubr.bf16.gmra.mxu0 %v1175
      %v1331 = vpop.f32.mrf.mxu0
      %v1332 = vadd.f32 0.0, %v1331
      %v1333 = vpop.f32.mrf.mxu0
      %v1334 = vpop.f32.mrf.mxu0
      %v1335 = vadd.f32 0.0, %v1334
      %v1336 = vpop.f32.mrf.mxu0
      %1337 = vmatprep.mubr.bf16.mxu0 0
      %1338 = vmatmul.mubr.bf16.gmra.mxu0 %v1176
      %v1339 = vpop.f32.mrf.mxu0
      %v1340 = vadd.f32 0.0, %v1339
      %v1341 = vpop.f32.mrf.mxu0
      %v1342 = vpop.f32.mrf.mxu0
      %v1343 = vadd.f32 0.0, %v1342
      %v1344 = vpop.f32.mrf.mxu0
      %1345 = vmatprep.mubr.bf16.mxu0 0
      %1346 = vmatmul.mubr.bf16.gmra.mxu0 %v1177
      %v1347 = vpop.f32.mrf.mxu0
      %v1348 = vadd.f32 0.0, %v1347
      %v1349 = vpop.f32.mrf.mxu0
      %v1350 = vpop.f32.mrf.mxu0
      %v1351 = vadd.f32 0.0, %v1350
      %v1352 = vpop.f32.mrf.mxu0
      %1353 = vmatprep.mubr.bf16.mxu0 0
      %1354 = vmatmul.mubr.bf16.gmra.mxu0 %v1178
      %v1355 = vpop.f32.mrf.mxu0
      %v1356 = vadd.f32 0.0, %v1355
      %v1357 = vpop.f32.mrf.mxu0
      %v1358 = vpop.f32.mrf.mxu0
      %v1359 = vadd.f32 0.0, %v1358
      %v1360 = vpop.f32.mrf.mxu0
      %1361 = vmatprep.mubr.bf16.mxu0 0
      %1362 = vmatmul.mubr.bf16.gmra.mxu0 %v1179
      %v1363 = vpop.f32.mrf.mxu0
      %v1364 = vadd.f32 0.0, %v1363
      %v1365 = vpop.f32.mrf.mxu0
      %v1366 = vpop.f32.mrf.mxu0
      %v1367 = vadd.f32 0.0, %v1366
      %v1368 = vpop.f32.mrf.mxu0
      %1369 = vmatprep.mubr.bf16.mxu0 0
      %1370 = vmatmul.mubr.bf16.gmra.mxu0 %v1180
      %v1371 = vpop.f32.mrf.mxu0
      %v1372 = vadd.f32 0.0, %v1371
      %v1373 = vpop.f32.mrf.mxu0
      %v1374 = vpop.f32.mrf.mxu0
      %v1375 = vadd.f32 0.0, %v1374
      %v1376 = vpop.f32.mrf.mxu0
      %1377 = vmatprep.mubr.bf16.mxu0 0
      %1378 = vmatmul.mubr.bf16.gmra.mxu0 %v1181
      %v1379 = vpop.f32.mrf.mxu0
      %v1380 = vadd.f32 0.0, %v1379
      %v1381 = vpop.f32.mrf.mxu0
      %v1382 = vpop.f32.mrf.mxu0
      %v1383 = vadd.f32 0.0, %v1382
      %v1384 = vpop.f32.mrf.mxu0
      %1385 = vmatprep.mubr.bf16.mxu0 0
      %1386 = vmatmul.mubr.bf16.gmra.mxu0 %v1182
      %v1387 = vpop.f32.mrf.mxu0
      %v1388 = vadd.f32 0.0, %v1387
      %v1389 = vpop.f32.mrf.mxu0
      %v1390 = vpop.f32.mrf.mxu0
      %v1391 = vadd.f32 0.0, %v1390
      %v1392 = vpop.f32.mrf.mxu0
      %1393 = vmatprep.mubr.bf16.mxu0 0
      %1394 = vmatmul.mubr.bf16.gmra.mxu0 %v1183
      %v1395 = vpop.f32.mrf.mxu0
      %v1396 = vadd.f32 0.0, %v1395
      %v1397 = vpop.f32.mrf.mxu0
      %v1398 = vpop.f32.mrf.mxu0
      %v1399 = vadd.f32 0.0, %v1398
      %v1400 = vpop.f32.mrf.mxu0
      %1401 = vmatprep.mubr.bf16.mxu0 0
      %1402 = vmatmul.mubr.bf16.gmra.mxu0 %v1184
      %v1403 = vpop.f32.mrf.mxu0
      %v1404 = vadd.f32 0.0, %v1403
      %v1405 = vpop.f32.mrf.mxu0
      %v1406 = vpop.f32.mrf.mxu0
      %v1407 = vadd.f32 0.0, %v1406
      %v1408 = vpop.f32.mrf.mxu0
      %1409 = vdwg.mxu0
      %v1410 = vunpack.c.l.b16 %v742
      %v1411 = vunpack.c.l.b16 %v751
      %v1412 = vpack.c.b16 %v1411, %v1410
      %v1430 = vunpack.c.l.b16 %v1082
      %v1431 = vunpack.c.l.b16 %v1083
      %v1432 = vunpack.c.l.b16 %v1084
      %v1433 = vunpack.c.l.b16 %v1085
      %v1434 = vunpack.c.l.b16 %v1086
      %v1435 = vunpack.c.l.b16 %v1087
      %v1436 = vunpack.c.l.b16 %v1088
      %v1437 = vunpack.c.l.b16 %v1089
      %v1438 = vunpack.c.l.b16 %v1090
      %v1439 = vunpack.c.l.b16 %v1091
      %v1440 = vunpack.c.l.b16 %v1092
      %v1441 = vunpack.c.l.b16 %v1093
      %v1442 = vunpack.c.l.b16 %v1094
      %v1443 = vunpack.c.l.b16 %v1095
      %v1444 = vunpack.c.l.b16 %v1096
      %v1445 = vunpack.c.l.b16 %v1097
      %v1446 = vpack.c.b16 %v1431, %v1430
      %v1447 = vpack.c.b16 %v1433, %v1432
      %v1448 = vpack.c.b16 %v1435, %v1434
      %v1449 = vpack.c.b16 %v1437, %v1436
      %v1450 = vpack.c.b16 %v1439, %v1438
      %v1451 = vpack.c.b16 %v1441, %v1440
      %v1452 = vpack.c.b16 %v1443, %v1442
      %v1453 = vpack.c.b16 %v1445, %v1444
      %1462 = vmatprep.subr.bf16.mxu0 0
      %1463 = vmatpush1.bf16.msra.mxu0 %v1453
      %1464 = vmatprep.subr.bf16.mxu0 0
      %1465 = vmatpush1.bf16.msra.mxu0 %v1452
      %1466 = vmatprep.subr.bf16.mxu0 0
      %1467 = vmatpush1.bf16.msra.mxu0 %v1451
      %1468 = vmatprep.subr.bf16.mxu0 0
      %1469 = vmatpush1.bf16.msra.mxu0 %v1450
      %1470 = vmatprep.subr.bf16.mxu0 0
      %1471 = vmatpush1.bf16.msra.mxu0 %v1449
      %1472 = vmatprep.subr.bf16.mxu0 0
      %1473 = vmatpush1.bf16.msra.mxu0 %v1448
      %1474 = vmatprep.subr.bf16.mxu0 0
      %1475 = vmatpush1.bf16.msra.mxu0 %v1447
      %1476 = vmatprep.subr.bf16.mxu0 0
      %1477 = vmatpush1.bf16.msra.mxu0 %v1446
      %1478 = vmatprep.subr.bf16.mxu0 0
      %1479 = vmatpush2.bf16.msra.mxu0 0
      %1480 = vmatprep.subr.bf16.mxu0 0
      %1481 = vmatpush2.bf16.msra.mxu0 0
      %1482 = vmatprep.subr.bf16.mxu0 0
      %1483 = vmatpush2.bf16.msra.mxu0 0
      %1484 = vmatprep.subr.bf16.mxu0 0
      %1485 = vmatpush2.bf16.msra.mxu0 0
      %1486 = vmatprep.subr.bf16.mxu0 0
      %1487 = vmatpush2.bf16.msra.mxu0 0
      %1488 = vmatprep.subr.bf16.mxu0 0
      %1489 = vmatpush2.bf16.msra.mxu0 0
      %1490 = vmatprep.subr.bf16.mxu0 0
      %1491 = vmatpush2.bf16.msra.mxu0 0
      %1492 = vmatprep.subr.bf16.mxu0 0
      %1493 = vmatpush2.bf16.msra.mxu0 0
      %1494 = vmatprep.mubr.bf16.mxu0 0
      %1495 = vmatmul.mubr.bf16.gmra.mxu0 %v1412
      %v1496 = vpop.f32.mrf.mxu0
      %v1497 = vadd.f32 %v1284, %v1496
      %v1498 = vpop.f32.mrf.mxu0
      %v1499 = vpop.f32.mrf.mxu0
      %v1500 = vadd.f32 %v1287, %v1499
      %v1501 = vpop.f32.mrf.mxu0
      %1502 = vmatprep.mubr.bf16.mxu0 0
      %1503 = vmatmul.mubr.bf16.gmra.mxu0 %v1169
      %v1504 = vpop.f32.mrf.mxu0
      %v1505 = vadd.f32 %v1292, %v1504
      %v1506 = vpop.f32.mrf.mxu0
      %v1507 = vpop.f32.mrf.mxu0
      %v1508 = vadd.f32 %v1295, %v1507
      %v1509 = vpop.f32.mrf.mxu0
      %1510 = vmatprep.mubr.bf16.mxu0 0
      %1511 = vmatmul.mubr.bf16.gmra.mxu0 %v1170
      %v1512 = vpop.f32.mrf.mxu0
      %v1513 = vadd.f32 %v1300, %v1512
      %v1514 = vpop.f32.mrf.mxu0
      %v1515 = vpop.f32.mrf.mxu0
      %v1516 = vadd.f32 %v1303, %v1515
      %v1517 = vpop.f32.mrf.mxu0
      %1518 = vmatprep.mubr.bf16.mxu0 0
      %1519 = vmatmul.mubr.bf16.gmra.mxu0 %v1171
      %v1520 = vpop.f32.mrf.mxu0
      %v1521 = vadd.f32 %v1308, %v1520
      %v1522 = vpop.f32.mrf.mxu0
      %v1523 = vpop.f32.mrf.mxu0
      %v1524 = vadd.f32 %v1311, %v1523
      %v1525 = vpop.f32.mrf.mxu0
      %1526 = vmatprep.mubr.bf16.mxu0 0
      %1527 = vmatmul.mubr.bf16.gmra.mxu0 %v1172
      %v1528 = vpop.f32.mrf.mxu0
      %v1529 = vadd.f32 %v1316, %v1528
      %v1530 = vpop.f32.mrf.mxu0
      %v1531 = vpop.f32.mrf.mxu0
      %v1532 = vadd.f32 %v1319, %v1531
      %v1533 = vpop.f32.mrf.mxu0
      %1534 = vmatprep.mubr.bf16.mxu0 0
      %1535 = vmatmul.mubr.bf16.gmra.mxu0 %v1173
      %v1536 = vpop.f32.mrf.mxu0
      %v1537 = vadd.f32 %v1324, %v1536
      %v1538 = vpop.f32.mrf.mxu0
      %v1539 = vpop.f32.mrf.mxu0
      %v1540 = vadd.f32 %v1327, %v1539
      %v1541 = vpop.f32.mrf.mxu0
      %1542 = vmatprep.mubr.bf16.mxu0 0
      %1543 = vmatmul.mubr.bf16.gmra.mxu0 %v1174
      %v1544 = vpop.f32.mrf.mxu0
      %v1545 = vadd.f32 %v1332, %v1544
      %v1546 = vpop.f32.mrf.mxu0
      %v1547 = vpop.f32.mrf.mxu0
      %v1548 = vadd.f32 %v1335, %v1547
      %v1549 = vpop.f32.mrf.mxu0
      %1550 = vmatprep.mubr.bf16.mxu0 0
      %1551 = vmatmul.mubr.bf16.gmra.mxu0 %v1175
      %v1552 = vpop.f32.mrf.mxu0
      %v1553 = vadd.f32 %v1340, %v1552
      %v1554 = vpop.f32.mrf.mxu0
      %v1555 = vpop.f32.mrf.mxu0
      %v1556 = vadd.f32 %v1343, %v1555
      %v1557 = vpop.f32.mrf.mxu0
      %1558 = vmatprep.mubr.bf16.mxu0 0
      %1559 = vmatmul.mubr.bf16.gmra.mxu0 %v1176
      %v1560 = vpop.f32.mrf.mxu0
      %v1561 = vadd.f32 %v1348, %v1560
      %v1562 = vpop.f32.mrf.mxu0
      %v1563 = vpop.f32.mrf.mxu0
      %v1564 = vadd.f32 %v1351, %v1563
      %v1565 = vpop.f32.mrf.mxu0
      %1566 = vmatprep.mubr.bf16.mxu0 0
      %1567 = vmatmul.mubr.bf16.gmra.mxu0 %v1177
      %v1568 = vpop.f32.mrf.mxu0
      %v1569 = vadd.f32 %v1356, %v1568
      %v1570 = vpop.f32.mrf.mxu0
      %v1571 = vpop.f32.mrf.mxu0
      %v1572 = vadd.f32 %v1359, %v1571
      %v1573 = vpop.f32.mrf.mxu0
      %1574 = vmatprep.mubr.bf16.mxu0 0
      %1575 = vmatmul.mubr.bf16.gmra.mxu0 %v1178
      %v1576 = vpop.f32.mrf.mxu0
      %v1577 = vadd.f32 %v1364, %v1576
      %v1578 = vpop.f32.mrf.mxu0
      %v1579 = vpop.f32.mrf.mxu0
      %v1580 = vadd.f32 %v1367, %v1579
      %v1581 = vpop.f32.mrf.mxu0
      %1582 = vmatprep.mubr.bf16.mxu0 0
      %1583 = vmatmul.mubr.bf16.gmra.mxu0 %v1179
      %v1584 = vpop.f32.mrf.mxu0
      %v1585 = vadd.f32 %v1372, %v1584
      %v1586 = vpop.f32.mrf.mxu0
      %v1587 = vpop.f32.mrf.mxu0
      %v1588 = vadd.f32 %v1375, %v1587
      %v1589 = vpop.f32.mrf.mxu0
      %1590 = vmatprep.mubr.bf16.mxu0 0
      %1591 = vmatmul.mubr.bf16.gmra.mxu0 %v1180
      %v1592 = vpop.f32.mrf.mxu0
      %v1593 = vadd.f32 %v1380, %v1592
      %v1594 = vpop.f32.mrf.mxu0
      %v1595 = vpop.f32.mrf.mxu0
      %v1596 = vadd.f32 %v1383, %v1595
      %v1597 = vpop.f32.mrf.mxu0
      %1598 = vmatprep.mubr.bf16.mxu0 0
      %1599 = vmatmul.mubr.bf16.gmra.mxu0 %v1181
      %v1600 = vpop.f32.mrf.mxu0
      %v1601 = vadd.f32 %v1388, %v1600
      %v1602 = vpop.f32.mrf.mxu0
      %v1603 = vpop.f32.mrf.mxu0
      %v1604 = vadd.f32 %v1391, %v1603
      %v1605 = vpop.f32.mrf.mxu0
      %1606 = vmatprep.mubr.bf16.mxu0 0
      %1607 = vmatmul.mubr.bf16.gmra.mxu0 %v1182
      %v1608 = vpop.f32.mrf.mxu0
      %v1609 = vadd.f32 %v1396, %v1608
      %v1610 = vpop.f32.mrf.mxu0
      %v1611 = vpop.f32.mrf.mxu0
      %v1612 = vadd.f32 %v1399, %v1611
      %v1613 = vpop.f32.mrf.mxu0
      %1614 = vmatprep.mubr.bf16.mxu0 0
      %1615 = vmatmul.mubr.bf16.gmra.mxu0 %v1183
      %v1616 = vpop.f32.mrf.mxu0
      %v1617 = vadd.f32 %v1404, %v1616
      %v1618 = vpop.f32.mrf.mxu0
      %v1619 = vpop.f32.mrf.mxu0
      %v1620 = vadd.f32 %v1407, %v1619
      %v1621 = vpop.f32.mrf.mxu0
      %1622 = vdwg.mxu0
      %v1624 = vshrl.u32 %v724, 16
      %v1626 = vrot.slane %v1624, 7
      %v1627 = vrot.slane %v1626, 4
      %v1629 = vshrl.u32 %v725, 16
      %v1631 = vrot.slane %v1629, 7
      %v1632 = vshll.u32 %v725, 16
      %v1634 = vor.u32 %v1631, %v1632
      %v1635 = vsel %vm729, %v1627, %v1634
      %v1636 = vrot.slane %v1631, 4
      %v1638 = vshrl.u32 %v726, 16
      %v1640 = vrot.slane %v1638, 7
      %v1641 = vshll.u32 %v726, 16
      %v1643 = vor.u32 %v1640, %v1641
      %v1644 = vsel %vm729, %v1636, %v1643
      %s1645 = scalar_lea.vmem %s3, 384
      %v1646 = vld [vmem:[%s1645] sm:$0xf]
      %v1647 = vld [vmem:[%s1645 + $0x4] sm:$0xf]
      %v1648 = vld [vmem:[%s1645 + $0x8] sm:$0xf]
      %v1649 = vld [vmem:[%s1645 + $0xc] sm:$0xf]
      %v1650 = vld [vmem:[%s1645 + $0x10] sm:$0xf]
      %v1651 = vld [vmem:[%s1645 + $0x14] sm:$0xf]
      %v1652 = vld [vmem:[%s1645 + $0x18] sm:$0xf]
      %v1653 = vld [vmem:[%s1645 + $0x1c] sm:$0xf]
      %v1654 = vld [vmem:[%s1645 + $0x20] sm:$0xf]
      %v1655 = vld [vmem:[%s1645 + $0x24] sm:$0xf]
      %v1656 = vld [vmem:[%s1645 + $0x28] sm:$0xf]
      %v1657 = vld [vmem:[%s1645 + $0x2c] sm:$0xf]
      %v1658 = vld [vmem:[%s1645 + $0x30] sm:$0xf]
      %v1659 = vld [vmem:[%s1645 + $0x34] sm:$0xf]
      %v1660 = vld [vmem:[%s1645 + $0x38] sm:$0xf]
      %v1661 = vld [vmem:[%s1645 + $0x3c] sm:$0xf]
      %v1662 = vunpack.c.l.b16 %v1635
      %v1663 = vunpack.c.l.b16 %v1644
      %v1664 = vpack.c.b16 %v1663, %v1662
      %v1682 = vunpack.c.l.b16 %v1646
      %v1683 = vunpack.c.l.b16 %v1647
      %v1684 = vunpack.c.l.b16 %v1648
      %v1685 = vunpack.c.l.b16 %v1649
      %v1686 = vunpack.c.l.b16 %v1650
      %v1687 = vunpack.c.l.b16 %v1651
      %v1688 = vunpack.c.l.b16 %v1652
      %v1689 = vunpack.c.l.b16 %v1653
      %v1690 = vunpack.c.l.b16 %v1654
      %v1691 = vunpack.c.l.b16 %v1655
      %v1692 = vunpack.c.l.b16 %v1656
      %v1693 = vunpack.c.l.b16 %v1657
      %v1694 = vunpack.c.l.b16 %v1658
      %v1695 = vunpack.c.l.b16 %v1659
      %v1696 = vunpack.c.l.b16 %v1660
      %v1697 = vunpack.c.l.b16 %v1661
      %v1698 = vpack.c.b16 %v1683, %v1682
      %v1699 = vpack.c.b16 %v1685, %v1684
      %v1700 = vpack.c.b16 %v1687, %v1686
      %v1701 = vpack.c.b16 %v1689, %v1688
      %v1702 = vpack.c.b16 %v1691, %v1690
      %v1703 = vpack.c.b16 %v1693, %v1692
      %v1704 = vpack.c.b16 %v1695, %v1694
      %v1705 = vpack.c.b16 %v1697, %v1696
      %1714 = vmatprep.subr.bf16.mxu0 0
      %1715 = vmatpush1.bf16.msra.mxu0 %v1705
      %1716 = vmatprep.subr.bf16.mxu0 0
      %1717 = vmatpush1.bf16.msra.mxu0 %v1704
      %1718 = vmatprep.subr.bf16.mxu0 0
      %1719 = vmatpush1.bf16.msra.mxu0 %v1703
      %1720 = vmatprep.subr.bf16.mxu0 0
      %1721 = vmatpush1.bf16.msra.mxu0 %v1702
      %1722 = vmatprep.subr.bf16.mxu0 0
      %1723 = vmatpush1.bf16.msra.mxu0 %v1701
      %1724 = vmatprep.subr.bf16.mxu0 0
      %1725 = vmatpush1.bf16.msra.mxu0 %v1700
      %1726 = vmatprep.subr.bf16.mxu0 0
      %1727 = vmatpush1.bf16.msra.mxu0 %v1699
      %1728 = vmatprep.subr.bf16.mxu0 0
      %1729 = vmatpush1.bf16.msra.mxu0 %v1698
      %1730 = vmatprep.subr.bf16.mxu0 0
      %1731 = vmatpush2.bf16.msra.mxu0 0
      %1732 = vmatprep.subr.bf16.mxu0 0
      %1733 = vmatpush2.bf16.msra.mxu0 0
      %1734 = vmatprep.subr.bf16.mxu0 0
      %1735 = vmatpush2.bf16.msra.mxu0 0
      %1736 = vmatprep.subr.bf16.mxu0 0
      %1737 = vmatpush2.bf16.msra.mxu0 0
      %1738 = vmatprep.subr.bf16.mxu0 0
      %1739 = vmatpush2.bf16.msra.mxu0 0
      %1740 = vmatprep.subr.bf16.mxu0 0
      %1741 = vmatpush2.bf16.msra.mxu0 0
      %1742 = vmatprep.subr.bf16.mxu0 0
      %1743 = vmatpush2.bf16.msra.mxu0 0
      %1744 = vmatprep.subr.bf16.mxu0 0
      %1745 = vmatpush2.bf16.msra.mxu0 0
      %1746 = vmatprep.mubr.bf16.mxu0 0
      %1747 = vmatmul.mubr.bf16.gmra.mxu0 %v1170
      %v1748 = vpop.f32.mrf.mxu0
      %v1749 = vadd.f32 0.0, %v1748
      %v1750 = vpop.f32.mrf.mxu0
      %v1751 = vpop.f32.mrf.mxu0
      %v1752 = vadd.f32 0.0, %v1751
      %v1753 = vpop.f32.mrf.mxu0
      %1754 = vmatprep.mubr.bf16.mxu0 0
      %1755 = vmatmul.mubr.bf16.gmra.mxu0 %v1171
      %v1756 = vpop.f32.mrf.mxu0
      %v1757 = vadd.f32 0.0, %v1756
      %v1758 = vpop.f32.mrf.mxu0
      %v1759 = vpop.f32.mrf.mxu0
      %v1760 = vadd.f32 0.0, %v1759
      %v1761 = vpop.f32.mrf.mxu0
      %1762 = vmatprep.mubr.bf16.mxu0 0
      %1763 = vmatmul.mubr.bf16.gmra.mxu0 %v1172
      %v1764 = vpop.f32.mrf.mxu0
      %v1765 = vadd.f32 0.0, %v1764
      %v1766 = vpop.f32.mrf.mxu0
      %v1767 = vpop.f32.mrf.mxu0
      %v1768 = vadd.f32 0.0, %v1767
      %v1769 = vpop.f32.mrf.mxu0
      %1770 = vmatprep.mubr.bf16.mxu0 0
      %1771 = vmatmul.mubr.bf16.gmra.mxu0 %v1173
      %v1772 = vpop.f32.mrf.mxu0
      %v1773 = vadd.f32 0.0, %v1772
      %v1774 = vpop.f32.mrf.mxu0
      %v1775 = vpop.f32.mrf.mxu0
      %v1776 = vadd.f32 0.0, %v1775
      %v1777 = vpop.f32.mrf.mxu0
      %1778 = vmatprep.mubr.bf16.mxu0 0
      %1779 = vmatmul.mubr.bf16.gmra.mxu0 %v1174
      %v1780 = vpop.f32.mrf.mxu0
      %v1781 = vadd.f32 0.0, %v1780
      %v1782 = vpop.f32.mrf.mxu0
      %v1783 = vpop.f32.mrf.mxu0
      %v1784 = vadd.f32 0.0, %v1783
      %v1785 = vpop.f32.mrf.mxu0
      %1786 = vmatprep.mubr.bf16.mxu0 0
      %1787 = vmatmul.mubr.bf16.gmra.mxu0 %v1175
      %v1788 = vpop.f32.mrf.mxu0
      %v1789 = vadd.f32 0.0, %v1788
      %v1790 = vpop.f32.mrf.mxu0
      %v1791 = vpop.f32.mrf.mxu0
      %v1792 = vadd.f32 0.0, %v1791
      %v1793 = vpop.f32.mrf.mxu0
      %1794 = vmatprep.mubr.bf16.mxu0 0
      %1795 = vmatmul.mubr.bf16.gmra.mxu0 %v1176
      %v1796 = vpop.f32.mrf.mxu0
      %v1797 = vadd.f32 0.0, %v1796
      %v1798 = vpop.f32.mrf.mxu0
      %v1799 = vpop.f32.mrf.mxu0
      %v1800 = vadd.f32 0.0, %v1799
      %v1801 = vpop.f32.mrf.mxu0
      %1802 = vmatprep.mubr.bf16.mxu0 0
      %1803 = vmatmul.mubr.bf16.gmra.mxu0 %v1177
      %v1804 = vpop.f32.mrf.mxu0
      %v1805 = vadd.f32 0.0, %v1804
      %v1806 = vpop.f32.mrf.mxu0
      %v1807 = vpop.f32.mrf.mxu0
      %v1808 = vadd.f32 0.0, %v1807
      %v1809 = vpop.f32.mrf.mxu0
      %1810 = vmatprep.mubr.bf16.mxu0 0
      %1811 = vmatmul.mubr.bf16.gmra.mxu0 %v1178
      %v1812 = vpop.f32.mrf.mxu0
      %v1813 = vadd.f32 0.0, %v1812
      %v1814 = vpop.f32.mrf.mxu0
      %v1815 = vpop.f32.mrf.mxu0
      %v1816 = vadd.f32 0.0, %v1815
      %v1817 = vpop.f32.mrf.mxu0
      %1818 = vmatprep.mubr.bf16.mxu0 0
      %1819 = vmatmul.mubr.bf16.gmra.mxu0 %v1179
      %v1820 = vpop.f32.mrf.mxu0
      %v1821 = vadd.f32 0.0, %v1820
      %v1822 = vpop.f32.mrf.mxu0
      %v1823 = vpop.f32.mrf.mxu0
      %v1824 = vadd.f32 0.0, %v1823
      %v1825 = vpop.f32.mrf.mxu0
      %1826 = vmatprep.mubr.bf16.mxu0 0
      %1827 = vmatmul.mubr.bf16.gmra.mxu0 %v1180
      %v1828 = vpop.f32.mrf.mxu0
      %v1829 = vadd.f32 0.0, %v1828
      %v1830 = vpop.f32.mrf.mxu0
      %v1831 = vpop.f32.mrf.mxu0
      %v1832 = vadd.f32 0.0, %v1831
      %v1833 = vpop.f32.mrf.mxu0
      %1834 = vmatprep.mubr.bf16.mxu0 0
      %1835 = vmatmul.mubr.bf16.gmra.mxu0 %v1181
      %v1836 = vpop.f32.mrf.mxu0
      %v1837 = vadd.f32 0.0, %v1836
      %v1838 = vpop.f32.mrf.mxu0
      %v1839 = vpop.f32.mrf.mxu0
      %v1840 = vadd.f32 0.0, %v1839
      %v1841 = vpop.f32.mrf.mxu0
      %1842 = vmatprep.mubr.bf16.mxu0 0
      %1843 = vmatmul.mubr.bf16.gmra.mxu0 %v1182
      %v1844 = vpop.f32.mrf.mxu0
      %v1845 = vadd.f32 0.0, %v1844
      %v1846 = vpop.f32.mrf.mxu0
      %v1847 = vpop.f32.mrf.mxu0
      %v1848 = vadd.f32 0.0, %v1847
      %v1849 = vpop.f32.mrf.mxu0
      %1850 = vmatprep.mubr.bf16.mxu0 0
      %1851 = vmatmul.mubr.bf16.gmra.mxu0 %v1183
      %v1852 = vpop.f32.mrf.mxu0
      %v1853 = vadd.f32 0.0, %v1852
      %v1854 = vpop.f32.mrf.mxu0
      %v1855 = vpop.f32.mrf.mxu0
      %v1856 = vadd.f32 0.0, %v1855
      %v1857 = vpop.f32.mrf.mxu0
      %1858 = vmatprep.mubr.bf16.mxu0 0
      %1859 = vmatmul.mubr.bf16.gmra.mxu0 %v1184
      %v1860 = vpop.f32.mrf.mxu0
      %v1861 = vadd.f32 0.0, %v1860
      %v1862 = vpop.f32.mrf.mxu0
      %v1863 = vpop.f32.mrf.mxu0
      %v1864 = vadd.f32 0.0, %v1863
      %v1865 = vpop.f32.mrf.mxu0
      %1866 = vmatprep.mubr.bf16.mxu0 0
      %1867 = vmatmul.mubr.bf16.gmra.mxu0 %v1664
      %v1868 = vpop.f32.mrf.mxu0
      %v1869 = vadd.f32 0.0, %v1868
      %v1870 = vpop.f32.mrf.mxu0
      %v1871 = vpop.f32.mrf.mxu0
      %v1872 = vadd.f32 0.0, %v1871
      %v1873 = vpop.f32.mrf.mxu0
      %1874 = vdwg.mxu0
      %v1875 = vadd.f32 %v1497, %v1749
      %v1876 = vadd.f32 %v1500, %v1752
      %v1877 = vadd.f32 %v1505, %v1757
      %v1878 = vadd.f32 %v1508, %v1760
      %v1879 = vadd.f32 %v1513, %v1765
      %v1880 = vadd.f32 %v1516, %v1768
      %v1881 = vadd.f32 %v1521, %v1773
      %v1882 = vadd.f32 %v1524, %v1776
      %v1883 = vadd.f32 %v1529, %v1781
      %v1884 = vadd.f32 %v1532, %v1784
      %v1885 = vadd.f32 %v1537, %v1789
      %v1886 = vadd.f32 %v1540, %v1792
      %v1887 = vadd.f32 %v1545, %v1797
      %v1888 = vadd.f32 %v1548, %v1800
      %v1889 = vadd.f32 %v1553, %v1805
      %v1890 = vadd.f32 %v1556, %v1808
      %v1891 = vadd.f32 %v1561, %v1813
      %v1892 = vadd.f32 %v1564, %v1816
      %v1893 = vadd.f32 %v1569, %v1821
      %v1894 = vadd.f32 %v1572, %v1824
      %v1895 = vadd.f32 %v1577, %v1829
      %v1896 = vadd.f32 %v1580, %v1832
      %v1897 = vadd.f32 %v1585, %v1837
      %v1898 = vadd.f32 %v1588, %v1840
      %v1899 = vadd.f32 %v1593, %v1845
      %v1900 = vadd.f32 %v1596, %v1848
      %v1901 = vadd.f32 %v1601, %v1853
      %v1902 = vadd.f32 %v1604, %v1856
      %v1903 = vadd.f32 %v1609, %v1861
      %v1904 = vadd.f32 %v1612, %v1864
      %v1905 = vadd.f32 %v1617, %v1869
      %v1906 = vadd.f32 %v1620, %v1872
      %s1907 = scalar_lea.vmem %s3, 64
      %v1908 = vld [vmem:[%s1907] sm:$0xf]
      %v1909 = vld [vmem:[%s1907 + $0x4] sm:$0xf]
      %v1910 = vld [vmem:[%s1907 + $0x8] sm:$0xf]
      %v1911 = vld [vmem:[%s1907 + $0xc] sm:$0xf]
      %v1912 = vld [vmem:[%s1907 + $0x10] sm:$0xf]
      %v1913 = vld [vmem:[%s1907 + $0x14] sm:$0xf]
      %v1914 = vld [vmem:[%s1907 + $0x18] sm:$0xf]
      %v1915 = vld [vmem:[%s1907 + $0x1c] sm:$0xf]
      %v1916 = vld [vmem:[%s1907 + $0x20] sm:$0xf]
      %v1917 = vld [vmem:[%s1907 + $0x24] sm:$0xf]
      %v1918 = vld [vmem:[%s1907 + $0x28] sm:$0xf]
      %v1919 = vld [vmem:[%s1907 + $0x2c] sm:$0xf]
      %v1920 = vld [vmem:[%s1907 + $0x30] sm:$0xf]
      %v1921 = vld [vmem:[%s1907 + $0x34] sm:$0xf]
      %v1922 = vld [vmem:[%s1907 + $0x38] sm:$0xf]
      %v1923 = vld [vmem:[%s1907 + $0x3c] sm:$0xf]
      %v1956 = vunpack.c.l.b16 %v674
      %v1957 = vunpack.c.l.b16 %v675
      %v1958 = vunpack.c.l.b16 %v677
      %v1959 = vunpack.c.l.b16 %v678
      %v1960 = vunpack.c.l.b16 %v680
      %v1961 = vunpack.c.l.b16 %v681
      %v1962 = vunpack.c.l.b16 %v683
      %v1963 = vunpack.c.l.b16 %v684
      %v1964 = vunpack.c.l.b16 %v686
      %v1965 = vunpack.c.l.b16 %v687
      %v1966 = vunpack.c.l.b16 %v689
      %v1967 = vunpack.c.l.b16 %v690
      %v1968 = vunpack.c.l.b16 %v692
      %v1969 = vunpack.c.l.b16 %v693
      %v1970 = vunpack.c.l.b16 %v695
      %v1971 = vunpack.c.l.b16 %v696
      %v1972 = vunpack.c.l.b16 %v698
      %v1973 = vunpack.c.l.b16 %v699
      %v1974 = vunpack.c.l.b16 %v701
      %v1975 = vunpack.c.l.b16 %v702
      %v1976 = vunpack.c.l.b16 %v704
      %v1977 = vunpack.c.l.b16 %v705
      %v1978 = vunpack.c.l.b16 %v707
      %v1979 = vunpack.c.l.b16 %v708
      %v1980 = vunpack.c.l.b16 %v710
      %v1981 = vunpack.c.l.b16 %v711
      %v1982 = vunpack.c.l.b16 %v713
      %v1983 = vunpack.c.l.b16 %v714
      %v1984 = vunpack.c.l.b16 %v716
      %v1985 = vunpack.c.l.b16 %v717
      %v1986 = vunpack.c.l.b16 %v719
      %v1987 = vunpack.c.l.b16 %v720
      %v1988 = vpack.c.b16 %v1957, %v1956
      %v1989 = vpack.c.b16 %v1959, %v1958
      %v1990 = vpack.c.b16 %v1961, %v1960
      %v1991 = vpack.c.b16 %v1963, %v1962
      %v1992 = vpack.c.b16 %v1965, %v1964
      %v1993 = vpack.c.b16 %v1967, %v1966
      %v1994 = vpack.c.b16 %v1969, %v1968
      %v1995 = vpack.c.b16 %v1971, %v1970
      %v1996 = vpack.c.b16 %v1973, %v1972
      %v1997 = vpack.c.b16 %v1975, %v1974
      %v1998 = vpack.c.b16 %v1977, %v1976
      %v1999 = vpack.c.b16 %v1979, %v1978
      %v2000 = vpack.c.b16 %v1981, %v1980
      %v2001 = vpack.c.b16 %v1983, %v1982
      %v2002 = vpack.c.b16 %v1985, %v1984
      %v2003 = vpack.c.b16 %v1987, %v1986
      %v2036 = vunpack.c.l.b16 %v1908
      %v2037 = vunpack.c.l.b16 %v1909
      %v2038 = vunpack.c.l.b16 %v1910
      %v2039 = vunpack.c.l.b16 %v1911
      %v2040 = vunpack.c.l.b16 %v1912
      %v2041 = vunpack.c.l.b16 %v1913
      %v2042 = vunpack.c.l.b16 %v1914
      %v2043 = vunpack.c.l.b16 %v1915
      %v2044 = vunpack.c.l.b16 %v1916
      %v2045 = vunpack.c.l.b16 %v1917
      %v2046 = vunpack.c.l.b16 %v1918
      %v2047 = vunpack.c.l.b16 %v1919
      %v2048 = vunpack.c.l.b16 %v1920
      %v2049 = vunpack.c.l.b16 %v1921
      %v2050 = vunpack.c.l.b16 %v1922
      %v2051 = vunpack.c.l.b16 %v1923
      %v2052 = vpack.c.b16 %v2037, %v2036
      %v2053 = vpack.c.b16 %v2039, %v2038
      %v2054 = vpack.c.b16 %v2041, %v2040
      %v2055 = vpack.c.b16 %v2043, %v2042
      %v2056 = vpack.c.b16 %v2045, %v2044
      %v2057 = vpack.c.b16 %v2047, %v2046
      %v2058 = vpack.c.b16 %v2049, %v2048
      %v2059 = vpack.c.b16 %v2051, %v2050
      %2068 = vmatprep.subr.bf16.mxu0 0
      %2069 = vmatpush1.bf16.msra.mxu0 %v2059
      %2070 = vmatprep.subr.bf16.mxu0 0
      %2071 = vmatpush1.bf16.msra.mxu0 %v2058
      %2072 = vmatprep.subr.bf16.mxu0 0
      %2073 = vmatpush1.bf16.msra.mxu0 %v2057
      %2074 = vmatprep.subr.bf16.mxu0 0
      %2075 = vmatpush1.bf16.msra.mxu0 %v2056
      %2076 = vmatprep.subr.bf16.mxu0 0
      %2077 = vmatpush1.bf16.msra.mxu0 %v2055
      %2078 = vmatprep.subr.bf16.mxu0 0
      %2079 = vmatpush1.bf16.msra.mxu0 %v2054
      %2080 = vmatprep.subr.bf16.mxu0 0
      %2081 = vmatpush1.bf16.msra.mxu0 %v2053
      %2082 = vmatprep.subr.bf16.mxu0 0
      %2083 = vmatpush1.bf16.msra.mxu0 %v2052
      %2084 = vmatprep.subr.bf16.mxu0 0
      %2085 = vmatpush2.bf16.msra.mxu0 0
      %2086 = vmatprep.subr.bf16.mxu0 0
      %2087 = vmatpush2.bf16.msra.mxu0 0
      %2088 = vmatprep.subr.bf16.mxu0 0
      %2089 = vmatpush2.bf16.msra.mxu0 0
      %2090 = vmatprep.subr.bf16.mxu0 0
      %2091 = vmatpush2.bf16.msra.mxu0 0
      %2092 = vmatprep.subr.bf16.mxu0 0
      %2093 = vmatpush2.bf16.msra.mxu0 0
      %2094 = vmatprep.subr.bf16.mxu0 0
      %2095 = vmatpush2.bf16.msra.mxu0 0
      %2096 = vmatprep.subr.bf16.mxu0 0
      %2097 = vmatpush2.bf16.msra.mxu0 0
      %2098 = vmatprep.subr.bf16.mxu0 0
      %2099 = vmatpush2.bf16.msra.mxu0 0
      %2100 = vmatprep.mubr.bf16.mxu0 0
      %2101 = vmatmul.mubr.bf16.gmra.mxu0 %v1988
      %v2102 = vpop.f32.mrf.mxu0
      %v2103 = vadd.f32 0.0, %v2102
      %v2104 = vpop.f32.mrf.mxu0
      %v2105 = vpop.f32.mrf.mxu0
      %v2106 = vadd.f32 0.0, %v2105
      %v2107 = vpop.f32.mrf.mxu0
      %2108 = vmatprep.mubr.bf16.mxu0 0
      %2109 = vmatmul.mubr.bf16.gmra.mxu0 %v1989
      %v2110 = vpop.f32.mrf.mxu0
      %v2111 = vadd.f32 0.0, %v2110
      %v2112 = vpop.f32.mrf.mxu0
      %v2113 = vpop.f32.mrf.mxu0
      %v2114 = vadd.f32 0.0, %v2113
      %v2115 = vpop.f32.mrf.mxu0
      %2116 = vmatprep.mubr.bf16.mxu0 0
      %2117 = vmatmul.mubr.bf16.gmra.mxu0 %v1990
      %v2118 = vpop.f32.mrf.mxu0
      %v2119 = vadd.f32 0.0, %v2118
      %v2120 = vpop.f32.mrf.mxu0
      %v2121 = vpop.f32.mrf.mxu0
      %v2122 = vadd.f32 0.0, %v2121
      %v2123 = vpop.f32.mrf.mxu0
      %2124 = vmatprep.mubr.bf16.mxu0 0
      %2125 = vmatmul.mubr.bf16.gmra.mxu0 %v1991
      %v2126 = vpop.f32.mrf.mxu0
      %v2127 = vadd.f32 0.0, %v2126
      %v2128 = vpop.f32.mrf.mxu0
      %v2129 = vpop.f32.mrf.mxu0
      %v2130 = vadd.f32 0.0, %v2129
      %v2131 = vpop.f32.mrf.mxu0
      %2132 = vmatprep.mubr.bf16.mxu0 0
      %2133 = vmatmul.mubr.bf16.gmra.mxu0 %v1992
      %v2134 = vpop.f32.mrf.mxu0
      %v2135 = vadd.f32 0.0, %v2134
      %v2136 = vpop.f32.mrf.mxu0
      %v2137 = vpop.f32.mrf.mxu0
      %v2138 = vadd.f32 0.0, %v2137
      %v2139 = vpop.f32.mrf.mxu0
      %2140 = vmatprep.mubr.bf16.mxu0 0
      %2141 = vmatmul.mubr.bf16.gmra.mxu0 %v1993
      %v2142 = vpop.f32.mrf.mxu0
      %v2143 = vadd.f32 0.0, %v2142
      %v2144 = vpop.f32.mrf.mxu0
      %v2145 = vpop.f32.mrf.mxu0
      %v2146 = vadd.f32 0.0, %v2145
      %v2147 = vpop.f32.mrf.mxu0
      %2148 = vmatprep.mubr.bf16.mxu0 0
      %2149 = vmatmul.mubr.bf16.gmra.mxu0 %v1994
      %v2150 = vpop.f32.mrf.mxu0
      %v2151 = vadd.f32 0.0, %v2150
      %v2152 = vpop.f32.mrf.mxu0
      %v2153 = vpop.f32.mrf.mxu0
      %v2154 = vadd.f32 0.0, %v2153
      %v2155 = vpop.f32.mrf.mxu0
      %2156 = vmatprep.mubr.bf16.mxu0 0
      %2157 = vmatmul.mubr.bf16.gmra.mxu0 %v1995
      %v2158 = vpop.f32.mrf.mxu0
      %v2159 = vadd.f32 0.0, %v2158
      %v2160 = vpop.f32.mrf.mxu0
      %v2161 = vpop.f32.mrf.mxu0
      %v2162 = vadd.f32 0.0, %v2161
      %v2163 = vpop.f32.mrf.mxu0
      %2164 = vmatprep.mubr.bf16.mxu0 0
      %2165 = vmatmul.mubr.bf16.gmra.mxu0 %v1996
      %v2166 = vpop.f32.mrf.mxu0
      %v2167 = vadd.f32 0.0, %v2166
      %v2168 = vpop.f32.mrf.mxu0
      %v2169 = vpop.f32.mrf.mxu0
      %v2170 = vadd.f32 0.0, %v2169
      %v2171 = vpop.f32.mrf.mxu0
      %2172 = vmatprep.mubr.bf16.mxu0 0
      %2173 = vmatmul.mubr.bf16.gmra.mxu0 %v1997
      %v2174 = vpop.f32.mrf.mxu0
      %v2175 = vadd.f32 0.0, %v2174
      %v2176 = vpop.f32.mrf.mxu0
      %v2177 = vpop.f32.mrf.mxu0
      %v2178 = vadd.f32 0.0, %v2177
      %v2179 = vpop.f32.mrf.mxu0
      %2180 = vmatprep.mubr.bf16.mxu0 0
      %2181 = vmatmul.mubr.bf16.gmra.mxu0 %v1998
      %v2182 = vpop.f32.mrf.mxu0
      %v2183 = vadd.f32 0.0, %v2182
      %v2184 = vpop.f32.mrf.mxu0
      %v2185 = vpop.f32.mrf.mxu0
      %v2186 = vadd.f32 0.0, %v2185
      %v2187 = vpop.f32.mrf.mxu0
      %2188 = vmatprep.mubr.bf16.mxu0 0
      %2189 = vmatmul.mubr.bf16.gmra.mxu0 %v1999
      %v2190 = vpop.f32.mrf.mxu0
      %v2191 = vadd.f32 0.0, %v2190
      %v2192 = vpop.f32.mrf.mxu0
      %v2193 = vpop.f32.mrf.mxu0
      %v2194 = vadd.f32 0.0, %v2193
      %v2195 = vpop.f32.mrf.mxu0
      %2196 = vmatprep.mubr.bf16.mxu0 0
      %2197 = vmatmul.mubr.bf16.gmra.mxu0 %v2000
      %v2198 = vpop.f32.mrf.mxu0
      %v2199 = vadd.f32 0.0, %v2198
      %v2200 = vpop.f32.mrf.mxu0
      %v2201 = vpop.f32.mrf.mxu0
      %v2202 = vadd.f32 0.0, %v2201
      %v2203 = vpop.f32.mrf.mxu0
      %2204 = vmatprep.mubr.bf16.mxu0 0
      %2205 = vmatmul.mubr.bf16.gmra.mxu0 %v2001
      %v2206 = vpop.f32.mrf.mxu0
      %v2207 = vadd.f32 0.0, %v2206
      %v2208 = vpop.f32.mrf.mxu0
      %v2209 = vpop.f32.mrf.mxu0
      %v2210 = vadd.f32 0.0, %v2209
      %v2211 = vpop.f32.mrf.mxu0
      %2212 = vmatprep.mubr.bf16.mxu0 0
      %2213 = vmatmul.mubr.bf16.gmra.mxu0 %v2002
      %v2214 = vpop.f32.mrf.mxu0
      %v2215 = vadd.f32 0.0, %v2214
      %v2216 = vpop.f32.mrf.mxu0
      %v2217 = vpop.f32.mrf.mxu0
      %v2218 = vadd.f32 0.0, %v2217
      %v2219 = vpop.f32.mrf.mxu0
      %2220 = vmatprep.mubr.bf16.mxu0 0
      %2221 = vmatmul.mubr.bf16.gmra.mxu0 %v2003
      %v2222 = vpop.f32.mrf.mxu0
      %v2223 = vadd.f32 0.0, %v2222
      %v2224 = vpop.f32.mrf.mxu0
      %v2225 = vpop.f32.mrf.mxu0
      %v2226 = vadd.f32 0.0, %v2225
      %v2227 = vpop.f32.mrf.mxu0
      %2228 = vdwg.mxu0
      %v2229 = vadd.f32 %v1875, %v2103
      %v2230 = vadd.f32 %v1876, %v2106
      %v2231 = vadd.f32 %v1877, %v2111
      %v2232 = vadd.f32 %v1878, %v2114
      %v2233 = vadd.f32 %v1879, %v2119
      %v2234 = vadd.f32 %v1880, %v2122
      %v2235 = vadd.f32 %v1881, %v2127
      %v2236 = vadd.f32 %v1882, %v2130
      %v2237 = vadd.f32 %v1883, %v2135
      %v2238 = vadd.f32 %v1884, %v2138
      %v2239 = vadd.f32 %v1885, %v2143
      %v2240 = vadd.f32 %v1886, %v2146
      %v2241 = vadd.f32 %v1887, %v2151
      %v2242 = vadd.f32 %v1888, %v2154
      %v2243 = vadd.f32 %v1889, %v2159
      %v2244 = vadd.f32 %v1890, %v2162
      %v2245 = vadd.f32 %v1891, %v2167
      %v2246 = vadd.f32 %v1892, %v2170
      %v2247 = vadd.f32 %v1893, %v2175
      %v2248 = vadd.f32 %v1894, %v2178
      %v2249 = vadd.f32 %v1895, %v2183
      %v2250 = vadd.f32 %v1896, %v2186
      %v2251 = vadd.f32 %v1897, %v2191
      %v2252 = vadd.f32 %v1898, %v2194
      %v2253 = vadd.f32 %v1899, %v2199
      %v2254 = vadd.f32 %v1900, %v2202
      %v2255 = vadd.f32 %v1901, %v2207
      %v2256 = vadd.f32 %v1902, %v2210
      %v2257 = vadd.f32 %v1903, %v2215
      %v2258 = vadd.f32 %v1904, %v2218
      %v2259 = vadd.f32 %v1905, %v2223
      %v2260 = vadd.f32 %v1906, %v2226
      %s2261 = scalar_lea.vmem %s3, 256
      %v2262 = vld [vmem:[%s2261] sm:$0xf]
      %v2263 = vld [vmem:[%s2261 + $0x4] sm:$0xf]
      %v2264 = vld [vmem:[%s2261 + $0x8] sm:$0xf]
      %v2265 = vld [vmem:[%s2261 + $0xc] sm:$0xf]
      %v2266 = vld [vmem:[%s2261 + $0x10] sm:$0xf]
      %v2267 = vld [vmem:[%s2261 + $0x14] sm:$0xf]
      %v2268 = vld [vmem:[%s2261 + $0x18] sm:$0xf]
      %v2269 = vld [vmem:[%s2261 + $0x1c] sm:$0xf]
      %v2270 = vld [vmem:[%s2261 + $0x20] sm:$0xf]
      %v2271 = vld [vmem:[%s2261 + $0x24] sm:$0xf]
      %v2272 = vld [vmem:[%s2261 + $0x28] sm:$0xf]
      %v2273 = vld [vmem:[%s2261 + $0x2c] sm:$0xf]
      %v2274 = vld [vmem:[%s2261 + $0x30] sm:$0xf]
      %v2275 = vld [vmem:[%s2261 + $0x34] sm:$0xf]
      %v2276 = vld [vmem:[%s2261 + $0x38] sm:$0xf]
      %v2277 = vld [vmem:[%s2261 + $0x3c] sm:$0xf]
      %v2280 = vunpack.c.l.b16 %v722
      %v2281 = vunpack.c.l.b16 %v723
      %v2282 = vpack.c.b16 %v2281, %v2280
      %v2300 = vunpack.c.l.b16 %v2262
      %v2301 = vunpack.c.l.b16 %v2263
      %v2302 = vunpack.c.l.b16 %v2264
      %v2303 = vunpack.c.l.b16 %v2265
      %v2304 = vunpack.c.l.b16 %v2266
      %v2305 = vunpack.c.l.b16 %v2267
      %v2306 = vunpack.c.l.b16 %v2268
      %v2307 = vunpack.c.l.b16 %v2269
      %v2308 = vunpack.c.l.b16 %v2270
      %v2309 = vunpack.c.l.b16 %v2271
      %v2310 = vunpack.c.l.b16 %v2272
      %v2311 = vunpack.c.l.b16 %v2273
      %v2312 = vunpack.c.l.b16 %v2274
      %v2313 = vunpack.c.l.b16 %v2275
      %v2314 = vunpack.c.l.b16 %v2276
      %v2315 = vunpack.c.l.b16 %v2277
      %v2316 = vpack.c.b16 %v2301, %v2300
      %v2317 = vpack.c.b16 %v2303, %v2302
      %v2318 = vpack.c.b16 %v2305, %v2304
      %v2319 = vpack.c.b16 %v2307, %v2306
      %v2320 = vpack.c.b16 %v2309, %v2308
      %v2321 = vpack.c.b16 %v2311, %v2310
      %v2322 = vpack.c.b16 %v2313, %v2312
      %v2323 = vpack.c.b16 %v2315, %v2314
      %2332 = vmatprep.subr.bf16.mxu0 0
      %2333 = vmatpush1.bf16.msra.mxu0 %v2323
      %2334 = vmatprep.subr.bf16.mxu0 0
      %2335 = vmatpush1.bf16.msra.mxu0 %v2322
      %2336 = vmatprep.subr.bf16.mxu0 0
      %2337 = vmatpush1.bf16.msra.mxu0 %v2321
      %2338 = vmatprep.subr.bf16.mxu0 0
      %2339 = vmatpush1.bf16.msra.mxu0 %v2320
      %2340 = vmatprep.subr.bf16.mxu0 0
      %2341 = vmatpush1.bf16.msra.mxu0 %v2319
      %2342 = vmatprep.subr.bf16.mxu0 0
      %2343 = vmatpush1.bf16.msra.mxu0 %v2318
      %2344 = vmatprep.subr.bf16.mxu0 0
      %2345 = vmatpush1.bf16.msra.mxu0 %v2317
      %2346 = vmatprep.subr.bf16.mxu0 0
      %2347 = vmatpush1.bf16.msra.mxu0 %v2316
      %2348 = vmatprep.subr.bf16.mxu0 0
      %2349 = vmatpush2.bf16.msra.mxu0 0
      %2350 = vmatprep.subr.bf16.mxu0 0
      %2351 = vmatpush2.bf16.msra.mxu0 0
      %2352 = vmatprep.subr.bf16.mxu0 0
      %2353 = vmatpush2.bf16.msra.mxu0 0
      %2354 = vmatprep.subr.bf16.mxu0 0
      %2355 = vmatpush2.bf16.msra.mxu0 0
      %2356 = vmatprep.subr.bf16.mxu0 0
      %2357 = vmatpush2.bf16.msra.mxu0 0
      %2358 = vmatprep.subr.bf16.mxu0 0
      %2359 = vmatpush2.bf16.msra.mxu0 0
      %2360 = vmatprep.subr.bf16.mxu0 0
      %2361 = vmatpush2.bf16.msra.mxu0 0
      %2362 = vmatprep.subr.bf16.mxu0 0
      %2363 = vmatpush2.bf16.msra.mxu0 0
      %2364 = vmatprep.mubr.bf16.mxu0 0
      %2365 = vmatmul.mubr.bf16.gmra.mxu0 %v1989
      %v2366 = vpop.f32.mrf.mxu0
      %v2367 = vadd.f32 0.0, %v2366
      %v2368 = vpop.f32.mrf.mxu0
      %v2369 = vpop.f32.mrf.mxu0
      %v2370 = vadd.f32 0.0, %v2369
      %v2371 = vpop.f32.mrf.mxu0
      %2372 = vmatprep.mubr.bf16.mxu0 0
      %2373 = vmatmul.mubr.bf16.gmra.mxu0 %v1990
      %v2374 = vpop.f32.mrf.mxu0
      %v2375 = vadd.f32 0.0, %v2374
      %v2376 = vpop.f32.mrf.mxu0
      %v2377 = vpop.f32.mrf.mxu0
      %v2378 = vadd.f32 0.0, %v2377
      %v2379 = vpop.f32.mrf.mxu0
      %2380 = vmatprep.mubr.bf16.mxu0 0
      %2381 = vmatmul.mubr.bf16.gmra.mxu0 %v1991
      %v2382 = vpop.f32.mrf.mxu0
      %v2383 = vadd.f32 0.0, %v2382
      %v2384 = vpop.f32.mrf.mxu0
      %v2385 = vpop.f32.mrf.mxu0
      %v2386 = vadd.f32 0.0, %v2385
      %v2387 = vpop.f32.mrf.mxu0
      %2388 = vmatprep.mubr.bf16.mxu0 0
      %2389 = vmatmul.mubr.bf16.gmra.mxu0 %v1992
      %v2390 = vpop.f32.mrf.mxu0
      %v2391 = vadd.f32 0.0, %v2390
      %v2392 = vpop.f32.mrf.mxu0
      %v2393 = vpop.f32.mrf.mxu0
      %v2394 = vadd.f32 0.0, %v2393
      %v2395 = vpop.f32.mrf.mxu0
      %2396 = vmatprep.mubr.bf16.mxu0 0
      %2397 = vmatmul.mubr.bf16.gmra.mxu0 %v1993
      %v2398 = vpop.f32.mrf.mxu0
      %v2399 = vadd.f32 0.0, %v2398
      %v2400 = vpop.f32.mrf.mxu0
      %v2401 = vpop.f32.mrf.mxu0
      %v2402 = vadd.f32 0.0, %v2401
      %v2403 = vpop.f32.mrf.mxu0
      %2404 = vmatprep.mubr.bf16.mxu0 0
      %2405 = vmatmul.mubr.bf16.gmra.mxu0 %v1994
      %v2406 = vpop.f32.mrf.mxu0
      %v2407 = vadd.f32 0.0, %v2406
      %v2408 = vpop.f32.mrf.mxu0
      %v2409 = vpop.f32.mrf.mxu0
      %v2410 = vadd.f32 0.0, %v2409
      %v2411 = vpop.f32.mrf.mxu0
      %2412 = vmatprep.mubr.bf16.mxu0 0
      %2413 = vmatmul.mubr.bf16.gmra.mxu0 %v1995
      %v2414 = vpop.f32.mrf.mxu0
      %v2415 = vadd.f32 0.0, %v2414
      %v2416 = vpop.f32.mrf.mxu0
      %v2417 = vpop.f32.mrf.mxu0
      %v2418 = vadd.f32 0.0, %v2417
      %v2419 = vpop.f32.mrf.mxu0
      %2420 = vmatprep.mubr.bf16.mxu0 0
      %2421 = vmatmul.mubr.bf16.gmra.mxu0 %v1996
      %v2422 = vpop.f32.mrf.mxu0
      %v2423 = vadd.f32 0.0, %v2422
      %v2424 = vpop.f32.mrf.mxu0
      %v2425 = vpop.f32.mrf.mxu0
      %v2426 = vadd.f32 0.0, %v2425
      %v2427 = vpop.f32.mrf.mxu0
      %2428 = vmatprep.mubr.bf16.mxu0 0
      %2429 = vmatmul.mubr.bf16.gmra.mxu0 %v1997
      %v2430 = vpop.f32.mrf.mxu0
      %v2431 = vadd.f32 0.0, %v2430
      %v2432 = vpop.f32.mrf.mxu0
      %v2433 = vpop.f32.mrf.mxu0
      %v2434 = vadd.f32 0.0, %v2433
      %v2435 = vpop.f32.mrf.mxu0
      %2436 = vmatprep.mubr.bf16.mxu0 0
      %2437 = vmatmul.mubr.bf16.gmra.mxu0 %v1998
      %v2438 = vpop.f32.mrf.mxu0
      %v2439 = vadd.f32 0.0, %v2438
      %v2440 = vpop.f32.mrf.mxu0
      %v2441 = vpop.f32.mrf.mxu0
      %v2442 = vadd.f32 0.0, %v2441
      %v2443 = vpop.f32.mrf.mxu0
      %2444 = vmatprep.mubr.bf16.mxu0 0
      %2445 = vmatmul.mubr.bf16.gmra.mxu0 %v1999
      %v2446 = vpop.f32.mrf.mxu0
      %v2447 = vadd.f32 0.0, %v2446
      %v2448 = vpop.f32.mrf.mxu0
      %v2449 = vpop.f32.mrf.mxu0
      %v2450 = vadd.f32 0.0, %v2449
      %v2451 = vpop.f32.mrf.mxu0
      %2452 = vmatprep.mubr.bf16.mxu0 0
      %2453 = vmatmul.mubr.bf16.gmra.mxu0 %v2000
      %v2454 = vpop.f32.mrf.mxu0
      %v2455 = vadd.f32 0.0, %v2454
      %v2456 = vpop.f32.mrf.mxu0
      %v2457 = vpop.f32.mrf.mxu0
      %v2458 = vadd.f32 0.0, %v2457
      %v2459 = vpop.f32.mrf.mxu0
      %2460 = vmatprep.mubr.bf16.mxu0 0
      %2461 = vmatmul.mubr.bf16.gmra.mxu0 %v2001
      %v2462 = vpop.f32.mrf.mxu0
      %v2463 = vadd.f32 0.0, %v2462
      %v2464 = vpop.f32.mrf.mxu0
      %v2465 = vpop.f32.mrf.mxu0
      %v2466 = vadd.f32 0.0, %v2465
      %v2467 = vpop.f32.mrf.mxu0
      %2468 = vmatprep.mubr.bf16.mxu0 0
      %2469 = vmatmul.mubr.bf16.gmra.mxu0 %v2002
      %v2470 = vpop.f32.mrf.mxu0
      %v2471 = vadd.f32 0.0, %v2470
      %v2472 = vpop.f32.mrf.mxu0
      %v2473 = vpop.f32.mrf.mxu0
      %v2474 = vadd.f32 0.0, %v2473
      %v2475 = vpop.f32.mrf.mxu0
      %2476 = vmatprep.mubr.bf16.mxu0 0
      %2477 = vmatmul.mubr.bf16.gmra.mxu0 %v2003
      %v2478 = vpop.f32.mrf.mxu0
      %v2479 = vadd.f32 0.0, %v2478
      %v2480 = vpop.f32.mrf.mxu0
      %v2481 = vpop.f32.mrf.mxu0
      %v2482 = vadd.f32 0.0, %v2481
      %v2483 = vpop.f32.mrf.mxu0
      %2484 = vmatprep.mubr.bf16.mxu0 0
      %2485 = vmatmul.mubr.bf16.gmra.mxu0 %v2282
      %v2486 = vpop.f32.mrf.mxu0
      %v2487 = vadd.f32 0.0, %v2486
      %v2488 = vpop.f32.mrf.mxu0
      %v2489 = vpop.f32.mrf.mxu0
      %v2490 = vadd.f32 0.0, %v2489
      %v2491 = vpop.f32.mrf.mxu0
      %2492 = vdwg.mxu0
      %v2493 = vadd.f32 %v2229, %v2367
      %v2494 = vadd.f32 %v2230, %v2370
      %v2495 = vadd.f32 %v2231, %v2375
      %v2496 = vadd.f32 %v2232, %v2378
      %v2497 = vadd.f32 %v2233, %v2383
      %v2498 = vadd.f32 %v2234, %v2386
      %v2499 = vadd.f32 %v2235, %v2391
      %v2500 = vadd.f32 %v2236, %v2394
      %v2501 = vadd.f32 %v2237, %v2399
      %v2502 = vadd.f32 %v2238, %v2402
      %v2503 = vadd.f32 %v2239, %v2407
      %v2504 = vadd.f32 %v2240, %v2410
      %v2505 = vadd.f32 %v2241, %v2415
      %v2506 = vadd.f32 %v2242, %v2418
      %v2507 = vadd.f32 %v2243, %v2423
      %v2508 = vadd.f32 %v2244, %v2426
      %v2509 = vadd.f32 %v2245, %v2431
      %v2510 = vadd.f32 %v2246, %v2434
      %v2511 = vadd.f32 %v2247, %v2439
      %v2512 = vadd.f32 %v2248, %v2442
      %v2513 = vadd.f32 %v2249, %v2447
      %v2514 = vadd.f32 %v2250, %v2450
      %v2515 = vadd.f32 %v2251, %v2455
      %v2516 = vadd.f32 %v2252, %v2458
      %v2517 = vadd.f32 %v2253, %v2463
      %v2518 = vadd.f32 %v2254, %v2466
      %v2519 = vadd.f32 %v2255, %v2471
      %v2520 = vadd.f32 %v2256, %v2474
      %v2521 = vadd.f32 %v2257, %v2479
      %v2522 = vadd.f32 %v2258, %v2482
      %v2523 = vadd.f32 %v2259, %v2487
      %v2524 = vadd.f32 %v2260, %v2490
      %s2525 = scalar_lea.vmem %s3, 448
      %v2526 = vld [vmem:[%s2525] sm:$0xf]
      %v2527 = vld [vmem:[%s2525 + $0x4] sm:$0xf]
      %v2528 = vld [vmem:[%s2525 + $0x8] sm:$0xf]
      %v2529 = vld [vmem:[%s2525 + $0xc] sm:$0xf]
      %v2530 = vld [vmem:[%s2525 + $0x10] sm:$0xf]
      %v2531 = vld [vmem:[%s2525 + $0x14] sm:$0xf]
      %v2532 = vld [vmem:[%s2525 + $0x18] sm:$0xf]
      %v2533 = vld [vmem:[%s2525 + $0x1c] sm:$0xf]
      %v2534 = vld [vmem:[%s2525 + $0x20] sm:$0xf]
      %v2535 = vld [vmem:[%s2525 + $0x24] sm:$0xf]
      %v2536 = vld [vmem:[%s2525 + $0x28] sm:$0xf]
      %v2537 = vld [vmem:[%s2525 + $0x2c] sm:$0xf]
      %v2538 = vld [vmem:[%s2525 + $0x30] sm:$0xf]
      %v2539 = vld [vmem:[%s2525 + $0x34] sm:$0xf]
      %v2540 = vld [vmem:[%s2525 + $0x38] sm:$0xf]
      %v2541 = vld [vmem:[%s2525 + $0x3c] sm:$0xf]
      %v2544 = vunpack.c.l.b16 %v725
      %v2545 = vunpack.c.l.b16 %v726
      %v2546 = vpack.c.b16 %v2545, %v2544
      %v2564 = vunpack.c.l.b16 %v2526
      %v2565 = vunpack.c.l.b16 %v2527
      %v2566 = vunpack.c.l.b16 %v2528
      %v2567 = vunpack.c.l.b16 %v2529
      %v2568 = vunpack.c.l.b16 %v2530
      %v2569 = vunpack.c.l.b16 %v2531
      %v2570 = vunpack.c.l.b16 %v2532
      %v2571 = vunpack.c.l.b16 %v2533
      %v2572 = vunpack.c.l.b16 %v2534
      %v2573 = vunpack.c.l.b16 %v2535
      %v2574 = vunpack.c.l.b16 %v2536
      %v2575 = vunpack.c.l.b16 %v2537
      %v2576 = vunpack.c.l.b16 %v2538
      %v2577 = vunpack.c.l.b16 %v2539
      %v2578 = vunpack.c.l.b16 %v2540
      %v2579 = vunpack.c.l.b16 %v2541
      %v2580 = vpack.c.b16 %v2565, %v2564
      %v2581 = vpack.c.b16 %v2567, %v2566
      %v2582 = vpack.c.b16 %v2569, %v2568
      %v2583 = vpack.c.b16 %v2571, %v2570
      %v2584 = vpack.c.b16 %v2573, %v2572
      %v2585 = vpack.c.b16 %v2575, %v2574
      %v2586 = vpack.c.b16 %v2577, %v2576
      %v2587 = vpack.c.b16 %v2579, %v2578
      %2596 = vmatprep.subr.bf16.mxu0 0
      %2597 = vmatpush1.bf16.msra.mxu0 %v2587
      %2598 = vmatprep.subr.bf16.mxu0 0
      %2599 = vmatpush1.bf16.msra.mxu0 %v2586
      %2600 = vmatprep.subr.bf16.mxu0 0
      %2601 = vmatpush1.bf16.msra.mxu0 %v2585
      %2602 = vmatprep.subr.bf16.mxu0 0
      %2603 = vmatpush1.bf16.msra.mxu0 %v2584
      %2604 = vmatprep.subr.bf16.mxu0 0
      %2605 = vmatpush1.bf16.msra.mxu0 %v2583
      %2606 = vmatprep.subr.bf16.mxu0 0
      %2607 = vmatpush1.bf16.msra.mxu0 %v2582
      %2608 = vmatprep.subr.bf16.mxu0 0
      %2609 = vmatpush1.bf16.msra.mxu0 %v2581
      %2610 = vmatprep.subr.bf16.mxu0 0
      %2611 = vmatpush1.bf16.msra.mxu0 %v2580
      %2612 = vmatprep.subr.bf16.mxu0 0
      %2613 = vmatpush2.bf16.msra.mxu0 0
      %2614 = vmatprep.subr.bf16.mxu0 0
      %2615 = vmatpush2.bf16.msra.mxu0 0
      %2616 = vmatprep.subr.bf16.mxu0 0
      %2617 = vmatpush2.bf16.msra.mxu0 0
      %2618 = vmatprep.subr.bf16.mxu0 0
      %2619 = vmatpush2.bf16.msra.mxu0 0
      %2620 = vmatprep.subr.bf16.mxu0 0
      %2621 = vmatpush2.bf16.msra.mxu0 0
      %2622 = vmatprep.subr.bf16.mxu0 0
      %2623 = vmatpush2.bf16.msra.mxu0 0
      %2624 = vmatprep.subr.bf16.mxu0 0
      %2625 = vmatpush2.bf16.msra.mxu0 0
      %2626 = vmatprep.subr.bf16.mxu0 0
      %2627 = vmatpush2.bf16.msra.mxu0 0
      %2628 = vmatprep.mubr.bf16.mxu0 0
      %2629 = vmatmul.mubr.bf16.gmra.mxu0 %v1990
      %v2630 = vpop.f32.mrf.mxu0
      %v2631 = vadd.f32 0.0, %v2630
      %v2632 = vpop.f32.mrf.mxu0
      %v2633 = vpop.f32.mrf.mxu0
      %v2634 = vadd.f32 0.0, %v2633
      %v2635 = vpop.f32.mrf.mxu0
      %2636 = vmatprep.mubr.bf16.mxu0 0
      %2637 = vmatmul.mubr.bf16.gmra.mxu0 %v1991
      %v2638 = vpop.f32.mrf.mxu0
      %v2639 = vadd.f32 0.0, %v2638
      %v2640 = vpop.f32.mrf.mxu0
      %v2641 = vpop.f32.mrf.mxu0
      %v2642 = vadd.f32 0.0, %v2641
      %v2643 = vpop.f32.mrf.mxu0
      %2644 = vmatprep.mubr.bf16.mxu0 0
      %2645 = vmatmul.mubr.bf16.gmra.mxu0 %v1992
      %v2646 = vpop.f32.mrf.mxu0
      %v2647 = vadd.f32 0.0, %v2646
      %v2648 = vpop.f32.mrf.mxu0
      %v2649 = vpop.f32.mrf.mxu0
      %v2650 = vadd.f32 0.0, %v2649
      %v2651 = vpop.f32.mrf.mxu0
      %2652 = vmatprep.mubr.bf16.mxu0 0
      %2653 = vmatmul.mubr.bf16.gmra.mxu0 %v1993
      %v2654 = vpop.f32.mrf.mxu0
      %v2655 = vadd.f32 0.0, %v2654
      %v2656 = vpop.f32.mrf.mxu0
      %v2657 = vpop.f32.mrf.mxu0
      %v2658 = vadd.f32 0.0, %v2657
      %v2659 = vpop.f32.mrf.mxu0
      %2660 = vmatprep.mubr.bf16.mxu0 0
      %2661 = vmatmul.mubr.bf16.gmra.mxu0 %v1994
      %v2662 = vpop.f32.mrf.mxu0
      %v2663 = vadd.f32 0.0, %v2662
      %v2664 = vpop.f32.mrf.mxu0
      %v2665 = vpop.f32.mrf.mxu0
      %v2666 = vadd.f32 0.0, %v2665
      %v2667 = vpop.f32.mrf.mxu0
      %2668 = vmatprep.mubr.bf16.mxu0 0
      %2669 = vmatmul.mubr.bf16.gmra.mxu0 %v1995
      %v2670 = vpop.f32.mrf.mxu0
      %v2671 = vadd.f32 0.0, %v2670
      %v2672 = vpop.f32.mrf.mxu0
      %v2673 = vpop.f32.mrf.mxu0
      %v2674 = vadd.f32 0.0, %v2673
      %v2675 = vpop.f32.mrf.mxu0
      %2676 = vmatprep.mubr.bf16.mxu0 0
      %2677 = vmatmul.mubr.bf16.gmra.mxu0 %v1996
      %v2678 = vpop.f32.mrf.mxu0
      %v2679 = vadd.f32 0.0, %v2678
      %v2680 = vpop.f32.mrf.mxu0
      %v2681 = vpop.f32.mrf.mxu0
      %v2682 = vadd.f32 0.0, %v2681
      %v2683 = vpop.f32.mrf.mxu0
      %2684 = vmatprep.mubr.bf16.mxu0 0
      %2685 = vmatmul.mubr.bf16.gmra.mxu0 %v1997
      %v2686 = vpop.f32.mrf.mxu0
      %v2687 = vadd.f32 0.0, %v2686
      %v2688 = vpop.f32.mrf.mxu0
      %v2689 = vpop.f32.mrf.mxu0
      %v2690 = vadd.f32 0.0, %v2689
      %v2691 = vpop.f32.mrf.mxu0
      %2692 = vmatprep.mubr.bf16.mxu0 0
      %2693 = vmatmul.mubr.bf16.gmra.mxu0 %v1998
      %v2694 = vpop.f32.mrf.mxu0
      %v2695 = vadd.f32 0.0, %v2694
      %v2696 = vpop.f32.mrf.mxu0
      %v2697 = vpop.f32.mrf.mxu0
      %v2698 = vadd.f32 0.0, %v2697
      %v2699 = vpop.f32.mrf.mxu0
      %2700 = vmatprep.mubr.bf16.mxu0 0
      %2701 = vmatmul.mubr.bf16.gmra.mxu0 %v1999
      %v2702 = vpop.f32.mrf.mxu0
      %v2703 = vadd.f32 0.0, %v2702
      %v2704 = vpop.f32.mrf.mxu0
      %v2705 = vpop.f32.mrf.mxu0
      %v2706 = vadd.f32 0.0, %v2705
      %v2707 = vpop.f32.mrf.mxu0
      %2708 = vmatprep.mubr.bf16.mxu0 0
      %2709 = vmatmul.mubr.bf16.gmra.mxu0 %v2000
      %v2710 = vpop.f32.mrf.mxu0
      %v2711 = vadd.f32 0.0, %v2710
      %v2712 = vpop.f32.mrf.mxu0
      %v2713 = vpop.f32.mrf.mxu0
      %v2714 = vadd.f32 0.0, %v2713
      %v2715 = vpop.f32.mrf.mxu0
      %2716 = vmatprep.mubr.bf16.mxu0 0
      %2717 = vmatmul.mubr.bf16.gmra.mxu0 %v2001
      %v2718 = vpop.f32.mrf.mxu0
      %v2719 = vadd.f32 0.0, %v2718
      %v2720 = vpop.f32.mrf.mxu0
      %v2721 = vpop.f32.mrf.mxu0
      %v2722 = vadd.f32 0.0, %v2721
      %v2723 = vpop.f32.mrf.mxu0
      %2724 = vmatprep.mubr.bf16.mxu0 0
      %2725 = vmatmul.mubr.bf16.gmra.mxu0 %v2002
      %v2726 = vpop.f32.mrf.mxu0
      %v2727 = vadd.f32 0.0, %v2726
      %v2728 = vpop.f32.mrf.mxu0
      %v2729 = vpop.f32.mrf.mxu0
      %v2730 = vadd.f32 0.0, %v2729
      %v2731 = vpop.f32.mrf.mxu0
      %2732 = vmatprep.mubr.bf16.mxu0 0
      %2733 = vmatmul.mubr.bf16.gmra.mxu0 %v2003
      %v2734 = vpop.f32.mrf.mxu0
      %v2735 = vadd.f32 0.0, %v2734
      %v2736 = vpop.f32.mrf.mxu0
      %v2737 = vpop.f32.mrf.mxu0
      %v2738 = vadd.f32 0.0, %v2737
      %v2739 = vpop.f32.mrf.mxu0
      %2740 = vmatprep.mubr.bf16.mxu0 0
      %2741 = vmatmul.mubr.bf16.gmra.mxu0 %v2282
      %v2742 = vpop.f32.mrf.mxu0
      %v2743 = vadd.f32 0.0, %v2742
      %v2744 = vpop.f32.mrf.mxu0
      %v2745 = vpop.f32.mrf.mxu0
      %v2746 = vadd.f32 0.0, %v2745
      %v2747 = vpop.f32.mrf.mxu0
      %2748 = vmatprep.mubr.bf16.mxu0 0
      %2749 = vmatmul.mubr.bf16.gmra.mxu0 %v2546
      %v2750 = vpop.f32.mrf.mxu0
      %v2751 = vadd.f32 0.0, %v2750
      %v2752 = vpop.f32.mrf.mxu0
      %v2753 = vpop.f32.mrf.mxu0
      %v2754 = vadd.f32 0.0, %v2753
      %v2755 = vpop.f32.mrf.mxu0
      %2756 = vdwg.mxu0
      %v2757 = vadd.f32 %v2493, %v2631
      %v2758 = vadd.f32 %v2494, %v2634
      %v2759 = vadd.f32 %v2495, %v2639
      %v2760 = vadd.f32 %v2496, %v2642
      %v2761 = vadd.f32 %v2497, %v2647
      %v2762 = vadd.f32 %v2498, %v2650
      %v2763 = vadd.f32 %v2499, %v2655
      %v2764 = vadd.f32 %v2500, %v2658
      %v2765 = vadd.f32 %v2501, %v2663
      %v2766 = vadd.f32 %v2502, %v2666
      %v2767 = vadd.f32 %v2503, %v2671
      %v2768 = vadd.f32 %v2504, %v2674
      %v2769 = vadd.f32 %v2505, %v2679
      %v2770 = vadd.f32 %v2506, %v2682
      %v2771 = vadd.f32 %v2507, %v2687
      %v2772 = vadd.f32 %v2508, %v2690
      %v2773 = vadd.f32 %v2509, %v2695
      %v2774 = vadd.f32 %v2510, %v2698
      %v2775 = vadd.f32 %v2511, %v2703
      %v2776 = vadd.f32 %v2512, %v2706
      %v2777 = vadd.f32 %v2513, %v2711
      %v2778 = vadd.f32 %v2514, %v2714
      %v2779 = vadd.f32 %v2515, %v2719
      %v2780 = vadd.f32 %v2516, %v2722
      %v2781 = vadd.f32 %v2517, %v2727
      %v2782 = vadd.f32 %v2518, %v2730
      %v2783 = vadd.f32 %v2519, %v2735
      %v2784 = vadd.f32 %v2520, %v2738
      %v2785 = vadd.f32 %v2521, %v2743
      %v2786 = vadd.f32 %v2522, %v2746
      %v2787 = vadd.f32 %v2523, %v2751
      %v2788 = vadd.f32 %v2524, %v2754
      %v2789 = vld [vmem:[#allocation2 + $0x8] sm:$0xf]
      %v2790 = vld [vmem:[#allocation2 + $0xc] sm:$0xf]
      %v2791 = vld [vmem:[#allocation2 + $0x10] sm:$0x1]
      %v2792 = vld [vmem:[#allocation2 + $0x20] sm:$0xf]
      %v2793 = vld [vmem:[#allocation2 + $0x24] sm:$0xf]
      %v2794 = vld [vmem:[#allocation2 + $0x28] sm:$0x1]
      %v2795 = vld [vmem:[#allocation2 + $0x38] sm:$0xf]
      %v2796 = vld [vmem:[#allocation2 + $0x3c] sm:$0xf]
      %v2797 = vld [vmem:[#allocation2 + $0x40] sm:$0x1]
      %v2798 = vld [vmem:[#allocation2 + $0x50] sm:$0xf]
      %v2799 = vld [vmem:[#allocation2 + $0x54] sm:$0xf]
      %v2800 = vld [vmem:[#allocation2 + $0x58] sm:$0x1]
      %v2801 = vld [vmem:[#allocation2 + $0x68] sm:$0xf]
      %v2802 = vld [vmem:[#allocation2 + $0x6c] sm:$0xf]
      %v2803 = vld [vmem:[#allocation2 + $0x70] sm:$0x1]
      %v2804 = vld [vmem:[#allocation2 + $0x80] sm:$0xf]
      %v2805 = vld [vmem:[#allocation2 + $0x84] sm:$0xf]
      %v2806 = vld [vmem:[#allocation2 + $0x88] sm:$0x1]
      %v2807 = vld [vmem:[#allocation2 + $0x98] sm:$0xf]
      %v2808 = vld [vmem:[#allocation2 + $0x9c] sm:$0xf]
      %v2809 = vld [vmem:[#allocation2 + $0xa0] sm:$0x1]
      %v2810 = vld [vmem:[#allocation2 + $0xb0] sm:$0xf]
      %v2811 = vld [vmem:[#allocation2 + $0xb4] sm:$0xf]
      %v2812 = vld [vmem:[#allocation2 + $0xb8] sm:$0x1]
      %v2813 = vld [vmem:[#allocation2 + $0xc8] sm:$0xf]
      %v2814 = vld [vmem:[#allocation2 + $0xcc] sm:$0xf]
      %v2815 = vld [vmem:[#allocation2 + $0xd0] sm:$0x1]
      %v2816 = vld [vmem:[#allocation2 + $0xe0] sm:$0xf]
      %v2817 = vld [vmem:[#allocation2 + $0xe4] sm:$0xf]
      %v2818 = vld [vmem:[#allocation2 + $0xe8] sm:$0x1]
      %v2819 = vld [vmem:[#allocation2 + $0xf8] sm:$0xf]
      %v2820 = vld [vmem:[#allocation2 + $0xfc] sm:$0xf]
      %v2821 = vld [vmem:[#allocation2 + $0x100] sm:$0x1]
      %v2822 = vld [vmem:[#allocation2 + $0x110] sm:$0xf]
      %v2823 = vld [vmem:[#allocation2 + $0x114] sm:$0xf]
      %v2824 = vld [vmem:[#allocation2 + $0x118] sm:$0x1]
      %v2825 = vld [vmem:[#allocation2 + $0x128] sm:$0xf]
      %v2826 = vld [vmem:[#allocation2 + $0x12c] sm:$0xf]
      %v2827 = vld [vmem:[#allocation2 + $0x130] sm:$0x1]
      %v2828 = vld [vmem:[#allocation2 + $0x140] sm:$0xf]
      %v2829 = vld [vmem:[#allocation2 + $0x144] sm:$0xf]
      %v2830 = vld [vmem:[#allocation2 + $0x148] sm:$0x1]
      %v2831 = vld [vmem:[#allocation2 + $0x158] sm:$0xf]
      %v2832 = vld [vmem:[#allocation2 + $0x15c] sm:$0xf]
      %v2833 = vld [vmem:[#allocation2 + $0x160] sm:$0x1]
      %v2834 = vld [vmem:[#allocation2 + $0x170] sm:$0xf]
      %v2835 = vld [vmem:[#allocation2 + $0x174] sm:$0xf]
      %v2836 = vld [vmem:[#allocation2 + $0x178] sm:$0x1]
      %v2837 = vld [vmem:[#allocation2 + $0x188] sm:$0xf]
      %v2838 = vld [vmem:[#allocation2 + $0x18c] sm:$0xf]
      %v2839 = vld [vmem:[#allocation2 + $0x190] sm:$0x1]
      %v2840 = vld [vmem:[#allocation2 + $0x1a0] sm:$0xf]
      %v2841 = vld [vmem:[#allocation2 + $0x1a4] sm:$0xf]
      %v2842 = vld [vmem:[#allocation2 + $0x1a8] sm:$0x1]
      %vm2843 = vsmask.f32 3328
      %vm2844 = vsmask.f32 7440
      %vm2845 = vmor %vm2843, %vm2844
      %v2847 = vshrl.u32 %v2789, 16
      %v2849 = vrot.slane %v2847, 4
      %v2850 = vshll.u32 %v2789, 16
      %v2852 = vrot.slane %v2850, 5
      %v2853 = vor.u32 %v2849, %v2852
      %v2854 = vrot.slane %v2853, 4
      %v2856 = vshll.u32 %v2790, 16
      %v2858 = vrot.slane %v2856, 5
      %v2859 = vsel %vm2845, %v2854, %v2858
      %v2860 = vshrl.u32 %v2790, 16
      %v2862 = vrot.slane %v2860, 4
      %v2863 = vor.u32 %v2862, %v2858
      %v2864 = vrot.slane %v2863, 4
      %v2866 = vshll.u32 %v2791, 16
      %v2868 = vrot.slane %v2866, 5
      %v2869 = vsel %vm2845, %v2864, %v2868
      %v2871 = vshrl.u32 %v2792, 16
      %v2873 = vrot.slane %v2871, 4
      %v2874 = vshll.u32 %v2792, 16
      %v2876 = vrot.slane %v2874, 5
      %v2877 = vor.u32 %v2873, %v2876
      %v2878 = vrot.slane %v2877, 4
      %v2880 = vshll.u32 %v2793, 16
      %v2882 = vrot.slane %v2880, 5
      %v2883 = vsel %vm2845, %v2878, %v2882
      %v2884 = vshrl.u32 %v2793, 16
      %v2886 = vrot.slane %v2884, 4
      %v2887 = vor.u32 %v2886, %v2882
      %v2888 = vrot.slane %v2887, 4
      %v2890 = vshll.u32 %v2794, 16
      %v2892 = vrot.slane %v2890, 5
      %v2893 = vsel %vm2845, %v2888, %v2892
      %v2895 = vshrl.u32 %v2795, 16
      %v2897 = vrot.slane %v2895, 4
      %v2898 = vshll.u32 %v2795, 16
      %v2900 = vrot.slane %v2898, 5
      %v2901 = vor.u32 %v2897, %v2900
      %v2902 = vrot.slane %v2901, 4
      %v2904 = vshll.u32 %v2796, 16
      %v2906 = vrot.slane %v2904, 5
      %v2907 = vsel %vm2845, %v2902, %v2906
      %v2908 = vshrl.u32 %v2796, 16
      %v2910 = vrot.slane %v2908, 4
      %v2911 = vor.u32 %v2910, %v2906
      %v2912 = vrot.slane %v2911, 4
      %v2914 = vshll.u32 %v2797, 16
      %v2916 = vrot.slane %v2914, 5
      %v2917 = vsel %vm2845, %v2912, %v2916
      %v2919 = vshrl.u32 %v2798, 16
      %v2921 = vrot.slane %v2919, 4
      %v2922 = vshll.u32 %v2798, 16
      %v2924 = vrot.slane %v2922, 5
      %v2925 = vor.u32 %v2921, %v2924
      %v2926 = vrot.slane %v2925, 4
      %v2928 = vshll.u32 %v2799, 16
      %v2930 = vrot.slane %v2928, 5
      %v2931 = vsel %vm2845, %v2926, %v2930
      %v2932 = vshrl.u32 %v2799, 16
      %v2934 = vrot.slane %v2932, 4
      %v2935 = vor.u32 %v2934, %v2930
      %v2936 = vrot.slane %v2935, 4
      %v2938 = vshll.u32 %v2800, 16
      %v2940 = vrot.slane %v2938, 5
      %v2941 = vsel %vm2845, %v2936, %v2940
      %v2943 = vshrl.u32 %v2801, 16
      %v2945 = vrot.slane %v2943, 4
      %v2946 = vshll.u32 %v2801, 16
      %v2948 = vrot.slane %v2946, 5
      %v2949 = vor.u32 %v2945, %v2948
      %v2950 = vrot.slane %v2949, 4
      %v2952 = vshll.u32 %v2802, 16
      %v2954 = vrot.slane %v2952, 5
      %v2955 = vsel %vm2845, %v2950, %v2954
      %v2956 = vshrl.u32 %v2802, 16
      %v2958 = vrot.slane %v2956, 4
      %v2959 = vor.u32 %v2958, %v2954
      %v2960 = vrot.slane %v2959, 4
      %v2962 = vshll.u32 %v2803, 16
      %v2964 = vrot.slane %v2962, 5
      %v2965 = vsel %vm2845, %v2960, %v2964
      %v2967 = vshrl.u32 %v2804, 16
      %v2969 = vrot.slane %v2967, 4
      %v2970 = vshll.u32 %v2804, 16
      %v2972 = vrot.slane %v2970, 5
      %v2973 = vor.u32 %v2969, %v2972
      %v2974 = vrot.slane %v2973, 4
      %v2976 = vshll.u32 %v2805, 16
      %v2978 = vrot.slane %v2976, 5
      %v2979 = vsel %vm2845, %v2974, %v2978
      %v2980 = vshrl.u32 %v2805, 16
      %v2982 = vrot.slane %v2980, 4
      %v2983 = vor.u32 %v2982, %v2978
      %v2984 = vrot.slane %v2983, 4
      %v2986 = vshll.u32 %v2806, 16
      %v2988 = vrot.slane %v2986, 5
      %v2989 = vsel %vm2845, %v2984, %v2988
      %v2991 = vshrl.u32 %v2807, 16
      %v2993 = vrot.slane %v2991, 4
      %v2994 = vshll.u32 %v2807, 16
      %v2996 = vrot.slane %v2994, 5
      %v2997 = vor.u32 %v2993, %v2996
      %v2998 = vrot.slane %v2997, 4
      %v3000 = vshll.u32 %v2808, 16
      %v3002 = vrot.slane %v3000, 5
      %v3003 = vsel %vm2845, %v2998, %v3002
      %v3004 = vshrl.u32 %v2808, 16
      %v3006 = vrot.slane %v3004, 4
      %v3007 = vor.u32 %v3006, %v3002
      %v3008 = vrot.slane %v3007, 4
      %v3010 = vshll.u32 %v2809, 16
      %v3012 = vrot.slane %v3010, 5
      %v3013 = vsel %vm2845, %v3008, %v3012
      %v3015 = vshrl.u32 %v2810, 16
      %v3017 = vrot.slane %v3015, 4
      %v3018 = vshll.u32 %v2810, 16
      %v3020 = vrot.slane %v3018, 5
      %v3021 = vor.u32 %v3017, %v3020
      %v3022 = vrot.slane %v3021, 4
      %v3024 = vshll.u32 %v2811, 16
      %v3026 = vrot.slane %v3024, 5
      %v3027 = vsel %vm2845, %v3022, %v3026
      %v3028 = vshrl.u32 %v2811, 16
      %v3030 = vrot.slane %v3028, 4
      %v3031 = vor.u32 %v3030, %v3026
      %v3032 = vrot.slane %v3031, 4
      %v3034 = vshll.u32 %v2812, 16
      %v3036 = vrot.slane %v3034, 5
      %v3037 = vsel %vm2845, %v3032, %v3036
      %v3039 = vshrl.u32 %v2813, 16
      %v3041 = vrot.slane %v3039, 4
      %v3042 = vshll.u32 %v2813, 16
      %v3044 = vrot.slane %v3042, 5
      %v3045 = vor.u32 %v3041, %v3044
      %v3046 = vrot.slane %v3045, 4
      %v3048 = vshll.u32 %v2814, 16
      %v3050 = vrot.slane %v3048, 5
      %v3051 = vsel %vm2845, %v3046, %v3050
      %v3052 = vshrl.u32 %v2814, 16
      %v3054 = vrot.slane %v3052, 4
      %v3055 = vor.u32 %v3054, %v3050
      %v3056 = vrot.slane %v3055, 4
      %v3058 = vshll.u32 %v2815, 16
      %v3060 = vrot.slane %v3058, 5
      %v3061 = vsel %vm2845, %v3056, %v3060
      %v3063 = vshrl.u32 %v2816, 16
      %v3065 = vrot.slane %v3063, 4
      %v3066 = vshll.u32 %v2816, 16
      %v3068 = vrot.slane %v3066, 5
      %v3069 = vor.u32 %v3065, %v3068
      %v3070 = vrot.slane %v3069, 4
      %v3072 = vshll.u32 %v2817, 16
      %v3074 = vrot.slane %v3072, 5
      %v3075 = vsel %vm2845, %v3070, %v3074
      %v3076 = vshrl.u32 %v2817, 16
      %v3078 = vrot.slane %v3076, 4
      %v3079 = vor.u32 %v3078, %v3074
      %v3080 = vrot.slane %v3079, 4
      %v3082 = vshll.u32 %v2818, 16
      %v3084 = vrot.slane %v3082, 5
      %v3085 = vsel %vm2845, %v3080, %v3084
      %v3087 = vshrl.u32 %v2819, 16
      %v3089 = vrot.slane %v3087, 4
      %v3090 = vshll.u32 %v2819, 16
      %v3092 = vrot.slane %v3090, 5
      %v3093 = vor.u32 %v3089, %v3092
      %v3094 = vrot.slane %v3093, 4
      %v3096 = vshll.u32 %v2820, 16
      %v3098 = vrot.slane %v3096, 5
      %v3099 = vsel %vm2845, %v3094, %v3098
      %v3100 = vshrl.u32 %v2820, 16
      %v3102 = vrot.slane %v3100, 4
      %v3103 = vor.u32 %v3102, %v3098
      %v3104 = vrot.slane %v3103, 4
      %v3106 = vshll.u32 %v2821, 16
      %v3108 = vrot.slane %v3106, 5
      %v3109 = vsel %vm2845, %v3104, %v3108
      %v3111 = vshrl.u32 %v2822, 16
      %v3113 = vrot.slane %v3111, 4
      %v3114 = vshll.u32 %v2822, 16
      %v3116 = vrot.slane %v3114, 5
      %v3117 = vor.u32 %v3113, %v3116
      %v3118 = vrot.slane %v3117, 4
      %v3120 = vshll.u32 %v2823, 16
      %v3122 = vrot.slane %v3120, 5
      %v3123 = vsel %vm2845, %v3118, %v3122
      %v3124 = vshrl.u32 %v2823, 16
      %v3126 = vrot.slane %v3124, 4
      %v3127 = vor.u32 %v3126, %v3122
      %v3128 = vrot.slane %v3127, 4
      %v3130 = vshll.u32 %v2824, 16
      %v3132 = vrot.slane %v3130, 5
      %v3133 = vsel %vm2845, %v3128, %v3132
      %v3135 = vshrl.u32 %v2825, 16
      %v3137 = vrot.slane %v3135, 4
      %v3138 = vshll.u32 %v2825, 16
      %v3140 = vrot.slane %v3138, 5
      %v3141 = vor.u32 %v3137, %v3140
      %v3142 = vrot.slane %v3141, 4
      %v3144 = vshll.u32 %v2826, 16
      %v3146 = vrot.slane %v3144, 5
      %v3147 = vsel %vm2845, %v3142, %v3146
      %v3148 = vshrl.u32 %v2826, 16
      %v3150 = vrot.slane %v3148, 4
      %v3151 = vor.u32 %v3150, %v3146
      %v3152 = vrot.slane %v3151, 4
      %v3154 = vshll.u32 %v2827, 16
      %v3156 = vrot.slane %v3154, 5
      %v3157 = vsel %vm2845, %v3152, %v3156
      %v3159 = vshrl.u32 %v2828, 16
      %v3161 = vrot.slane %v3159, 4
      %v3162 = vshll.u32 %v2828, 16
      %v3164 = vrot.slane %v3162, 5
      %v3165 = vor.u32 %v3161, %v3164
      %v3166 = vrot.slane %v3165, 4
      %v3168 = vshll.u32 %v2829, 16
      %v3170 = vrot.slane %v3168, 5
      %v3171 = vsel %vm2845, %v3166, %v3170
      %v3172 = vshrl.u32 %v2829, 16
      %v3174 = vrot.slane %v3172, 4
      %v3175 = vor.u32 %v3174, %v3170
      %v3176 = vrot.slane %v3175, 4
      %v3178 = vshll.u32 %v2830, 16
      %v3180 = vrot.slane %v3178, 5
      %v3181 = vsel %vm2845, %v3176, %v3180
      %v3183 = vshrl.u32 %v2831, 16
      %v3185 = vrot.slane %v3183, 4
      %v3186 = vshll.u32 %v2831, 16
      %v3188 = vrot.slane %v3186, 5
      %v3189 = vor.u32 %v3185, %v3188
      %v3190 = vrot.slane %v3189, 4
      %v3192 = vshll.u32 %v2832, 16
      %v3194 = vrot.slane %v3192, 5
      %v3195 = vsel %vm2845, %v3190, %v3194
      %v3196 = vshrl.u32 %v2832, 16
      %v3198 = vrot.slane %v3196, 4
      %v3199 = vor.u32 %v3198, %v3194
      %v3200 = vrot.slane %v3199, 4
      %v3202 = vshll.u32 %v2833, 16
      %v3204 = vrot.slane %v3202, 5
      %v3205 = vsel %vm2845, %v3200, %v3204
      %v3207 = vshrl.u32 %v2834, 16
      %v3209 = vrot.slane %v3207, 4
      %v3210 = vshll.u32 %v2834, 16
      %v3212 = vrot.slane %v3210, 5
      %v3213 = vor.u32 %v3209, %v3212
      %v3214 = vrot.slane %v3213, 4
      %v3216 = vshll.u32 %v2835, 16
      %v3218 = vrot.slane %v3216, 5
      %v3219 = vsel %vm2845, %v3214, %v3218
      %v3220 = vshrl.u32 %v2835, 16
      %v3222 = vrot.slane %v3220, 4
      %v3223 = vor.u32 %v3222, %v3218
      %v3224 = vrot.slane %v3223, 4
      %v3226 = vshll.u32 %v2836, 16
      %v3228 = vrot.slane %v3226, 5
      %v3229 = vsel %vm2845, %v3224, %v3228
      %s3230 = scalar_lea.vmem %s3, 128
      %v3231 = vld [vmem:[%s3230] sm:$0xf]
      %v3232 = vld [vmem:[%s3230 + $0x4] sm:$0xf]
      %v3233 = vld [vmem:[%s3230 + $0x8] sm:$0xf]
      %v3234 = vld [vmem:[%s3230 + $0xc] sm:$0xf]
      %v3235 = vld [vmem:[%s3230 + $0x10] sm:$0xf]
      %v3236 = vld [vmem:[%s3230 + $0x14] sm:$0xf]
      %v3237 = vld [vmem:[%s3230 + $0x18] sm:$0xf]
      %v3238 = vld [vmem:[%s3230 + $0x1c] sm:$0xf]
      %v3239 = vld [vmem:[%s3230 + $0x20] sm:$0xf]
      %v3240 = vld [vmem:[%s3230 + $0x24] sm:$0xf]
      %v3241 = vld [vmem:[%s3230 + $0x28] sm:$0xf]
      %v3242 = vld [vmem:[%s3230 + $0x2c] sm:$0xf]
      %v3243 = vld [vmem:[%s3230 + $0x30] sm:$0xf]
      %v3244 = vld [vmem:[%s3230 + $0x34] sm:$0xf]
      %v3245 = vld [vmem:[%s3230 + $0x38] sm:$0xf]
      %v3246 = vld [vmem:[%s3230 + $0x3c] sm:$0xf]
      %v3247 = vunpack.c.l.b16 %v2859
      %v3248 = vunpack.c.l.b16 %v2869
      %v3249 = vunpack.c.l.b16 %v2883
      %v3250 = vunpack.c.l.b16 %v2893
      %v3251 = vunpack.c.l.b16 %v2907
      %v3252 = vunpack.c.l.b16 %v2917
      %v3253 = vunpack.c.l.b16 %v2931
      %v3254 = vunpack.c.l.b16 %v2941
      %v3255 = vunpack.c.l.b16 %v2955
      %v3256 = vunpack.c.l.b16 %v2965
      %v3257 = vunpack.c.l.b16 %v2979
      %v3258 = vunpack.c.l.b16 %v2989
      %v3259 = vunpack.c.l.b16 %v3003
      %v3260 = vunpack.c.l.b16 %v3013
      %v3261 = vunpack.c.l.b16 %v3027
      %v3262 = vunpack.c.l.b16 %v3037
      %v3263 = vunpack.c.l.b16 %v3051
      %v3264 = vunpack.c.l.b16 %v3061
      %v3265 = vunpack.c.l.b16 %v3075
      %v3266 = vunpack.c.l.b16 %v3085
      %v3267 = vunpack.c.l.b16 %v3099
      %v3268 = vunpack.c.l.b16 %v3109
      %v3269 = vunpack.c.l.b16 %v3123
      %v3270 = vunpack.c.l.b16 %v3133
      %v3271 = vunpack.c.l.b16 %v3147
      %v3272 = vunpack.c.l.b16 %v3157
      %v3273 = vunpack.c.l.b16 %v3171
      %v3274 = vunpack.c.l.b16 %v3181
      %v3275 = vunpack.c.l.b16 %v3195
      %v3276 = vunpack.c.l.b16 %v3205
      %v3277 = vunpack.c.l.b16 %v3219
      %v3278 = vunpack.c.l.b16 %v3229
      %v3279 = vpack.c.b16 %v3248, %v3247
      %v3280 = vpack.c.b16 %v3250, %v3249
      %v3281 = vpack.c.b16 %v3252, %v3251
      %v3282 = vpack.c.b16 %v3254, %v3253
      %v3283 = vpack.c.b16 %v3256, %v3255
      %v3284 = vpack.c.b16 %v3258, %v3257
      %v3285 = vpack.c.b16 %v3260, %v3259
      %v3286 = vpack.c.b16 %v3262, %v3261
      %v3287 = vpack.c.b16 %v3264, %v3263
      %v3288 = vpack.c.b16 %v3266, %v3265
      %v3289 = vpack.c.b16 %v3268, %v3267
      %v3290 = vpack.c.b16 %v3270, %v3269
      %v3291 = vpack.c.b16 %v3272, %v3271
      %v3292 = vpack.c.b16 %v3274, %v3273
      %v3293 = vpack.c.b16 %v3276, %v3275
      %v3294 = vpack.c.b16 %v3278, %v3277
      %v3327 = vunpack.c.l.b16 %v3231
      %v3328 = vunpack.c.l.b16 %v3232
      %v3329 = vunpack.c.l.b16 %v3233
      %v3330 = vunpack.c.l.b16 %v3234
      %v3331 = vunpack.c.l.b16 %v3235
      %v3332 = vunpack.c.l.b16 %v3236
      %v3333 = vunpack.c.l.b16 %v3237
      %v3334 = vunpack.c.l.b16 %v3238
      %v3335 = vunpack.c.l.b16 %v3239
      %v3336 = vunpack.c.l.b16 %v3240
      %v3337 = vunpack.c.l.b16 %v3241
      %v3338 = vunpack.c.l.b16 %v3242
      %v3339 = vunpack.c.l.b16 %v3243
      %v3340 = vunpack.c.l.b16 %v3244
      %v3341 = vunpack.c.l.b16 %v3245
      %v3342 = vunpack.c.l.b16 %v3246
      %v3343 = vpack.c.b16 %v3328, %v3327
      %v3344 = vpack.c.b16 %v3330, %v3329
      %v3345 = vpack.c.b16 %v3332, %v3331
      %v3346 = vpack.c.b16 %v3334, %v3333
      %v3347 = vpack.c.b16 %v3336, %v3335
      %v3348 = vpack.c.b16 %v3338, %v3337
      %v3349 = vpack.c.b16 %v3340, %v3339
      %v3350 = vpack.c.b16 %v3342, %v3341
      %3359 = vmatprep.subr.bf16.mxu0 0
      %3360 = vmatpush1.bf16.msra.mxu0 %v3350
      %3361 = vmatprep.subr.bf16.mxu0 0
      %3362 = vmatpush1.bf16.msra.mxu0 %v3349
      %3363 = vmatprep.subr.bf16.mxu0 0
      %3364 = vmatpush1.bf16.msra.mxu0 %v3348
      %3365 = vmatprep.subr.bf16.mxu0 0
      %3366 = vmatpush1.bf16.msra.mxu0 %v3347
      %3367 = vmatprep.subr.bf16.mxu0 0
      %3368 = vmatpush1.bf16.msra.mxu0 %v3346
      %3369 = vmatprep.subr.bf16.mxu0 0
      %3370 = vmatpush1.bf16.msra.mxu0 %v3345
      %3371 = vmatprep.subr.bf16.mxu0 0
      %3372 = vmatpush1.bf16.msra.mxu0 %v3344
      %3373 = vmatprep.subr.bf16.mxu0 0
      %3374 = vmatpush1.bf16.msra.mxu0 %v3343
      %3375 = vmatprep.subr.bf16.mxu0 0
      %3376 = vmatpush2.bf16.msra.mxu0 0
      %3377 = vmatprep.subr.bf16.mxu0 0
      %3378 = vmatpush2.bf16.msra.mxu0 0
      %3379 = vmatprep.subr.bf16.mxu0 0
      %3380 = vmatpush2.bf16.msra.mxu0 0
      %3381 = vmatprep.subr.bf16.mxu0 0
      %3382 = vmatpush2.bf16.msra.mxu0 0
      %3383 = vmatprep.subr.bf16.mxu0 0
      %3384 = vmatpush2.bf16.msra.mxu0 0
      %3385 = vmatprep.subr.bf16.mxu0 0
      %3386 = vmatpush2.bf16.msra.mxu0 0
      %3387 = vmatprep.subr.bf16.mxu0 0
      %3388 = vmatpush2.bf16.msra.mxu0 0
      %3389 = vmatprep.subr.bf16.mxu0 0
      %3390 = vmatpush2.bf16.msra.mxu0 0
      %3391 = vmatprep.mubr.bf16.mxu0 0
      %3392 = vmatmul.mubr.bf16.gmra.mxu0 %v3279
      %v3393 = vpop.f32.mrf.mxu0
      %v3394 = vadd.f32 0.0, %v3393
      %v3395 = vpop.f32.mrf.mxu0
      %v3396 = vpop.f32.mrf.mxu0
      %v3397 = vadd.f32 0.0, %v3396
      %v3398 = vpop.f32.mrf.mxu0
      %3399 = vmatprep.mubr.bf16.mxu0 0
      %3400 = vmatmul.mubr.bf16.gmra.mxu0 %v3280
      %v3401 = vpop.f32.mrf.mxu0
      %v3402 = vadd.f32 0.0, %v3401
      %v3403 = vpop.f32.mrf.mxu0
      %v3404 = vpop.f32.mrf.mxu0
      %v3405 = vadd.f32 0.0, %v3404
      %v3406 = vpop.f32.mrf.mxu0
      %3407 = vmatprep.mubr.bf16.mxu0 0
      %3408 = vmatmul.mubr.bf16.gmra.mxu0 %v3281
      %v3409 = vpop.f32.mrf.mxu0
      %v3410 = vadd.f32 0.0, %v3409
      %v3411 = vpop.f32.mrf.mxu0
      %v3412 = vpop.f32.mrf.mxu0
      %v3413 = vadd.f32 0.0, %v3412
      %v3414 = vpop.f32.mrf.mxu0
      %3415 = vmatprep.mubr.bf16.mxu0 0
      %3416 = vmatmul.mubr.bf16.gmra.mxu0 %v3282
      %v3417 = vpop.f32.mrf.mxu0
      %v3418 = vadd.f32 0.0, %v3417
      %v3419 = vpop.f32.mrf.mxu0
      %v3420 = vpop.f32.mrf.mxu0
      %v3421 = vadd.f32 0.0, %v3420
      %v3422 = vpop.f32.mrf.mxu0
      %3423 = vmatprep.mubr.bf16.mxu0 0
      %3424 = vmatmul.mubr.bf16.gmra.mxu0 %v3283
      %v3425 = vpop.f32.mrf.mxu0
      %v3426 = vadd.f32 0.0, %v3425
      %v3427 = vpop.f32.mrf.mxu0
      %v3428 = vpop.f32.mrf.mxu0
      %v3429 = vadd.f32 0.0, %v3428
      %v3430 = vpop.f32.mrf.mxu0
      %3431 = vmatprep.mubr.bf16.mxu0 0
      %3432 = vmatmul.mubr.bf16.gmra.mxu0 %v3284
      %v3433 = vpop.f32.mrf.mxu0
      %v3434 = vadd.f32 0.0, %v3433
      %v3435 = vpop.f32.mrf.mxu0
      %v3436 = vpop.f32.mrf.mxu0
      %v3437 = vadd.f32 0.0, %v3436
      %v3438 = vpop.f32.mrf.mxu0
      %3439 = vmatprep.mubr.bf16.mxu0 0
      %3440 = vmatmul.mubr.bf16.gmra.mxu0 %v3285
      %v3441 = vpop.f32.mrf.mxu0
      %v3442 = vadd.f32 0.0, %v3441
      %v3443 = vpop.f32.mrf.mxu0
      %v3444 = vpop.f32.mrf.mxu0
      %v3445 = vadd.f32 0.0, %v3444
      %v3446 = vpop.f32.mrf.mxu0
      %3447 = vmatprep.mubr.bf16.mxu0 0
      %3448 = vmatmul.mubr.bf16.gmra.mxu0 %v3286
      %v3449 = vpop.f32.mrf.mxu0
      %v3450 = vadd.f32 0.0, %v3449
      %v3451 = vpop.f32.mrf.mxu0
      %v3452 = vpop.f32.mrf.mxu0
      %v3453 = vadd.f32 0.0, %v3452
      %v3454 = vpop.f32.mrf.mxu0
      %3455 = vmatprep.mubr.bf16.mxu0 0
      %3456 = vmatmul.mubr.bf16.gmra.mxu0 %v3287
      %v3457 = vpop.f32.mrf.mxu0
      %v3458 = vadd.f32 0.0, %v3457
      %v3459 = vpop.f32.mrf.mxu0
      %v3460 = vpop.f32.mrf.mxu0
      %v3461 = vadd.f32 0.0, %v3460
      %v3462 = vpop.f32.mrf.mxu0
      %3463 = vmatprep.mubr.bf16.mxu0 0
      %3464 = vmatmul.mubr.bf16.gmra.mxu0 %v3288
      %v3465 = vpop.f32.mrf.mxu0
      %v3466 = vadd.f32 0.0, %v3465
      %v3467 = vpop.f32.mrf.mxu0
      %v3468 = vpop.f32.mrf.mxu0
      %v3469 = vadd.f32 0.0, %v3468
      %v3470 = vpop.f32.mrf.mxu0
      %3471 = vmatprep.mubr.bf16.mxu0 0
      %3472 = vmatmul.mubr.bf16.gmra.mxu0 %v3289
      %v3473 = vpop.f32.mrf.mxu0
      %v3474 = vadd.f32 0.0, %v3473
      %v3475 = vpop.f32.mrf.mxu0
      %v3476 = vpop.f32.mrf.mxu0
      %v3477 = vadd.f32 0.0, %v3476
      %v3478 = vpop.f32.mrf.mxu0
      %3479 = vmatprep.mubr.bf16.mxu0 0
      %3480 = vmatmul.mubr.bf16.gmra.mxu0 %v3290
      %v3481 = vpop.f32.mrf.mxu0
      %v3482 = vadd.f32 0.0, %v3481
      %v3483 = vpop.f32.mrf.mxu0
      %v3484 = vpop.f32.mrf.mxu0
      %v3485 = vadd.f32 0.0, %v3484
      %v3486 = vpop.f32.mrf.mxu0
      %3487 = vmatprep.mubr.bf16.mxu0 0
      %3488 = vmatmul.mubr.bf16.gmra.mxu0 %v3291
      %v3489 = vpop.f32.mrf.mxu0
      %v3490 = vadd.f32 0.0, %v3489
      %v3491 = vpop.f32.mrf.mxu0
      %v3492 = vpop.f32.mrf.mxu0
      %v3493 = vadd.f32 0.0, %v3492
      %v3494 = vpop.f32.mrf.mxu0
      %3495 = vmatprep.mubr.bf16.mxu0 0
      %3496 = vmatmul.mubr.bf16.gmra.mxu0 %v3292
      %v3497 = vpop.f32.mrf.mxu0
      %v3498 = vadd.f32 0.0, %v3497
      %v3499 = vpop.f32.mrf.mxu0
      %v3500 = vpop.f32.mrf.mxu0
      %v3501 = vadd.f32 0.0, %v3500
      %v3502 = vpop.f32.mrf.mxu0
      %3503 = vmatprep.mubr.bf16.mxu0 0
      %3504 = vmatmul.mubr.bf16.gmra.mxu0 %v3293
      %v3505 = vpop.f32.mrf.mxu0
      %v3506 = vadd.f32 0.0, %v3505
      %v3507 = vpop.f32.mrf.mxu0
      %v3508 = vpop.f32.mrf.mxu0
      %v3509 = vadd.f32 0.0, %v3508
      %v3510 = vpop.f32.mrf.mxu0
      %3511 = vmatprep.mubr.bf16.mxu0 0
      %3512 = vmatmul.mubr.bf16.gmra.mxu0 %v3294
      %v3513 = vpop.f32.mrf.mxu0
      %v3514 = vadd.f32 0.0, %v3513
      %v3515 = vpop.f32.mrf.mxu0
      %v3516 = vpop.f32.mrf.mxu0
      %v3517 = vadd.f32 0.0, %v3516
      %v3518 = vpop.f32.mrf.mxu0
      %3519 = vdwg.mxu0
      %v3520 = vadd.f32 %v2757, %v3394
      %v3521 = vadd.f32 %v2758, %v3397
      %v3522 = vadd.f32 %v2759, %v3402
      %v3523 = vadd.f32 %v2760, %v3405
      %v3524 = vadd.f32 %v2761, %v3410
      %v3525 = vadd.f32 %v2762, %v3413
      %v3526 = vadd.f32 %v2763, %v3418
      %v3527 = vadd.f32 %v2764, %v3421
      %v3528 = vadd.f32 %v2765, %v3426
      %v3529 = vadd.f32 %v2766, %v3429
      %v3530 = vadd.f32 %v2767, %v3434
      %v3531 = vadd.f32 %v2768, %v3437
      %v3532 = vadd.f32 %v2769, %v3442
      %v3533 = vadd.f32 %v2770, %v3445
      %v3534 = vadd.f32 %v2771, %v3450
      %v3535 = vadd.f32 %v2772, %v3453
      %v3536 = vadd.f32 %v2773, %v3458
      %v3537 = vadd.f32 %v2774, %v3461
      %v3538 = vadd.f32 %v2775, %v3466
      %v3539 = vadd.f32 %v2776, %v3469
      %v3540 = vadd.f32 %v2777, %v3474
      %v3541 = vadd.f32 %v2778, %v3477
      %v3542 = vadd.f32 %v2779, %v3482
      %v3543 = vadd.f32 %v2780, %v3485
      %v3544 = vadd.f32 %v2781, %v3490
      %v3545 = vadd.f32 %v2782, %v3493
      %v3546 = vadd.f32 %v2783, %v3498
      %v3547 = vadd.f32 %v2784, %v3501
      %v3548 = vadd.f32 %v2785, %v3506
      %v3549 = vadd.f32 %v2786, %v3509
      %v3550 = vadd.f32 %v2787, %v3514
      %v3551 = vadd.f32 %v2788, %v3517
      %v3553 = vshrl.u32 %v2837, 16
      %v3555 = vrot.slane %v3553, 4
      %v3556 = vshll.u32 %v2837, 16
      %v3558 = vrot.slane %v3556, 5
      %v3559 = vor.u32 %v3555, %v3558
      %v3560 = vrot.slane %v3559, 4
      %v3562 = vshll.u32 %v2838, 16
      %v3564 = vrot.slane %v3562, 5
      %v3565 = vsel %vm2845, %v3560, %v3564
      %v3566 = vshrl.u32 %v2838, 16
      %v3568 = vrot.slane %v3566, 4
      %v3569 = vor.u32 %v3568, %v3564
      %v3570 = vrot.slane %v3569, 4
      %v3572 = vshll.u32 %v2839, 16
      %v3574 = vrot.slane %v3572, 5
      %v3575 = vsel %vm2845, %v3570, %v3574
      %s3576 = scalar_lea.vmem %s3, 320
      %v3577 = vld [vmem:[%s3576] sm:$0xf]
      %v3578 = vld [vmem:[%s3576 + $0x4] sm:$0xf]
      %v3579 = vld [vmem:[%s3576 + $0x8] sm:$0xf]
      %v3580 = vld [vmem:[%s3576 + $0xc] sm:$0xf]
      %v3581 = vld [vmem:[%s3576 + $0x10] sm:$0xf]
      %v3582 = vld [vmem:[%s3576 + $0x14] sm:$0xf]
      %v3583 = vld [vmem:[%s3576 + $0x18] sm:$0xf]
      %v3584 = vld [vmem:[%s3576 + $0x1c] sm:$0xf]
      %v3585 = vld [vmem:[%s3576 + $0x20] sm:$0xf]
      %v3586 = vld [vmem:[%s3576 + $0x24] sm:$0xf]
      %v3587 = vld [vmem:[%s3576 + $0x28] sm:$0xf]
      %v3588 = vld [vmem:[%s3576 + $0x2c] sm:$0xf]
      %v3589 = vld [vmem:[%s3576 + $0x30] sm:$0xf]
      %v3590 = vld [vmem:[%s3576 + $0x34] sm:$0xf]
      %v3591 = vld [vmem:[%s3576 + $0x38] sm:$0xf]
      %v3592 = vld [vmem:[%s3576 + $0x3c] sm:$0xf]
      %v3593 = vunpack.c.l.b16 %v3565
      %v3594 = vunpack.c.l.b16 %v3575
      %v3595 = vpack.c.b16 %v3594, %v3593
      %v3613 = vunpack.c.l.b16 %v3577
      %v3614 = vunpack.c.l.b16 %v3578
      %v3615 = vunpack.c.l.b16 %v3579
      %v3616 = vunpack.c.l.b16 %v3580
      %v3617 = vunpack.c.l.b16 %v3581
      %v3618 = vunpack.c.l.b16 %v3582
      %v3619 = vunpack.c.l.b16 %v3583
      %v3620 = vunpack.c.l.b16 %v3584
      %v3621 = vunpack.c.l.b16 %v3585
      %v3622 = vunpack.c.l.b16 %v3586
      %v3623 = vunpack.c.l.b16 %v3587
      %v3624 = vunpack.c.l.b16 %v3588
      %v3625 = vunpack.c.l.b16 %v3589
      %v3626 = vunpack.c.l.b16 %v3590
      %v3627 = vunpack.c.l.b16 %v3591
      %v3628 = vunpack.c.l.b16 %v3592
      %v3629 = vpack.c.b16 %v3614, %v3613
      %v3630 = vpack.c.b16 %v3616, %v3615
      %v3631 = vpack.c.b16 %v3618, %v3617
      %v3632 = vpack.c.b16 %v3620, %v3619
      %v3633 = vpack.c.b16 %v3622, %v3621
      %v3634 = vpack.c.b16 %v3624, %v3623
      %v3635 = vpack.c.b16 %v3626, %v3625
      %v3636 = vpack.c.b16 %v3628, %v3627
      %3645 = vmatprep.subr.bf16.mxu0 0
      %3646 = vmatpush1.bf16.msra.mxu0 %v3636
      %3647 = vmatprep.subr.bf16.mxu0 0
      %3648 = vmatpush1.bf16.msra.mxu0 %v3635
      %3649 = vmatprep.subr.bf16.mxu0 0
      %3650 = vmatpush1.bf16.msra.mxu0 %v3634
      %3651 = vmatprep.subr.bf16.mxu0 0
      %3652 = vmatpush1.bf16.msra.mxu0 %v3633
      %3653 = vmatprep.subr.bf16.mxu0 0
      %3654 = vmatpush1.bf16.msra.mxu0 %v3632
      %3655 = vmatprep.subr.bf16.mxu0 0
      %3656 = vmatpush1.bf16.msra.mxu0 %v3631
      %3657 = vmatprep.subr.bf16.mxu0 0
      %3658 = vmatpush1.bf16.msra.mxu0 %v3630
      %3659 = vmatprep.subr.bf16.mxu0 0
      %3660 = vmatpush1.bf16.msra.mxu0 %v3629
      %3661 = vmatprep.subr.bf16.mxu0 0
      %3662 = vmatpush2.bf16.msra.mxu0 0
      %3663 = vmatprep.subr.bf16.mxu0 0
      %3664 = vmatpush2.bf16.msra.mxu0 0
      %3665 = vmatprep.subr.bf16.mxu0 0
      %3666 = vmatpush2.bf16.msra.mxu0 0
      %3667 = vmatprep.subr.bf16.mxu0 0
      %3668 = vmatpush2.bf16.msra.mxu0 0
      %3669 = vmatprep.subr.bf16.mxu0 0
      %3670 = vmatpush2.bf16.msra.mxu0 0
      %3671 = vmatprep.subr.bf16.mxu0 0
      %3672 = vmatpush2.bf16.msra.mxu0 0
      %3673 = vmatprep.subr.bf16.mxu0 0
      %3674 = vmatpush2.bf16.msra.mxu0 0
      %3675 = vmatprep.subr.bf16.mxu0 0
      %3676 = vmatpush2.bf16.msra.mxu0 0
      %3677 = vmatprep.mubr.bf16.mxu0 0
      %3678 = vmatmul.mubr.bf16.gmra.mxu0 %v3280
      %v3679 = vpop.f32.mrf.mxu0
      %v3680 = vadd.f32 0.0, %v3679
      %v3681 = vpop.f32.mrf.mxu0
      %v3682 = vpop.f32.mrf.mxu0
      %v3683 = vadd.f32 0.0, %v3682
      %v3684 = vpop.f32.mrf.mxu0
      %3685 = vmatprep.mubr.bf16.mxu0 0
      %3686 = vmatmul.mubr.bf16.gmra.mxu0 %v3281
      %v3687 = vpop.f32.mrf.mxu0
      %v3688 = vadd.f32 0.0, %v3687
      %v3689 = vpop.f32.mrf.mxu0
      %v3690 = vpop.f32.mrf.mxu0
      %v3691 = vadd.f32 0.0, %v3690
      %v3692 = vpop.f32.mrf.mxu0
      %3693 = vmatprep.mubr.bf16.mxu0 0
      %3694 = vmatmul.mubr.bf16.gmra.mxu0 %v3282
      %v3695 = vpop.f32.mrf.mxu0
      %v3696 = vadd.f32 0.0, %v3695
      %v3697 = vpop.f32.mrf.mxu0
      %v3698 = vpop.f32.mrf.mxu0
      %v3699 = vadd.f32 0.0, %v3698
      %v3700 = vpop.f32.mrf.mxu0
      %3701 = vmatprep.mubr.bf16.mxu0 0
      %3702 = vmatmul.mubr.bf16.gmra.mxu0 %v3283
      %v3703 = vpop.f32.mrf.mxu0
      %v3704 = vadd.f32 0.0, %v3703
      %v3705 = vpop.f32.mrf.mxu0
      %v3706 = vpop.f32.mrf.mxu0
      %v3707 = vadd.f32 0.0, %v3706
      %v3708 = vpop.f32.mrf.mxu0
      %3709 = vmatprep.mubr.bf16.mxu0 0
      %3710 = vmatmul.mubr.bf16.gmra.mxu0 %v3284
      %v3711 = vpop.f32.mrf.mxu0
      %v3712 = vadd.f32 0.0, %v3711
      %v3713 = vpop.f32.mrf.mxu0
      %v3714 = vpop.f32.mrf.mxu0
      %v3715 = vadd.f32 0.0, %v3714
      %v3716 = vpop.f32.mrf.mxu0
      %3717 = vmatprep.mubr.bf16.mxu0 0
      %3718 = vmatmul.mubr.bf16.gmra.mxu0 %v3285
      %v3719 = vpop.f32.mrf.mxu0
      %v3720 = vadd.f32 0.0, %v3719
      %v3721 = vpop.f32.mrf.mxu0
      %v3722 = vpop.f32.mrf.mxu0
      %v3723 = vadd.f32 0.0, %v3722
      %v3724 = vpop.f32.mrf.mxu0
      %3725 = vmatprep.mubr.bf16.mxu0 0
      %3726 = vmatmul.mubr.bf16.gmra.mxu0 %v3286
      %v3727 = vpop.f32.mrf.mxu0
      %v3728 = vadd.f32 0.0, %v3727
      %v3729 = vpop.f32.mrf.mxu0
      %v3730 = vpop.f32.mrf.mxu0
      %v3731 = vadd.f32 0.0, %v3730
      %v3732 = vpop.f32.mrf.mxu0
      %3733 = vmatprep.mubr.bf16.mxu0 0
      %3734 = vmatmul.mubr.bf16.gmra.mxu0 %v3287
      %v3735 = vpop.f32.mrf.mxu0
      %v3736 = vadd.f32 0.0, %v3735
      %v3737 = vpop.f32.mrf.mxu0
      %v3738 = vpop.f32.mrf.mxu0
      %v3739 = vadd.f32 0.0, %v3738
      %v3740 = vpop.f32.mrf.mxu0
      %3741 = vmatprep.mubr.bf16.mxu0 0
      %3742 = vmatmul.mubr.bf16.gmra.mxu0 %v3288
      %v3743 = vpop.f32.mrf.mxu0
      %v3744 = vadd.f32 0.0, %v3743
      %v3745 = vpop.f32.mrf.mxu0
      %v3746 = vpop.f32.mrf.mxu0
      %v3747 = vadd.f32 0.0, %v3746
      %v3748 = vpop.f32.mrf.mxu0
      %3749 = vmatprep.mubr.bf16.mxu0 0
      %3750 = vmatmul.mubr.bf16.gmra.mxu0 %v3289
      %v3751 = vpop.f32.mrf.mxu0
      %v3752 = vadd.f32 0.0, %v3751
      %v3753 = vpop.f32.mrf.mxu0
      %v3754 = vpop.f32.mrf.mxu0
      %v3755 = vadd.f32 0.0, %v3754
      %v3756 = vpop.f32.mrf.mxu0
      %3757 = vmatprep.mubr.bf16.mxu0 0
      %3758 = vmatmul.mubr.bf16.gmra.mxu0 %v3290
      %v3759 = vpop.f32.mrf.mxu0
      %v3760 = vadd.f32 0.0, %v3759
      %v3761 = vpop.f32.mrf.mxu0
      %v3762 = vpop.f32.mrf.mxu0
      %v3763 = vadd.f32 0.0, %v3762
      %v3764 = vpop.f32.mrf.mxu0
      %3765 = vmatprep.mubr.bf16.mxu0 0
      %3766 = vmatmul.mubr.bf16.gmra.mxu0 %v3291
      %v3767 = vpop.f32.mrf.mxu0
      %v3768 = vadd.f32 0.0, %v3767
      %v3769 = vpop.f32.mrf.mxu0
      %v3770 = vpop.f32.mrf.mxu0
      %v3771 = vadd.f32 0.0, %v3770
      %v3772 = vpop.f32.mrf.mxu0
      %3773 = vmatprep.mubr.bf16.mxu0 0
      %3774 = vmatmul.mubr.bf16.gmra.mxu0 %v3292
      %v3775 = vpop.f32.mrf.mxu0
      %v3776 = vadd.f32 0.0, %v3775
      %v3777 = vpop.f32.mrf.mxu0
      %v3778 = vpop.f32.mrf.mxu0
      %v3779 = vadd.f32 0.0, %v3778
      %v3780 = vpop.f32.mrf.mxu0
      %3781 = vmatprep.mubr.bf16.mxu0 0
      %3782 = vmatmul.mubr.bf16.gmra.mxu0 %v3293
      %v3783 = vpop.f32.mrf.mxu0
      %v3784 = vadd.f32 0.0, %v3783
      %v3785 = vpop.f32.mrf.mxu0
      %v3786 = vpop.f32.mrf.mxu0
      %v3787 = vadd.f32 0.0, %v3786
      %v3788 = vpop.f32.mrf.mxu0
      %3789 = vmatprep.mubr.bf16.mxu0 0
      %3790 = vmatmul.mubr.bf16.gmra.mxu0 %v3294
      %v3791 = vpop.f32.mrf.mxu0
      %v3792 = vadd.f32 0.0, %v3791
      %v3793 = vpop.f32.mrf.mxu0
      %v3794 = vpop.f32.mrf.mxu0
      %v3795 = vadd.f32 0.0, %v3794
      %v3796 = vpop.f32.mrf.mxu0
      %3797 = vmatprep.mubr.bf16.mxu0 0
      %3798 = vmatmul.mubr.bf16.gmra.mxu0 %v3595
      %v3799 = vpop.f32.mrf.mxu0
      %v3800 = vadd.f32 0.0, %v3799
      %v3801 = vpop.f32.mrf.mxu0
      %v3802 = vpop.f32.mrf.mxu0
      %v3803 = vadd.f32 0.0, %v3802
      %v3804 = vpop.f32.mrf.mxu0
      %3805 = vdwg.mxu0
      %v3806 = vadd.f32 %v3520, %v3680
      %v3807 = vadd.f32 %v3521, %v3683
      %v3808 = vadd.f32 %v3522, %v3688
      %v3809 = vadd.f32 %v3523, %v3691
      %v3810 = vadd.f32 %v3524, %v3696
      %v3811 = vadd.f32 %v3525, %v3699
      %v3812 = vadd.f32 %v3526, %v3704
      %v3813 = vadd.f32 %v3527, %v3707
      %v3814 = vadd.f32 %v3528, %v3712
      %v3815 = vadd.f32 %v3529, %v3715
      %v3816 = vadd.f32 %v3530, %v3720
      %v3817 = vadd.f32 %v3531, %v3723
      %v3818 = vadd.f32 %v3532, %v3728
      %v3819 = vadd.f32 %v3533, %v3731
      %v3820 = vadd.f32 %v3534, %v3736
      %v3821 = vadd.f32 %v3535, %v3739
      %v3822 = vadd.f32 %v3536, %v3744
      %v3823 = vadd.f32 %v3537, %v3747
      %v3824 = vadd.f32 %v3538, %v3752
      %v3825 = vadd.f32 %v3539, %v3755
      %v3826 = vadd.f32 %v3540, %v3760
      %v3827 = vadd.f32 %v3541, %v3763
      %v3828 = vadd.f32 %v3542, %v3768
      %v3829 = vadd.f32 %v3543, %v3771
      %v3830 = vadd.f32 %v3544, %v3776
      %v3831 = vadd.f32 %v3545, %v3779
      %v3832 = vadd.f32 %v3546, %v3784
      %v3833 = vadd.f32 %v3547, %v3787
      %v3834 = vadd.f32 %v3548, %v3792
      %v3835 = vadd.f32 %v3549, %v3795
      %v3836 = vadd.f32 %v3550, %v3800
      %v3837 = vadd.f32 %v3551, %v3803
      %v3839 = vshrl.u32 %v2840, 16
      %v3841 = vrot.slane %v3839, 4
      %v3842 = vshll.u32 %v2840, 16
      %v3844 = vrot.slane %v3842, 5
      %v3845 = vor.u32 %v3841, %v3844
      %v3846 = vrot.slane %v3845, 4
      %v3848 = vshll.u32 %v2841, 16
      %v3850 = vrot.slane %v3848, 5
      %v3851 = vsel %vm2845, %v3846, %v3850
      %v3852 = vshrl.u32 %v2841, 16
      %v3854 = vrot.slane %v3852, 4
      %v3855 = vor.u32 %v3854, %v3850
      %v3856 = vrot.slane %v3855, 4
      %v3858 = vshll.u32 %v2842, 16
      %v3860 = vrot.slane %v3858, 5
      %v3861 = vsel %vm2845, %v3856, %v3860
      %s3862 = scalar_lea.vmem %s3, 512
      %v3863 = vld [vmem:[%s3862] sm:$0xf]
      %v3864 = vld [vmem:[%s3862 + $0x4] sm:$0xf]
      %v3865 = vld [vmem:[%s3862 + $0x8] sm:$0xf]
      %v3866 = vld [vmem:[%s3862 + $0xc] sm:$0xf]
      %v3867 = vld [vmem:[%s3862 + $0x10] sm:$0xf]
      %v3868 = vld [vmem:[%s3862 + $0x14] sm:$0xf]
      %v3869 = vld [vmem:[%s3862 + $0x18] sm:$0xf]
      %v3870 = vld [vmem:[%s3862 + $0x1c] sm:$0xf]
      %v3871 = vld [vmem:[%s3862 + $0x20] sm:$0xf]
      %v3872 = vld [vmem:[%s3862 + $0x24] sm:$0xf]
      %v3873 = vld [vmem:[%s3862 + $0x28] sm:$0xf]
      %v3874 = vld [vmem:[%s3862 + $0x2c] sm:$0xf]
      %v3875 = vld [vmem:[%s3862 + $0x30] sm:$0xf]
      %v3876 = vld [vmem:[%s3862 + $0x34] sm:$0xf]
      %v3877 = vld [vmem:[%s3862 + $0x38] sm:$0xf]
      %v3878 = vld [vmem:[%s3862 + $0x3c] sm:$0xf]
      %v3879 = vunpack.c.l.b16 %v3851
      %v3880 = vunpack.c.l.b16 %v3861
      %v3881 = vpack.c.b16 %v3880, %v3879
      %v3899 = vunpack.c.l.b16 %v3863
      %v3900 = vunpack.c.l.b16 %v3864
      %v3901 = vunpack.c.l.b16 %v3865
      %v3902 = vunpack.c.l.b16 %v3866
      %v3903 = vunpack.c.l.b16 %v3867
      %v3904 = vunpack.c.l.b16 %v3868
      %v3905 = vunpack.c.l.b16 %v3869
      %v3906 = vunpack.c.l.b16 %v3870
      %v3907 = vunpack.c.l.b16 %v3871
      %v3908 = vunpack.c.l.b16 %v3872
      %v3909 = vunpack.c.l.b16 %v3873
      %v3910 = vunpack.c.l.b16 %v3874
      %v3911 = vunpack.c.l.b16 %v3875
      %v3912 = vunpack.c.l.b16 %v3876
      %v3913 = vunpack.c.l.b16 %v3877
      %v3914 = vunpack.c.l.b16 %v3878
      %v3915 = vpack.c.b16 %v3900, %v3899
      %v3916 = vpack.c.b16 %v3902, %v3901
      %v3917 = vpack.c.b16 %v3904, %v3903
      %v3918 = vpack.c.b16 %v3906, %v3905
      %v3919 = vpack.c.b16 %v3908, %v3907
      %v3920 = vpack.c.b16 %v3910, %v3909
      %v3921 = vpack.c.b16 %v3912, %v3911
      %v3922 = vpack.c.b16 %v3914, %v3913
      %3931 = vmatprep.subr.bf16.mxu0 0
      %3932 = vmatpush1.bf16.msra.mxu0 %v3922
      %3933 = vmatprep.subr.bf16.mxu0 0
      %3934 = vmatpush1.bf16.msra.mxu0 %v3921
      %3935 = vmatprep.subr.bf16.mxu0 0
      %3936 = vmatpush1.bf16.msra.mxu0 %v3920
      %3937 = vmatprep.subr.bf16.mxu0 0
      %3938 = vmatpush1.bf16.msra.mxu0 %v3919
      %3939 = vmatprep.subr.bf16.mxu0 0
      %3940 = vmatpush1.bf16.msra.mxu0 %v3918
      %3941 = vmatprep.subr.bf16.mxu0 0
      %3942 = vmatpush1.bf16.msra.mxu0 %v3917
      %3943 = vmatprep.subr.bf16.mxu0 0
      %3944 = vmatpush1.bf16.msra.mxu0 %v3916
      %3945 = vmatprep.subr.bf16.mxu0 0
      %3946 = vmatpush1.bf16.msra.mxu0 %v3915
      %3947 = vmatprep.subr.bf16.mxu0 0
      %3948 = vmatpush2.bf16.msra.mxu0 0
      %3949 = vmatprep.subr.bf16.mxu0 0
      %3950 = vmatpush2.bf16.msra.mxu0 0
      %3951 = vmatprep.subr.bf16.mxu0 0
      %3952 = vmatpush2.bf16.msra.mxu0 0
      %3953 = vmatprep.subr.bf16.mxu0 0
      %3954 = vmatpush2.bf16.msra.mxu0 0
      %3955 = vmatprep.subr.bf16.mxu0 0
      %3956 = vmatpush2.bf16.msra.mxu0 0
      %3957 = vmatprep.subr.bf16.mxu0 0
      %3958 = vmatpush2.bf16.msra.mxu0 0
      %3959 = vmatprep.subr.bf16.mxu0 0
      %3960 = vmatpush2.bf16.msra.mxu0 0
      %3961 = vmatprep.subr.bf16.mxu0 0
      %3962 = vmatpush2.bf16.msra.mxu0 0
      %3963 = vmatprep.mubr.bf16.mxu0 0
      %3964 = vmatmul.mubr.bf16.gmra.mxu0 %v3281
      %v3965 = vpop.f32.mrf.mxu0
      %v3966 = vadd.f32 0.0, %v3965
      %v3967 = vpop.f32.mrf.mxu0
      %v3968 = vpop.f32.mrf.mxu0
      %v3969 = vadd.f32 0.0, %v3968
      %v3970 = vpop.f32.mrf.mxu0
      %3971 = vmatprep.mubr.bf16.mxu0 0
      %3972 = vmatmul.mubr.bf16.gmra.mxu0 %v3282
      %v3973 = vpop.f32.mrf.mxu0
      %v3974 = vadd.f32 0.0, %v3973
      %v3975 = vpop.f32.mrf.mxu0
      %v3976 = vpop.f32.mrf.mxu0
      %v3977 = vadd.f32 0.0, %v3976
      %v3978 = vpop.f32.mrf.mxu0
      %3979 = vmatprep.mubr.bf16.mxu0 0
      %3980 = vmatmul.mubr.bf16.gmra.mxu0 %v3283
      %v3981 = vpop.f32.mrf.mxu0
      %v3982 = vadd.f32 0.0, %v3981
      %v3983 = vpop.f32.mrf.mxu0
      %v3984 = vpop.f32.mrf.mxu0
      %v3985 = vadd.f32 0.0, %v3984
      %v3986 = vpop.f32.mrf.mxu0
      %3987 = vmatprep.mubr.bf16.mxu0 0
      %3988 = vmatmul.mubr.bf16.gmra.mxu0 %v3284
      %v3989 = vpop.f32.mrf.mxu0
      %v3990 = vadd.f32 0.0, %v3989
      %v3991 = vpop.f32.mrf.mxu0
      %v3992 = vpop.f32.mrf.mxu0
      %v3993 = vadd.f32 0.0, %v3992
      %v3994 = vpop.f32.mrf.mxu0
      %3995 = vmatprep.mubr.bf16.mxu0 0
      %3996 = vmatmul.mubr.bf16.gmra.mxu0 %v3285
      %v3997 = vpop.f32.mrf.mxu0
      %v3998 = vadd.f32 0.0, %v3997
      %v3999 = vpop.f32.mrf.mxu0
      %v4000 = vpop.f32.mrf.mxu0
      %v4001 = vadd.f32 0.0, %v4000
      %v4002 = vpop.f32.mrf.mxu0
      %4003 = vmatprep.mubr.bf16.mxu0 0
      %4004 = vmatmul.mubr.bf16.gmra.mxu0 %v3286
      %v4005 = vpop.f32.mrf.mxu0
      %v4006 = vadd.f32 0.0, %v4005
      %v4007 = vpop.f32.mrf.mxu0
      %v4008 = vpop.f32.mrf.mxu0
      %v4009 = vadd.f32 0.0, %v4008
      %v4010 = vpop.f32.mrf.mxu0
      %4011 = vmatprep.mubr.bf16.mxu0 0
      %4012 = vmatmul.mubr.bf16.gmra.mxu0 %v3287
      %v4013 = vpop.f32.mrf.mxu0
      %v4014 = vadd.f32 0.0, %v4013
      %v4015 = vpop.f32.mrf.mxu0
      %v4016 = vpop.f32.mrf.mxu0
      %v4017 = vadd.f32 0.0, %v4016
      %v4018 = vpop.f32.mrf.mxu0
      %4019 = vmatprep.mubr.bf16.mxu0 0
      %4020 = vmatmul.mubr.bf16.gmra.mxu0 %v3288
      %v4021 = vpop.f32.mrf.mxu0
      %v4022 = vadd.f32 0.0, %v4021
      %v4023 = vpop.f32.mrf.mxu0
      %v4024 = vpop.f32.mrf.mxu0
      %v4025 = vadd.f32 0.0, %v4024
      %v4026 = vpop.f32.mrf.mxu0
      %4027 = vmatprep.mubr.bf16.mxu0 0
      %4028 = vmatmul.mubr.bf16.gmra.mxu0 %v3289
      %v4029 = vpop.f32.mrf.mxu0
      %v4030 = vadd.f32 0.0, %v4029
      %v4031 = vpop.f32.mrf.mxu0
      %v4032 = vpop.f32.mrf.mxu0
      %v4033 = vadd.f32 0.0, %v4032
      %v4034 = vpop.f32.mrf.mxu0
      %4035 = vmatprep.mubr.bf16.mxu0 0
      %4036 = vmatmul.mubr.bf16.gmra.mxu0 %v3290
      %v4037 = vpop.f32.mrf.mxu0
      %v4038 = vadd.f32 0.0, %v4037
      %v4039 = vpop.f32.mrf.mxu0
      %v4040 = vpop.f32.mrf.mxu0
      %v4041 = vadd.f32 0.0, %v4040
      %v4042 = vpop.f32.mrf.mxu0
      %4043 = vmatprep.mubr.bf16.mxu0 0
      %4044 = vmatmul.mubr.bf16.gmra.mxu0 %v3291
      %v4045 = vpop.f32.mrf.mxu0
      %v4046 = vadd.f32 0.0, %v4045
      %v4047 = vpop.f32.mrf.mxu0
      %v4048 = vpop.f32.mrf.mxu0
      %v4049 = vadd.f32 0.0, %v4048
      %v4050 = vpop.f32.mrf.mxu0
      %4051 = vmatprep.mubr.bf16.mxu0 0
      %4052 = vmatmul.mubr.bf16.gmra.mxu0 %v3292
      %v4053 = vpop.f32.mrf.mxu0
      %v4054 = vadd.f32 0.0, %v4053
      %v4055 = vpop.f32.mrf.mxu0
      %v4056 = vpop.f32.mrf.mxu0
      %v4057 = vadd.f32 0.0, %v4056
      %v4058 = vpop.f32.mrf.mxu0
      %4059 = vmatprep.mubr.bf16.mxu0 0
      %4060 = vmatmul.mubr.bf16.gmra.mxu0 %v3293
      %v4061 = vpop.f32.mrf.mxu0
      %v4062 = vadd.f32 0.0, %v4061
      %v4063 = vpop.f32.mrf.mxu0
      %v4064 = vpop.f32.mrf.mxu0
      %v4065 = vadd.f32 0.0, %v4064
      %v4066 = vpop.f32.mrf.mxu0
      %4067 = vmatprep.mubr.bf16.mxu0 0
      %4068 = vmatmul.mubr.bf16.gmra.mxu0 %v3294
      %v4069 = vpop.f32.mrf.mxu0
      %v4070 = vadd.f32 0.0, %v4069
      %v4071 = vpop.f32.mrf.mxu0
      %v4072 = vpop.f32.mrf.mxu0
      %v4073 = vadd.f32 0.0, %v4072
      %v4074 = vpop.f32.mrf.mxu0
      %4075 = vmatprep.mubr.bf16.mxu0 0
      %4076 = vmatmul.mubr.bf16.gmra.mxu0 %v3595
      %v4077 = vpop.f32.mrf.mxu0
      %v4078 = vadd.f32 0.0, %v4077
      %v4079 = vpop.f32.mrf.mxu0
      %v4080 = vpop.f32.mrf.mxu0
      %v4081 = vadd.f32 0.0, %v4080
      %v4082 = vpop.f32.mrf.mxu0
      %4083 = vmatprep.mubr.bf16.mxu0 0
      %4084 = vmatmul.mubr.bf16.gmra.mxu0 %v3881
      %v4085 = vpop.f32.mrf.mxu0
      %v4086 = vadd.f32 0.0, %v4085
      %v4087 = vpop.f32.mrf.mxu0
      %v4088 = vpop.f32.mrf.mxu0
      %v4089 = vadd.f32 0.0, %v4088
      %v4090 = vpop.f32.mrf.mxu0
      %4091 = vdwg.mxu0
      %v4092 = vadd.f32 %v3806, %v3966
      %v4093 = vadd.f32 %v3807, %v3969
      %v4094 = vadd.f32 %v3808, %v3974
      %v4095 = vadd.f32 %v3809, %v3977
      %v4096 = vadd.f32 %v3810, %v3982
      %v4097 = vadd.f32 %v3811, %v3985
      %v4098 = vadd.f32 %v3812, %v3990
      %v4099 = vadd.f32 %v3813, %v3993
      %v4100 = vadd.f32 %v3814, %v3998
      %v4101 = vadd.f32 %v3815, %v4001
      %v4102 = vadd.f32 %v3816, %v4006
      %v4103 = vadd.f32 %v3817, %v4009
      %v4104 = vadd.f32 %v3818, %v4014
      %v4105 = vadd.f32 %v3819, %v4017
      %v4106 = vadd.f32 %v3820, %v4022
      %v4107 = vadd.f32 %v3821, %v4025
      %v4108 = vadd.f32 %v3822, %v4030
      %v4109 = vadd.f32 %v3823, %v4033
      %v4110 = vadd.f32 %v3824, %v4038
      %v4111 = vadd.f32 %v3825, %v4041
      %v4112 = vadd.f32 %v3826, %v4046
      %v4113 = vadd.f32 %v3827, %v4049
      %v4114 = vadd.f32 %v3828, %v4054
      %v4115 = vadd.f32 %v3829, %v4057
      %v4116 = vadd.f32 %v3830, %v4062
      %v4117 = vadd.f32 %v3831, %v4065
      %v4118 = vadd.f32 %v3832, %v4070
      %v4119 = vadd.f32 %v3833, %v4073
      %v4120 = vadd.f32 %v3834, %v4078
      %v4121 = vadd.f32 %v3835, %v4081
      %v4122 = vadd.f32 %v3836, %v4086
      %v4123 = vadd.f32 %v3837, %v4089
      %v4124 = vld [vmem:[%s4] sm:$0x1]
      %v4126 = vlaneseq
      %v4127 = vshrl.u32 %v4126, 7
      %v4128 = vsub.s32 0, %v4127
      %v4129 = vrot.slane %v4124, %v4128
      %v4131 = vadd.f32 %v4092, %v4129
      %v4132 = vadd.f32 %v4093, %v4129
      %v4133 = vadd.f32 %v4094, %v4129
      %v4134 = vadd.f32 %v4095, %v4129
      %v4135 = vadd.f32 %v4096, %v4129
      %v4136 = vadd.f32 %v4097, %v4129
      %v4137 = vadd.f32 %v4098, %v4129
      %v4138 = vadd.f32 %v4099, %v4129
      %v4139 = vadd.f32 %v4100, %v4129
      %v4140 = vadd.f32 %v4101, %v4129
      %v4141 = vadd.f32 %v4102, %v4129
      %v4142 = vadd.f32 %v4103, %v4129
      %v4143 = vadd.f32 %v4104, %v4129
      %v4144 = vadd.f32 %v4105, %v4129
      %v4145 = vadd.f32 %v4106, %v4129
      %v4146 = vadd.f32 %v4107, %v4129
      %v4147 = vadd.f32 %v4108, %v4129
      %v4148 = vadd.f32 %v4109, %v4129
      %v4149 = vadd.f32 %v4110, %v4129
      %v4150 = vadd.f32 %v4111, %v4129
      %v4151 = vadd.f32 %v4112, %v4129
      %v4152 = vadd.f32 %v4113, %v4129
      %v4153 = vadd.f32 %v4114, %v4129
      %v4154 = vadd.f32 %v4115, %v4129
      %v4155 = vadd.f32 %v4116, %v4129
      %v4156 = vadd.f32 %v4117, %v4129
      %v4157 = vadd.f32 %v4118, %v4129
      %v4158 = vadd.f32 %v4119, %v4129
      %v4159 = vadd.f32 %v4120, %v4129
      %v4160 = vadd.f32 %v4121, %v4129
      %v4161 = vadd.f32 %v4122, %v4129
      %v4162 = vadd.f32 %v4123, %v4129
      %v4163 = vpack.c.bf16 %v4132, %v4131
      %v4164 = vpack.c.bf16 %v4134, %v4133
      %v4165 = vpack.c.bf16 %v4136, %v4135
      %v4166 = vpack.c.bf16 %v4138, %v4137
      %v4167 = vpack.c.bf16 %v4140, %v4139
      %v4168 = vpack.c.bf16 %v4142, %v4141
      %v4169 = vpack.c.bf16 %v4144, %v4143
      %v4170 = vpack.c.bf16 %v4146, %v4145
      %v4171 = vpack.c.bf16 %v4148, %v4147
      %v4172 = vpack.c.bf16 %v4150, %v4149
      %v4173 = vpack.c.bf16 %v4152, %v4151
      %v4174 = vpack.c.bf16 %v4154, %v4153
      %v4175 = vpack.c.bf16 %v4156, %v4155
      %v4176 = vpack.c.bf16 %v4158, %v4157
      %v4177 = vpack.c.bf16 %v4160, %v4159
      %v4178 = vpack.c.bf16 %v4162, %v4161
      %v4195 = vunpack.c.l.b16 %v4163
      %v4196 = vunpack.c.h.b16 %v4163
      %v4197 = vunpack.c.l.b16 %v4164
      %v4198 = vunpack.c.h.b16 %v4164
      %v4199 = vunpack.c.l.b16 %v4165
      %v4200 = vunpack.c.h.b16 %v4165
      %v4201 = vunpack.c.l.b16 %v4166
      %v4202 = vunpack.c.h.b16 %v4166
      %v4203 = vunpack.c.l.b16 %v4167
      %v4204 = vunpack.c.h.b16 %v4167
      %v4205 = vunpack.c.l.b16 %v4168
      %v4206 = vunpack.c.h.b16 %v4168
      %v4207 = vunpack.c.l.b16 %v4169
      %v4208 = vunpack.c.h.b16 %v4169
      %v4209 = vunpack.c.l.b16 %v4170
      %v4210 = vunpack.c.h.b16 %v4170
      %v4211 = vunpack.c.l.b16 %v4171
      %v4212 = vunpack.c.h.b16 %v4171
      %v4213 = vunpack.c.l.b16 %v4172
      %v4214 = vunpack.c.h.b16 %v4172
      %v4215 = vunpack.c.l.b16 %v4173
      %v4216 = vunpack.c.h.b16 %v4173
      %v4217 = vunpack.c.l.b16 %v4174
      %v4218 = vunpack.c.h.b16 %v4174
      %v4219 = vunpack.c.l.b16 %v4175
      %v4220 = vunpack.c.h.b16 %v4175
      %v4221 = vunpack.c.l.b16 %v4176
      %v4222 = vunpack.c.h.b16 %v4176
      %v4223 = vunpack.c.l.b16 %v4177
      %v4224 = vunpack.c.h.b16 %v4177
      %v4225 = vunpack.c.l.b16 %v4178
      %v4226 = vunpack.c.h.b16 %v4178
      %v4227 = vpack.c.b16 %v4195, %v4195
      %v4228 = vpack.c.b16 %v4196, %v4196
      %v4229 = vpack.c.b16 %v4197, %v4197
      %v4230 = vpack.c.b16 %v4198, %v4198
      %v4231 = vpack.c.b16 %v4199, %v4199
      %v4232 = vpack.c.b16 %v4200, %v4200
      %v4233 = vpack.c.b16 %v4201, %v4201
      %v4234 = vpack.c.b16 %v4202, %v4202
      %v4235 = vpack.c.b16 %v4203, %v4203
      %v4236 = vpack.c.b16 %v4204, %v4204
      %v4237 = vpack.c.b16 %v4205, %v4205
      %v4238 = vpack.c.b16 %v4206, %v4206
      %v4239 = vpack.c.b16 %v4207, %v4207
      %v4240 = vpack.c.b16 %v4208, %v4208
      %v4241 = vpack.c.b16 %v4209, %v4209
      %v4242 = vpack.c.b16 %v4210, %v4210
      %v4243 = vpack.c.b16 %v4211, %v4211
      %v4244 = vpack.c.b16 %v4212, %v4212
      %v4245 = vpack.c.b16 %v4213, %v4213
      %v4246 = vpack.c.b16 %v4214, %v4214
      %v4247 = vpack.c.b16 %v4215, %v4215
      %v4248 = vpack.c.b16 %v4216, %v4216
      %v4249 = vpack.c.b16 %v4217, %v4217
      %v4250 = vpack.c.b16 %v4218, %v4218
      %v4251 = vpack.c.b16 %v4219, %v4219
      %v4252 = vpack.c.b16 %v4220, %v4220
      %v4253 = vpack.c.b16 %v4221, %v4221
      %v4254 = vpack.c.b16 %v4222, %v4222
      %v4255 = vpack.c.b16 %v4223, %v4223
      %v4256 = vpack.c.b16 %v4224, %v4224
      %v4257 = vpack.c.b16 %v4225, %v4225
      %v4258 = vpack.c.b16 %v4226, %v4226
      %4291 = vst [vmem:[%s289] sm:$0xf] %v4227
      %4292 = vst [vmem:[%s289 + $0x4] sm:$0xf] %v4228
      %4293 = vst [vmem:[%s289 + $0x8] sm:$0xf] %v4229
      %4294 = vst [vmem:[%s289 + $0xc] sm:$0xf] %v4230
      %4295 = vst [vmem:[%s289 + $0x10] sm:$0xf] %v4231
      %4296 = vst [vmem:[%s289 + $0x14] sm:$0xf] %v4232
      %4297 = vst [vmem:[%s289 + $0x18] sm:$0xf] %v4233
      %4298 = vst [vmem:[%s289 + $0x1c] sm:$0xf] %v4234
      %4299 = vst [vmem:[%s289 + $0x20] sm:$0xf] %v4235
      %4300 = vst [vmem:[%s289 + $0x24] sm:$0xf] %v4236
      %4301 = vst [vmem:[%s289 + $0x28] sm:$0xf] %v4237
      %4302 = vst [vmem:[%s289 + $0x2c] sm:$0xf] %v4238
      %4303 = vst [vmem:[%s289 + $0x30] sm:$0xf] %v4239
      %4304 = vst [vmem:[%s289 + $0x34] sm:$0xf] %v4240
      %4305 = vst [vmem:[%s289 + $0x38] sm:$0xf] %v4241
      %4306 = vst [vmem:[%s289 + $0x3c] sm:$0xf] %v4242
      %4307 = vst [vmem:[%s289 + $0x40] sm:$0xf] %v4243
      %4308 = vst [vmem:[%s289 + $0x44] sm:$0xf] %v4244
      %4309 = vst [vmem:[%s289 + $0x48] sm:$0xf] %v4245
      %4310 = vst [vmem:[%s289 + $0x4c] sm:$0xf] %v4246
      %4311 = vst [vmem:[%s289 + $0x50] sm:$0xf] %v4247
      %4312 = vst [vmem:[%s289 + $0x54] sm:$0xf] %v4248
      %4313 = vst [vmem:[%s289 + $0x58] sm:$0xf] %v4249
      %4314 = vst [vmem:[%s289 + $0x5c] sm:$0xf] %v4250
      %4315 = vst [vmem:[%s289 + $0x60] sm:$0xf] %v4251
      %4316 = vst [vmem:[%s289 + $0x64] sm:$0xf] %v4252
      %4317 = vst [vmem:[%s289 + $0x68] sm:$0xf] %v4253
      %4318 = vst [vmem:[%s289 + $0x6c] sm:$0xf] %v4254
      %4319 = vst [vmem:[%s289 + $0x70] sm:$0xf] %v4255
      %4320 = vst [vmem:[%s289 + $0x74] sm:$0xf] %v4256
      %4321 = vst [vmem:[%s289 + $0x78] sm:$0xf] %v4257
      %4322 = vst [vmem:[%s289 + $0x7c] sm:$0xf] %v4258
      %v4323 = vadd.f32 %v4131, %v4132
      %v4324 = vadd.f32 %v4323, %v4133
      %v4325 = vadd.f32 %v4324, %v4134
      %v4326 = vadd.f32 %v4325, %v4135
      %v4327 = vadd.f32 %v4326, %v4136
      %v4328 = vadd.f32 %v4327, %v4137
      %v4329 = vadd.f32 %v4328, %v4138
      %v4330 = vadd.f32 %v4329, %v4139
      %v4331 = vadd.f32 %v4330, %v4140
      %v4332 = vadd.f32 %v4331, %v4141
      %v4333 = vadd.f32 %v4332, %v4142
      %v4334 = vadd.f32 %v4333, %v4143
      %v4335 = vadd.f32 %v4334, %v4144
      %v4336 = vadd.f32 %v4335, %v4145
      %v4337 = vadd.f32 %v4336, %v4146
      %v4338 = vadd.f32 %v4337, %v4147
      %v4339 = vadd.f32 %v4338, %v4148
      %v4340 = vadd.f32 %v4339, %v4149
      %v4341 = vadd.f32 %v4340, %v4150
      %v4342 = vadd.f32 %v4341, %v4151
      %v4343 = vadd.f32 %v4342, %v4152
      %v4344 = vadd.f32 %v4343, %v4153
      %v4345 = vadd.f32 %v4344, %v4154
      %v4346 = vadd.f32 %v4345, %v4155
      %v4347 = vadd.f32 %v4346, %v4156
      %v4348 = vadd.f32 %v4347, %v4157
      %v4349 = vadd.f32 %v4348, %v4158
      %v4350 = vadd.f32 %v4349, %v4159
      %v4351 = vadd.f32 %v4350, %v4160
      %v4352 = vadd.f32 %v4351, %v4161
      %v4353 = vadd.f32 %v4352, %v4162
      %v4354 = vrot.slane %v4353, 4
      %v4355 = vadd.f32 %v4353, %v4354
      %v4356 = vrot.slane %v4355, 2
      %v4357 = vadd.f32 %v4355, %v4356
      %v4358 = vrot.slane %v4357, 1
      %v4359 = vadd.f32 %v4357, %v4358
      %4360 = vst [vmem:[%s292] sm:$0x1] %v4359
      %v4361 = vmul.f32 %v4131, %v4131
      %v4362 = vmul.f32 %v4132, %v4132
      %v4363 = vmul.f32 %v4133, %v4133
      %v4364 = vmul.f32 %v4134, %v4134
      %v4365 = vmul.f32 %v4135, %v4135
      %v4366 = vmul.f32 %v4136, %v4136
      %v4367 = vmul.f32 %v4137, %v4137
      %v4368 = vmul.f32 %v4138, %v4138
      %v4369 = vmul.f32 %v4139, %v4139
      %v4370 = vmul.f32 %v4140, %v4140
      %v4371 = vmul.f32 %v4141, %v4141
      %v4372 = vmul.f32 %v4142, %v4142
      %v4373 = vmul.f32 %v4143, %v4143
      %v4374 = vmul.f32 %v4144, %v4144
      %v4375 = vmul.f32 %v4145, %v4145
      %v4376 = vmul.f32 %v4146, %v4146
      %v4377 = vmul.f32 %v4147, %v4147
      %v4378 = vmul.f32 %v4148, %v4148
      %v4379 = vmul.f32 %v4149, %v4149
      %v4380 = vmul.f32 %v4150, %v4150
      %v4381 = vmul.f32 %v4151, %v4151
      %v4382 = vmul.f32 %v4152, %v4152
      %v4383 = vmul.f32 %v4153, %v4153
      %v4384 = vmul.f32 %v4154, %v4154
      %v4385 = vmul.f32 %v4155, %v4155
      %v4386 = vmul.f32 %v4156, %v4156
      %v4387 = vmul.f32 %v4157, %v4157
      %v4388 = vmul.f32 %v4158, %v4158
      %v4389 = vmul.f32 %v4159, %v4159
      %v4390 = vmul.f32 %v4160, %v4160
      %v4391 = vmul.f32 %v4161, %v4161
      %v4392 = vmul.f32 %v4162, %v4162
      %v4393 = vadd.f32 %v4361, %v4362
      %v4394 = vadd.f32 %v4393, %v4363
      %v4395 = vadd.f32 %v4394, %v4364
      %v4396 = vadd.f32 %v4395, %v4365
      %v4397 = vadd.f32 %v4396, %v4366
      %v4398 = vadd.f32 %v4397, %v4367
      %v4399 = vadd.f32 %v4398, %v4368
      %v4400 = vadd.f32 %v4399, %v4369
      %v4401 = vadd.f32 %v4400, %v4370
      %v4402 = vadd.f32 %v4401, %v4371
      %v4403 = vadd.f32 %v4402, %v4372
      %v4404 = vadd.f32 %v4403, %v4373
      %v4405 = vadd.f32 %v4404, %v4374
      %v4406 = vadd.f32 %v4405, %v4375
      %v4407 = vadd.f32 %v4406, %v4376
      %v4408 = vadd.f32 %v4407, %v4377
      %v4409 = vadd.f32 %v4408, %v4378
      %v4410 = vadd.f32 %v4409, %v4379
      %v4411 = vadd.f32 %v4410, %v4380
      %v4412 = vadd.f32 %v4411, %v4381
      %v4413 = vadd.f32 %v4412, %v4382
      %v4414 = vadd.f32 %v4413, %v4383
      %v4415 = vadd.f32 %v4414, %v4384
      %v4416 = vadd.f32 %v4415, %v4385
      %v4417 = vadd.f32 %v4416, %v4386
      %v4418 = vadd.f32 %v4417, %v4387
      %v4419 = vadd.f32 %v4418, %v4388
      %v4420 = vadd.f32 %v4419, %v4389
      %v4421 = vadd.f32 %v4420, %v4390
      %v4422 = vadd.f32 %v4421, %v4391
      %v4423 = vadd.f32 %v4422, %v4392
      %v4424 = vrot.slane %v4423, 4
      %v4425 = vadd.f32 %v4423, %v4424
      %v4426 = vrot.slane %v4425, 2
      %v4427 = vadd.f32 %v4425, %v4426
      %v4428 = vrot.slane %v4427, 1
      %v4429 = vadd.f32 %v4427, %v4428
      %4430 = vst [vmem:[%s295] sm:$0x1] %v4429
      %p4431 = scmp.lt.s32.totalorder %s19, 1
      %s4432 = scalar_select %p4431, %s19, 1
      %s4433 = smul.addr %s4432, 32
      %s4434 = smul.addr %s4433, 4
      %s4435 = scalar_lea.vmem %s5, %s4434
      %p4436 = scmp.lt.s32.totalorder %s19, 1
      %s4437 = scalar_select %p4436, %s19, 1
      %s4438 = scalar_lea.vmem %s6, %s4437
      %p4439 = scmp.lt.s32.totalorder %s19, 1
      %s4440 = scalar_select %p4439, %s19, 1
      %s4441 = scalar_lea.vmem %s7, %s4440
      // Predicated region
      $region41: #{stack_encoder_forward.4} parent=39 // pred_check
        %p4442 = pneg %p147
      $region42: #{stack_encoder_forward.4} parent=39 // pred_check_branch
        %4444 = sbr.rel (%p4442) target = $region44
      $region43: #{stack_encoder_forward.4} parent=39 // pred_region
        _
      $region44: #{stack_encoder_forward.4} parent=39 // pred_fallthru
        _
      // Predicated region
      $region45: #{stack_encoder_forward.4} parent=39 // pred_check
        %p4445 = pneg %p173
      $region46: #{stack_encoder_forward.4} parent=39 // pred_check_branch
        %4447 = sbr.rel (%p4445) target = $region48
      $region47: #{stack_encoder_forward.4} parent=39 // pred_region
        _
      $region48: #{stack_encoder_forward.4} parent=39 // pred_fallthru
        _
      // Predicated region
      $region49: #{stack_encoder_forward.4} parent=39 // pred_check
        %p4448 = pneg %p199
      $region50: #{stack_encoder_forward.4} parent=39 // pred_check_branch
        %4450 = sbr.rel (%p4448) target = $region52
      $region51: #{stack_encoder_forward.4} parent=39 // pred_region
        _
      $region52: #{stack_encoder_forward.4} parent=39 // pred_fallthru
        _
    $region40: #{stack_encoder_forward.4} parent=5 // pred_fallthru
      _
    %p4451 = scmp.le.s32.totalorder 2, %s14
    // Predicated region
    $region53: #{stack_encoder_forward.4} parent=5 // pred_check
      %p4452 = pneg %p4451
    $region54: #{stack_encoder_forward.4} parent=5 // pred_check_branch
      %4454 = sbr.rel (%p4452) target = $region56
    $region55: #{stack_encoder_forward.4} parent=5 // pred_region
      %s4455 = ssub.s32 %s14, 2
      // Predicated region
      $region57: #{stack_encoder_forward.4} parent=55 // pred_check
        %p4456 = pneg %p153
      $region58: #{stack_encoder_forward.4} parent=55 // pred_check_branch
        %4458 = sbr.rel (%p4456) target = $region60
      $region59: #{stack_encoder_forward.4} parent=55 // pred_region
        %p4459 = scmp.lt.s32.totalorder %s20, 1
        %s4460 = scalar_select %p4459, %s20, 1
        %s4461 = smul.addr %s4460, 32
        %s4462 = smul.addr %s4461, 4
        %s4463 = scalar_lea.vmem %s5, %s4462
      $region60: #{stack_encoder_forward.4} parent=55 // pred_fallthru
        _
      // Predicated region
      $region61: #{stack_encoder_forward.4} parent=55 // pred_check
        %p4464 = pneg %p179
      $region62: #{stack_encoder_forward.4} parent=55 // pred_check_branch
        %4466 = sbr.rel (%p4464) target = $region64
      $region63: #{stack_encoder_forward.4} parent=55 // pred_region
        %p4467 = scmp.lt.s32.totalorder %s20, 1
        %s4468 = scalar_select %p4467, %s20, 1
        %s4469 = scalar_lea.vmem %s6, %s4468
      $region64: #{stack_encoder_forward.4} parent=55 // pred_fallthru
        _
      // Predicated region
      $region65: #{stack_encoder_forward.4} parent=55 // pred_check
        %p4470 = pneg %p205
      $region66: #{stack_encoder_forward.4} parent=55 // pred_check_branch
        %4472 = sbr.rel (%p4470) target = $region68
      $region67: #{stack_encoder_forward.4} parent=55 // pred_region
        %p4473 = scmp.lt.s32.totalorder %s20, 1
        %s4474 = scalar_select %p4473, %s20, 1
        %s4475 = scalar_lea.vmem %s7, %s4474
      $region68: #{stack_encoder_forward.4} parent=55 // pred_fallthru
        _
    $region56: #{stack_encoder_forward.4} parent=5 // pred_fallthru
      _
  $region6: #{stack_encoder_forward.4} parent=0 // loop_footer
    %s18 = sadd.s32 1, %s14
  $region7: #{stack_encoder_forward.4} parent=0 // loop_footer_branch
    %13 = sbr.rel target = $region3
  $region8: #{stack_encoder_forward.4} parent=0 // loop_exit
    _

</llo_original>
